<compile_context>
chip_gen: v7x
topology: tpu7x:2x2x1
jax: 0.10.0
libtpu: 0.0.40
codegen_flags: <defaults>
</compile_context>

<pallas_src>
import math
from functools import partial

import jax
import jax.numpy as jnp
from jax.experimental import pallas as pl
from jax.experimental.pallas import tpu as pltpu


def _layer_norm(x, gamma, beta, eps=1e-5):
    mean = jnp.mean(x, axis=-1, keepdims=True)
    var = jnp.mean(jnp.square(x - mean), axis=-1, keepdims=True)
    return (x - mean) * jax.lax.rsqrt(var + eps) * gamma + beta


def encoder_layer_kernel(
    x_ref, mask_ref,
    wq_ref, bq_ref, wk_ref, bk_ref, wv_ref, bv_ref, wo_ref, bo_ref,
    g1_ref, b1_ref,
    wff1_ref, bff1_ref, wff2_ref, bff2_ref,
    g2_ref, b2_ref,
    o_ref,
    k_scr, v_scr,
    *, num_heads, head_chunk,
):
    H = num_heads
    HC = head_chunk
    qi = pl.program_id(1)

    TQ = mask_ref.shape[1]
    S = x_ref.shape[1]
    E = x_ref.shape[2]
    dh = E // H
    bf16 = jnp.bfloat16

    # --- K / V over the full sequence: compute once per batch (qi == 0). -----
    # The K transpose to (dh, S) (NN-form scores matmul) is hoisted here so it
    # is done once per batch instead of once per query tile.
    @pl.when(qi == 0)
    def _():
        xf = x_ref[0].astype(bf16)                                # (S, E)
        for h in range(H):                                        # static unroll
            k_h = jnp.dot(xf, wk_ref[h],
                          preferred_element_type=jnp.float32) + bk_ref[h]
            v_h = jnp.dot(xf, wv_ref[h],
                          preferred_element_type=jnp.float32) + bv_ref[h]
            k_scr[h] = k_h.T.astype(bf16)                         # (dh, S)
            v_scr[h] = v_h.astype(bf16)                           # (S, dh)

    # --- Current query tile, sliced from the resident full-seq f32 block. ----
    q_start = pl.multiple_of(qi * TQ, TQ)
    x = x_ref[0, pl.ds(q_start, TQ), :]                           # (TQ, E) f32
    xb = x.astype(bf16)
    mask = mask_ref[0].astype(jnp.float32)                        # (TQ, S)

    # --- Multi-head self-attention, head-chunked to bound live scores. -------
    attn = jnp.broadcast_to(bo_ref[...], (TQ, E))                 # f32
    for c in range(H // HC):
        heads = range(c * HC, (c + 1) * HC)
        # Per-head q projection (full-depth K=E matmul); 1/sqrt(dh) is already
        # folded into wq/bq by the wrapper.  Stack along the leading axis (no
        # lane slicing).
        qc = jnp.stack(
            [jnp.dot(xb, wq_ref[h], preferred_element_type=jnp.float32)
             + bq_ref[h] for h in heads],
            axis=0).astype(bf16)                                  # (HC, TQ, dh)
        kc = k_scr[pl.ds(c * HC, HC)]                             # (HC, dh, S)
        vc = v_scr[pl.ds(c * HC, HC)]                             # (HC, S, dh)

        s = jnp.einsum('hqd,hdk->hqk', qc, kc,
                       preferred_element_type=jnp.float32)        # (HC, TQ, S)
        s = s + mask[None, :, :]
        s = s - jnp.max(s, axis=-1, keepdims=True)
        p = jnp.exp(s)
        p = p * pl.reciprocal(jnp.sum(p, axis=-1, keepdims=True), approx=True)
        pv = jnp.einsum('hqk,hkd->hqd', p.astype(bf16), vc,
                        preferred_element_type=jnp.float32)       # (HC, TQ, dh)

        # Output projection: per-head (TQ,dh)@(dh,E) accumulation -- never
        # materializes a lane-dim concatenate of the head outputs.
        # TODO(synk): benchmark a single full-depth dot_general over (h, d)
        # against these shallow K=dh matmuls on v6e/v7x.
        for i, h in enumerate(heads):
            attn = attn + jnp.dot(pv[i].astype(bf16), wo_ref[h],
                                  preferred_element_type=jnp.float32)

    # dropout_1: eval mode -> identity.
    x1 = _layer_norm(attn + x, g1_ref[...], b1_ref[...])

    # --- Feed-forward. --------------------------------------------------------
    h1 = jnp.dot(x1.astype(bf16), wff1_ref[...],
                 preferred_element_type=jnp.float32) + bff1_ref[...]
    h1 = jnp.maximum(h1, 0.0)                                     # ReLU
    ff = jnp.dot(h1.astype(bf16), wff2_ref[...],
                 preferred_element_type=jnp.float32) + bff2_ref[...]

    # dropout_2: eval mode -> identity.
    o_ref[0] = _layer_norm(ff + x1, g2_ref[...], b2_ref[...])


def _vmem_limit_bytes():
    """Per-generation VMEM limit: ~62% of physical capacity, capped at 100 MiB."""
    try:
        cap = pltpu.get_tpu_info().vmem_capacity_bytes
    except Exception:
        cap = 64 * 1024 * 1024
    return int(min(0.625 * cap, 100 * 1024 * 1024))


def _pick_tiles(*, S, E, F, H, dh, vmem_limit):
    """VMEM-aware choice of the query tile TQ and the attention head chunk HC.

    Accounts for the dominant per-step live tensors (f32 scores + probs:
    2*HC*TQ*S*4 bytes) on top of single-buffered resident weights, the K/V
    scratch, the resident full-sequence x block and the activation slabs.
    """
    bfb, f4 = 2, 4
    weights = (3 * H * E * dh + H * dh * E + 2 * E * F) * bfb
    small = (3 * H * dh + 8 * E + F) * f4            # biases / LN params
    kv_scratch = 2 * H * S * dh * bfb
    x_block = 2 * S * E * f4                         # double-buffered full-seq x
    fixed = weights + small + kv_scratch + x_block
    budget = max(vmem_limit - fixed, 2 * 1024 * 1024)

    def var_bytes(tq, hc):
        scores = 2 * hc * tq * S * f4                # scores + exp(scores), f32
        mask_t = 2 * tq * S * bfb                    # double-buffered bf16 mask
        out_t = 2 * tq * E * f4                      # double-buffered f32 out
        acts = tq * (4 * E + 2 * F) * f4             # x tile / attn / x1 / h1 / ff
        return scores + mask_t + out_t + acts

    if S % 8 != 0:
        tq_cands = [S]
    else:
        tq_cands = sorted({t for t in range(8, min(S, 512) + 1, 8) if S % t == 0},
                          reverse=True)
    hc_cands = [c for c in (8, 4, 2, 1) if c <= H and H % c == 0]

    for tq in tq_cands:
        for hc in hc_cands:
            if var_bytes(tq, hc) <= budget:
                return tq, hc
    return tq_cands[-1], hc_cands[-1]


def encoder_layer(x, mask, params, *, num_heads):
    B, S, E = x.shape
    H = num_heads
    dh = E // H
    F = params["wff1"].shape[1]
    bf16 = jnp.bfloat16

    vmem_limit = _vmem_limit_bytes()
    TQ, HC = _pick_tiles(S=S, E=E, F=F, H=H, dh=dh, vmem_limit=vmem_limit)
    n_qt = S // TQ

    scale = 1.0 / math.sqrt(dh)

    def split_w(w):          # (E, E) -> (H, E, dh)
        return w.reshape(E, H, dh).transpose(1, 0, 2)

    def split_b(b):          # (1, E) -> (H, 1, dh)
        return b.reshape(1, H, dh).transpose(1, 0, 2)

    # bf16 matmul operands (f32 accumulate in-kernel); 1/sqrt(dh) folded into
    # the q projection weights/bias once in the wrapper (free).
    wq3 = split_w(params["wq"] * scale).astype(bf16)
    bq3 = split_b(params["bq"] * scale)
    wk3 = split_w(params["wk"]).astype(bf16)
    bk3 = split_b(params["bk"])
    wv3 = split_w(params["wv"]).astype(bf16)
    bv3 = split_b(params["bv"])
    wo3 = params["wo"].reshape(H, dh, E).astype(bf16)
    wff1 = params["wff1"].astype(bf16)
    wff2 = params["wff2"].astype(bf16)
    mask_bf = mask.astype(bf16)                      # halves mask HBM traffic

    kernel = partial(encoder_layer_kernel, num_heads=H, head_chunk=HC)

    flops = int(B * (8 * S * E * E + 4 * S * S * E + 4 * S * E * F))
    transcendentals = int(B * H * S * S)
    bytes_accessed = int(2 * B * S * E * 4 + B * S * S * 2
                         + (4 * E * E + 2 * E * F) * 2)

    args = (x, mask_bf,
            wq3, bq3, wk3, bk3, wv3, bv3, wo3, params["bo"],
            params["g1"], params["b1"],
            wff1, params["bff1"], wff2, params["bff2"],
            params["g2"], params["b2"])

    def build(single_buffer_consts):
        const_kwargs = (dict(pipeline_mode=pl.Buffered(1))
                        if single_buffer_consts else {})

        def const(shape):
            zeros = (0,) * len(shape)
            return pl.BlockSpec(shape, lambda b, qi: zeros, **const_kwargs)

        in_specs = [
            # x: full sequence of the current batch, resident across q tiles.
            pl.BlockSpec((1, S, E), lambda b, qi: (b, 0, 0)),
            # additive mask rows for the current q tile (bf16).
            pl.BlockSpec((1, TQ, S), lambda b, qi: (b, qi, 0)),
            const((H, E, dh)), const((H, 1, dh)),    # wq, bq (pre-scaled)
            const((H, E, dh)), const((H, 1, dh)),    # wk, bk
            const((H, E, dh)), const((H, 1, dh)),    # wv, bv
            const((H, dh, E)), const((1, E)),        # wo (per head), bo
            const((1, E)), const((1, E)),            # ln1 gamma, beta
            const((E, F)), const((1, F)),            # ffn w1, b1
            const((F, E)), const((1, E)),            # ffn w2, b2
            const((1, E)), const((1, E)),            # ln2 gamma, beta
        ]

        return pl.pallas_call(
            kernel,
            out_shape=jax.ShapeDtypeStruct((B, S, E), jnp.float32),
            grid_spec=pltpu.PrefetchScalarGridSpec(
                num_scalar_prefetch=0,
                grid=(B, n_qt),
                in_specs=in_specs,
                out_specs=pl.BlockSpec((1, TQ, E), lambda b, qi: (b, qi, 0)),
                scratch_shapes=[
                    pltpu.VMEM((H, dh, S), bf16),    # K^T per head, current batch
                    pltpu.VMEM((H, S, dh), bf16),    # V per head, current batch
                ],
            ),
            compiler_params=pltpu.CompilerParams(
                # q-tile axis must stay innermost and 'arbitrary': the K/V
                # scratch written at qi == 0 is carried across the q tiles of
                # the same batch.
                dimension_semantics=("parallel", "arbitrary"),
                vmem_limit_bytes=vmem_limit,
            ),
            cost_estimate=pl.CostEstimate(
                flops=flops,
                transcendentals=transcendentals,
                bytes_accessed=bytes_accessed,
            ),
        )(*args)

    try:
        return build(True)
    except Exception:
        # Fallback for JAX versions without BlockSpec(pipeline_mode=...).
        return build(False)


def reference_encoder_layer(x, mask, params, *, num_heads):
    """Pure-JAX f32 reference for sanity checking."""
    B, S, E = x.shape
    dh = E // num_heads
    q = x @ params["wq"] + params["bq"]
    k = x @ params["wk"] + params["bk"]
    v = x @ params["wv"] + params["bv"]
    qh = q.reshape(B, S, num_heads, dh).transpose(0, 2, 1, 3)
    kh = k.reshape(B, S, num_heads, dh).transpose(0, 2, 1, 3)
    vh = v.reshape(B, S, num_heads, dh).transpose(0, 2, 1, 3)
    scores = jnp.einsum("bhqd,bhkd->bhqk", qh, kh) / math.sqrt(dh)
    scores = scores + mask[:, None, :, :]
    p = jax.nn.softmax(scores, axis=-1)
    attn = jnp.einsum("bhqk,bhkd->bhqd", p, vh).transpose(0, 2, 1, 3).reshape(B, S, E)
    attn = attn @ params["wo"] + params["bo"]
    x1 = _layer_norm(attn + x, params["g1"], params["b1"])
    ff = jnp.maximum(x1 @ params["wff1"] + params["bff1"], 0.0) @ params["wff2"] + params["bff2"]
    return _layer_norm(ff + x1, params["g2"], params["b2"])


if __name__ == "__main__":
    B, S, E = 2, 8, 32
    NUM_HEADS = 4
    FF = 64

    key = jax.random.PRNGKey(0)
    keys = jax.random.split(key, 12)

    def init_w(k, shape):
        fan_in = shape[0]
        return jax.random.normal(k, shape, jnp.float32) / math.sqrt(fan_in)

    params = {
        "wq": init_w(keys[0], (E, E)),  "bq": jnp.zeros((1, E), jnp.float32),
        "wk": init_w(keys[1], (E, E)),  "bk": jnp.zeros((1, E), jnp.float32),
        "wv": init_w(keys[2], (E, E)),  "bv": jnp.zeros((1, E), jnp.float32),
        "wo": init_w(keys[3], (E, E)),  "bo": jnp.zeros((1, E), jnp.float32),
        "g1": jnp.ones((1, E), jnp.float32),  "b1": jnp.zeros((1, E), jnp.float32),
        "wff1": init_w(keys[4], (E, FF)), "bff1": jnp.zeros((1, FF), jnp.float32),
        "wff2": init_w(keys[5], (FF, E)), "bff2": jnp.zeros((1, E), jnp.float32),
        "g2": jnp.ones((1, E), jnp.float32),  "b2": jnp.zeros((1, E), jnp.float32),
    }

    x = jax.random.normal(keys[6], (B, S, E), jnp.float32)

    # Additive mask (causal pattern, just to exercise masking deterministically).
    causal = jnp.tril(jnp.ones((S, S), jnp.float32))
    mask = jnp.where(causal > 0, 0.0, -1e9)[None].repeat(B, axis=0)   # (B, S, S)

    out = encoder_layer(x, mask, params, num_heads=NUM_HEADS)
    out = jax.block_until_ready(out)

    ref = reference_encoder_layer(x, mask, params, num_heads=NUM_HEADS)
    # bf16 matmul operands + approx reciprocal -> compare against the f32
    # reference with a correspondingly looser tolerance.
    assert jnp.allclose(out, ref, atol=5e-2, rtol=5e-2), "mismatch vs. JAX reference"

    print("KERNEL_OK")
</pallas_src>

<mosaic_0001>
module attributes {stable_mosaic.version = 11 : i64} {
  func.func @encoder_layer_kernel(%arg0: i32, %arg1: i32, %arg2: memref<1x8x32xf32, #tpu.memory_space<vmem>>, %arg3: memref<1x8x8xbf16, #tpu.memory_space<vmem>>, %arg4: memref<4x32x8xbf16, #tpu.memory_space<vmem>>, %arg5: memref<4x1x8xf32, #tpu.memory_space<vmem>>, %arg6: memref<4x32x8xbf16, #tpu.memory_space<vmem>>, %arg7: memref<4x1x8xf32, #tpu.memory_space<vmem>>, %arg8: memref<4x32x8xbf16, #tpu.memory_space<vmem>>, %arg9: memref<4x1x8xf32, #tpu.memory_space<vmem>>, %arg10: memref<4x8x32xbf16, #tpu.memory_space<vmem>>, %arg11: memref<1x32xf32, #tpu.memory_space<vmem>>, %arg12: memref<1x32xf32, #tpu.memory_space<vmem>>, %arg13: memref<1x32xf32, #tpu.memory_space<vmem>>, %arg14: memref<32x64xbf16, #tpu.memory_space<vmem>>, %arg15: memref<1x64xf32, #tpu.memory_space<vmem>>, %arg16: memref<64x32xbf16, #tpu.memory_space<vmem>>, %arg17: memref<1x32xf32, #tpu.memory_space<vmem>>, %arg18: memref<1x32xf32, #tpu.memory_space<vmem>>, %arg19: memref<1x32xf32, #tpu.memory_space<vmem>>, %arg20: memref<1x8x32xf32, #tpu.memory_space<vmem>>, %arg21: memref<4x8x8xbf16, #tpu.memory_space<vmem>>, %arg22: memref<4x8x8xbf16, #tpu.memory_space<vmem>>) attributes {dimension_semantics = [#tpu.dimension_semantics<parallel>, #tpu.dimension_semantics<arbitrary>], iteration_bounds = array<i64: 2, 1>, scalar_prefetch = 0 : i64, scratch_operands = 2 : i64, tpu.core_type = #tpu.core_type<tc>, window_params = [{transform_indices = @transform_0, window_bounds = array<i64: 1, 8, 32>}, {transform_indices = @transform_1, window_bounds = array<i64: 1, 8, 8>}, {pipeline_mode = #tpu.pipeline_mode<synchronous>, transform_indices = @transform_2, window_bounds = array<i64: 4, 32, 8>}, {pipeline_mode = #tpu.pipeline_mode<synchronous>, transform_indices = @transform_3, window_bounds = array<i64: 4, 1, 8>}, {pipeline_mode = #tpu.pipeline_mode<synchronous>, transform_indices = @transform_4, window_bounds = array<i64: 4, 32, 8>}, {pipeline_mode = #tpu.pipeline_mode<synchronous>, transform_indices = @transform_5, window_bounds = array<i64: 4, 1, 8>}, {pipeline_mode = #tpu.pipeline_mode<synchronous>, transform_indices = @transform_6, window_bounds = array<i64: 4, 32, 8>}, {pipeline_mode = #tpu.pipeline_mode<synchronous>, transform_indices = @transform_7, window_bounds = array<i64: 4, 1, 8>}, {pipeline_mode = #tpu.pipeline_mode<synchronous>, transform_indices = @transform_8, window_bounds = array<i64: 4, 8, 32>}, {pipeline_mode = #tpu.pipeline_mode<synchronous>, transform_indices = @transform_9, window_bounds = array<i64: 1, 32>}, {pipeline_mode = #tpu.pipeline_mode<synchronous>, transform_indices = @transform_10, window_bounds = array<i64: 1, 32>}, {pipeline_mode = #tpu.pipeline_mode<synchronous>, transform_indices = @transform_11, window_bounds = array<i64: 1, 32>}, {pipeline_mode = #tpu.pipeline_mode<synchronous>, transform_indices = @transform_12, window_bounds = array<i64: 32, 64>}, {pipeline_mode = #tpu.pipeline_mode<synchronous>, transform_indices = @transform_13, window_bounds = array<i64: 1, 64>}, {pipeline_mode = #tpu.pipeline_mode<synchronous>, transform_indices = @transform_14, window_bounds = array<i64: 64, 32>}, {pipeline_mode = #tpu.pipeline_mode<synchronous>, transform_indices = @transform_15, window_bounds = array<i64: 1, 32>}, {pipeline_mode = #tpu.pipeline_mode<synchronous>, transform_indices = @transform_16, window_bounds = array<i64: 1, 32>}, {pipeline_mode = #tpu.pipeline_mode<synchronous>, transform_indices = @transform_17, window_bounds = array<i64: 1, 32>}, {transform_indices = @transform_18, window_bounds = array<i64: 1, 8, 32>}]} {
    %c0_i32 = arith.constant 0 : i32
    %0 = arith.cmpi eq, %arg1, %c0_i32 : i32
    %1 = arith.extui %0 : i1 to i32
    %c0_i32_0 = arith.constant 0 : i32
    %2 = arith.cmpi ne, %1, %c0_i32_0 : i32
    scf.if %2 {
      %c0_89 = arith.constant 0 : index
      %c0_90 = arith.constant 0 : index
      %c0_91 = arith.constant 0 : index
      %162 = vector.load %arg2[%c0_89, %c0_90, %c0_91] : memref<1x8x32xf32, #tpu.memory_space<vmem>>, vector<1x8x32xf32>
      %163 = vector.shape_cast %162 : vector<1x8x32xf32> to vector<8x32xf32>
      %164 = arith.truncf %163 : vector<8x32xf32> to vector<8x32xbf16>
      %c0_92 = arith.constant 0 : index
      %c0_93 = arith.constant 0 : index
      %c0_94 = arith.constant 0 : index
      %165 = vector.load %arg6[%c0_92, %c0_93, %c0_94] : memref<4x32x8xbf16, #tpu.memory_space<vmem>>, vector<1x32x8xbf16>
      %166 = vector.shape_cast %165 : vector<1x32x8xbf16> to vector<32x8xbf16>
      %cst_95 = arith.constant dense<0.000000e+00> : vector<8x8xf32>
      %167 = tpu.matmul %164, %166, %cst_95 {dimension_numbers = #tpu.dot_dimension_numbers<[1], [0], [0], [1], [0, 0, 1, 1], [], []>} : vector<8x32xbf16>, vector<32x8xbf16>, vector<8x8xf32> -> vector<8x8xf32>
      %c0_96 = arith.constant 0 : index
      %c0_97 = arith.constant 0 : index
      %c0_98 = arith.constant 0 : index
      %168 = vector.load %arg7[%c0_96, %c0_97, %c0_98] : memref<4x1x8xf32, #tpu.memory_space<vmem>>, vector<1x1x8xf32>
      %169 = vector.shape_cast %168 : vector<1x1x8xf32> to vector<1x8xf32>
      %170 = vector.broadcast %169 : vector<1x8xf32> to vector<8x8xf32>
      %171 = arith.addf %167, %170 : vector<8x8xf32>
      %c0_99 = arith.constant 0 : index
      %c0_100 = arith.constant 0 : index
      %c0_101 = arith.constant 0 : index
      %172 = vector.load %arg8[%c0_99, %c0_100, %c0_101] : memref<4x32x8xbf16, #tpu.memory_space<vmem>>, vector<1x32x8xbf16>
      %173 = vector.shape_cast %172 : vector<1x32x8xbf16> to vector<32x8xbf16>
      %cst_102 = arith.constant dense<0.000000e+00> : vector<8x8xf32>
      %174 = tpu.matmul %164, %173, %cst_102 {dimension_numbers = #tpu.dot_dimension_numbers<[1], [0], [0], [1], [0, 0, 1, 1], [], []>} : vector<8x32xbf16>, vector<32x8xbf16>, vector<8x8xf32> -> vector<8x8xf32>
      %c0_103 = arith.constant 0 : index
      %c0_104 = arith.constant 0 : index
      %c0_105 = arith.constant 0 : index
      %175 = vector.load %arg9[%c0_103, %c0_104, %c0_105] : memref<4x1x8xf32, #tpu.memory_space<vmem>>, vector<1x1x8xf32>
      %176 = vector.shape_cast %175 : vector<1x1x8xf32> to vector<1x8xf32>
      %177 = vector.broadcast %176 : vector<1x8xf32> to vector<8x8xf32>
      %178 = arith.addf %174, %177 : vector<8x8xf32>
      %179 = tpu.transpose %171, [1, 0] : vector<8x8xf32> -> vector<8x8xf32>
      %180 = arith.truncf %179 : vector<8x8xf32> to vector<8x8xbf16>
      %c0_106 = arith.constant 0 : index
      %c0_107 = arith.constant 0 : index
      %c0_108 = arith.constant 0 : index
      %181 = vector.load %arg21[%c0_106, %c0_107, %c0_108] : memref<4x8x8xbf16, #tpu.memory_space<vmem>>, vector<1x8x8xbf16>
      %182 = vector.shape_cast %181 : vector<1x8x8xbf16> to vector<8x8xbf16>
      %183 = vector.shape_cast %180 : vector<8x8xbf16> to vector<1x8x8xbf16>
      tpu.vector_store %arg21[%c0_106, %c0_107, %c0_108], %183 {strides = array<i32>} : memref<4x8x8xbf16, #tpu.memory_space<vmem>>, vector<1x8x8xbf16>,
      %184 = arith.truncf %178 : vector<8x8xf32> to vector<8x8xbf16>
      %c0_109 = arith.constant 0 : index
      %c0_110 = arith.constant 0 : index
      %c0_111 = arith.constant 0 : index
      %185 = vector.load %arg22[%c0_109, %c0_110, %c0_111] : memref<4x8x8xbf16, #tpu.memory_space<vmem>>, vector<1x8x8xbf16>
      %186 = vector.shape_cast %185 : vector<1x8x8xbf16> to vector<8x8xbf16>
      %187 = vector.shape_cast %184 : vector<8x8xbf16> to vector<1x8x8xbf16>
      tpu.vector_store %arg22[%c0_109, %c0_110, %c0_111], %187 {strides = array<i32>} : memref<4x8x8xbf16, #tpu.memory_space<vmem>>, vector<1x8x8xbf16>,
      %c1_112 = arith.constant 1 : index
      %c0_113 = arith.constant 0 : index
      %c0_114 = arith.constant 0 : index
      %188 = vector.load %arg6[%c1_112, %c0_113, %c0_114] : memref<4x32x8xbf16, #tpu.memory_space<vmem>>, vector<1x32x8xbf16>
      %189 = vector.shape_cast %188 : vector<1x32x8xbf16> to vector<32x8xbf16>
      %cst_115 = arith.constant dense<0.000000e+00> : vector<8x8xf32>
      %190 = tpu.matmul %164, %189, %cst_115 {dimension_numbers = #tpu.dot_dimension_numbers<[1], [0], [0], [1], [0, 0, 1, 1], [], []>} : vector<8x32xbf16>, vector<32x8xbf16>, vector<8x8xf32> -> vector<8x8xf32>
      %c1_116 = arith.constant 1 : index
      %c0_117 = arith.constant 0 : index
      %c0_118 = arith.constant 0 : index
      %191 = vector.load %arg7[%c1_116, %c0_117, %c0_118] : memref<4x1x8xf32, #tpu.memory_space<vmem>>, vector<1x1x8xf32>
      %192 = vector.shape_cast %191 : vector<1x1x8xf32> to vector<1x8xf32>
      %193 = vector.broadcast %192 : vector<1x8xf32> to vector<8x8xf32>
      %194 = arith.addf %190, %193 : vector<8x8xf32>
      %c1_119 = arith.constant 1 : index
      %c0_120 = arith.constant 0 : index
      %c0_121 = arith.constant 0 : index
      %195 = vector.load %arg8[%c1_119, %c0_120, %c0_121] : memref<4x32x8xbf16, #tpu.memory_space<vmem>>, vector<1x32x8xbf16>
      %196 = vector.shape_cast %195 : vector<1x32x8xbf16> to vector<32x8xbf16>
      %cst_122 = arith.constant dense<0.000000e+00> : vector<8x8xf32>
      %197 = tpu.matmul %164, %196, %cst_122 {dimension_numbers = #tpu.dot_dimension_numbers<[1], [0], [0], [1], [0, 0, 1, 1], [], []>} : vector<8x32xbf16>, vector<32x8xbf16>, vector<8x8xf32> -> vector<8x8xf32>
      %c1_123 = arith.constant 1 : index
      %c0_124 = arith.constant 0 : index
      %c0_125 = arith.constant 0 : index
      %198 = vector.load %arg9[%c1_123, %c0_124, %c0_125] : memref<4x1x8xf32, #tpu.memory_space<vmem>>, vector<1x1x8xf32>
      %199 = vector.shape_cast %198 : vector<1x1x8xf32> to vector<1x8xf32>
      %200 = vector.broadcast %199 : vector<1x8xf32> to vector<8x8xf32>
      %201 = arith.addf %197, %200 : vector<8x8xf32>
      %202 = tpu.transpose %194, [1, 0] : vector<8x8xf32> -> vector<8x8xf32>
      %203 = arith.truncf %202 : vector<8x8xf32> to vector<8x8xbf16>
      %c1_126 = arith.constant 1 : index
      %c0_127 = arith.constant 0 : index
      %c0_128 = arith.constant 0 : index
      %204 = vector.load %arg21[%c1_126, %c0_127, %c0_128] : memref<4x8x8xbf16, #tpu.memory_space<vmem>>, vector<1x8x8xbf16>
      %205 = vector.shape_cast %204 : vector<1x8x8xbf16> to vector<8x8xbf16>
      %206 = vector.shape_cast %203 : vector<8x8xbf16> to vector<1x8x8xbf16>
      tpu.vector_store %arg21[%c1_126, %c0_127, %c0_128], %206 {strides = array<i32>} : memref<4x8x8xbf16, #tpu.memory_space<vmem>>, vector<1x8x8xbf16>,
      %207 = arith.truncf %201 : vector<8x8xf32> to vector<8x8xbf16>
      %c1_129 = arith.constant 1 : index
      %c0_130 = arith.constant 0 : index
      %c0_131 = arith.constant 0 : index
      %208 = vector.load %arg22[%c1_129, %c0_130, %c0_131] : memref<4x8x8xbf16, #tpu.memory_space<vmem>>, vector<1x8x8xbf16>
      %209 = vector.shape_cast %208 : vector<1x8x8xbf16> to vector<8x8xbf16>
      %210 = vector.shape_cast %207 : vector<8x8xbf16> to vector<1x8x8xbf16>
      tpu.vector_store %arg22[%c1_129, %c0_130, %c0_131], %210 {strides = array<i32>} : memref<4x8x8xbf16, #tpu.memory_space<vmem>>, vector<1x8x8xbf16>,
      %c2_132 = arith.constant 2 : index
      %c0_133 = arith.constant 0 : index
      %c0_134 = arith.constant 0 : index
      %211 = vector.load %arg6[%c2_132, %c0_133, %c0_134] : memref<4x32x8xbf16, #tpu.memory_space<vmem>>, vector<1x32x8xbf16>
      %212 = vector.shape_cast %211 : vector<1x32x8xbf16> to vector<32x8xbf16>
      %cst_135 = arith.constant dense<0.000000e+00> : vector<8x8xf32>
      %213 = tpu.matmul %164, %212, %cst_135 {dimension_numbers = #tpu.dot_dimension_numbers<[1], [0], [0], [1], [0, 0, 1, 1], [], []>} : vector<8x32xbf16>, vector<32x8xbf16>, vector<8x8xf32> -> vector<8x8xf32>
      %c2_136 = arith.constant 2 : index
      %c0_137 = arith.constant 0 : index
      %c0_138 = arith.constant 0 : index
      %214 = vector.load %arg7[%c2_136, %c0_137, %c0_138] : memref<4x1x8xf32, #tpu.memory_space<vmem>>, vector<1x1x8xf32>
      %215 = vector.shape_cast %214 : vector<1x1x8xf32> to vector<1x8xf32>
      %216 = vector.broadcast %215 : vector<1x8xf32> to vector<8x8xf32>
      %217 = arith.addf %213, %216 : vector<8x8xf32>
      %c2_139 = arith.constant 2 : index
      %c0_140 = arith.constant 0 : index
      %c0_141 = arith.constant 0 : index
      %218 = vector.load %arg8[%c2_139, %c0_140, %c0_141] : memref<4x32x8xbf16, #tpu.memory_space<vmem>>, vector<1x32x8xbf16>
      %219 = vector.shape_cast %218 : vector<1x32x8xbf16> to vector<32x8xbf16>
      %cst_142 = arith.constant dense<0.000000e+00> : vector<8x8xf32>
      %220 = tpu.matmul %164, %219, %cst_142 {dimension_numbers = #tpu.dot_dimension_numbers<[1], [0], [0], [1], [0, 0, 1, 1], [], []>} : vector<8x32xbf16>, vector<32x8xbf16>, vector<8x8xf32> -> vector<8x8xf32>
      %c2_143 = arith.constant 2 : index
      %c0_144 = arith.constant 0 : index
      %c0_145 = arith.constant 0 : index
      %221 = vector.load %arg9[%c2_143, %c0_144, %c0_145] : memref<4x1x8xf32, #tpu.memory_space<vmem>>, vector<1x1x8xf32>
      %222 = vector.shape_cast %221 : vector<1x1x8xf32> to vector<1x8xf32>
      %223 = vector.broadcast %222 : vector<1x8xf32> to vector<8x8xf32>
      %224 = arith.addf %220, %223 : vector<8x8xf32>
      %225 = tpu.transpose %217, [1, 0] : vector<8x8xf32> -> vector<8x8xf32>
      %226 = arith.truncf %225 : vector<8x8xf32> to vector<8x8xbf16>
      %c2_146 = arith.constant 2 : index
      %c0_147 = arith.constant 0 : index
      %c0_148 = arith.constant 0 : index
      %227 = vector.load %arg21[%c2_146, %c0_147, %c0_148] : memref<4x8x8xbf16, #tpu.memory_space<vmem>>, vector<1x8x8xbf16>
      %228 = vector.shape_cast %227 : vector<1x8x8xbf16> to vector<8x8xbf16>
      %229 = vector.shape_cast %226 : vector<8x8xbf16> to vector<1x8x8xbf16>
      tpu.vector_store %arg21[%c2_146, %c0_147, %c0_148], %229 {strides = array<i32>} : memref<4x8x8xbf16, #tpu.memory_space<vmem>>, vector<1x8x8xbf16>,
      %230 = arith.truncf %224 : vector<8x8xf32> to vector<8x8xbf16>
      %c2_149 = arith.constant 2 : index
      %c0_150 = arith.constant 0 : index
      %c0_151 = arith.constant 0 : index
      %231 = vector.load %arg22[%c2_149, %c0_150, %c0_151] : memref<4x8x8xbf16, #tpu.memory_space<vmem>>, vector<1x8x8xbf16>
      %232 = vector.shape_cast %231 : vector<1x8x8xbf16> to vector<8x8xbf16>
      %233 = vector.shape_cast %230 : vector<8x8xbf16> to vector<1x8x8xbf16>
      tpu.vector_store %arg22[%c2_149, %c0_150, %c0_151], %233 {strides = array<i32>} : memref<4x8x8xbf16, #tpu.memory_space<vmem>>, vector<1x8x8xbf16>,
      %c3_152 = arith.constant 3 : index
      %c0_153 = arith.constant 0 : index
      %c0_154 = arith.constant 0 : index
      %234 = vector.load %arg6[%c3_152, %c0_153, %c0_154] : memref<4x32x8xbf16, #tpu.memory_space<vmem>>, vector<1x32x8xbf16>
      %235 = vector.shape_cast %234 : vector<1x32x8xbf16> to vector<32x8xbf16>
      %cst_155 = arith.constant dense<0.000000e+00> : vector<8x8xf32>
      %236 = tpu.matmul %164, %235, %cst_155 {dimension_numbers = #tpu.dot_dimension_numbers<[1], [0], [0], [1], [0, 0, 1, 1], [], []>} : vector<8x32xbf16>, vector<32x8xbf16>, vector<8x8xf32> -> vector<8x8xf32>
      %c3_156 = arith.constant 3 : index
      %c0_157 = arith.constant 0 : index
      %c0_158 = arith.constant 0 : index
      %237 = vector.load %arg7[%c3_156, %c0_157, %c0_158] : memref<4x1x8xf32, #tpu.memory_space<vmem>>, vector<1x1x8xf32>
      %238 = vector.shape_cast %237 : vector<1x1x8xf32> to vector<1x8xf32>
      %239 = vector.broadcast %238 : vector<1x8xf32> to vector<8x8xf32>
      %240 = arith.addf %236, %239 : vector<8x8xf32>
      %c3_159 = arith.constant 3 : index
      %c0_160 = arith.constant 0 : index
      %c0_161 = arith.constant 0 : index
      %241 = vector.load %arg8[%c3_159, %c0_160, %c0_161] : memref<4x32x8xbf16, #tpu.memory_space<vmem>>, vector<1x32x8xbf16>
      %242 = vector.shape_cast %241 : vector<1x32x8xbf16> to vector<32x8xbf16>
      %cst_162 = arith.constant dense<0.000000e+00> : vector<8x8xf32>
      %243 = tpu.matmul %164, %242, %cst_162 {dimension_numbers = #tpu.dot_dimension_numbers<[1], [0], [0], [1], [0, 0, 1, 1], [], []>} : vector<8x32xbf16>, vector<32x8xbf16>, vector<8x8xf32> -> vector<8x8xf32>
      %c3_163 = arith.constant 3 : index
      %c0_164 = arith.constant 0 : index
      %c0_165 = arith.constant 0 : index
      %244 = vector.load %arg9[%c3_163, %c0_164, %c0_165] : memref<4x1x8xf32, #tpu.memory_space<vmem>>, vector<1x1x8xf32>
      %245 = vector.shape_cast %244 : vector<1x1x8xf32> to vector<1x8xf32>
      %246 = vector.broadcast %245 : vector<1x8xf32> to vector<8x8xf32>
      %247 = arith.addf %243, %246 : vector<8x8xf32>
      %248 = tpu.transpose %240, [1, 0] : vector<8x8xf32> -> vector<8x8xf32>
      %249 = arith.truncf %248 : vector<8x8xf32> to vector<8x8xbf16>
      %c3_166 = arith.constant 3 : index
      %c0_167 = arith.constant 0 : index
      %c0_168 = arith.constant 0 : index
      %250 = vector.load %arg21[%c3_166, %c0_167, %c0_168] : memref<4x8x8xbf16, #tpu.memory_space<vmem>>, vector<1x8x8xbf16>
      %251 = vector.shape_cast %250 : vector<1x8x8xbf16> to vector<8x8xbf16>
      %252 = vector.shape_cast %249 : vector<8x8xbf16> to vector<1x8x8xbf16>
      tpu.vector_store %arg21[%c3_166, %c0_167, %c0_168], %252 {strides = array<i32>} : memref<4x8x8xbf16, #tpu.memory_space<vmem>>, vector<1x8x8xbf16>,
      %253 = arith.truncf %247 : vector<8x8xf32> to vector<8x8xbf16>
      %c3_169 = arith.constant 3 : index
      %c0_170 = arith.constant 0 : index
      %c0_171 = arith.constant 0 : index
      %254 = vector.load %arg22[%c3_169, %c0_170, %c0_171] : memref<4x8x8xbf16, #tpu.memory_space<vmem>>, vector<1x8x8xbf16>
      %255 = vector.shape_cast %254 : vector<1x8x8xbf16> to vector<8x8xbf16>
      %256 = vector.shape_cast %253 : vector<8x8xbf16> to vector<1x8x8xbf16>
      tpu.vector_store %arg22[%c3_169, %c0_170, %c0_171], %256 {strides = array<i32>} : memref<4x8x8xbf16, #tpu.memory_space<vmem>>, vector<1x8x8xbf16>,
    } else {
    }
    %c8_i32 = arith.constant 8 : i32
    %3 = arith.muli %arg1, %c8_i32 : i32
    %4 = tpu.assume_multiple %3, 8 : i32
    %c0 = arith.constant 0 : index
    %5 = arith.index_cast %4 : i32 to index
    %c0_1 = arith.constant 0 : index
    %6 = vector.load %arg2[%c0, %5, %c0_1] : memref<1x8x32xf32, #tpu.memory_space<vmem>>, vector<1x8x32xf32>
    %7 = vector.shape_cast %6 : vector<1x8x32xf32> to vector<8x32xf32>
    %8 = arith.truncf %7 : vector<8x32xf32> to vector<8x32xbf16>
    %c0_2 = arith.constant 0 : index
    %c0_3 = arith.constant 0 : index
    %c0_4 = arith.constant 0 : index
    %9 = vector.load %arg3[%c0_2, %c0_3, %c0_4] : memref<1x8x8xbf16, #tpu.memory_space<vmem>>, vector<1x8x8xbf16>
    %10 = vector.shape_cast %9 : vector<1x8x8xbf16> to vector<8x8xbf16>
    %11 = arith.extf %10 : vector<8x8xbf16> to vector<8x8xf32>
    %c0_5 = arith.constant 0 : index
    %c0_6 = arith.constant 0 : index
    %12 = vector.load %arg11[%c0_5, %c0_6] : memref<1x32xf32, #tpu.memory_space<vmem>>, vector<1x32xf32>
    %13 = vector.shape_cast %12 : vector<1x32xf32> to vector<1x32xf32>
    %14 = vector.broadcast %13 : vector<1x32xf32> to vector<8x32xf32>
    %c0_7 = arith.constant 0 : index
    %c0_8 = arith.constant 0 : index
    %c0_9 = arith.constant 0 : index
    %15 = vector.load %arg4[%c0_7, %c0_8, %c0_9] : memref<4x32x8xbf16, #tpu.memory_space<vmem>>, vector<1x32x8xbf16>
    %16 = vector.shape_cast %15 : vector<1x32x8xbf16> to vector<32x8xbf16>
    %cst = arith.constant dense<0.000000e+00> : vector<8x8xf32>
    %17 = tpu.matmul %8, %16, %cst {dimension_numbers = #tpu.dot_dimension_numbers<[1], [0], [0], [1], [0, 0, 1, 1], [], []>} : vector<8x32xbf16>, vector<32x8xbf16>, vector<8x8xf32> -> vector<8x8xf32>
    %c0_10 = arith.constant 0 : index
    %c0_11 = arith.constant 0 : index
    %c0_12 = arith.constant 0 : index
    %18 = vector.load %arg5[%c0_10, %c0_11, %c0_12] : memref<4x1x8xf32, #tpu.memory_space<vmem>>, vector<1x1x8xf32>
    %19 = vector.shape_cast %18 : vector<1x1x8xf32> to vector<1x8xf32>
    %20 = vector.broadcast %19 : vector<1x8xf32> to vector<8x8xf32>
    %21 = arith.addf %17, %20 : vector<8x8xf32>
    %c1 = arith.constant 1 : index
    %c0_13 = arith.constant 0 : index
    %c0_14 = arith.constant 0 : index
    %22 = vector.load %arg4[%c1, %c0_13, %c0_14] : memref<4x32x8xbf16, #tpu.memory_space<vmem>>, vector<1x32x8xbf16>
    %23 = vector.shape_cast %22 : vector<1x32x8xbf16> to vector<32x8xbf16>
    %cst_15 = arith.constant dense<0.000000e+00> : vector<8x8xf32>
    %24 = tpu.matmul %8, %23, %cst_15 {dimension_numbers = #tpu.dot_dimension_numbers<[1], [0], [0], [1], [0, 0, 1, 1], [], []>} : vector<8x32xbf16>, vector<32x8xbf16>, vector<8x8xf32> -> vector<8x8xf32>
    %c1_16 = arith.constant 1 : index
    %c0_17 = arith.constant 0 : index
    %c0_18 = arith.constant 0 : index
    %25 = vector.load %arg5[%c1_16, %c0_17, %c0_18] : memref<4x1x8xf32, #tpu.memory_space<vmem>>, vector<1x1x8xf32>
    %26 = vector.shape_cast %25 : vector<1x1x8xf32> to vector<1x8xf32>
    %27 = vector.broadcast %26 : vector<1x8xf32> to vector<8x8xf32>
    %28 = arith.addf %24, %27 : vector<8x8xf32>
    %c2 = arith.constant 2 : index
    %c0_19 = arith.constant 0 : index
    %c0_20 = arith.constant 0 : index
    %29 = vector.load %arg4[%c2, %c0_19, %c0_20] : memref<4x32x8xbf16, #tpu.memory_space<vmem>>, vector<1x32x8xbf16>
    %30 = vector.shape_cast %29 : vector<1x32x8xbf16> to vector<32x8xbf16>
    %cst_21 = arith.constant dense<0.000000e+00> : vector<8x8xf32>
    %31 = tpu.matmul %8, %30, %cst_21 {dimension_numbers = #tpu.dot_dimension_numbers<[1], [0], [0], [1], [0, 0, 1, 1], [], []>} : vector<8x32xbf16>, vector<32x8xbf16>, vector<8x8xf32> -> vector<8x8xf32>
    %c2_22 = arith.constant 2 : index
    %c0_23 = arith.constant 0 : index
    %c0_24 = arith.constant 0 : index
    %32 = vector.load %arg5[%c2_22, %c0_23, %c0_24] : memref<4x1x8xf32, #tpu.memory_space<vmem>>, vector<1x1x8xf32>
    %33 = vector.shape_cast %32 : vector<1x1x8xf32> to vector<1x8xf32>
    %34 = vector.broadcast %33 : vector<1x8xf32> to vector<8x8xf32>
    %35 = arith.addf %31, %34 : vector<8x8xf32>
    %c3 = arith.constant 3 : index
    %c0_25 = arith.constant 0 : index
    %c0_26 = arith.constant 0 : index
    %36 = vector.load %arg4[%c3, %c0_25, %c0_26] : memref<4x32x8xbf16, #tpu.memory_space<vmem>>, vector<1x32x8xbf16>
    %37 = vector.shape_cast %36 : vector<1x32x8xbf16> to vector<32x8xbf16>
    %cst_27 = arith.constant dense<0.000000e+00> : vector<8x8xf32>
    %38 = tpu.matmul %8, %37, %cst_27 {dimension_numbers = #tpu.dot_dimension_numbers<[1], [0], [0], [1], [0, 0, 1, 1], [], []>} : vector<8x32xbf16>, vector<32x8xbf16>, vector<8x8xf32> -> vector<8x8xf32>
    %c3_28 = arith.constant 3 : index
    %c0_29 = arith.constant 0 : index
    %c0_30 = arith.constant 0 : index
    %39 = vector.load %arg5[%c3_28, %c0_29, %c0_30] : memref<4x1x8xf32, #tpu.memory_space<vmem>>, vector<1x1x8xf32>
    %40 = vector.shape_cast %39 : vector<1x1x8xf32> to vector<1x8xf32>
    %41 = vector.broadcast %40 : vector<1x8xf32> to vector<8x8xf32>
    %42 = arith.addf %38, %41 : vector<8x8xf32>
    %43 = vector.shape_cast %21 : vector<8x8xf32> to vector<1x8x8xf32>
    %44 = vector.shape_cast %28 : vector<8x8xf32> to vector<1x8x8xf32>
    %45 = vector.shape_cast %35 : vector<8x8xf32> to vector<1x8x8xf32>
    %46 = vector.shape_cast %42 : vector<8x8xf32> to vector<1x8x8xf32>
    %47 = tpu.concatenate %43, %44, %45, %46 in 0 : vector<1x8x8xf32>, vector<1x8x8xf32>, vector<1x8x8xf32>, vector<1x8x8xf32> -> vector<4x8x8xf32>
    %48 = arith.truncf %47 : vector<4x8x8xf32> to vector<4x8x8xbf16>
    %c0_31 = arith.constant 0 : index
    %c0_32 = arith.constant 0 : index
    %c0_33 = arith.constant 0 : index
    %49 = vector.load %arg21[%c0_31, %c0_32, %c0_33] : memref<4x8x8xbf16, #tpu.memory_space<vmem>>, vector<4x8x8xbf16>
    %c0_34 = arith.constant 0 : index
    %c0_35 = arith.constant 0 : index
    %c0_36 = arith.constant 0 : index
    %50 = vector.load %arg22[%c0_34, %c0_35, %c0_36] : memref<4x8x8xbf16, #tpu.memory_space<vmem>>, vector<4x8x8xbf16>
    "tpu.trace_start"() <{level = 10 : i32, message = "hqd,hdk->hqk"}> : () -> ()
    %cst_37 = arith.constant dense<0.000000e+00> : vector<4x8x8xf32>
    %51 = tpu.matmul %48, %49, %cst_37 {dimension_numbers = #tpu.dot_dimension_numbers<[2], [1], [1], [2], [0, 0, 0, 1, 1, 2], [0], [0]>} : vector<4x8x8xbf16>, vector<4x8x8xbf16>, vector<4x8x8xf32> -> vector<4x8x8xf32>
    "tpu.trace_stop"() : () -> ()
    %52 = vector.shape_cast %11 : vector<8x8xf32> to vector<1x8x8xf32>
    %53 = vector.broadcast %52 : vector<1x8x8xf32> to vector<4x8x8xf32>
    %54 = arith.addf %51, %53 : vector<4x8x8xf32>
    %cst_38 = arith.constant dense<0xFF800000> : vector<4x8xf32>
    %55 = vector.multi_reduction <maximumf>, %54, %cst_38 [2] : vector<4x8x8xf32> to vector<4x8xf32>
    %56 = vector.shape_cast %55 : vector<4x8xf32> to vector<4x8x1xf32>
    %57 = vector.broadcast %56 : vector<4x8x1xf32> to vector<4x8x8xf32>
    %58 = arith.subf %54, %57 : vector<4x8x8xf32>
    %59 = math.exp %58 : vector<4x8x8xf32>
    %cst_39 = arith.constant dense<0.000000e+00> : vector<4x8xf32>
    %60 = vector.multi_reduction <add>, %59, %cst_39 [2] : vector<4x8x8xf32> to vector<4x8xf32>
    %61 = vector.shape_cast %60 : vector<4x8xf32> to vector<4x8x1xf32>
    %62 = tpu.reciprocal %61 {approx = true} : vector<4x8x1xf32> -> vector<4x8x1xf32>
    %63 = vector.broadcast %62 : vector<4x8x1xf32> to vector<4x8x8xf32>
    %64 = arith.mulf %59, %63 : vector<4x8x8xf32>
    %65 = arith.truncf %64 : vector<4x8x8xf32> to vector<4x8x8xbf16>
    "tpu.trace_start"() <{level = 10 : i32, message = "hqk,hkd->hqd"}> : () -> ()
    %cst_40 = arith.constant dense<0.000000e+00> : vector<4x8x8xf32>
    %66 = tpu.matmul %65, %50, %cst_40 {dimension_numbers = #tpu.dot_dimension_numbers<[2], [1], [1], [2], [0, 0, 0, 1, 1, 2], [0], [0]>} : vector<4x8x8xbf16>, vector<4x8x8xbf16>, vector<4x8x8xf32> -> vector<4x8x8xf32>
    "tpu.trace_stop"() : () -> ()
    %67 = vector.extract_strided_slice %66 {offsets = [0, 0, 0], sizes = [1, 8, 8], strides = [1, 1, 1]} : vector<4x8x8xf32> to vector<1x8x8xf32>
    %68 = vector.shape_cast %67 : vector<1x8x8xf32> to vector<8x8xf32>
    %69 = arith.truncf %68 : vector<8x8xf32> to vector<8x8xbf16>
    %c0_41 = arith.constant 0 : index
    %c0_42 = arith.constant 0 : index
    %c0_43 = arith.constant 0 : index
    %70 = vector.load %arg10[%c0_41, %c0_42, %c0_43] : memref<4x8x32xbf16, #tpu.memory_space<vmem>>, vector<1x8x32xbf16>
    %71 = vector.shape_cast %70 : vector<1x8x32xbf16> to vector<8x32xbf16>
    %cst_44 = arith.constant dense<0.000000e+00> : vector<8x32xf32>
    %72 = tpu.matmul %69, %71, %cst_44 {dimension_numbers = #tpu.dot_dimension_numbers<[1], [0], [0], [1], [0, 0, 1, 1], [], []>} : vector<8x8xbf16>, vector<8x32xbf16>, vector<8x32xf32> -> vector<8x32xf32>
    %73 = arith.addf %14, %72 : vector<8x32xf32>
    %74 = vector.extract_strided_slice %66 {offsets = [1, 0, 0], sizes = [1, 8, 8], strides = [1, 1, 1]} : vector<4x8x8xf32> to vector<1x8x8xf32>
    %75 = vector.shape_cast %74 : vector<1x8x8xf32> to vector<8x8xf32>
    %76 = arith.truncf %75 : vector<8x8xf32> to vector<8x8xbf16>
    %c1_45 = arith.constant 1 : index
    %c0_46 = arith.constant 0 : index
    %c0_47 = arith.constant 0 : index
    %77 = vector.load %arg10[%c1_45, %c0_46, %c0_47] : memref<4x8x32xbf16, #tpu.memory_space<vmem>>, vector<1x8x32xbf16>
    %78 = vector.shape_cast %77 : vector<1x8x32xbf16> to vector<8x32xbf16>
    %cst_48 = arith.constant dense<0.000000e+00> : vector<8x32xf32>
    %79 = tpu.matmul %76, %78, %cst_48 {dimension_numbers = #tpu.dot_dimension_numbers<[1], [0], [0], [1], [0, 0, 1, 1], [], []>} : vector<8x8xbf16>, vector<8x32xbf16>, vector<8x32xf32> -> vector<8x32xf32>
    %80 = arith.addf %73, %79 : vector<8x32xf32>
    %81 = vector.extract_strided_slice %66 {offsets = [2, 0, 0], sizes = [1, 8, 8], strides = [1, 1, 1]} : vector<4x8x8xf32> to vector<1x8x8xf32>
    %82 = vector.shape_cast %81 : vector<1x8x8xf32> to vector<8x8xf32>
    %83 = arith.truncf %82 : vector<8x8xf32> to vector<8x8xbf16>
    %c2_49 = arith.constant 2 : index
    %c0_50 = arith.constant 0 : index
    %c0_51 = arith.constant 0 : index
    %84 = vector.load %arg10[%c2_49, %c0_50, %c0_51] : memref<4x8x32xbf16, #tpu.memory_space<vmem>>, vector<1x8x32xbf16>
    %85 = vector.shape_cast %84 : vector<1x8x32xbf16> to vector<8x32xbf16>
    %cst_52 = arith.constant dense<0.000000e+00> : vector<8x32xf32>
    %86 = tpu.matmul %83, %85, %cst_52 {dimension_numbers = #tpu.dot_dimension_numbers<[1], [0], [0], [1], [0, 0, 1, 1], [], []>} : vector<8x8xbf16>, vector<8x32xbf16>, vector<8x32xf32> -> vector<8x32xf32>
    %87 = arith.addf %80, %86 : vector<8x32xf32>
    %88 = vector.extract_strided_slice %66 {offsets = [3, 0, 0], sizes = [1, 8, 8], strides = [1, 1, 1]} : vector<4x8x8xf32> to vector<1x8x8xf32>
    %89 = vector.shape_cast %88 : vector<1x8x8xf32> to vector<8x8xf32>
    %90 = arith.truncf %89 : vector<8x8xf32> to vector<8x8xbf16>
    %c3_53 = arith.constant 3 : index
    %c0_54 = arith.constant 0 : index
    %c0_55 = arith.constant 0 : index
    %91 = vector.load %arg10[%c3_53, %c0_54, %c0_55] : memref<4x8x32xbf16, #tpu.memory_space<vmem>>, vector<1x8x32xbf16>
    %92 = vector.shape_cast %91 : vector<1x8x32xbf16> to vector<8x32xbf16>
    %cst_56 = arith.constant dense<0.000000e+00> : vector<8x32xf32>
    %93 = tpu.matmul %90, %92, %cst_56 {dimension_numbers = #tpu.dot_dimension_numbers<[1], [0], [0], [1], [0, 0, 1, 1], [], []>} : vector<8x8xbf16>, vector<8x32xbf16>, vector<8x32xf32> -> vector<8x32xf32>
    %94 = arith.addf %87, %93 : vector<8x32xf32>
    %95 = arith.addf %94, %7 : vector<8x32xf32>
    %c0_57 = arith.constant 0 : index
    %c0_58 = arith.constant 0 : index
    %96 = vector.load %arg12[%c0_57, %c0_58] : memref<1x32xf32, #tpu.memory_space<vmem>>, vector<1x32xf32>
    %c0_59 = arith.constant 0 : index
    %c0_60 = arith.constant 0 : index
    %97 = vector.load %arg13[%c0_59, %c0_60] : memref<1x32xf32, #tpu.memory_space<vmem>>, vector<1x32xf32>
    %cst_61 = arith.constant dense<0.000000e+00> : vector<8xf32>
    %98 = vector.multi_reduction <add>, %95, %cst_61 [1] : vector<8x32xf32> to vector<8xf32>
    %99 = vector.shape_cast %98 : vector<8xf32> to vector<8x1xf32>
    %cst_62 = arith.constant 3.200000e+01 : f32
    %100 = vector.broadcast %cst_62 : f32 to vector<8x1xf32>
    %101 = arith.divf %99, %100 : vector<8x1xf32>
    %102 = vector.broadcast %101 : vector<8x1xf32> to vector<8x32xf32>
    %103 = arith.subf %95, %102 : vector<8x32xf32>
    %104 = arith.mulf %103, %103 : vector<8x32xf32>
    %cst_63 = arith.constant dense<0.000000e+00> : vector<8xf32>
    %105 = vector.multi_reduction <add>, %104, %cst_63 [1] : vector<8x32xf32> to vector<8xf32>
    %106 = vector.shape_cast %105 : vector<8xf32> to vector<8x1xf32>
    %cst_64 = arith.constant 3.200000e+01 : f32
    %107 = vector.broadcast %cst_64 : f32 to vector<8x1xf32>
    %108 = arith.divf %106, %107 : vector<8x1xf32>
    %109 = vector.broadcast %101 : vector<8x1xf32> to vector<8x32xf32>
    %110 = arith.subf %95, %109 : vector<8x32xf32>
    %cst_65 = arith.constant 9.99999974E-6 : f32
    %111 = vector.broadcast %cst_65 : f32 to vector<8x1xf32>
    %112 = arith.addf %108, %111 : vector<8x1xf32>
    %113 = math.rsqrt %112 : vector<8x1xf32>
    %114 = vector.broadcast %113 : vector<8x1xf32> to vector<8x32xf32>
    %115 = arith.mulf %110, %114 : vector<8x32xf32>
    %116 = vector.broadcast %96 : vector<1x32xf32> to vector<8x32xf32>
    %117 = arith.mulf %115, %116 : vector<8x32xf32>
    %118 = vector.broadcast %97 : vector<1x32xf32> to vector<8x32xf32>
    %119 = arith.addf %117, %118 : vector<8x32xf32>
    %120 = arith.truncf %119 : vector<8x32xf32> to vector<8x32xbf16>
    %c0_66 = arith.constant 0 : index
    %c0_67 = arith.constant 0 : index
    %121 = vector.load %arg14[%c0_66, %c0_67] : memref<32x64xbf16, #tpu.memory_space<vmem>>, vector<32x64xbf16>
    %cst_68 = arith.constant dense<0.000000e+00> : vector<8x64xf32>
    %122 = tpu.matmul %120, %121, %cst_68 {dimension_numbers = #tpu.dot_dimension_numbers<[1], [0], [0], [1], [0, 0, 1, 1], [], []>} : vector<8x32xbf16>, vector<32x64xbf16>, vector<8x64xf32> -> vector<8x64xf32>
    %c0_69 = arith.constant 0 : index
    %c0_70 = arith.constant 0 : index
    %123 = vector.load %arg15[%c0_69, %c0_70] : memref<1x64xf32, #tpu.memory_space<vmem>>, vector<1x64xf32>
    %124 = vector.broadcast %123 : vector<1x64xf32> to vector<8x64xf32>
    %125 = arith.addf %122, %124 : vector<8x64xf32>
    %cst_71 = arith.constant 0.000000e+00 : f32
    %126 = vector.broadcast %cst_71 : f32 to vector<8x64xf32>
    %127 = arith.maximumf %125, %126 : vector<8x64xf32>
    %128 = arith.truncf %127 : vector<8x64xf32> to vector<8x64xbf16>
    %c0_72 = arith.constant 0 : index
    %c0_73 = arith.constant 0 : index
    %129 = vector.load %arg16[%c0_72, %c0_73] : memref<64x32xbf16, #tpu.memory_space<vmem>>, vector<64x32xbf16>
    %cst_74 = arith.constant dense<0.000000e+00> : vector<8x32xf32>
    %130 = tpu.matmul %128, %129, %cst_74 {dimension_numbers = #tpu.dot_dimension_numbers<[1], [0], [0], [1], [0, 0, 1, 1], [], []>} : vector<8x64xbf16>, vector<64x32xbf16>, vector<8x32xf32> -> vector<8x32xf32>
    %c0_75 = arith.constant 0 : index
    %c0_76 = arith.constant 0 : index
    %131 = vector.load %arg17[%c0_75, %c0_76] : memref<1x32xf32, #tpu.memory_space<vmem>>, vector<1x32xf32>
    %132 = vector.broadcast %131 : vector<1x32xf32> to vector<8x32xf32>
    %133 = arith.addf %130, %132 : vector<8x32xf32>
    %134 = arith.addf %133, %119 : vector<8x32xf32>
    %c0_77 = arith.constant 0 : index
    %c0_78 = arith.constant 0 : index
    %135 = vector.load %arg18[%c0_77, %c0_78] : memref<1x32xf32, #tpu.memory_space<vmem>>, vector<1x32xf32>
    %c0_79 = arith.constant 0 : index
    %c0_80 = arith.constant 0 : index
    %136 = vector.load %arg19[%c0_79, %c0_80] : memref<1x32xf32, #tpu.memory_space<vmem>>, vector<1x32xf32>
    %cst_81 = arith.constant dense<0.000000e+00> : vector<8xf32>
    %137 = vector.multi_reduction <add>, %134, %cst_81 [1] : vector<8x32xf32> to vector<8xf32>
    %138 = vector.shape_cast %137 : vector<8xf32> to vector<8x1xf32>
    %cst_82 = arith.constant 3.200000e+01 : f32
    %139 = vector.broadcast %cst_82 : f32 to vector<8x1xf32>
    %140 = arith.divf %138, %139 : vector<8x1xf32>
    %141 = vector.broadcast %140 : vector<8x1xf32> to vector<8x32xf32>
    %142 = arith.subf %134, %141 : vector<8x32xf32>
    %143 = arith.mulf %142, %142 : vector<8x32xf32>
    %cst_83 = arith.constant dense<0.000000e+00> : vector<8xf32>
    %144 = vector.multi_reduction <add>, %143, %cst_83 [1] : vector<8x32xf32> to vector<8xf32>
    %145 = vector.shape_cast %144 : vector<8xf32> to vector<8x1xf32>
    %cst_84 = arith.constant 3.200000e+01 : f32
    %146 = vector.broadcast %cst_84 : f32 to vector<8x1xf32>
    %147 = arith.divf %145, %146 : vector<8x1xf32>
    %148 = vector.broadcast %140 : vector<8x1xf32> to vector<8x32xf32>
    %149 = arith.subf %134, %148 : vector<8x32xf32>
    %cst_85 = arith.constant 9.99999974E-6 : f32
    %150 = vector.broadcast %cst_85 : f32 to vector<8x1xf32>
    %151 = arith.addf %147, %150 : vector<8x1xf32>
    %152 = math.rsqrt %151 : vector<8x1xf32>
    %153 = vector.broadcast %152 : vector<8x1xf32> to vector<8x32xf32>
    %154 = arith.mulf %149, %153 : vector<8x32xf32>
    %155 = vector.broadcast %135 : vector<1x32xf32> to vector<8x32xf32>
    %156 = arith.mulf %154, %155 : vector<8x32xf32>
    %157 = vector.broadcast %136 : vector<1x32xf32> to vector<8x32xf32>
    %158 = arith.addf %156, %157 : vector<8x32xf32>
    %c0_86 = arith.constant 0 : index
    %c0_87 = arith.constant 0 : index
    %c0_88 = arith.constant 0 : index
    %159 = vector.load %arg20[%c0_86, %c0_87, %c0_88] : memref<1x8x32xf32, #tpu.memory_space<vmem>>, vector<1x8x32xf32>
    %160 = vector.shape_cast %159 : vector<1x8x32xf32> to vector<8x32xf32>
    %161 = vector.shape_cast %158 : vector<8x32xf32> to vector<1x8x32xf32>
    tpu.vector_store %arg20[%c0_86, %c0_87, %c0_88], %161 {strides = array<i32>} : memref<1x8x32xf32, #tpu.memory_space<vmem>>, vector<1x8x32xf32>,
    return
  }
  func.func @transform_0(%arg0: i32, %arg1: i32) -> (i32, i32, i32) {
    %c0_i32 = arith.constant 0 : i32
    %c0_i32_0 = arith.constant 0 : i32
    %c0_i32_1 = arith.constant 0 : i32
    return %arg0, %c0_i32, %c0_i32_0 : i32, i32, i32
  }
  func.func @transform_1(%arg0: i32, %arg1: i32) -> (i32, i32, i32) {
    %c0_i32 = arith.constant 0 : i32
    %c0_i32_0 = arith.constant 0 : i32
    return %arg0, %arg1, %c0_i32 : i32, i32, i32
  }
  func.func @transform_2(%arg0: i32, %arg1: i32) -> (i32, i32, i32) {
    %c0_i32 = arith.constant 0 : i32
    %c0_i32_0 = arith.constant 0 : i32
    %c0_i32_1 = arith.constant 0 : i32
    %c0_i32_2 = arith.constant 0 : i32
    return %c0_i32, %c0_i32_0, %c0_i32_1 : i32, i32, i32
  }
  func.func @transform_3(%arg0: i32, %arg1: i32) -> (i32, i32, i32) {
    %c0_i32 = arith.constant 0 : i32
    %c0_i32_0 = arith.constant 0 : i32
    %c0_i32_1 = arith.constant 0 : i32
    %c0_i32_2 = arith.constant 0 : i32
    return %c0_i32, %c0_i32_0, %c0_i32_1 : i32, i32, i32
  }
  func.func @transform_4(%arg0: i32, %arg1: i32) -> (i32, i32, i32) {
    %c0_i32 = arith.constant 0 : i32
    %c0_i32_0 = arith.constant 0 : i32
    %c0_i32_1 = arith.constant 0 : i32
    %c0_i32_2 = arith.constant 0 : i32
    return %c0_i32, %c0_i32_0, %c0_i32_1 : i32, i32, i32
  }
  func.func @transform_5(%arg0: i32, %arg1: i32) -> (i32, i32, i32) {
    %c0_i32 = arith.constant 0 : i32
    %c0_i32_0 = arith.constant 0 : i32
    %c0_i32_1 = arith.constant 0 : i32
    %c0_i32_2 = arith.constant 0 : i32
    return %c0_i32, %c0_i32_0, %c0_i32_1 : i32, i32, i32
  }
  func.func @transform_6(%arg0: i32, %arg1: i32) -> (i32, i32, i32) {
    %c0_i32 = arith.constant 0 : i32
    %c0_i32_0 = arith.constant 0 : i32
    %c0_i32_1 = arith.constant 0 : i32
    %c0_i32_2 = arith.constant 0 : i32
    return %c0_i32, %c0_i32_0, %c0_i32_1 : i32, i32, i32
  }
  func.func @transform_7(%arg0: i32, %arg1: i32) -> (i32, i32, i32) {
    %c0_i32 = arith.constant 0 : i32
    %c0_i32_0 = arith.constant 0 : i32
    %c0_i32_1 = arith.constant 0 : i32
    %c0_i32_2 = arith.constant 0 : i32
    return %c0_i32, %c0_i32_0, %c0_i32_1 : i32, i32, i32
  }
  func.func @transform_8(%arg0: i32, %arg1: i32) -> (i32, i32, i32) {
    %c0_i32 = arith.constant 0 : i32
    %c0_i32_0 = arith.constant 0 : i32
    %c0_i32_1 = arith.constant 0 : i32
    %c0_i32_2 = arith.constant 0 : i32
    return %c0_i32, %c0_i32_0, %c0_i32_1 : i32, i32, i32
  }
  func.func @transform_9(%arg0: i32, %arg1: i32) -> (i32, i32) {
    %c0_i32 = arith.constant 0 : i32
    %c0_i32_0 = arith.constant 0 : i32
    %c0_i32_1 = arith.constant 0 : i32
    return %c0_i32, %c0_i32_0 : i32, i32
  }
  func.func @transform_10(%arg0: i32, %arg1: i32) -> (i32, i32) {
    %c0_i32 = arith.constant 0 : i32
    %c0_i32_0 = arith.constant 0 : i32
    %c0_i32_1 = arith.constant 0 : i32
    return %c0_i32, %c0_i32_0 : i32, i32
  }
  func.func @transform_11(%arg0: i32, %arg1: i32) -> (i32, i32) {
    %c0_i32 = arith.constant 0 : i32
    %c0_i32_0 = arith.constant 0 : i32
    %c0_i32_1 = arith.constant 0 : i32
    return %c0_i32, %c0_i32_0 : i32, i32
  }
  func.func @transform_12(%arg0: i32, %arg1: i32) -> (i32, i32) {
    %c0_i32 = arith.constant 0 : i32
    %c0_i32_0 = arith.constant 0 : i32
    %c0_i32_1 = arith.constant 0 : i32
    return %c0_i32, %c0_i32_0 : i32, i32
  }
  func.func @transform_13(%arg0: i32, %arg1: i32) -> (i32, i32) {
    %c0_i32 = arith.constant 0 : i32
    %c0_i32_0 = arith.constant 0 : i32
    %c0_i32_1 = arith.constant 0 : i32
    return %c0_i32, %c0_i32_0 : i32, i32
  }
  func.func @transform_14(%arg0: i32, %arg1: i32) -> (i32, i32) {
    %c0_i32 = arith.constant 0 : i32
    %c0_i32_0 = arith.constant 0 : i32
    %c0_i32_1 = arith.constant 0 : i32
    return %c0_i32, %c0_i32_0 : i32, i32
  }
  func.func @transform_15(%arg0: i32, %arg1: i32) -> (i32, i32) {
    %c0_i32 = arith.constant 0 : i32
    %c0_i32_0 = arith.constant 0 : i32
    %c0_i32_1 = arith.constant 0 : i32
    return %c0_i32, %c0_i32_0 : i32, i32
  }
  func.func @transform_16(%arg0: i32, %arg1: i32) -> (i32, i32) {
    %c0_i32 = arith.constant 0 : i32
    %c0_i32_0 = arith.constant 0 : i32
    %c0_i32_1 = arith.constant 0 : i32
    return %c0_i32, %c0_i32_0 : i32, i32
  }
  func.func @transform_17(%arg0: i32, %arg1: i32) -> (i32, i32) {
    %c0_i32 = arith.constant 0 : i32
    %c0_i32_0 = arith.constant 0 : i32
    %c0_i32_1 = arith.constant 0 : i32
    return %c0_i32, %c0_i32_0 : i32, i32
  }
  func.func @transform_18(%arg0: i32, %arg1: i32) -> (i32, i32, i32) {
    %c0_i32 = arith.constant 0 : i32
    %c0_i32_0 = arith.constant 0 : i32
    return %arg0, %arg1, %c0_i32 : i32, i32, i32
  }
}

module attributes {stable_mosaic.version = 11 : i64} {
  func.func @encoder_layer_kernel(%arg0: i32, %arg1: i32, %arg2: memref<1x8x32xf32, #tpu.memory_space<vmem>>, %arg3: memref<1x8x8xbf16, #tpu.memory_space<vmem>>, %arg4: memref<4x32x8xbf16, #tpu.memory_space<vmem>>, %arg5: memref<4x1x8xf32, #tpu.memory_space<vmem>>, %arg6: memref<4x32x8xbf16, #tpu.memory_space<vmem>>, %arg7: memref<4x1x8xf32, #tpu.memory_space<vmem>>, %arg8: memref<4x32x8xbf16, #tpu.memory_space<vmem>>, %arg9: memref<4x1x8xf32, #tpu.memory_space<vmem>>, %arg10: memref<4x8x32xbf16, #tpu.memory_space<vmem>>, %arg11: memref<1x32xf32, #tpu.memory_space<vmem>>, %arg12: memref<1x32xf32, #tpu.memory_space<vmem>>, %arg13: memref<1x32xf32, #tpu.memory_space<vmem>>, %arg14: memref<32x64xbf16, #tpu.memory_space<vmem>>, %arg15: memref<1x64xf32, #tpu.memory_space<vmem>>, %arg16: memref<64x32xbf16, #tpu.memory_space<vmem>>, %arg17: memref<1x32xf32, #tpu.memory_space<vmem>>, %arg18: memref<1x32xf32, #tpu.memory_space<vmem>>, %arg19: memref<1x32xf32, #tpu.memory_space<vmem>>, %arg20: memref<1x8x32xf32, #tpu.memory_space<vmem>>, %arg21: memref<4x8x8xbf16, #tpu.memory_space<vmem>>, %arg22: memref<4x8x8xbf16, #tpu.memory_space<vmem>>) attributes {dimension_semantics = [#tpu.dimension_semantics<parallel>, #tpu.dimension_semantics<arbitrary>], iteration_bounds = array<i64: 2, 1>, scalar_prefetch = 0 : i64, scratch_operands = 2 : i64, tpu.core_type = #tpu.core_type<tc>, window_params = [{transform_indices = @transform_0, window_bounds = array<i64: 1, 8, 32>}, {transform_indices = @transform_1, window_bounds = array<i64: 1, 8, 8>}, {pipeline_mode = #tpu.pipeline_mode<synchronous>, transform_indices = @transform_2, window_bounds = array<i64: 4, 32, 8>}, {pipeline_mode = #tpu.pipeline_mode<synchronous>, transform_indices = @transform_3, window_bounds = array<i64: 4, 1, 8>}, {pipeline_mode = #tpu.pipeline_mode<synchronous>, transform_indices = @transform_4, window_bounds = array<i64: 4, 32, 8>}, {pipeline_mode = #tpu.pipeline_mode<synchronous>, transform_indices = @transform_5, window_bounds = array<i64: 4, 1, 8>}, {pipeline_mode = #tpu.pipeline_mode<synchronous>, transform_indices = @transform_6, window_bounds = array<i64: 4, 32, 8>}, {pipeline_mode = #tpu.pipeline_mode<synchronous>, transform_indices = @transform_7, window_bounds = array<i64: 4, 1, 8>}, {pipeline_mode = #tpu.pipeline_mode<synchronous>, transform_indices = @transform_8, window_bounds = array<i64: 4, 8, 32>}, {pipeline_mode = #tpu.pipeline_mode<synchronous>, transform_indices = @transform_9, window_bounds = array<i64: 1, 32>}, {pipeline_mode = #tpu.pipeline_mode<synchronous>, transform_indices = @transform_10, window_bounds = array<i64: 1, 32>}, {pipeline_mode = #tpu.pipeline_mode<synchronous>, transform_indices = @transform_11, window_bounds = array<i64: 1, 32>}, {pipeline_mode = #tpu.pipeline_mode<synchronous>, transform_indices = @transform_12, window_bounds = array<i64: 32, 64>}, {pipeline_mode = #tpu.pipeline_mode<synchronous>, transform_indices = @transform_13, window_bounds = array<i64: 1, 64>}, {pipeline_mode = #tpu.pipeline_mode<synchronous>, transform_indices = @transform_14, window_bounds = array<i64: 64, 32>}, {pipeline_mode = #tpu.pipeline_mode<synchronous>, transform_indices = @transform_15, window_bounds = array<i64: 1, 32>}, {pipeline_mode = #tpu.pipeline_mode<synchronous>, transform_indices = @transform_16, window_bounds = array<i64: 1, 32>}, {pipeline_mode = #tpu.pipeline_mode<synchronous>, transform_indices = @transform_17, window_bounds = array<i64: 1, 32>}, {transform_indices = @transform_18, window_bounds = array<i64: 1, 8, 32>}]} {
    %c0_i32 = arith.constant 0 : i32
    %0 = arith.cmpi eq, %arg1, %c0_i32 : i32
    %1 = arith.extui %0 : i1 to i32
    %c0_i32_0 = arith.constant 0 : i32
    %2 = arith.cmpi ne, %1, %c0_i32_0 : i32
    scf.if %2 {
      %c0_89 = arith.constant 0 : index
      %c0_90 = arith.constant 0 : index
      %c0_91 = arith.constant 0 : index
      %162 = vector.load %arg2[%c0_89, %c0_90, %c0_91] : memref<1x8x32xf32, #tpu.memory_space<vmem>>, vector<1x8x32xf32>
      %163 = vector.shape_cast %162 : vector<1x8x32xf32> to vector<8x32xf32>
      %164 = arith.truncf %163 : vector<8x32xf32> to vector<8x32xbf16>
      %c0_92 = arith.constant 0 : index
      %c0_93 = arith.constant 0 : index
      %c0_94 = arith.constant 0 : index
      %165 = vector.load %arg6[%c0_92, %c0_93, %c0_94] : memref<4x32x8xbf16, #tpu.memory_space<vmem>>, vector<1x32x8xbf16>
      %166 = vector.shape_cast %165 : vector<1x32x8xbf16> to vector<32x8xbf16>
      %cst_95 = arith.constant dense<0.000000e+00> : vector<8x8xf32>
      %167 = tpu.matmul %164, %166, %cst_95 {dimension_numbers = #tpu.dot_dimension_numbers<[1], [0], [0], [1], [0, 0, 1, 1], [], []>} : vector<8x32xbf16>, vector<32x8xbf16>, vector<8x8xf32> -> vector<8x8xf32>
      %c0_96 = arith.constant 0 : index
      %c0_97 = arith.constant 0 : index
      %c0_98 = arith.constant 0 : index
      %168 = vector.load %arg7[%c0_96, %c0_97, %c0_98] : memref<4x1x8xf32, #tpu.memory_space<vmem>>, vector<1x1x8xf32>
      %169 = vector.shape_cast %168 : vector<1x1x8xf32> to vector<1x8xf32>
      %170 = vector.broadcast %169 : vector<1x8xf32> to vector<8x8xf32>
      %171 = arith.addf %167, %170 : vector<8x8xf32>
      %c0_99 = arith.constant 0 : index
      %c0_100 = arith.constant 0 : index
      %c0_101 = arith.constant 0 : index
      %172 = vector.load %arg8[%c0_99, %c0_100, %c0_101] : memref<4x32x8xbf16, #tpu.memory_space<vmem>>, vector<1x32x8xbf16>
      %173 = vector.shape_cast %172 : vector<1x32x8xbf16> to vector<32x8xbf16>
      %cst_102 = arith.constant dense<0.000000e+00> : vector<8x8xf32>
      %174 = tpu.matmul %164, %173, %cst_102 {dimension_numbers = #tpu.dot_dimension_numbers<[1], [0], [0], [1], [0, 0, 1, 1], [], []>} : vector<8x32xbf16>, vector<32x8xbf16>, vector<8x8xf32> -> vector<8x8xf32>
      %c0_103 = arith.constant 0 : index
      %c0_104 = arith.constant 0 : index
      %c0_105 = arith.constant 0 : index
      %175 = vector.load %arg9[%c0_103, %c0_104, %c0_105] : memref<4x1x8xf32, #tpu.memory_space<vmem>>, vector<1x1x8xf32>
      %176 = vector.shape_cast %175 : vector<1x1x8xf32> to vector<1x8xf32>
      %177 = vector.broadcast %176 : vector<1x8xf32> to vector<8x8xf32>
      %178 = arith.addf %174, %177 : vector<8x8xf32>
      %179 = tpu.transpose %171, [1, 0] : vector<8x8xf32> -> vector<8x8xf32>
      %180 = arith.truncf %179 : vector<8x8xf32> to vector<8x8xbf16>
      %c0_106 = arith.constant 0 : index
      %c0_107 = arith.constant 0 : index
      %c0_108 = arith.constant 0 : index
      %181 = vector.load %arg21[%c0_106, %c0_107, %c0_108] : memref<4x8x8xbf16, #tpu.memory_space<vmem>>, vector<1x8x8xbf16>
      %182 = vector.shape_cast %181 : vector<1x8x8xbf16> to vector<8x8xbf16>
      %183 = vector.shape_cast %180 : vector<8x8xbf16> to vector<1x8x8xbf16>
      tpu.vector_store %arg21[%c0_106, %c0_107, %c0_108], %183 {strides = array<i32>} : memref<4x8x8xbf16, #tpu.memory_space<vmem>>, vector<1x8x8xbf16>,
      %184 = arith.truncf %178 : vector<8x8xf32> to vector<8x8xbf16>
      %c0_109 = arith.constant 0 : index
      %c0_110 = arith.constant 0 : index
      %c0_111 = arith.constant 0 : index
      %185 = vector.load %arg22[%c0_109, %c0_110, %c0_111] : memref<4x8x8xbf16, #tpu.memory_space<vmem>>, vector<1x8x8xbf16>
      %186 = vector.shape_cast %185 : vector<1x8x8xbf16> to vector<8x8xbf16>
      %187 = vector.shape_cast %184 : vector<8x8xbf16> to vector<1x8x8xbf16>
      tpu.vector_store %arg22[%c0_109, %c0_110, %c0_111], %187 {strides = array<i32>} : memref<4x8x8xbf16, #tpu.memory_space<vmem>>, vector<1x8x8xbf16>,
      %c1_112 = arith.constant 1 : index
      %c0_113 = arith.constant 0 : index
      %c0_114 = arith.constant 0 : index
      %188 = vector.load %arg6[%c1_112, %c0_113, %c0_114] : memref<4x32x8xbf16, #tpu.memory_space<vmem>>, vector<1x32x8xbf16>
      %189 = vector.shape_cast %188 : vector<1x32x8xbf16> to vector<32x8xbf16>
      %cst_115 = arith.constant dense<0.000000e+00> : vector<8x8xf32>
      %190 = tpu.matmul %164, %189, %cst_115 {dimension_numbers = #tpu.dot_dimension_numbers<[1], [0], [0], [1], [0, 0, 1, 1], [], []>} : vector<8x32xbf16>, vector<32x8xbf16>, vector<8x8xf32> -> vector<8x8xf32>
      %c1_116 = arith.constant 1 : index
      %c0_117 = arith.constant 0 : index
      %c0_118 = arith.constant 0 : index
      %191 = vector.load %arg7[%c1_116, %c0_117, %c0_118] : memref<4x1x8xf32, #tpu.memory_space<vmem>>, vector<1x1x8xf32>
      %192 = vector.shape_cast %191 : vector<1x1x8xf32> to vector<1x8xf32>
      %193 = vector.broadcast %192 : vector<1x8xf32> to vector<8x8xf32>
      %194 = arith.addf %190, %193 : vector<8x8xf32>
      %c1_119 = arith.constant 1 : index
      %c0_120 = arith.constant 0 : index
      %c0_121 = arith.constant 0 : index
      %195 = vector.load %arg8[%c1_119, %c0_120, %c0_121] : memref<4x32x8xbf16, #tpu.memory_space<vmem>>, vector<1x32x8xbf16>
      %196 = vector.shape_cast %195 : vector<1x32x8xbf16> to vector<32x8xbf16>
      %cst_122 = arith.constant dense<0.000000e+00> : vector<8x8xf32>
      %197 = tpu.matmul %164, %196, %cst_122 {dimension_numbers = #tpu.dot_dimension_numbers<[1], [0], [0], [1], [0, 0, 1, 1], [], []>} : vector<8x32xbf16>, vector<32x8xbf16>, vector<8x8xf32> -> vector<8x8xf32>
      %c1_123 = arith.constant 1 : index
      %c0_124 = arith.constant 0 : index
      %c0_125 = arith.constant 0 : index
      %198 = vector.load %arg9[%c1_123, %c0_124, %c0_125] : memref<4x1x8xf32, #tpu.memory_space<vmem>>, vector<1x1x8xf32>
      %199 = vector.shape_cast %198 : vector<1x1x8xf32> to vector<1x8xf32>
      %200 = vector.broadcast %199 : vector<1x8xf32> to vector<8x8xf32>
      %201 = arith.addf %197, %200 : vector<8x8xf32>
      %202 = tpu.transpose %194, [1, 0] : vector<8x8xf32> -> vector<8x8xf32>
      %203 = arith.truncf %202 : vector<8x8xf32> to vector<8x8xbf16>
      %c1_126 = arith.constant 1 : index
      %c0_127 = arith.constant 0 : index
      %c0_128 = arith.constant 0 : index
      %204 = vector.load %arg21[%c1_126, %c0_127, %c0_128] : memref<4x8x8xbf16, #tpu.memory_space<vmem>>, vector<1x8x8xbf16>
      %205 = vector.shape_cast %204 : vector<1x8x8xbf16> to vector<8x8xbf16>
      %206 = vector.shape_cast %203 : vector<8x8xbf16> to vector<1x8x8xbf16>
      tpu.vector_store %arg21[%c1_126, %c0_127, %c0_128], %206 {strides = array<i32>} : memref<4x8x8xbf16, #tpu.memory_space<vmem>>, vector<1x8x8xbf16>,
      %207 = arith.truncf %201 : vector<8x8xf32> to vector<8x8xbf16>
      %c1_129 = arith.constant 1 : index
      %c0_130 = arith.constant 0 : index
      %c0_131 = arith.constant 0 : index
      %208 = vector.load %arg22[%c1_129, %c0_130, %c0_131] : memref<4x8x8xbf16, #tpu.memory_space<vmem>>, vector<1x8x8xbf16>
      %209 = vector.shape_cast %208 : vector<1x8x8xbf16> to vector<8x8xbf16>
      %210 = vector.shape_cast %207 : vector<8x8xbf16> to vector<1x8x8xbf16>
      tpu.vector_store %arg22[%c1_129, %c0_130, %c0_131], %210 {strides = array<i32>} : memref<4x8x8xbf16, #tpu.memory_space<vmem>>, vector<1x8x8xbf16>,
      %c2_132 = arith.constant 2 : index
      %c0_133 = arith.constant 0 : index
      %c0_134 = arith.constant 0 : index
      %211 = vector.load %arg6[%c2_132, %c0_133, %c0_134] : memref<4x32x8xbf16, #tpu.memory_space<vmem>>, vector<1x32x8xbf16>
      %212 = vector.shape_cast %211 : vector<1x32x8xbf16> to vector<32x8xbf16>
      %cst_135 = arith.constant dense<0.000000e+00> : vector<8x8xf32>
      %213 = tpu.matmul %164, %212, %cst_135 {dimension_numbers = #tpu.dot_dimension_numbers<[1], [0], [0], [1], [0, 0, 1, 1], [], []>} : vector<8x32xbf16>, vector<32x8xbf16>, vector<8x8xf32> -> vector<8x8xf32>
      %c2_136 = arith.constant 2 : index
      %c0_137 = arith.constant 0 : index
      %c0_138 = arith.constant 0 : index
      %214 = vector.load %arg7[%c2_136, %c0_137, %c0_138] : memref<4x1x8xf32, #tpu.memory_space<vmem>>, vector<1x1x8xf32>
      %215 = vector.shape_cast %214 : vector<1x1x8xf32> to vector<1x8xf32>
      %216 = vector.broadcast %215 : vector<1x8xf32> to vector<8x8xf32>
      %217 = arith.addf %213, %216 : vector<8x8xf32>
      %c2_139 = arith.constant 2 : index
      %c0_140 = arith.constant 0 : index
      %c0_141 = arith.constant 0 : index
      %218 = vector.load %arg8[%c2_139, %c0_140, %c0_141] : memref<4x32x8xbf16, #tpu.memory_space<vmem>>, vector<1x32x8xbf16>
      %219 = vector.shape_cast %218 : vector<1x32x8xbf16> to vector<32x8xbf16>
      %cst_142 = arith.constant dense<0.000000e+00> : vector<8x8xf32>
      %220 = tpu.matmul %164, %219, %cst_142 {dimension_numbers = #tpu.dot_dimension_numbers<[1], [0], [0], [1], [0, 0, 1, 1], [], []>} : vector<8x32xbf16>, vector<32x8xbf16>, vector<8x8xf32> -> vector<8x8xf32>
      %c2_143 = arith.constant 2 : index
      %c0_144 = arith.constant 0 : index
      %c0_145 = arith.constant 0 : index
      %221 = vector.load %arg9[%c2_143, %c0_144, %c0_145] : memref<4x1x8xf32, #tpu.memory_space<vmem>>, vector<1x1x8xf32>
      %222 = vector.shape_cast %221 : vector<1x1x8xf32> to vector<1x8xf32>
      %223 = vector.broadcast %222 : vector<1x8xf32> to vector<8x8xf32>
      %224 = arith.addf %220, %223 : vector<8x8xf32>
      %225 = tpu.transpose %217, [1, 0] : vector<8x8xf32> -> vector<8x8xf32>
      %226 = arith.truncf %225 : vector<8x8xf32> to vector<8x8xbf16>
      %c2_146 = arith.constant 2 : index
      %c0_147 = arith.constant 0 : index
      %c0_148 = arith.constant 0 : index
      %227 = vector.load %arg21[%c2_146, %c0_147, %c0_148] : memref<4x8x8xbf16, #tpu.memory_space<vmem>>, vector<1x8x8xbf16>
      %228 = vector.shape_cast %227 : vector<1x8x8xbf16> to vector<8x8xbf16>
      %229 = vector.shape_cast %226 : vector<8x8xbf16> to vector<1x8x8xbf16>
      tpu.vector_store %arg21[%c2_146, %c0_147, %c0_148], %229 {strides = array<i32>} : memref<4x8x8xbf16, #tpu.memory_space<vmem>>, vector<1x8x8xbf16>,
      %230 = arith.truncf %224 : vector<8x8xf32> to vector<8x8xbf16>
      %c2_149 = arith.constant 2 : index
      %c0_150 = arith.constant 0 : index
      %c0_151 = arith.constant 0 : index
      %231 = vector.load %arg22[%c2_149, %c0_150, %c0_151] : memref<4x8x8xbf16, #tpu.memory_space<vmem>>, vector<1x8x8xbf16>
      %232 = vector.shape_cast %231 : vector<1x8x8xbf16> to vector<8x8xbf16>
      %233 = vector.shape_cast %230 : vector<8x8xbf16> to vector<1x8x8xbf16>
      tpu.vector_store %arg22[%c2_149, %c0_150, %c0_151], %233 {strides = array<i32>} : memref<4x8x8xbf16, #tpu.memory_space<vmem>>, vector<1x8x8xbf16>,
      %c3_152 = arith.constant 3 : index
      %c0_153 = arith.constant 0 : index
      %c0_154 = arith.constant 0 : index
      %234 = vector.load %arg6[%c3_152, %c0_153, %c0_154] : memref<4x32x8xbf16, #tpu.memory_space<vmem>>, vector<1x32x8xbf16>
      %235 = vector.shape_cast %234 : vector<1x32x8xbf16> to vector<32x8xbf16>
      %cst_155 = arith.constant dense<0.000000e+00> : vector<8x8xf32>
      %236 = tpu.matmul %164, %235, %cst_155 {dimension_numbers = #tpu.dot_dimension_numbers<[1], [0], [0], [1], [0, 0, 1, 1], [], []>} : vector<8x32xbf16>, vector<32x8xbf16>, vector<8x8xf32> -> vector<8x8xf32>
      %c3_156 = arith.constant 3 : index
      %c0_157 = arith.constant 0 : index
      %c0_158 = arith.constant 0 : index
      %237 = vector.load %arg7[%c3_156, %c0_157, %c0_158] : memref<4x1x8xf32, #tpu.memory_space<vmem>>, vector<1x1x8xf32>
      %238 = vector.shape_cast %237 : vector<1x1x8xf32> to vector<1x8xf32>
      %239 = vector.broadcast %238 : vector<1x8xf32> to vector<8x8xf32>
      %240 = arith.addf %236, %239 : vector<8x8xf32>
      %c3_159 = arith.constant 3 : index
      %c0_160 = arith.constant 0 : index
      %c0_161 = arith.constant 0 : index
      %241 = vector.load %arg8[%c3_159, %c0_160, %c0_161] : memref<4x32x8xbf16, #tpu.memory_space<vmem>>, vector<1x32x8xbf16>
      %242 = vector.shape_cast %241 : vector<1x32x8xbf16> to vector<32x8xbf16>
      %cst_162 = arith.constant dense<0.000000e+00> : vector<8x8xf32>
      %243 = tpu.matmul %164, %242, %cst_162 {dimension_numbers = #tpu.dot_dimension_numbers<[1], [0], [0], [1], [0, 0, 1, 1], [], []>} : vector<8x32xbf16>, vector<32x8xbf16>, vector<8x8xf32> -> vector<8x8xf32>
      %c3_163 = arith.constant 3 : index
      %c0_164 = arith.constant 0 : index
      %c0_165 = arith.constant 0 : index
      %244 = vector.load %arg9[%c3_163, %c0_164, %c0_165] : memref<4x1x8xf32, #tpu.memory_space<vmem>>, vector<1x1x8xf32>
      %245 = vector.shape_cast %244 : vector<1x1x8xf32> to vector<1x8xf32>
      %246 = vector.broadcast %245 : vector<1x8xf32> to vector<8x8xf32>
      %247 = arith.addf %243, %246 : vector<8x8xf32>
      %248 = tpu.transpose %240, [1, 0] : vector<8x8xf32> -> vector<8x8xf32>
      %249 = arith.truncf %248 : vector<8x8xf32> to vector<8x8xbf16>
      %c3_166 = arith.constant 3 : index
      %c0_167 = arith.constant 0 : index
      %c0_168 = arith.constant 0 : index
      %250 = vector.load %arg21[%c3_166, %c0_167, %c0_168] : memref<4x8x8xbf16, #tpu.memory_space<vmem>>, vector<1x8x8xbf16>
      %251 = vector.shape_cast %250 : vector<1x8x8xbf16> to vector<8x8xbf16>
      %252 = vector.shape_cast %249 : vector<8x8xbf16> to vector<1x8x8xbf16>
      tpu.vector_store %arg21[%c3_166, %c0_167, %c0_168], %252 {strides = array<i32>} : memref<4x8x8xbf16, #tpu.memory_space<vmem>>, vector<1x8x8xbf16>,
      %253 = arith.truncf %247 : vector<8x8xf32> to vector<8x8xbf16>
      %c3_169 = arith.constant 3 : index
      %c0_170 = arith.constant 0 : index
      %c0_171 = arith.constant 0 : index
      %254 = vector.load %arg22[%c3_169, %c0_170, %c0_171] : memref<4x8x8xbf16, #tpu.memory_space<vmem>>, vector<1x8x8xbf16>
      %255 = vector.shape_cast %254 : vector<1x8x8xbf16> to vector<8x8xbf16>
      %256 = vector.shape_cast %253 : vector<8x8xbf16> to vector<1x8x8xbf16>
      tpu.vector_store %arg22[%c3_169, %c0_170, %c0_171], %256 {strides = array<i32>} : memref<4x8x8xbf16, #tpu.memory_space<vmem>>, vector<1x8x8xbf16>,
    } else {
    }
    %c8_i32 = arith.constant 8 : i32
    %3 = arith.muli %arg1, %c8_i32 : i32
    %4 = tpu.assume_multiple %3, 8 : i32
    %c0 = arith.constant 0 : index
    %5 = arith.index_cast %4 : i32 to index
    %c0_1 = arith.constant 0 : index
    %6 = vector.load %arg2[%c0, %5, %c0_1] : memref<1x8x32xf32, #tpu.memory_space<vmem>>, vector<1x8x32xf32>
    %7 = vector.shape_cast %6 : vector<1x8x32xf32> to vector<8x32xf32>
    %8 = arith.truncf %7 : vector<8x32xf32> to vector<8x32xbf16>
    %c0_2 = arith.constant 0 : index
    %c0_3 = arith.constant 0 : index
    %c0_4 = arith.constant 0 : index
    %9 = vector.load %arg3[%c0_2, %c0_3, %c0_4] : memref<1x8x8xbf16, #tpu.memory_space<vmem>>, vector<1x8x8xbf16>
    %10 = vector.shape_cast %9 : vector<1x8x8xbf16> to vector<8x8xbf16>
    %11 = arith.extf %10 : vector<8x8xbf16> to vector<8x8xf32>
    %c0_5 = arith.constant 0 : index
    %c0_6 = arith.constant 0 : index
    %12 = vector.load %arg11[%c0_5, %c0_6] : memref<1x32xf32, #tpu.memory_space<vmem>>, vector<1x32xf32>
    %13 = vector.shape_cast %12 : vector<1x32xf32> to vector<1x32xf32>
    %14 = vector.broadcast %13 : vector<1x32xf32> to vector<8x32xf32>
    %c0_7 = arith.constant 0 : index
    %c0_8 = arith.constant 0 : index
    %c0_9 = arith.constant 0 : index
    %15 = vector.load %arg4[%c0_7, %c0_8, %c0_9] : memref<4x32x8xbf16, #tpu.memory_space<vmem>>, vector<1x32x8xbf16>
    %16 = vector.shape_cast %15 : vector<1x32x8xbf16> to vector<32x8xbf16>
    %cst = arith.constant dense<0.000000e+00> : vector<8x8xf32>
    %17 = tpu.matmul %8, %16, %cst {dimension_numbers = #tpu.dot_dimension_numbers<[1], [0], [0], [1], [0, 0, 1, 1], [], []>} : vector<8x32xbf16>, vector<32x8xbf16>, vector<8x8xf32> -> vector<8x8xf32>
    %c0_10 = arith.constant 0 : index
    %c0_11 = arith.constant 0 : index
    %c0_12 = arith.constant 0 : index
    %18 = vector.load %arg5[%c0_10, %c0_11, %c0_12] : memref<4x1x8xf32, #tpu.memory_space<vmem>>, vector<1x1x8xf32>
    %19 = vector.shape_cast %18 : vector<1x1x8xf32> to vector<1x8xf32>
    %20 = vector.broadcast %19 : vector<1x8xf32> to vector<8x8xf32>
    %21 = arith.addf %17, %20 : vector<8x8xf32>
    %c1 = arith.constant 1 : index
    %c0_13 = arith.constant 0 : index
    %c0_14 = arith.constant 0 : index
    %22 = vector.load %arg4[%c1, %c0_13, %c0_14] : memref<4x32x8xbf16, #tpu.memory_space<vmem>>, vector<1x32x8xbf16>
    %23 = vector.shape_cast %22 : vector<1x32x8xbf16> to vector<32x8xbf16>
    %cst_15 = arith.constant dense<0.000000e+00> : vector<8x8xf32>
    %24 = tpu.matmul %8, %23, %cst_15 {dimension_numbers = #tpu.dot_dimension_numbers<[1], [0], [0], [1], [0, 0, 1, 1], [], []>} : vector<8x32xbf16>, vector<32x8xbf16>, vector<8x8xf32> -> vector<8x8xf32>
    %c1_16 = arith.constant 1 : index
    %c0_17 = arith.constant 0 : index
    %c0_18 = arith.constant 0 : index
    %25 = vector.load %arg5[%c1_16, %c0_17, %c0_18] : memref<4x1x8xf32, #tpu.memory_space<vmem>>, vector<1x1x8xf32>
    %26 = vector.shape_cast %25 : vector<1x1x8xf32> to vector<1x8xf32>
    %27 = vector.broadcast %26 : vector<1x8xf32> to vector<8x8xf32>
    %28 = arith.addf %24, %27 : vector<8x8xf32>
    %c2 = arith.constant 2 : index
    %c0_19 = arith.constant 0 : index
    %c0_20 = arith.constant 0 : index
    %29 = vector.load %arg4[%c2, %c0_19, %c0_20] : memref<4x32x8xbf16, #tpu.memory_space<vmem>>, vector<1x32x8xbf16>
    %30 = vector.shape_cast %29 : vector<1x32x8xbf16> to vector<32x8xbf16>
    %cst_21 = arith.constant dense<0.000000e+00> : vector<8x8xf32>
    %31 = tpu.matmul %8, %30, %cst_21 {dimension_numbers = #tpu.dot_dimension_numbers<[1], [0], [0], [1], [0, 0, 1, 1], [], []>} : vector<8x32xbf16>, vector<32x8xbf16>, vector<8x8xf32> -> vector<8x8xf32>
    %c2_22 = arith.constant 2 : index
    %c0_23 = arith.constant 0 : index
    %c0_24 = arith.constant 0 : index
    %32 = vector.load %arg5[%c2_22, %c0_23, %c0_24] : memref<4x1x8xf32, #tpu.memory_space<vmem>>, vector<1x1x8xf32>
    %33 = vector.shape_cast %32 : vector<1x1x8xf32> to vector<1x8xf32>
    %34 = vector.broadcast %33 : vector<1x8xf32> to vector<8x8xf32>
    %35 = arith.addf %31, %34 : vector<8x8xf32>
    %c3 = arith.constant 3 : index
    %c0_25 = arith.constant 0 : index
    %c0_26 = arith.constant 0 : index
    %36 = vector.load %arg4[%c3, %c0_25, %c0_26] : memref<4x32x8xbf16, #tpu.memory_space<vmem>>, vector<1x32x8xbf16>
    %37 = vector.shape_cast %36 : vector<1x32x8xbf16> to vector<32x8xbf16>
    %cst_27 = arith.constant dense<0.000000e+00> : vector<8x8xf32>
    %38 = tpu.matmul %8, %37, %cst_27 {dimension_numbers = #tpu.dot_dimension_numbers<[1], [0], [0], [1], [0, 0, 1, 1], [], []>} : vector<8x32xbf16>, vector<32x8xbf16>, vector<8x8xf32> -> vector<8x8xf32>
    %c3_28 = arith.constant 3 : index
    %c0_29 = arith.constant 0 : index
    %c0_30 = arith.constant 0 : index
    %39 = vector.load %arg5[%c3_28, %c0_29, %c0_30] : memref<4x1x8xf32, #tpu.memory_space<vmem>>, vector<1x1x8xf32>
    %40 = vector.shape_cast %39 : vector<1x1x8xf32> to vector<1x8xf32>
    %41 = vector.broadcast %40 : vector<1x8xf32> to vector<8x8xf32>
    %42 = arith.addf %38, %41 : vector<8x8xf32>
    %43 = vector.shape_cast %21 : vector<8x8xf32> to vector<1x8x8xf32>
    %44 = vector.shape_cast %28 : vector<8x8xf32> to vector<1x8x8xf32>
    %45 = vector.shape_cast %35 : vector<8x8xf32> to vector<1x8x8xf32>
    %46 = vector.shape_cast %42 : vector<8x8xf32> to vector<1x8x8xf32>
    %47 = tpu.concatenate %43, %44, %45, %46 in 0 : vector<1x8x8xf32>, vector<1x8x8xf32>, vector<1x8x8xf32>, vector<1x8x8xf32> -> vector<4x8x8xf32>
    %48 = arith.truncf %47 : vector<4x8x8xf32> to vector<4x8x8xbf16>
    %c0_31 = arith.constant 0 : index
    %c0_32 = arith.constant 0 : index
    %c0_33 = arith.constant 0 : index
    %49 = vector.load %arg21[%c0_31, %c0_32, %c0_33] : memref<4x8x8xbf16, #tpu.memory_space<vmem>>, vector<4x8x8xbf16>
    %c0_34 = arith.constant 0 : index
    %c0_35 = arith.constant 0 : index
    %c0_36 = arith.constant 0 : index
    %50 = vector.load %arg22[%c0_34, %c0_35, %c0_36] : memref<4x8x8xbf16, #tpu.memory_space<vmem>>, vector<4x8x8xbf16>
    "tpu.trace_start"() <{level = 10 : i32, message = "hqd,hdk->hqk"}> : () -> ()
    %cst_37 = arith.constant dense<0.000000e+00> : vector<4x8x8xf32>
    %51 = tpu.matmul %48, %49, %cst_37 {dimension_numbers = #tpu.dot_dimension_numbers<[2], [1], [1], [2], [0, 0, 0, 1, 1, 2], [0], [0]>} : vector<4x8x8xbf16>, vector<4x8x8xbf16>, vector<4x8x8xf32> -> vector<4x8x8xf32>
    "tpu.trace_stop"() : () -> ()
    %52 = vector.shape_cast %11 : vector<8x8xf32> to vector<1x8x8xf32>
    %53 = vector.broadcast %52 : vector<1x8x8xf32> to vector<4x8x8xf32>
    %54 = arith.addf %51, %53 : vector<4x8x8xf32>
    %cst_38 = arith.constant dense<0xFF800000> : vector<4x8xf32>
    %55 = vector.multi_reduction <maximumf>, %54, %cst_38 [2] : vector<4x8x8xf32> to vector<4x8xf32>
    %56 = vector.shape_cast %55 : vector<4x8xf32> to vector<4x8x1xf32>
    %57 = vector.broadcast %56 : vector<4x8x1xf32> to vector<4x8x8xf32>
    %58 = arith.subf %54, %57 : vector<4x8x8xf32>
    %59 = math.exp %58 : vector<4x8x8xf32>
    %cst_39 = arith.constant dense<0.000000e+00> : vector<4x8xf32>
    %60 = vector.multi_reduction <add>, %59, %cst_39 [2] : vector<4x8x8xf32> to vector<4x8xf32>
    %61 = vector.shape_cast %60 : vector<4x8xf32> to vector<4x8x1xf32>
    %62 = tpu.reciprocal %61 {approx = true} : vector<4x8x1xf32> -> vector<4x8x1xf32>
    %63 = vector.broadcast %62 : vector<4x8x1xf32> to vector<4x8x8xf32>
    %64 = arith.mulf %59, %63 : vector<4x8x8xf32>
    %65 = arith.truncf %64 : vector<4x8x8xf32> to vector<4x8x8xbf16>
    "tpu.trace_start"() <{level = 10 : i32, message = "hqk,hkd->hqd"}> : () -> ()
    %cst_40 = arith.constant dense<0.000000e+00> : vector<4x8x8xf32>
    %66 = tpu.matmul %65, %50, %cst_40 {dimension_numbers = #tpu.dot_dimension_numbers<[2], [1], [1], [2], [0, 0, 0, 1, 1, 2], [0], [0]>} : vector<4x8x8xbf16>, vector<4x8x8xbf16>, vector<4x8x8xf32> -> vector<4x8x8xf32>
    "tpu.trace_stop"() : () -> ()
    %67 = vector.extract_strided_slice %66 {offsets = [0, 0, 0], sizes = [1, 8, 8], strides = [1, 1, 1]} : vector<4x8x8xf32> to vector<1x8x8xf32>
    %68 = vector.shape_cast %67 : vector<1x8x8xf32> to vector<8x8xf32>
    %69 = arith.truncf %68 : vector<8x8xf32> to vector<8x8xbf16>
    %c0_41 = arith.constant 0 : index
    %c0_42 = arith.constant 0 : index
    %c0_43 = arith.constant 0 : index
    %70 = vector.load %arg10[%c0_41, %c0_42, %c0_43] : memref<4x8x32xbf16, #tpu.memory_space<vmem>>, vector<1x8x32xbf16>
    %71 = vector.shape_cast %70 : vector<1x8x32xbf16> to vector<8x32xbf16>
    %cst_44 = arith.constant dense<0.000000e+00> : vector<8x32xf32>
    %72 = tpu.matmul %69, %71, %cst_44 {dimension_numbers = #tpu.dot_dimension_numbers<[1], [0], [0], [1], [0, 0, 1, 1], [], []>} : vector<8x8xbf16>, vector<8x32xbf16>, vector<8x32xf32> -> vector<8x32xf32>
    %73 = arith.addf %14, %72 : vector<8x32xf32>
    %74 = vector.extract_strided_slice %66 {offsets = [1, 0, 0], sizes = [1, 8, 8], strides = [1, 1, 1]} : vector<4x8x8xf32> to vector<1x8x8xf32>
    %75 = vector.shape_cast %74 : vector<1x8x8xf32> to vector<8x8xf32>
    %76 = arith.truncf %75 : vector<8x8xf32> to vector<8x8xbf16>
    %c1_45 = arith.constant 1 : index
    %c0_46 = arith.constant 0 : index
    %c0_47 = arith.constant 0 : index
    %77 = vector.load %arg10[%c1_45, %c0_46, %c0_47] : memref<4x8x32xbf16, #tpu.memory_space<vmem>>, vector<1x8x32xbf16>
    %78 = vector.shape_cast %77 : vector<1x8x32xbf16> to vector<8x32xbf16>
    %cst_48 = arith.constant dense<0.000000e+00> : vector<8x32xf32>
    %79 = tpu.matmul %76, %78, %cst_48 {dimension_numbers = #tpu.dot_dimension_numbers<[1], [0], [0], [1], [0, 0, 1, 1], [], []>} : vector<8x8xbf16>, vector<8x32xbf16>, vector<8x32xf32> -> vector<8x32xf32>
    %80 = arith.addf %73, %79 : vector<8x32xf32>
    %81 = vector.extract_strided_slice %66 {offsets = [2, 0, 0], sizes = [1, 8, 8], strides = [1, 1, 1]} : vector<4x8x8xf32> to vector<1x8x8xf32>
    %82 = vector.shape_cast %81 : vector<1x8x8xf32> to vector<8x8xf32>
    %83 = arith.truncf %82 : vector<8x8xf32> to vector<8x8xbf16>
    %c2_49 = arith.constant 2 : index
    %c0_50 = arith.constant 0 : index
    %c0_51 = arith.constant 0 : index
    %84 = vector.load %arg10[%c2_49, %c0_50, %c0_51] : memref<4x8x32xbf16, #tpu.memory_space<vmem>>, vector<1x8x32xbf16>
    %85 = vector.shape_cast %84 : vector<1x8x32xbf16> to vector<8x32xbf16>
    %cst_52 = arith.constant dense<0.000000e+00> : vector<8x32xf32>
    %86 = tpu.matmul %83, %85, %cst_52 {dimension_numbers = #tpu.dot_dimension_numbers<[1], [0], [0], [1], [0, 0, 1, 1], [], []>} : vector<8x8xbf16>, vector<8x32xbf16>, vector<8x32xf32> -> vector<8x32xf32>
    %87 = arith.addf %80, %86 : vector<8x32xf32>
    %88 = vector.extract_strided_slice %66 {offsets = [3, 0, 0], sizes = [1, 8, 8], strides = [1, 1, 1]} : vector<4x8x8xf32> to vector<1x8x8xf32>
    %89 = vector.shape_cast %88 : vector<1x8x8xf32> to vector<8x8xf32>
    %90 = arith.truncf %89 : vector<8x8xf32> to vector<8x8xbf16>
    %c3_53 = arith.constant 3 : index
    %c0_54 = arith.constant 0 : index
    %c0_55 = arith.constant 0 : index
    %91 = vector.load %arg10[%c3_53, %c0_54, %c0_55] : memref<4x8x32xbf16, #tpu.memory_space<vmem>>, vector<1x8x32xbf16>
    %92 = vector.shape_cast %91 : vector<1x8x32xbf16> to vector<8x32xbf16>
    %cst_56 = arith.constant dense<0.000000e+00> : vector<8x32xf32>
    %93 = tpu.matmul %90, %92, %cst_56 {dimension_numbers = #tpu.dot_dimension_numbers<[1], [0], [0], [1], [0, 0, 1, 1], [], []>} : vector<8x8xbf16>, vector<8x32xbf16>, vector<8x32xf32> -> vector<8x32xf32>
    %94 = arith.addf %87, %93 : vector<8x32xf32>
    %95 = arith.addf %94, %7 : vector<8x32xf32>
    %c0_57 = arith.constant 0 : index
    %c0_58 = arith.constant 0 : index
    %96 = vector.load %arg12[%c0_57, %c0_58] : memref<1x32xf32, #tpu.memory_space<vmem>>, vector<1x32xf32>
    %c0_59 = arith.constant 0 : index
    %c0_60 = arith.constant 0 : index
    %97 = vector.load %arg13[%c0_59, %c0_60] : memref<1x32xf32, #tpu.memory_space<vmem>>, vector<1x32xf32>
    %cst_61 = arith.constant dense<0.000000e+00> : vector<8xf32>
    %98 = vector.multi_reduction <add>, %95, %cst_61 [1] : vector<8x32xf32> to vector<8xf32>
    %99 = vector.shape_cast %98 : vector<8xf32> to vector<8x1xf32>
    %cst_62 = arith.constant 3.200000e+01 : f32
    %100 = vector.broadcast %cst_62 : f32 to vector<8x1xf32>
    %101 = arith.divf %99, %100 : vector<8x1xf32>
    %102 = vector.broadcast %101 : vector<8x1xf32> to vector<8x32xf32>
    %103 = arith.subf %95, %102 : vector<8x32xf32>
    %104 = arith.mulf %103, %103 : vector<8x32xf32>
    %cst_63 = arith.constant dense<0.000000e+00> : vector<8xf32>
    %105 = vector.multi_reduction <add>, %104, %cst_63 [1] : vector<8x32xf32> to vector<8xf32>
    %106 = vector.shape_cast %105 : vector<8xf32> to vector<8x1xf32>
    %cst_64 = arith.constant 3.200000e+01 : f32
    %107 = vector.broadcast %cst_64 : f32 to vector<8x1xf32>
    %108 = arith.divf %106, %107 : vector<8x1xf32>
    %109 = vector.broadcast %101 : vector<8x1xf32> to vector<8x32xf32>
    %110 = arith.subf %95, %109 : vector<8x32xf32>
    %cst_65 = arith.constant 9.99999974E-6 : f32
    %111 = vector.broadcast %cst_65 : f32 to vector<8x1xf32>
    %112 = arith.addf %108, %111 : vector<8x1xf32>
    %113 = math.rsqrt %112 : vector<8x1xf32>
    %114 = vector.broadcast %113 : vector<8x1xf32> to vector<8x32xf32>
    %115 = arith.mulf %110, %114 : vector<8x32xf32>
    %116 = vector.broadcast %96 : vector<1x32xf32> to vector<8x32xf32>
    %117 = arith.mulf %115, %116 : vector<8x32xf32>
    %118 = vector.broadcast %97 : vector<1x32xf32> to vector<8x32xf32>
    %119 = arith.addf %117, %118 : vector<8x32xf32>
    %120 = arith.truncf %119 : vector<8x32xf32> to vector<8x32xbf16>
    %c0_66 = arith.constant 0 : index
    %c0_67 = arith.constant 0 : index
    %121 = vector.load %arg14[%c0_66, %c0_67] : memref<32x64xbf16, #tpu.memory_space<vmem>>, vector<32x64xbf16>
    %cst_68 = arith.constant dense<0.000000e+00> : vector<8x64xf32>
    %122 = tpu.matmul %120, %121, %cst_68 {dimension_numbers = #tpu.dot_dimension_numbers<[1], [0], [0], [1], [0, 0, 1, 1], [], []>} : vector<8x32xbf16>, vector<32x64xbf16>, vector<8x64xf32> -> vector<8x64xf32>
    %c0_69 = arith.constant 0 : index
    %c0_70 = arith.constant 0 : index
    %123 = vector.load %arg15[%c0_69, %c0_70] : memref<1x64xf32, #tpu.memory_space<vmem>>, vector<1x64xf32>
    %124 = vector.broadcast %123 : vector<1x64xf32> to vector<8x64xf32>
    %125 = arith.addf %122, %124 : vector<8x64xf32>
    %cst_71 = arith.constant 0.000000e+00 : f32
    %126 = vector.broadcast %cst_71 : f32 to vector<8x64xf32>
    %127 = arith.maximumf %125, %126 : vector<8x64xf32>
    %128 = arith.truncf %127 : vector<8x64xf32> to vector<8x64xbf16>
    %c0_72 = arith.constant 0 : index
    %c0_73 = arith.constant 0 : index
    %129 = vector.load %arg16[%c0_72, %c0_73] : memref<64x32xbf16, #tpu.memory_space<vmem>>, vector<64x32xbf16>
    %cst_74 = arith.constant dense<0.000000e+00> : vector<8x32xf32>
    %130 = tpu.matmul %128, %129, %cst_74 {dimension_numbers = #tpu.dot_dimension_numbers<[1], [0], [0], [1], [0, 0, 1, 1], [], []>} : vector<8x64xbf16>, vector<64x32xbf16>, vector<8x32xf32> -> vector<8x32xf32>
    %c0_75 = arith.constant 0 : index
    %c0_76 = arith.constant 0 : index
    %131 = vector.load %arg17[%c0_75, %c0_76] : memref<1x32xf32, #tpu.memory_space<vmem>>, vector<1x32xf32>
    %132 = vector.broadcast %131 : vector<1x32xf32> to vector<8x32xf32>
    %133 = arith.addf %130, %132 : vector<8x32xf32>
    %134 = arith.addf %133, %119 : vector<8x32xf32>
    %c0_77 = arith.constant 0 : index
    %c0_78 = arith.constant 0 : index
    %135 = vector.load %arg18[%c0_77, %c0_78] : memref<1x32xf32, #tpu.memory_space<vmem>>, vector<1x32xf32>
    %c0_79 = arith.constant 0 : index
    %c0_80 = arith.constant 0 : index
    %136 = vector.load %arg19[%c0_79, %c0_80] : memref<1x32xf32, #tpu.memory_space<vmem>>, vector<1x32xf32>
    %cst_81 = arith.constant dense<0.000000e+00> : vector<8xf32>
    %137 = vector.multi_reduction <add>, %134, %cst_81 [1] : vector<8x32xf32> to vector<8xf32>
    %138 = vector.shape_cast %137 : vector<8xf32> to vector<8x1xf32>
    %cst_82 = arith.constant 3.200000e+01 : f32
    %139 = vector.broadcast %cst_82 : f32 to vector<8x1xf32>
    %140 = arith.divf %138, %139 : vector<8x1xf32>
    %141 = vector.broadcast %140 : vector<8x1xf32> to vector<8x32xf32>
    %142 = arith.subf %134, %141 : vector<8x32xf32>
    %143 = arith.mulf %142, %142 : vector<8x32xf32>
    %cst_83 = arith.constant dense<0.000000e+00> : vector<8xf32>
    %144 = vector.multi_reduction <add>, %143, %cst_83 [1] : vector<8x32xf32> to vector<8xf32>
    %145 = vector.shape_cast %144 : vector<8xf32> to vector<8x1xf32>
    %cst_84 = arith.constant 3.200000e+01 : f32
    %146 = vector.broadcast %cst_84 : f32 to vector<8x1xf32>
    %147 = arith.divf %145, %146 : vector<8x1xf32>
    %148 = vector.broadcast %140 : vector<8x1xf32> to vector<8x32xf32>
    %149 = arith.subf %134, %148 : vector<8x32xf32>
    %cst_85 = arith.constant 9.99999974E-6 : f32
    %150 = vector.broadcast %cst_85 : f32 to vector<8x1xf32>
    %151 = arith.addf %147, %150 : vector<8x1xf32>
    %152 = math.rsqrt %151 : vector<8x1xf32>
    %153 = vector.broadcast %152 : vector<8x1xf32> to vector<8x32xf32>
    %154 = arith.mulf %149, %153 : vector<8x32xf32>
    %155 = vector.broadcast %135 : vector<1x32xf32> to vector<8x32xf32>
    %156 = arith.mulf %154, %155 : vector<8x32xf32>
    %157 = vector.broadcast %136 : vector<1x32xf32> to vector<8x32xf32>
    %158 = arith.addf %156, %157 : vector<8x32xf32>
    %c0_86 = arith.constant 0 : index
    %c0_87 = arith.constant 0 : index
    %c0_88 = arith.constant 0 : index
    %159 = vector.load %arg20[%c0_86, %c0_87, %c0_88] : memref<1x8x32xf32, #tpu.memory_space<vmem>>, vector<1x8x32xf32>
    %160 = vector.shape_cast %159 : vector<1x8x32xf32> to vector<8x32xf32>
    %161 = vector.shape_cast %158 : vector<8x32xf32> to vector<1x8x32xf32>
    tpu.vector_store %arg20[%c0_86, %c0_87, %c0_88], %161 {strides = array<i32>} : memref<1x8x32xf32, #tpu.memory_space<vmem>>, vector<1x8x32xf32>,
    return
  }
  func.func @transform_0(%arg0: i32, %arg1: i32) -> (i32, i32, i32) {
    %c0_i32 = arith.constant 0 : i32
    %c0_i32_0 = arith.constant 0 : i32
    %c0_i32_1 = arith.constant 0 : i32
    return %arg0, %c0_i32, %c0_i32_0 : i32, i32, i32
  }
  func.func @transform_1(%arg0: i32, %arg1: i32) -> (i32, i32, i32) {
    %c0_i32 = arith.constant 0 : i32
    %c0_i32_0 = arith.constant 0 : i32
    return %arg0, %arg1, %c0_i32 : i32, i32, i32
  }
  func.func @transform_2(%arg0: i32, %arg1: i32) -> (i32, i32, i32) {
    %c0_i32 = arith.constant 0 : i32
    %c0_i32_0 = arith.constant 0 : i32
    %c0_i32_1 = arith.constant 0 : i32
    %c0_i32_2 = arith.constant 0 : i32
    return %c0_i32, %c0_i32_0, %c0_i32_1 : i32, i32, i32
  }
  func.func @transform_3(%arg0: i32, %arg1: i32) -> (i32, i32, i32) {
    %c0_i32 = arith.constant 0 : i32
    %c0_i32_0 = arith.constant 0 : i32
    %c0_i32_1 = arith.constant 0 : i32
    %c0_i32_2 = arith.constant 0 : i32
    return %c0_i32, %c0_i32_0, %c0_i32_1 : i32, i32, i32
  }
  func.func @transform_4(%arg0: i32, %arg1: i32) -> (i32, i32, i32) {
    %c0_i32 = arith.constant 0 : i32
    %c0_i32_0 = arith.constant 0 : i32
    %c0_i32_1 = arith.constant 0 : i32
    %c0_i32_2 = arith.constant 0 : i32
    return %c0_i32, %c0_i32_0, %c0_i32_1 : i32, i32, i32
  }
  func.func @transform_5(%arg0: i32, %arg1: i32) -> (i32, i32, i32) {
    %c0_i32 = arith.constant 0 : i32
    %c0_i32_0 = arith.constant 0 : i32
    %c0_i32_1 = arith.constant 0 : i32
    %c0_i32_2 = arith.constant 0 : i32
    return %c0_i32, %c0_i32_0, %c0_i32_1 : i32, i32, i32
  }
  func.func @transform_6(%arg0: i32, %arg1: i32) -> (i32, i32, i32) {
    %c0_i32 = arith.constant 0 : i32
    %c0_i32_0 = arith.constant 0 : i32
    %c0_i32_1 = arith.constant 0 : i32
    %c0_i32_2 = arith.constant 0 : i32
    return %c0_i32, %c0_i32_0, %c0_i32_1 : i32, i32, i32
  }
  func.func @transform_7(%arg0: i32, %arg1: i32) -> (i32, i32, i32) {
    %c0_i32 = arith.constant 0 : i32
    %c0_i32_0 = arith.constant 0 : i32
    %c0_i32_1 = arith.constant 0 : i32
    %c0_i32_2 = arith.constant 0 : i32
    return %c0_i32, %c0_i32_0, %c0_i32_1 : i32, i32, i32
  }
  func.func @transform_8(%arg0: i32, %arg1: i32) -> (i32, i32, i32) {
    %c0_i32 = arith.constant 0 : i32
    %c0_i32_0 = arith.constant 0 : i32
    %c0_i32_1 = arith.constant 0 : i32
    %c0_i32_2 = arith.constant 0 : i32
    return %c0_i32, %c0_i32_0, %c0_i32_1 : i32, i32, i32
  }
  func.func @transform_9(%arg0: i32, %arg1: i32) -> (i32, i32) {
    %c0_i32 = arith.constant 0 : i32
    %c0_i32_0 = arith.constant 0 : i32
    %c0_i32_1 = arith.constant 0 : i32
    return %c0_i32, %c0_i32_0 : i32, i32
  }
  func.func @transform_10(%arg0: i32, %arg1: i32) -> (i32, i32) {
    %c0_i32 = arith.constant 0 : i32
    %c0_i32_0 = arith.constant 0 : i32
    %c0_i32_1 = arith.constant 0 : i32
    return %c0_i32, %c0_i32_0 : i32, i32
  }
  func.func @transform_11(%arg0: i32, %arg1: i32) -> (i32, i32) {
    %c0_i32 = arith.constant 0 : i32
    %c0_i32_0 = arith.constant 0 : i32
    %c0_i32_1 = arith.constant 0 : i32
    return %c0_i32, %c0_i32_0 : i32, i32
  }
  func.func @transform_12(%arg0: i32, %arg1: i32) -> (i32, i32) {
    %c0_i32 = arith.constant 0 : i32
    %c0_i32_0 = arith.constant 0 : i32
    %c0_i32_1 = arith.constant 0 : i32
    return %c0_i32, %c0_i32_0 : i32, i32
  }
  func.func @transform_13(%arg0: i32, %arg1: i32) -> (i32, i32) {
    %c0_i32 = arith.constant 0 : i32
    %c0_i32_0 = arith.constant 0 : i32
    %c0_i32_1 = arith.constant 0 : i32
    return %c0_i32, %c0_i32_0 : i32, i32
  }
  func.func @transform_14(%arg0: i32, %arg1: i32) -> (i32, i32) {
    %c0_i32 = arith.constant 0 : i32
    %c0_i32_0 = arith.constant 0 : i32
    %c0_i32_1 = arith.constant 0 : i32
    return %c0_i32, %c0_i32_0 : i32, i32
  }
  func.func @transform_15(%arg0: i32, %arg1: i32) -> (i32, i32) {
    %c0_i32 = arith.constant 0 : i32
    %c0_i32_0 = arith.constant 0 : i32
    %c0_i32_1 = arith.constant 0 : i32
    return %c0_i32, %c0_i32_0 : i32, i32
  }
  func.func @transform_16(%arg0: i32, %arg1: i32) -> (i32, i32) {
    %c0_i32 = arith.constant 0 : i32
    %c0_i32_0 = arith.constant 0 : i32
    %c0_i32_1 = arith.constant 0 : i32
    return %c0_i32, %c0_i32_0 : i32, i32
  }
  func.func @transform_17(%arg0: i32, %arg1: i32) -> (i32, i32) {
    %c0_i32 = arith.constant 0 : i32
    %c0_i32_0 = arith.constant 0 : i32
    %c0_i32_1 = arith.constant 0 : i32
    return %c0_i32, %c0_i32_0 : i32, i32
  }
  func.func @transform_18(%arg0: i32, %arg1: i32) -> (i32, i32, i32) {
    %c0_i32 = arith.constant 0 : i32
    %c0_i32_0 = arith.constant 0 : i32
    return %arg0, %arg1, %c0_i32 : i32, i32, i32
  }
}

</mosaic_0001>

<llo_original>
// kernel: tpu_custom_call.1
$region0: #{tpu_custom_call.1}
  #allocation0 [shape = 'u32[]', space=smem, size = 0x4, offset = 0x4, fixed_abs, tag = 'smem constant byte address 0x4 - core index']
  #allocation1 [shape = 'u32[144,128]{1,0:T(1,128)}', space=vmem, size = 0x12000, scoped, tag = 'internal scratch']
  #allocation2 [shape = 'bf16[4,8,8]{2,1,0:T(8,128)(2,1)}', space=vmem, size = 0x2000, scoped, tag = 'scratch operand']
  #allocation3 [shape = 'bf16[4,8,8]{2,1,0:T(8,128)(2,1)}', space=vmem, size = 0x2000, scoped, tag = 'scratch operand']
  %s0 = inlined_call_operand.vmem [shape: f32[2,8,32], index: 0, kind: input, shape index: {}]
  %s1 = inlined_call_operand.vmem [shape: bf16[2,8,8], index: 1, kind: input, shape index: {}]
  %s2 = inlined_call_operand.vmem [shape: bf16[4,32,8], index: 2, kind: input, shape index: {}]
  %s3 = inlined_call_operand.vmem [shape: f32[4,1,8], index: 3, kind: input, shape index: {}]
  %s4 = inlined_call_operand.vmem [shape: bf16[4,32,8], index: 4, kind: input, shape index: {}]
  %s5 = inlined_call_operand.vmem [shape: f32[4,1,8], index: 5, kind: input, shape index: {}]
  %s6 = inlined_call_operand.vmem [shape: bf16[4,32,8], index: 6, kind: input, shape index: {}]
  %s7 = inlined_call_operand.vmem [shape: f32[4,1,8], index: 7, kind: input, shape index: {}]
  %s8 = inlined_call_operand.vmem [shape: bf16[4,8,32], index: 8, kind: input, shape index: {}]
  %s9 = inlined_call_operand.vmem [shape: f32[1,32], index: 9, kind: input, shape index: {}]
  %s10 = inlined_call_operand.vmem [shape: f32[1,32], index: 10, kind: input, shape index: {}]
  %s11 = inlined_call_operand.vmem [shape: f32[1,32], index: 11, kind: input, shape index: {}]
  %s12 = inlined_call_operand.vmem [shape: bf16[32,64], index: 12, kind: input, shape index: {}]
  %s13 = inlined_call_operand.vmem [shape: f32[1,64], index: 13, kind: input, shape index: {}]
  %s14 = inlined_call_operand.vmem [shape: bf16[64,32], index: 14, kind: input, shape index: {}]
  %s15 = inlined_call_operand.vmem [shape: f32[1,32], index: 15, kind: input, shape index: {}]
  %s16 = inlined_call_operand.vmem [shape: f32[1,32], index: 16, kind: input, shape index: {}]
  %s17 = inlined_call_operand.vmem [shape: f32[1,32], index: 17, kind: input, shape index: {}]
  %s18 = inlined_call_operand.hbm [shape: f32[2,8,32], index: 18, kind: output, shape index: {}]
  %s19 = sld [smem:[#allocation0]]
  $region109: #{tpu_custom_call.1} parent=0
    _
  %s21 = ssub.s32 1, %s19
  %s22 = scalar_select 0, %s21, %s19
  $region1: #{tpu_custom_call.1} parent=0
    #allocation4 [shape = 'u8[8192]{0}', space=vmem, size = 0x2000, scoped, tag = 'output window, operand 0']
    #allocation5 [shape = 's32[2]{0}', space=sflag, size = 0x8, scoped, tag = 'scoped memory for tpu_custom_call.1']
    %23 = vsyncpa [#allocation5], 0
    %s24 = scalar_lea.sflag [#allocation5], 1
    %25 = vsyncpa %s24, 0
    loop: start=0, step=1, limit=4
    $region2: #{tpu_custom_call.1} parent=1 // loop_pre_header
      _
    $region3: #{tpu_custom_call.1} parent=1 // loop_header
      %s27 = sphi 0, %s31
      %p28 = scmp.ge.s32.totalorder %s27, 4
      %s34 = sphi 0, %s46
      %s35 = sphi 0, %s42
      %s36 = sphi 0, %s34
      %s37 = sphi 0, %s35
      %s38 = sphi 0, %s36
      %s39 = sphi 0, %s37
      %s49 = sphi 0, %s51
      %s52 = sphi 0, %s49
      %s53 = sphi 0, %s52
      %s69 = sphi 0, %s53
      %s77 = sphi 0, %s79
      %s80 = sphi 0, %s77
      %s81 = sphi 0, %s80
      %s97 = sphi 0, %s81
      %s101 = sphi 0, %s101
      %s103 = sphi 0, %s101
      %s104 = sphi 0, %s103
      %s118 = sphi 0, %s104
      %s122 = sphi 0, %s122
      %s124 = sphi 0, %s122
      %s125 = sphi 0, %s124
      %s139 = sphi 0, %s125
      %s143 = sphi 0, %s143
      %s145 = sphi 0, %s143
      %s146 = sphi 0, %s145
      %s160 = sphi 0, %s146
      %s164 = sphi 0, %s164
      %s166 = sphi 0, %s164
      %s167 = sphi 0, %s166
      %s181 = sphi 0, %s167
      %s185 = sphi 0, %s185
      %s187 = sphi 0, %s185
      %s188 = sphi 0, %s187
      %s202 = sphi 0, %s188
      %s206 = sphi 0, %s206
      %s208 = sphi 0, %s206
      %s209 = sphi 0, %s208
      %s223 = sphi 0, %s209
      %s227 = sphi 0, %s227
      %s229 = sphi 0, %s227
      %s230 = sphi 0, %s229
      %s244 = sphi 0, %s230
      %s248 = sphi 0, %s248
      %s250 = sphi 0, %s248
      %s251 = sphi 0, %s250
      %s265 = sphi 0, %s251
      %s269 = sphi 0, %s269
      %s271 = sphi 0, %s269
      %s272 = sphi 0, %s271
      %s286 = sphi 0, %s272
      %s290 = sphi 0, %s290
      %s292 = sphi 0, %s290
      %s293 = sphi 0, %s292
      %s307 = sphi 0, %s293
      %s311 = sphi 0, %s311
      %s313 = sphi 0, %s311
      %s314 = sphi 0, %s313
      %s328 = sphi 0, %s314
      %s332 = sphi 0, %s332
      %s334 = sphi 0, %s332
      %s335 = sphi 0, %s334
      %s349 = sphi 0, %s335
      %s353 = sphi 0, %s353
      %s355 = sphi 0, %s353
      %s356 = sphi 0, %s355
      %s370 = sphi 0, %s356
      %s374 = sphi 0, %s374
      %s376 = sphi 0, %s374
      %s377 = sphi 0, %s376
      %s391 = sphi 0, %s377
      %s395 = sphi 0, %s395
      %s397 = sphi 0, %s395
      %s398 = sphi 0, %s397
      %s412 = sphi 0, %s398
      %s416 = sphi 0, %s416
      %s418 = sphi 0, %s416
      %s419 = sphi 0, %s418
      %s433 = sphi 0, %s419
      %s441 = sphi 0, %s443
      %s444 = sphi 0, %s441
      %s445 = sphi 0, %s444
      %s461 = sphi 0, %s445
    $region4: #{tpu_custom_call.1} parent=1 // loop_header_branch
      %30 = sbr.rel (%p28) target = $region8
    $region5: #{tpu_custom_call.1} parent=1 // loop_body
      %s32 = ssub.s32 %s27, 1
      %s33 = ssub.s32 %s27, 2
      %s40 = sadd.s32 1, %s35
      %p41 = scmp.ge.s32.totalorder %s40, 1
      %s42 = scalar_select %p41, 0, %s40
      %s43 = sadd.s32 1, %s34
      %s44 = scalar_select %p41, %s43, %s34
      %p45 = scmp.ge.s32.totalorder %s44, 2
      %s46 = scalar_select %p45, 0, %s44
      %s47 = ssub.s32 %s34, %s46
      %p48 = scmp.eq.s32.totalorder %s47, 0
      %s50 = sadd.s32 %s49, 1
      %s51 = scalar_select %p48, %s49, %s50
      %p54 = pneg %p48
      %p55 = scmp.eq.s32.totalorder %s27, 1
      %p56 = por %p54, %p55
      %p57 = scmp.ne.s32.totalorder %s49, %s52
      %p58 = scmp.eq.s32.totalorder %s27, 0
      %p59 = por %p57, %p58
      %p60 = scmp.ne.s32.totalorder %s49, %s52
      %p61 = scmp.eq.s32.totalorder %s32, 1
      %p62 = por %p60, %p61
      %p63 = scmp.ne.s32.totalorder %s52, %s53
      %p64 = scmp.eq.s32.totalorder %s32, 0
      %p65 = por %p63, %p64
      %p66 = scmp.ne.s32.totalorder %s52, %s53
      %p67 = scmp.eq.s32.totalorder %s33, 1
      %p68 = por %p66, %p67
      %p70 = scmp.ne.s32.totalorder %s53, %s69
      %p71 = scmp.eq.s32.totalorder %s33, 0
      %p72 = por %p70, %p71
      %s73 = ssub.s32 %s34, %s46
      %s74 = ssub.s32 %s35, %s42
      %s75 = sor.u32 %s73, %s74
      %p76 = scmp.eq.s32.totalorder %s75, 0
      %s78 = sadd.s32 %s77, 1
      %s79 = scalar_select %p76, %s77, %s78
      %p82 = pneg %p76
      %p83 = scmp.eq.s32.totalorder %s27, 1
      %p84 = por %p82, %p83
      %p85 = scmp.ne.s32.totalorder %s77, %s80
      %p86 = scmp.eq.s32.totalorder %s27, 0
      %p87 = por %p85, %p86
      %p88 = scmp.ne.s32.totalorder %s77, %s80
      %p89 = scmp.eq.s32.totalorder %s32, 1
      %p90 = por %p88, %p89
      %p91 = scmp.ne.s32.totalorder %s80, %s81
      %p92 = scmp.eq.s32.totalorder %s32, 0
      %p93 = por %p91, %p92
      %p94 = scmp.ne.s32.totalorder %s80, %s81
      %p95 = scmp.eq.s32.totalorder %s33, 1
      %p96 = por %p94, %p95
      %p98 = scmp.ne.s32.totalorder %s81, %s97
      %p99 = scmp.eq.s32.totalorder %s33, 0
      %p100 = por %p98, %p99
      %s102 = sadd.s32 %s101, 1
      %p105 = scmp.eq.s32.totalorder %s27, 1
      %p106 = scmp.ne.s32.totalorder %s101, %s103
      %p107 = scmp.eq.s32.totalorder %s27, 0
      %p108 = por %p106, %p107
      %p109 = scmp.ne.s32.totalorder %s101, %s103
      %p110 = scmp.eq.s32.totalorder %s32, 1
      %p111 = por %p109, %p110
      %p112 = scmp.ne.s32.totalorder %s103, %s104
      %p113 = scmp.eq.s32.totalorder %s32, 0
      %p114 = por %p112, %p113
      %p115 = scmp.ne.s32.totalorder %s103, %s104
      %p116 = scmp.eq.s32.totalorder %s33, 1
      %p117 = por %p115, %p116
      %p119 = scmp.ne.s32.totalorder %s104, %s118
      %p120 = scmp.eq.s32.totalorder %s33, 0
      %p121 = por %p119, %p120
      %s123 = sadd.s32 %s122, 1
      %p126 = scmp.eq.s32.totalorder %s27, 1
      %p127 = scmp.ne.s32.totalorder %s122, %s124
      %p128 = scmp.eq.s32.totalorder %s27, 0
      %p129 = por %p127, %p128
      %p130 = scmp.ne.s32.totalorder %s122, %s124
      %p131 = scmp.eq.s32.totalorder %s32, 1
      %p132 = por %p130, %p131
      %p133 = scmp.ne.s32.totalorder %s124, %s125
      %p134 = scmp.eq.s32.totalorder %s32, 0
      %p135 = por %p133, %p134
      %p136 = scmp.ne.s32.totalorder %s124, %s125
      %p137 = scmp.eq.s32.totalorder %s33, 1
      %p138 = por %p136, %p137
      %p140 = scmp.ne.s32.totalorder %s125, %s139
      %p141 = scmp.eq.s32.totalorder %s33, 0
      %p142 = por %p140, %p141
      %s144 = sadd.s32 %s143, 1
      %p147 = scmp.eq.s32.totalorder %s27, 1
      %p148 = scmp.ne.s32.totalorder %s143, %s145
      %p149 = scmp.eq.s32.totalorder %s27, 0
      %p150 = por %p148, %p149
      %p151 = scmp.ne.s32.totalorder %s143, %s145
      %p152 = scmp.eq.s32.totalorder %s32, 1
      %p153 = por %p151, %p152
      %p154 = scmp.ne.s32.totalorder %s145, %s146
      %p155 = scmp.eq.s32.totalorder %s32, 0
      %p156 = por %p154, %p155
      %p157 = scmp.ne.s32.totalorder %s145, %s146
      %p158 = scmp.eq.s32.totalorder %s33, 1
      %p159 = por %p157, %p158
      %p161 = scmp.ne.s32.totalorder %s146, %s160
      %p162 = scmp.eq.s32.totalorder %s33, 0
      %p163 = por %p161, %p162
      %s165 = sadd.s32 %s164, 1
      %p168 = scmp.eq.s32.totalorder %s27, 1
      %p169 = scmp.ne.s32.totalorder %s164, %s166
      %p170 = scmp.eq.s32.totalorder %s27, 0
      %p171 = por %p169, %p170
      %p172 = scmp.ne.s32.totalorder %s164, %s166
      %p173 = scmp.eq.s32.totalorder %s32, 1
      %p174 = por %p172, %p173
      %p175 = scmp.ne.s32.totalorder %s166, %s167
      %p176 = scmp.eq.s32.totalorder %s32, 0
      %p177 = por %p175, %p176
      %p178 = scmp.ne.s32.totalorder %s166, %s167
      %p179 = scmp.eq.s32.totalorder %s33, 1
      %p180 = por %p178, %p179
      %p182 = scmp.ne.s32.totalorder %s167, %s181
      %p183 = scmp.eq.s32.totalorder %s33, 0
      %p184 = por %p182, %p183
      %s186 = sadd.s32 %s185, 1
      %p189 = scmp.eq.s32.totalorder %s27, 1
      %p190 = scmp.ne.s32.totalorder %s185, %s187
      %p191 = scmp.eq.s32.totalorder %s27, 0
      %p192 = por %p190, %p191
      %p193 = scmp.ne.s32.totalorder %s185, %s187
      %p194 = scmp.eq.s32.totalorder %s32, 1
      %p195 = por %p193, %p194
      %p196 = scmp.ne.s32.totalorder %s187, %s188
      %p197 = scmp.eq.s32.totalorder %s32, 0
      %p198 = por %p196, %p197
      %p199 = scmp.ne.s32.totalorder %s187, %s188
      %p200 = scmp.eq.s32.totalorder %s33, 1
      %p201 = por %p199, %p200
      %p203 = scmp.ne.s32.totalorder %s188, %s202
      %p204 = scmp.eq.s32.totalorder %s33, 0
      %p205 = por %p203, %p204
      %s207 = sadd.s32 %s206, 1
      %p210 = scmp.eq.s32.totalorder %s27, 1
      %p211 = scmp.ne.s32.totalorder %s206, %s208
      %p212 = scmp.eq.s32.totalorder %s27, 0
      %p213 = por %p211, %p212
      %p214 = scmp.ne.s32.totalorder %s206, %s208
      %p215 = scmp.eq.s32.totalorder %s32, 1
      %p216 = por %p214, %p215
      %p217 = scmp.ne.s32.totalorder %s208, %s209
      %p218 = scmp.eq.s32.totalorder %s32, 0
      %p219 = por %p217, %p218
      %p220 = scmp.ne.s32.totalorder %s208, %s209
      %p221 = scmp.eq.s32.totalorder %s33, 1
      %p222 = por %p220, %p221
      %p224 = scmp.ne.s32.totalorder %s209, %s223
      %p225 = scmp.eq.s32.totalorder %s33, 0
      %p226 = por %p224, %p225
      %s228 = sadd.s32 %s227, 1
      %p231 = scmp.eq.s32.totalorder %s27, 1
      %p232 = scmp.ne.s32.totalorder %s227, %s229
      %p233 = scmp.eq.s32.totalorder %s27, 0
      %p234 = por %p232, %p233
      %p235 = scmp.ne.s32.totalorder %s227, %s229
      %p236 = scmp.eq.s32.totalorder %s32, 1
      %p237 = por %p235, %p236
      %p238 = scmp.ne.s32.totalorder %s229, %s230
      %p239 = scmp.eq.s32.totalorder %s32, 0
      %p240 = por %p238, %p239
      %p241 = scmp.ne.s32.totalorder %s229, %s230
      %p242 = scmp.eq.s32.totalorder %s33, 1
      %p243 = por %p241, %p242
      %p245 = scmp.ne.s32.totalorder %s230, %s244
      %p246 = scmp.eq.s32.totalorder %s33, 0
      %p247 = por %p245, %p246
      %s249 = sadd.s32 %s248, 1
      %p252 = scmp.eq.s32.totalorder %s27, 1
      %p253 = scmp.ne.s32.totalorder %s248, %s250
      %p254 = scmp.eq.s32.totalorder %s27, 0
      %p255 = por %p253, %p254
      %p256 = scmp.ne.s32.totalorder %s248, %s250
      %p257 = scmp.eq.s32.totalorder %s32, 1
      %p258 = por %p256, %p257
      %p259 = scmp.ne.s32.totalorder %s250, %s251
      %p260 = scmp.eq.s32.totalorder %s32, 0
      %p261 = por %p259, %p260
      %p262 = scmp.ne.s32.totalorder %s250, %s251
      %p263 = scmp.eq.s32.totalorder %s33, 1
      %p264 = por %p262, %p263
      %p266 = scmp.ne.s32.totalorder %s251, %s265
      %p267 = scmp.eq.s32.totalorder %s33, 0
      %p268 = por %p266, %p267
      %s270 = sadd.s32 %s269, 1
      %p273 = scmp.eq.s32.totalorder %s27, 1
      %p274 = scmp.ne.s32.totalorder %s269, %s271
      %p275 = scmp.eq.s32.totalorder %s27, 0
      %p276 = por %p274, %p275
      %p277 = scmp.ne.s32.totalorder %s269, %s271
      %p278 = scmp.eq.s32.totalorder %s32, 1
      %p279 = por %p277, %p278
      %p280 = scmp.ne.s32.totalorder %s271, %s272
      %p281 = scmp.eq.s32.totalorder %s32, 0
      %p282 = por %p280, %p281
      %p283 = scmp.ne.s32.totalorder %s271, %s272
      %p284 = scmp.eq.s32.totalorder %s33, 1
      %p285 = por %p283, %p284
      %p287 = scmp.ne.s32.totalorder %s272, %s286
      %p288 = scmp.eq.s32.totalorder %s33, 0
      %p289 = por %p287, %p288
      %s291 = sadd.s32 %s290, 1
      %p294 = scmp.eq.s32.totalorder %s27, 1
      %p295 = scmp.ne.s32.totalorder %s290, %s292
      %p296 = scmp.eq.s32.totalorder %s27, 0
      %p297 = por %p295, %p296
      %p298 = scmp.ne.s32.totalorder %s290, %s292
      %p299 = scmp.eq.s32.totalorder %s32, 1
      %p300 = por %p298, %p299
      %p301 = scmp.ne.s32.totalorder %s292, %s293
      %p302 = scmp.eq.s32.totalorder %s32, 0
      %p303 = por %p301, %p302
      %p304 = scmp.ne.s32.totalorder %s292, %s293
      %p305 = scmp.eq.s32.totalorder %s33, 1
      %p306 = por %p304, %p305
      %p308 = scmp.ne.s32.totalorder %s293, %s307
      %p309 = scmp.eq.s32.totalorder %s33, 0
      %p310 = por %p308, %p309
      %s312 = sadd.s32 %s311, 1
      %p315 = scmp.eq.s32.totalorder %s27, 1
      %p316 = scmp.ne.s32.totalorder %s311, %s313
      %p317 = scmp.eq.s32.totalorder %s27, 0
      %p318 = por %p316, %p317
      %p319 = scmp.ne.s32.totalorder %s311, %s313
      %p320 = scmp.eq.s32.totalorder %s32, 1
      %p321 = por %p319, %p320
      %p322 = scmp.ne.s32.totalorder %s313, %s314
      %p323 = scmp.eq.s32.totalorder %s32, 0
      %p324 = por %p322, %p323
      %p325 = scmp.ne.s32.totalorder %s313, %s314
      %p326 = scmp.eq.s32.totalorder %s33, 1
      %p327 = por %p325, %p326
      %p329 = scmp.ne.s32.totalorder %s314, %s328
      %p330 = scmp.eq.s32.totalorder %s33, 0
      %p331 = por %p329, %p330
      %s333 = sadd.s32 %s332, 1
      %p336 = scmp.eq.s32.totalorder %s27, 1
      %p337 = scmp.ne.s32.totalorder %s332, %s334
      %p338 = scmp.eq.s32.totalorder %s27, 0
      %p339 = por %p337, %p338
      %p340 = scmp.ne.s32.totalorder %s332, %s334
      %p341 = scmp.eq.s32.totalorder %s32, 1
      %p342 = por %p340, %p341
      %p343 = scmp.ne.s32.totalorder %s334, %s335
      %p344 = scmp.eq.s32.totalorder %s32, 0
      %p345 = por %p343, %p344
      %p346 = scmp.ne.s32.totalorder %s334, %s335
      %p347 = scmp.eq.s32.totalorder %s33, 1
      %p348 = por %p346, %p347
      %p350 = scmp.ne.s32.totalorder %s335, %s349
      %p351 = scmp.eq.s32.totalorder %s33, 0
      %p352 = por %p350, %p351
      %s354 = sadd.s32 %s353, 1
      %p357 = scmp.eq.s32.totalorder %s27, 1
      %p358 = scmp.ne.s32.totalorder %s353, %s355
      %p359 = scmp.eq.s32.totalorder %s27, 0
      %p360 = por %p358, %p359
      %p361 = scmp.ne.s32.totalorder %s353, %s355
      %p362 = scmp.eq.s32.totalorder %s32, 1
      %p363 = por %p361, %p362
      %p364 = scmp.ne.s32.totalorder %s355, %s356
      %p365 = scmp.eq.s32.totalorder %s32, 0
      %p366 = por %p364, %p365
      %p367 = scmp.ne.s32.totalorder %s355, %s356
      %p368 = scmp.eq.s32.totalorder %s33, 1
      %p369 = por %p367, %p368
      %p371 = scmp.ne.s32.totalorder %s356, %s370
      %p372 = scmp.eq.s32.totalorder %s33, 0
      %p373 = por %p371, %p372
      %s375 = sadd.s32 %s374, 1
      %p378 = scmp.eq.s32.totalorder %s27, 1
      %p379 = scmp.ne.s32.totalorder %s374, %s376
      %p380 = scmp.eq.s32.totalorder %s27, 0
      %p381 = por %p379, %p380
      %p382 = scmp.ne.s32.totalorder %s374, %s376
      %p383 = scmp.eq.s32.totalorder %s32, 1
      %p384 = por %p382, %p383
      %p385 = scmp.ne.s32.totalorder %s376, %s377
      %p386 = scmp.eq.s32.totalorder %s32, 0
      %p387 = por %p385, %p386
      %p388 = scmp.ne.s32.totalorder %s376, %s377
      %p389 = scmp.eq.s32.totalorder %s33, 1
      %p390 = por %p388, %p389
      %p392 = scmp.ne.s32.totalorder %s377, %s391
      %p393 = scmp.eq.s32.totalorder %s33, 0
      %p394 = por %p392, %p393
      %s396 = sadd.s32 %s395, 1
      %p399 = scmp.eq.s32.totalorder %s27, 1
      %p400 = scmp.ne.s32.totalorder %s395, %s397
      %p401 = scmp.eq.s32.totalorder %s27, 0
      %p402 = por %p400, %p401
      %p403 = scmp.ne.s32.totalorder %s395, %s397
      %p404 = scmp.eq.s32.totalorder %s32, 1
      %p405 = por %p403, %p404
      %p406 = scmp.ne.s32.totalorder %s397, %s398
      %p407 = scmp.eq.s32.totalorder %s32, 0
      %p408 = por %p406, %p407
      %p409 = scmp.ne.s32.totalorder %s397, %s398
      %p410 = scmp.eq.s32.totalorder %s33, 1
      %p411 = por %p409, %p410
      %p413 = scmp.ne.s32.totalorder %s398, %s412
      %p414 = scmp.eq.s32.totalorder %s33, 0
      %p415 = por %p413, %p414
      %s417 = sadd.s32 %s416, 1
      %p420 = scmp.eq.s32.totalorder %s27, 1
      %p421 = scmp.ne.s32.totalorder %s416, %s418
      %p422 = scmp.eq.s32.totalorder %s27, 0
      %p423 = por %p421, %p422
      %p424 = scmp.ne.s32.totalorder %s416, %s418
      %p425 = scmp.eq.s32.totalorder %s32, 1
      %p426 = por %p424, %p425
      %p427 = scmp.ne.s32.totalorder %s418, %s419
      %p428 = scmp.eq.s32.totalorder %s32, 0
      %p429 = por %p427, %p428
      %p430 = scmp.ne.s32.totalorder %s418, %s419
      %p431 = scmp.eq.s32.totalorder %s33, 1
      %p432 = por %p430, %p431
      %p434 = scmp.ne.s32.totalorder %s419, %s433
      %p435 = scmp.eq.s32.totalorder %s33, 0
      %p436 = por %p434, %p435
      %s437 = ssub.s32 %s34, %s46
      %s438 = ssub.s32 %s35, %s42
      %s439 = sor.u32 %s437, %s438
      %p440 = scmp.eq.s32.totalorder %s439, 0
      %s442 = sadd.s32 %s441, 1
      %s443 = scalar_select %p440, %s441, %s442
      %p446 = pneg %p440
      %p447 = scmp.eq.s32.totalorder %s27, 1
      %p448 = por %p446, %p447
      %p449 = scmp.ne.s32.totalorder %s441, %s444
      %p450 = scmp.eq.s32.totalorder %s27, 0
      %p451 = por %p449, %p450
      %p452 = scmp.ne.s32.totalorder %s441, %s444
      %p453 = scmp.eq.s32.totalorder %s32, 1
      %p454 = por %p452, %p453
      %p455 = scmp.ne.s32.totalorder %s444, %s445
      %p456 = scmp.eq.s32.totalorder %s32, 0
      %p457 = por %p455, %p456
      %p458 = scmp.ne.s32.totalorder %s444, %s445
      %p459 = scmp.eq.s32.totalorder %s33, 1
      %p460 = por %p458, %p459
      %p462 = scmp.ne.s32.totalorder %s445, %s461
      %p463 = scmp.eq.s32.totalorder %s33, 0
      %p464 = por %p462, %p463
      %p465 = scmp.le.s32.totalorder 1, %s27
      %p466 = scmp.lt.s32.totalorder %s27, 3
      %p467 = pnand %p465, %p466
      %p468 = pneg %p467
      // Predicated region
      $region9: #{tpu_custom_call.1} parent=5 // pred_check
        _
      $region10: #{tpu_custom_call.1} parent=5 // pred_check_branch
        %470 = sbr.rel (%p467) target = $region12
      $region11: #{tpu_custom_call.1} parent=5 // pred_region
        %s471 = ssub.s32 %s27, 1
        // Predicated region
        $region13: #{tpu_custom_call.1} parent=11 // pred_check
          %p472 = pneg %p114
        $region14: #{tpu_custom_call.1} parent=11 // pred_check_branch
          %474 = sbr.rel (%p472) target = $region16
        $region15: #{tpu_custom_call.1} parent=11 // pred_region
          _
        $region16: #{tpu_custom_call.1} parent=11 // pred_fallthru
          _
        // Predicated region
        $region17: #{tpu_custom_call.1} parent=11 // pred_check
          %p475 = pneg %p135
        $region18: #{tpu_custom_call.1} parent=11 // pred_check_branch
          %477 = sbr.rel (%p475) target = $region20
        $region19: #{tpu_custom_call.1} parent=11 // pred_region
          _
        $region20: #{tpu_custom_call.1} parent=11 // pred_fallthru
          _
        // Predicated region
        $region21: #{tpu_custom_call.1} parent=11 // pred_check
          %p478 = pneg %p156
        $region22: #{tpu_custom_call.1} parent=11 // pred_check_branch
          %480 = sbr.rel (%p478) target = $region24
        $region23: #{tpu_custom_call.1} parent=11 // pred_region
          _
        $region24: #{tpu_custom_call.1} parent=11 // pred_fallthru
          _
        // Predicated region
        $region25: #{tpu_custom_call.1} parent=11 // pred_check
          %p481 = pneg %p177
        $region26: #{tpu_custom_call.1} parent=11 // pred_check_branch
          %483 = sbr.rel (%p481) target = $region28
        $region27: #{tpu_custom_call.1} parent=11 // pred_region
          _
        $region28: #{tpu_custom_call.1} parent=11 // pred_fallthru
          _
        // Predicated region
        $region29: #{tpu_custom_call.1} parent=11 // pred_check
          %p484 = pneg %p198
        $region30: #{tpu_custom_call.1} parent=11 // pred_check_branch
          %486 = sbr.rel (%p484) target = $region32
        $region31: #{tpu_custom_call.1} parent=11 // pred_region
          _
        $region32: #{tpu_custom_call.1} parent=11 // pred_fallthru
          _
        // Predicated region
        $region33: #{tpu_custom_call.1} parent=11 // pred_check
          %p487 = pneg %p219
        $region34: #{tpu_custom_call.1} parent=11 // pred_check_branch
          %489 = sbr.rel (%p487) target = $region36
        $region35: #{tpu_custom_call.1} parent=11 // pred_region
          _
        $region36: #{tpu_custom_call.1} parent=11 // pred_fallthru
          _
        // Predicated region
        $region37: #{tpu_custom_call.1} parent=11 // pred_check
          %p490 = pneg %p240
        $region38: #{tpu_custom_call.1} parent=11 // pred_check_branch
          %492 = sbr.rel (%p490) target = $region40
        $region39: #{tpu_custom_call.1} parent=11 // pred_region
          _
        $region40: #{tpu_custom_call.1} parent=11 // pred_fallthru
          _
        // Predicated region
        $region41: #{tpu_custom_call.1} parent=11 // pred_check
          %p493 = pneg %p261
        $region42: #{tpu_custom_call.1} parent=11 // pred_check_branch
          %495 = sbr.rel (%p493) target = $region44
        $region43: #{tpu_custom_call.1} parent=11 // pred_region
          _
        $region44: #{tpu_custom_call.1} parent=11 // pred_fallthru
          _
        // Predicated region
        $region45: #{tpu_custom_call.1} parent=11 // pred_check
          %p496 = pneg %p282
        $region46: #{tpu_custom_call.1} parent=11 // pred_check_branch
          %498 = sbr.rel (%p496) target = $region48
        $region47: #{tpu_custom_call.1} parent=11 // pred_region
          _
        $region48: #{tpu_custom_call.1} parent=11 // pred_fallthru
          _
        // Predicated region
        $region49: #{tpu_custom_call.1} parent=11 // pred_check
          %p499 = pneg %p303
        $region50: #{tpu_custom_call.1} parent=11 // pred_check_branch
          %501 = sbr.rel (%p499) target = $region52
        $region51: #{tpu_custom_call.1} parent=11 // pred_region
          _
        $region52: #{tpu_custom_call.1} parent=11 // pred_fallthru
          _
        // Predicated region
        $region53: #{tpu_custom_call.1} parent=11 // pred_check
          %p502 = pneg %p324
        $region54: #{tpu_custom_call.1} parent=11 // pred_check_branch
          %504 = sbr.rel (%p502) target = $region56
        $region55: #{tpu_custom_call.1} parent=11 // pred_region
          _
        $region56: #{tpu_custom_call.1} parent=11 // pred_fallthru
          _
        // Predicated region
        $region57: #{tpu_custom_call.1} parent=11 // pred_check
          %p505 = pneg %p345
        $region58: #{tpu_custom_call.1} parent=11 // pred_check_branch
          %507 = sbr.rel (%p505) target = $region60
        $region59: #{tpu_custom_call.1} parent=11 // pred_region
          _
        $region60: #{tpu_custom_call.1} parent=11 // pred_fallthru
          _
        // Predicated region
        $region61: #{tpu_custom_call.1} parent=11 // pred_check
          %p508 = pneg %p366
        $region62: #{tpu_custom_call.1} parent=11 // pred_check_branch
          %510 = sbr.rel (%p508) target = $region64
        $region63: #{tpu_custom_call.1} parent=11 // pred_region
          _
        $region64: #{tpu_custom_call.1} parent=11 // pred_fallthru
          _
        // Predicated region
        $region65: #{tpu_custom_call.1} parent=11 // pred_check
          %p511 = pneg %p387
        $region66: #{tpu_custom_call.1} parent=11 // pred_check_branch
          %513 = sbr.rel (%p511) target = $region68
        $region67: #{tpu_custom_call.1} parent=11 // pred_region
          _
        $region68: #{tpu_custom_call.1} parent=11 // pred_fallthru
          _
        // Predicated region
        $region69: #{tpu_custom_call.1} parent=11 // pred_check
          %p514 = pneg %p408
        $region70: #{tpu_custom_call.1} parent=11 // pred_check_branch
          %516 = sbr.rel (%p514) target = $region72
        $region71: #{tpu_custom_call.1} parent=11 // pred_region
          _
        $region72: #{tpu_custom_call.1} parent=11 // pred_fallthru
          _
        // Predicated region
        $region73: #{tpu_custom_call.1} parent=11 // pred_check
          %p517 = pneg %p429
        $region74: #{tpu_custom_call.1} parent=11 // pred_check_branch
          %519 = sbr.rel (%p517) target = $region76
        $region75: #{tpu_custom_call.1} parent=11 // pred_region
          _
        $region76: #{tpu_custom_call.1} parent=11 // pred_fallthru
          _
      $region12: #{tpu_custom_call.1} parent=5 // pred_fallthru
        _
      %p520 = scmp.lt.s32.totalorder %s27, 2
      // Predicated region
      $region77: #{tpu_custom_call.1} parent=5 // pred_check
        %p521 = pneg %p520
      $region78: #{tpu_custom_call.1} parent=5 // pred_check_branch
        %523 = sbr.rel (%p521) target = $region80
      $region79: #{tpu_custom_call.1} parent=5 // pred_region
        // Predicated region
        $region81: #{tpu_custom_call.1} parent=79 // pred_check
          %p524 = pneg %p59
        $region82: #{tpu_custom_call.1} parent=79 // pred_check_branch
          %526 = sbr.rel (%p524) target = $region84
        $region83: #{tpu_custom_call.1} parent=79 // pred_region
          %p527 = scmp.lt.s32.totalorder %s34, 1
          %s528 = scalar_select %p527, %s34, 1
          %s529 = smul.addr %s528, 8
          %s530 = scalar_lea.vmem %s0, %s529
        $region84: #{tpu_custom_call.1} parent=79 // pred_fallthru
          _
        // Predicated region
        $region85: #{tpu_custom_call.1} parent=79 // pred_check
          %p531 = pneg %p87
        $region86: #{tpu_custom_call.1} parent=79 // pred_check_branch
          %533 = sbr.rel (%p531) target = $region88
        $region87: #{tpu_custom_call.1} parent=79 // pred_region
          %p534 = scmp.lt.s32.totalorder %s34, 1
          %s535 = scalar_select %p534, %s34, 1
          %p536 = scmp.lt.s32.totalorder %s35, 0
          %s537 = scalar_select %p536, %s35, 0
          %s538 = sadd.s32 %s537, %s535
          %s539 = smul.addr %s538, 4
          %s540 = scalar_lea.vmem %s1, %s539
        $region88: #{tpu_custom_call.1} parent=79 // pred_fallthru
          _
      $region80: #{tpu_custom_call.1} parent=5 // pred_fallthru
        _
      %p541 = scmp.le.s32.totalorder 1, %s27
      %p542 = scmp.lt.s32.totalorder %s27, 3
      %p543 = pnand %p541, %p542
      %p544 = pneg %p543
      // Predicated region
      $region89: #{tpu_custom_call.1} parent=5 // pred_check
        _
      $region90: #{tpu_custom_call.1} parent=5 // pred_check_branch
        %546 = sbr.rel (%p543) target = $region92
      $region91: #{tpu_custom_call.1} parent=5 // pred_region
        %s547 = ssub.s32 %s27, 1
        %p548 = scmp.lt.s32.totalorder %s36, 1
        %s549 = scalar_select %p548, %s36, 1
        %s550 = smul.addr %s549, 8
        %s551 = scalar_lea.vmem %s0, %s550
        %p552 = pneg %p65
        %p553 = pneg %p62
        %p554 = scmp.lt.s32.totalorder %s36, 1
        %s555 = scalar_select %p554, %s36, 1
        %p556 = scmp.lt.s32.totalorder %s37, 0
        %s557 = scalar_select %p556, %s37, 0
        %s558 = sadd.s32 %s557, %s555
        %s559 = smul.addr %s558, 4
        %s560 = scalar_lea.vmem %s1, %s559
        %p561 = pneg %p93
        %p562 = pneg %p90
        %p563 = pneg %p114
        %p564 = pneg %p111
        %p565 = pneg %p135
        %p566 = pneg %p132
        %p567 = pneg %p156
        %p568 = pneg %p153
        %p569 = pneg %p177
        %p570 = pneg %p174
        %p571 = pneg %p198
        %p572 = pneg %p195
        %p573 = pneg %p219
        %p574 = pneg %p216
        %p575 = pneg %p240
        %p576 = pneg %p237
        %p577 = pneg %p261
        %p578 = pneg %p258
        %p579 = pneg %p282
        %p580 = pneg %p279
        %p581 = pneg %p303
        %p582 = pneg %p300
        %p583 = pneg %p324
        %p584 = pneg %p321
        %p585 = pneg %p345
        %p586 = pneg %p342
        %p587 = pneg %p366
        %p588 = pneg %p363
        %p589 = pneg %p387
        %p590 = pneg %p384
        %p591 = pneg %p408
        %p592 = pneg %p405
        %p593 = pneg %p429
        %p594 = pneg %p426
        %p595 = pneg %p457
        %p596 = pneg %p454
        %s597 = sand.u32 %s444, 1
        %s598 = scalar_lea.sflag [#allocation5], %s597
        %s599 = sand.u32 %s444, 1
        %s600 = smul.addr %s599, 8
        %s601 = scalar_lea.vmem [#allocation4], %s600
        %p602 = scmp.lt.s32.totalorder %s36, 1
        %s603 = scalar_select %p602, %s36, 1
        %s604 = smul.addr %s603, 8
        %s605 = scalar_lea.vmem %s0, %s604
        %p606 = scmp.lt.s32.totalorder %s36, 1
        %s607 = scalar_select %p606, %s36, 1
        %p608 = scmp.lt.s32.totalorder %s37, 0
        %s609 = scalar_select %p608, %s37, 0
        %s610 = sadd.s32 %s609, %s607
        %s611 = smul.addr %s610, 4
        %s612 = scalar_lea.vmem %s1, %s611
        %p614 = scmp.eq.s32.totalorder %s37, 0
        // Predicated region
        $region93: #{tpu_custom_call.1} parent=91 // pred_check
          %p615 = pneg %p614
        $region94: #{tpu_custom_call.1} parent=91 // pred_check_branch
          %617 = sbr.rel (%p615) target = $region96
        $region95: #{tpu_custom_call.1} parent=91 // pred_region
          %v618 = vld [vmem:[%s605] sm:$0xff]
          %v619 = vpack.c.bf16 %v618, %v618
          %v620 = vld [vmem:[%s4] sm:$0xf]
          %v621 = vld [vmem:[%s4 + $0x4] sm:$0xf]
          %v622 = vld [vmem:[%s4 + $0x8] sm:$0xf]
          %v623 = vld [vmem:[%s4 + $0xc] sm:$0xf]
          %v624 = vld [vmem:[%s5] sm:$0x1]
          %v626 = vlaneseq
          %v627 = vshrl.u32 %v626, 7
          %v628 = vsub.s32 0, %v627
          %v629 = vrot.slane %v624, %v628
          %v635 = vunpack.c.l.b16 %v620
          %v636 = vunpack.c.l.b16 %v621
          %v637 = vunpack.c.l.b16 %v622
          %v638 = vunpack.c.l.b16 %v623
          %v639 = vpack.c.b16 %v636, %v635
          %v640 = vpack.c.b16 %v638, %v637
          %vm643 = vcmask 261120
          %v645 = vsel %vm643, %v619, 0
          %647 = vmatprep.subr.bf16.mxu0 0
          %648 = vmatpush1.bf16.msra.mxu0 %v639
          %649 = vmatprep.subr.bf16.mxu0 0
          %650 = vmatpush1.bf16.msra.mxu0 %v640
          %651 = vmatprep.subr.bf16.mxu0 0
          %652 = vmatpush1.bf16.msra.mxu0 0
          %653 = vmatprep.subr.bf16.mxu0 0
          %654 = vmatpush1.bf16.msra.mxu0 0
          %655 = vmatprep.subr.bf16.mxu0 0
          %656 = vmatpush1.bf16.msra.mxu0 0
          %657 = vmatprep.subr.bf16.mxu0 0
          %658 = vmatpush1.bf16.msra.mxu0 0
          %659 = vmatprep.subr.bf16.mxu0 0
          %660 = vmatpush1.bf16.msra.mxu0 0
          %661 = vmatprep.subr.bf16.mxu0 0
          %662 = vmatpush1.bf16.msra.mxu0 0
          %663 = vmatprep.subr.bf16.mxu0 0
          %664 = vmatpush1.bf16.msra.mxu0 0
          %665 = vmatprep.subr.bf16.mxu0 0
          %666 = vmatpush1.bf16.msra.mxu0 0
          %667 = vmatprep.subr.bf16.mxu0 0
          %668 = vmatpush1.bf16.msra.mxu0 0
          %669 = vmatprep.subr.bf16.mxu0 0
          %670 = vmatpush1.bf16.msra.mxu0 0
          %671 = vmatprep.subr.bf16.mxu0 0
          %672 = vmatpush1.bf16.msra.mxu0 0
          %673 = vmatprep.subr.bf16.mxu0 0
          %674 = vmatpush1.bf16.msra.mxu0 0
          %675 = vmatprep.subr.bf16.mxu0 0
          %676 = vmatpush1.bf16.msra.mxu0 0
          %677 = vmatprep.subr.bf16.mxu0 0
          %678 = vmatpush1.bf16.msra.mxu0 0
          %679 = vmatprep.mubr.bf16.mxu0 0
          %680 = vmatmul.mubr.bf16.gmra.mrb[0].mxu0 %v645
          %v681 = vpop.f32.mrb[0].mxu0
          %v682 = vadd.f32 %v629, %v681
          %v683 = vpop.f32.mrb[0].mxu0
          %v684 = vpop.f32.mrb[0].mxu0
          %v685 = vpop.f32.mrb[0].mxu0
          %686 = vdwg.mxu0
          %v687 = vld [vmem:[%s6] sm:$0xf]
          %v688 = vld [vmem:[%s6 + $0x4] sm:$0xf]
          %v689 = vld [vmem:[%s6 + $0x8] sm:$0xf]
          %v690 = vld [vmem:[%s6 + $0xc] sm:$0xf]
          %v691 = vld [vmem:[%s7] sm:$0x1]
          %v693 = vlaneseq
          %v694 = vshrl.u32 %v693, 7
          %v695 = vsub.s32 0, %v694
          %v696 = vrot.slane %v691, %v695
          %v702 = vunpack.c.l.b16 %v687
          %v703 = vunpack.c.l.b16 %v688
          %v704 = vunpack.c.l.b16 %v689
          %v705 = vunpack.c.l.b16 %v690
          %v706 = vpack.c.b16 %v703, %v702
          %v707 = vpack.c.b16 %v705, %v704
          %710 = vmatprep.subr.bf16.mxu0 0
          %711 = vmatpush1.bf16.msra.mxu0 %v706
          %712 = vmatprep.subr.bf16.mxu0 0
          %713 = vmatpush1.bf16.msra.mxu0 %v707
          %714 = vmatprep.subr.bf16.mxu0 0
          %715 = vmatpush1.bf16.msra.mxu0 0
          %716 = vmatprep.subr.bf16.mxu0 0
          %717 = vmatpush1.bf16.msra.mxu0 0
          %718 = vmatprep.subr.bf16.mxu0 0
          %719 = vmatpush1.bf16.msra.mxu0 0
          %720 = vmatprep.subr.bf16.mxu0 0
          %721 = vmatpush1.bf16.msra.mxu0 0
          %722 = vmatprep.subr.bf16.mxu0 0
          %723 = vmatpush1.bf16.msra.mxu0 0
          %724 = vmatprep.subr.bf16.mxu0 0
          %725 = vmatpush1.bf16.msra.mxu0 0
          %726 = vmatprep.subr.bf16.mxu0 0
          %727 = vmatpush1.bf16.msra.mxu0 0
          %728 = vmatprep.subr.bf16.mxu0 0
          %729 = vmatpush1.bf16.msra.mxu0 0
          %730 = vmatprep.subr.bf16.mxu0 0
          %731 = vmatpush1.bf16.msra.mxu0 0
          %732 = vmatprep.subr.bf16.mxu0 0
          %733 = vmatpush1.bf16.msra.mxu0 0
          %734 = vmatprep.subr.bf16.mxu0 0
          %735 = vmatpush1.bf16.msra.mxu0 0
          %736 = vmatprep.subr.bf16.mxu0 0
          %737 = vmatpush1.bf16.msra.mxu0 0
          %738 = vmatprep.subr.bf16.mxu0 0
          %739 = vmatpush1.bf16.msra.mxu0 0
          %740 = vmatprep.subr.bf16.mxu0 0
          %741 = vmatpush1.bf16.msra.mxu0 0
          %742 = vmatprep.mubr.bf16.mxu0 0
          %743 = vmatmul.mubr.bf16.gmra.mrb[0].mxu0 %v645
          %v744 = vpop.f32.mrb[0].mxu0
          %v745 = vadd.f32 %v696, %v744
          %v746 = vpop.f32.mrb[0].mxu0
          %v747 = vpop.f32.mrb[0].mxu0
          %v748 = vpop.f32.mrb[0].mxu0
          %749 = vdwg.mxu0
          %750 = vxpose.xlu0.b32.start [1/16] %v682, 128
          %751 = vxpose.xlu0.b32.cont [2/16] 0.0, 128
          %752 = vxpose.xlu0.b32.cont [3/16] 0.0, 128
          %753 = vxpose.xlu0.b32.cont [4/16] 0.0, 128
          %754 = vxpose.xlu0.b32.cont [5/16] 0.0, 128
          %755 = vxpose.xlu0.b32.cont [6/16] 0.0, 128
          %756 = vxpose.xlu0.b32.cont [7/16] 0.0, 128
          %757 = vxpose.xlu0.b32.cont [8/16] 0.0, 128
          %758 = vxpose.xlu0.b32.cont [9/16] 0.0, 128
          %759 = vxpose.xlu0.b32.cont [10/16] 0.0, 128
          %760 = vxpose.xlu0.b32.cont [11/16] 0.0, 128
          %761 = vxpose.xlu0.b32.cont [12/16] 0.0, 128
          %762 = vxpose.xlu0.b32.cont [13/16] 0.0, 128
          %763 = vxpose.xlu0.b32.cont [14/16] 0.0, 128
          %764 = vxpose.xlu0.b32.cont [15/16] 0.0, 128
          %765 = vxpose.xlu0.b32.end [16/16] 0.0, 128
          %v766 = vpop.trf.xlu0
          %v767 = vpop.trf.xlu0
          %v768 = vpop.trf.xlu0
          %v769 = vpop.trf.xlu0
          %v770 = vpop.trf.xlu0
          %v771 = vpop.trf.xlu0
          %v772 = vpop.trf.xlu0
          %v773 = vpop.trf.xlu0
          %v774 = vpop.trf.xlu0
          %v775 = vpop.trf.xlu0
          %v776 = vpop.trf.xlu0
          %v777 = vpop.trf.xlu0
          %v778 = vpop.trf.xlu0
          %v779 = vpop.trf.xlu0
          %v780 = vpop.trf.xlu0
          %v781 = vpop.trf.xlu0
          %v782 = vpack.c.bf16 %v766, %v766
          %vm783 = vcmask 60416
          %784 = vst.msk [vmem:[#allocation2] sm:$0xf] %vm783, %v782
          %v785 = vpack.c.bf16 %v745, %v745
          %786 = vst.msk [vmem:[#allocation3] sm:$0xf] %vm783, %v785
          %s787 = scalar_lea.vmem %s4, 16
          %v788 = vld [vmem:[%s787] sm:$0xf]
          %v789 = vld [vmem:[%s787 + $0x4] sm:$0xf]
          %v790 = vld [vmem:[%s787 + $0x8] sm:$0xf]
          %v791 = vld [vmem:[%s787 + $0xc] sm:$0xf]
          %s792 = scalar_lea.vmem %s5, 1
          %v793 = vld [vmem:[%s792] sm:$0x1]
          %v795 = vlaneseq
          %v796 = vshrl.u32 %v795, 7
          %v797 = vsub.s32 0, %v796
          %v798 = vrot.slane %v793, %v797
          %v804 = vunpack.c.l.b16 %v788
          %v805 = vunpack.c.l.b16 %v789
          %v806 = vunpack.c.l.b16 %v790
          %v807 = vunpack.c.l.b16 %v791
          %v808 = vpack.c.b16 %v805, %v804
          %v809 = vpack.c.b16 %v807, %v806
          %812 = vmatprep.subr.bf16.mxu0 0
          %813 = vmatpush1.bf16.msra.mxu0 %v808
          %814 = vmatprep.subr.bf16.mxu0 0
          %815 = vmatpush1.bf16.msra.mxu0 %v809
          %816 = vmatprep.subr.bf16.mxu0 0
          %817 = vmatpush1.bf16.msra.mxu0 0
          %818 = vmatprep.subr.bf16.mxu0 0
          %819 = vmatpush1.bf16.msra.mxu0 0
          %820 = vmatprep.subr.bf16.mxu0 0
          %821 = vmatpush1.bf16.msra.mxu0 0
          %822 = vmatprep.subr.bf16.mxu0 0
          %823 = vmatpush1.bf16.msra.mxu0 0
          %824 = vmatprep.subr.bf16.mxu0 0
          %825 = vmatpush1.bf16.msra.mxu0 0
          %826 = vmatprep.subr.bf16.mxu0 0
          %827 = vmatpush1.bf16.msra.mxu0 0
          %828 = vmatprep.subr.bf16.mxu0 0
          %829 = vmatpush1.bf16.msra.mxu0 0
          %830 = vmatprep.subr.bf16.mxu0 0
          %831 = vmatpush1.bf16.msra.mxu0 0
          %832 = vmatprep.subr.bf16.mxu0 0
          %833 = vmatpush1.bf16.msra.mxu0 0
          %834 = vmatprep.subr.bf16.mxu0 0
          %835 = vmatpush1.bf16.msra.mxu0 0
          %836 = vmatprep.subr.bf16.mxu0 0
          %837 = vmatpush1.bf16.msra.mxu0 0
          %838 = vmatprep.subr.bf16.mxu0 0
          %839 = vmatpush1.bf16.msra.mxu0 0
          %840 = vmatprep.subr.bf16.mxu0 0
          %841 = vmatpush1.bf16.msra.mxu0 0
          %842 = vmatprep.subr.bf16.mxu0 0
          %843 = vmatpush1.bf16.msra.mxu0 0
          %844 = vmatprep.mubr.bf16.mxu0 0
          %845 = vmatmul.mubr.bf16.gmra.mrb[0].mxu0 %v645
          %v846 = vpop.f32.mrb[0].mxu0
          %v847 = vadd.f32 %v798, %v846
          %v848 = vpop.f32.mrb[0].mxu0
          %v849 = vpop.f32.mrb[0].mxu0
          %v850 = vpop.f32.mrb[0].mxu0
          %851 = vdwg.mxu0
          %s852 = scalar_lea.vmem %s6, 16
          %v853 = vld [vmem:[%s852] sm:$0xf]
          %v854 = vld [vmem:[%s852 + $0x4] sm:$0xf]
          %v855 = vld [vmem:[%s852 + $0x8] sm:$0xf]
          %v856 = vld [vmem:[%s852 + $0xc] sm:$0xf]
          %s857 = scalar_lea.vmem %s7, 1
          %v858 = vld [vmem:[%s857] sm:$0x1]
          %v860 = vlaneseq
          %v861 = vshrl.u32 %v860, 7
          %v862 = vsub.s32 0, %v861
          %v863 = vrot.slane %v858, %v862
          %v869 = vunpack.c.l.b16 %v853
          %v870 = vunpack.c.l.b16 %v854
          %v871 = vunpack.c.l.b16 %v855
          %v872 = vunpack.c.l.b16 %v856
          %v873 = vpack.c.b16 %v870, %v869
          %v874 = vpack.c.b16 %v872, %v871
          %877 = vmatprep.subr.bf16.mxu0 0
          %878 = vmatpush1.bf16.msra.mxu0 %v873
          %879 = vmatprep.subr.bf16.mxu0 0
          %880 = vmatpush1.bf16.msra.mxu0 %v874
          %881 = vmatprep.subr.bf16.mxu0 0
          %882 = vmatpush1.bf16.msra.mxu0 0
          %883 = vmatprep.subr.bf16.mxu0 0
          %884 = vmatpush1.bf16.msra.mxu0 0
          %885 = vmatprep.subr.bf16.mxu0 0
          %886 = vmatpush1.bf16.msra.mxu0 0
          %887 = vmatprep.subr.bf16.mxu0 0
          %888 = vmatpush1.bf16.msra.mxu0 0
          %889 = vmatprep.subr.bf16.mxu0 0
          %890 = vmatpush1.bf16.msra.mxu0 0
          %891 = vmatprep.subr.bf16.mxu0 0
          %892 = vmatpush1.bf16.msra.mxu0 0
          %893 = vmatprep.subr.bf16.mxu0 0
          %894 = vmatpush1.bf16.msra.mxu0 0
          %895 = vmatprep.subr.bf16.mxu0 0
          %896 = vmatpush1.bf16.msra.mxu0 0
          %897 = vmatprep.subr.bf16.mxu0 0
          %898 = vmatpush1.bf16.msra.mxu0 0
          %899 = vmatprep.subr.bf16.mxu0 0
          %900 = vmatpush1.bf16.msra.mxu0 0
          %901 = vmatprep.subr.bf16.mxu0 0
          %902 = vmatpush1.bf16.msra.mxu0 0
          %903 = vmatprep.subr.bf16.mxu0 0
          %904 = vmatpush1.bf16.msra.mxu0 0
          %905 = vmatprep.subr.bf16.mxu0 0
          %906 = vmatpush1.bf16.msra.mxu0 0
          %907 = vmatprep.subr.bf16.mxu0 0
          %908 = vmatpush1.bf16.msra.mxu0 0
          %909 = vmatprep.mubr.bf16.mxu0 0
          %910 = vmatmul.mubr.bf16.gmra.mrb[0].mxu0 %v645
          %v911 = vpop.f32.mrb[0].mxu0
          %v912 = vadd.f32 %v863, %v911
          %v913 = vpop.f32.mrb[0].mxu0
          %v914 = vpop.f32.mrb[0].mxu0
          %v915 = vpop.f32.mrb[0].mxu0
          %916 = vdwg.mxu0
          %917 = vxpose.xlu0.b32.start [1/16] %v847, 128
          %918 = vxpose.xlu0.b32.cont [2/16] 0.0, 128
          %919 = vxpose.xlu0.b32.cont [3/16] 0.0, 128
          %920 = vxpose.xlu0.b32.cont [4/16] 0.0, 128
          %921 = vxpose.xlu0.b32.cont [5/16] 0.0, 128
          %922 = vxpose.xlu0.b32.cont [6/16] 0.0, 128
          %923 = vxpose.xlu0.b32.cont [7/16] 0.0, 128
          %924 = vxpose.xlu0.b32.cont [8/16] 0.0, 128
          %925 = vxpose.xlu0.b32.cont [9/16] 0.0, 128
          %926 = vxpose.xlu0.b32.cont [10/16] 0.0, 128
          %927 = vxpose.xlu0.b32.cont [11/16] 0.0, 128
          %928 = vxpose.xlu0.b32.cont [12/16] 0.0, 128
          %929 = vxpose.xlu0.b32.cont [13/16] 0.0, 128
          %930 = vxpose.xlu0.b32.cont [14/16] 0.0, 128
          %931 = vxpose.xlu0.b32.cont [15/16] 0.0, 128
          %932 = vxpose.xlu0.b32.end [16/16] 0.0, 128
          %v933 = vpop.trf.xlu0
          %v934 = vpop.trf.xlu0
          %v935 = vpop.trf.xlu0
          %v936 = vpop.trf.xlu0
          %v937 = vpop.trf.xlu0
          %v938 = vpop.trf.xlu0
          %v939 = vpop.trf.xlu0
          %v940 = vpop.trf.xlu0
          %v941 = vpop.trf.xlu0
          %v942 = vpop.trf.xlu0
          %v943 = vpop.trf.xlu0
          %v944 = vpop.trf.xlu0
          %v945 = vpop.trf.xlu0
          %v946 = vpop.trf.xlu0
          %v947 = vpop.trf.xlu0
          %v948 = vpop.trf.xlu0
          %v949 = vpack.c.bf16 %v933, %v933
          %s950 = scalar_lea.vmem [#allocation2], 4
          %951 = vst.msk [vmem:[%s950] sm:$0xf] %vm783, %v949
          %v952 = vpack.c.bf16 %v912, %v912
          %s953 = scalar_lea.vmem [#allocation3], 4
          %954 = vst.msk [vmem:[%s953] sm:$0xf] %vm783, %v952
          %s955 = scalar_lea.vmem %s4, 32
          %v956 = vld [vmem:[%s955] sm:$0xf]
          %v957 = vld [vmem:[%s955 + $0x4] sm:$0xf]
          %v958 = vld [vmem:[%s955 + $0x8] sm:$0xf]
          %v959 = vld [vmem:[%s955 + $0xc] sm:$0xf]
          %s960 = scalar_lea.vmem %s5, 2
          %v961 = vld [vmem:[%s960] sm:$0x1]
          %v963 = vlaneseq
          %v964 = vshrl.u32 %v963, 7
          %v965 = vsub.s32 0, %v964
          %v966 = vrot.slane %v961, %v965
          %v972 = vunpack.c.l.b16 %v956
          %v973 = vunpack.c.l.b16 %v957
          %v974 = vunpack.c.l.b16 %v958
          %v975 = vunpack.c.l.b16 %v959
          %v976 = vpack.c.b16 %v973, %v972
          %v977 = vpack.c.b16 %v975, %v974
          %980 = vmatprep.subr.bf16.mxu0 0
          %981 = vmatpush1.bf16.msra.mxu0 %v976
          %982 = vmatprep.subr.bf16.mxu0 0
          %983 = vmatpush1.bf16.msra.mxu0 %v977
          %984 = vmatprep.subr.bf16.mxu0 0
          %985 = vmatpush1.bf16.msra.mxu0 0
          %986 = vmatprep.subr.bf16.mxu0 0
          %987 = vmatpush1.bf16.msra.mxu0 0
          %988 = vmatprep.subr.bf16.mxu0 0
          %989 = vmatpush1.bf16.msra.mxu0 0
          %990 = vmatprep.subr.bf16.mxu0 0
          %991 = vmatpush1.bf16.msra.mxu0 0
          %992 = vmatprep.subr.bf16.mxu0 0
          %993 = vmatpush1.bf16.msra.mxu0 0
          %994 = vmatprep.subr.bf16.mxu0 0
          %995 = vmatpush1.bf16.msra.mxu0 0
          %996 = vmatprep.subr.bf16.mxu0 0
          %997 = vmatpush1.bf16.msra.mxu0 0
          %998 = vmatprep.subr.bf16.mxu0 0
          %999 = vmatpush1.bf16.msra.mxu0 0
          %1000 = vmatprep.subr.bf16.mxu0 0
          %1001 = vmatpush1.bf16.msra.mxu0 0
          %1002 = vmatprep.subr.bf16.mxu0 0
          %1003 = vmatpush1.bf16.msra.mxu0 0
          %1004 = vmatprep.subr.bf16.mxu0 0
          %1005 = vmatpush1.bf16.msra.mxu0 0
          %1006 = vmatprep.subr.bf16.mxu0 0
          %1007 = vmatpush1.bf16.msra.mxu0 0
          %1008 = vmatprep.subr.bf16.mxu0 0
          %1009 = vmatpush1.bf16.msra.mxu0 0
          %1010 = vmatprep.subr.bf16.mxu0 0
          %1011 = vmatpush1.bf16.msra.mxu0 0
          %1012 = vmatprep.mubr.bf16.mxu0 0
          %1013 = vmatmul.mubr.bf16.gmra.mrb[0].mxu0 %v645
          %v1014 = vpop.f32.mrb[0].mxu0
          %v1015 = vadd.f32 %v966, %v1014
          %v1016 = vpop.f32.mrb[0].mxu0
          %v1017 = vpop.f32.mrb[0].mxu0
          %v1018 = vpop.f32.mrb[0].mxu0
          %1019 = vdwg.mxu0
          %s1020 = scalar_lea.vmem %s6, 32
          %v1021 = vld [vmem:[%s1020] sm:$0xf]
          %v1022 = vld [vmem:[%s1020 + $0x4] sm:$0xf]
          %v1023 = vld [vmem:[%s1020 + $0x8] sm:$0xf]
          %v1024 = vld [vmem:[%s1020 + $0xc] sm:$0xf]
          %s1025 = scalar_lea.vmem %s7, 2
          %v1026 = vld [vmem:[%s1025] sm:$0x1]
          %v1028 = vlaneseq
          %v1029 = vshrl.u32 %v1028, 7
          %v1030 = vsub.s32 0, %v1029
          %v1031 = vrot.slane %v1026, %v1030
          %v1037 = vunpack.c.l.b16 %v1021
          %v1038 = vunpack.c.l.b16 %v1022
          %v1039 = vunpack.c.l.b16 %v1023
          %v1040 = vunpack.c.l.b16 %v1024
          %v1041 = vpack.c.b16 %v1038, %v1037
          %v1042 = vpack.c.b16 %v1040, %v1039
          %1045 = vmatprep.subr.bf16.mxu0 0
          %1046 = vmatpush1.bf16.msra.mxu0 %v1041
          %1047 = vmatprep.subr.bf16.mxu0 0
          %1048 = vmatpush1.bf16.msra.mxu0 %v1042
          %1049 = vmatprep.subr.bf16.mxu0 0
          %1050 = vmatpush1.bf16.msra.mxu0 0
          %1051 = vmatprep.subr.bf16.mxu0 0
          %1052 = vmatpush1.bf16.msra.mxu0 0
          %1053 = vmatprep.subr.bf16.mxu0 0
          %1054 = vmatpush1.bf16.msra.mxu0 0
          %1055 = vmatprep.subr.bf16.mxu0 0
          %1056 = vmatpush1.bf16.msra.mxu0 0
          %1057 = vmatprep.subr.bf16.mxu0 0
          %1058 = vmatpush1.bf16.msra.mxu0 0
          %1059 = vmatprep.subr.bf16.mxu0 0
          %1060 = vmatpush1.bf16.msra.mxu0 0
          %1061 = vmatprep.subr.bf16.mxu0 0
          %1062 = vmatpush1.bf16.msra.mxu0 0
          %1063 = vmatprep.subr.bf16.mxu0 0
          %1064 = vmatpush1.bf16.msra.mxu0 0
          %1065 = vmatprep.subr.bf16.mxu0 0
          %1066 = vmatpush1.bf16.msra.mxu0 0
          %1067 = vmatprep.subr.bf16.mxu0 0
          %1068 = vmatpush1.bf16.msra.mxu0 0
          %1069 = vmatprep.subr.bf16.mxu0 0
          %1070 = vmatpush1.bf16.msra.mxu0 0
          %1071 = vmatprep.subr.bf16.mxu0 0
          %1072 = vmatpush1.bf16.msra.mxu0 0
          %1073 = vmatprep.subr.bf16.mxu0 0
          %1074 = vmatpush1.bf16.msra.mxu0 0
          %1075 = vmatprep.subr.bf16.mxu0 0
          %1076 = vmatpush1.bf16.msra.mxu0 0
          %1077 = vmatprep.mubr.bf16.mxu0 0
          %1078 = vmatmul.mubr.bf16.gmra.mrb[0].mxu0 %v645
          %v1079 = vpop.f32.mrb[0].mxu0
          %v1080 = vadd.f32 %v1031, %v1079
          %v1081 = vpop.f32.mrb[0].mxu0
          %v1082 = vpop.f32.mrb[0].mxu0
          %v1083 = vpop.f32.mrb[0].mxu0
          %1084 = vdwg.mxu0
          %1085 = vxpose.xlu0.b32.start [1/16] %v1015, 128
          %1086 = vxpose.xlu0.b32.cont [2/16] 0.0, 128
          %1087 = vxpose.xlu0.b32.cont [3/16] 0.0, 128
          %1088 = vxpose.xlu0.b32.cont [4/16] 0.0, 128
          %1089 = vxpose.xlu0.b32.cont [5/16] 0.0, 128
          %1090 = vxpose.xlu0.b32.cont [6/16] 0.0, 128
          %1091 = vxpose.xlu0.b32.cont [7/16] 0.0, 128
          %1092 = vxpose.xlu0.b32.cont [8/16] 0.0, 128
          %1093 = vxpose.xlu0.b32.cont [9/16] 0.0, 128
          %1094 = vxpose.xlu0.b32.cont [10/16] 0.0, 128
          %1095 = vxpose.xlu0.b32.cont [11/16] 0.0, 128
          %1096 = vxpose.xlu0.b32.cont [12/16] 0.0, 128
          %1097 = vxpose.xlu0.b32.cont [13/16] 0.0, 128
          %1098 = vxpose.xlu0.b32.cont [14/16] 0.0, 128
          %1099 = vxpose.xlu0.b32.cont [15/16] 0.0, 128
          %1100 = vxpose.xlu0.b32.end [16/16] 0.0, 128
          %v1101 = vpop.trf.xlu0
          %v1102 = vpop.trf.xlu0
          %v1103 = vpop.trf.xlu0
          %v1104 = vpop.trf.xlu0
          %v1105 = vpop.trf.xlu0
          %v1106 = vpop.trf.xlu0
          %v1107 = vpop.trf.xlu0
          %v1108 = vpop.trf.xlu0
          %v1109 = vpop.trf.xlu0
          %v1110 = vpop.trf.xlu0
          %v1111 = vpop.trf.xlu0
          %v1112 = vpop.trf.xlu0
          %v1113 = vpop.trf.xlu0
          %v1114 = vpop.trf.xlu0
          %v1115 = vpop.trf.xlu0
          %v1116 = vpop.trf.xlu0
          %v1117 = vpack.c.bf16 %v1101, %v1101
          %s1118 = scalar_lea.vmem [#allocation2], 8
          %1119 = vst.msk [vmem:[%s1118] sm:$0xf] %vm783, %v1117
          %v1120 = vpack.c.bf16 %v1080, %v1080
          %s1121 = scalar_lea.vmem [#allocation3], 8
          %1122 = vst.msk [vmem:[%s1121] sm:$0xf] %vm783, %v1120
          %s1123 = scalar_lea.vmem %s4, 48
          %v1124 = vld [vmem:[%s1123] sm:$0xf]
          %v1125 = vld [vmem:[%s1123 + $0x4] sm:$0xf]
          %v1126 = vld [vmem:[%s1123 + $0x8] sm:$0xf]
          %v1127 = vld [vmem:[%s1123 + $0xc] sm:$0xf]
          %s1128 = scalar_lea.vmem %s5, 3
          %v1129 = vld [vmem:[%s1128] sm:$0x1]
          %v1131 = vlaneseq
          %v1132 = vshrl.u32 %v1131, 7
          %v1133 = vsub.s32 0, %v1132
          %v1134 = vrot.slane %v1129, %v1133
          %v1140 = vunpack.c.l.b16 %v1124
          %v1141 = vunpack.c.l.b16 %v1125
          %v1142 = vunpack.c.l.b16 %v1126
          %v1143 = vunpack.c.l.b16 %v1127
          %v1144 = vpack.c.b16 %v1141, %v1140
          %v1145 = vpack.c.b16 %v1143, %v1142
          %1148 = vmatprep.subr.bf16.mxu0 0
          %1149 = vmatpush1.bf16.msra.mxu0 %v1144
          %1150 = vmatprep.subr.bf16.mxu0 0
          %1151 = vmatpush1.bf16.msra.mxu0 %v1145
          %1152 = vmatprep.subr.bf16.mxu0 0
          %1153 = vmatpush1.bf16.msra.mxu0 0
          %1154 = vmatprep.subr.bf16.mxu0 0
          %1155 = vmatpush1.bf16.msra.mxu0 0
          %1156 = vmatprep.subr.bf16.mxu0 0
          %1157 = vmatpush1.bf16.msra.mxu0 0
          %1158 = vmatprep.subr.bf16.mxu0 0
          %1159 = vmatpush1.bf16.msra.mxu0 0
          %1160 = vmatprep.subr.bf16.mxu0 0
          %1161 = vmatpush1.bf16.msra.mxu0 0
          %1162 = vmatprep.subr.bf16.mxu0 0
          %1163 = vmatpush1.bf16.msra.mxu0 0
          %1164 = vmatprep.subr.bf16.mxu0 0
          %1165 = vmatpush1.bf16.msra.mxu0 0
          %1166 = vmatprep.subr.bf16.mxu0 0
          %1167 = vmatpush1.bf16.msra.mxu0 0
          %1168 = vmatprep.subr.bf16.mxu0 0
          %1169 = vmatpush1.bf16.msra.mxu0 0
          %1170 = vmatprep.subr.bf16.mxu0 0
          %1171 = vmatpush1.bf16.msra.mxu0 0
          %1172 = vmatprep.subr.bf16.mxu0 0
          %1173 = vmatpush1.bf16.msra.mxu0 0
          %1174 = vmatprep.subr.bf16.mxu0 0
          %1175 = vmatpush1.bf16.msra.mxu0 0
          %1176 = vmatprep.subr.bf16.mxu0 0
          %1177 = vmatpush1.bf16.msra.mxu0 0
          %1178 = vmatprep.subr.bf16.mxu0 0
          %1179 = vmatpush1.bf16.msra.mxu0 0
          %1180 = vmatprep.mubr.bf16.mxu0 0
          %1181 = vmatmul.mubr.bf16.gmra.mrb[0].mxu0 %v645
          %v1182 = vpop.f32.mrb[0].mxu0
          %v1183 = vadd.f32 %v1134, %v1182
          %v1184 = vpop.f32.mrb[0].mxu0
          %v1185 = vpop.f32.mrb[0].mxu0
          %v1186 = vpop.f32.mrb[0].mxu0
          %1187 = vdwg.mxu0
          %s1188 = scalar_lea.vmem %s6, 48
          %v1189 = vld [vmem:[%s1188] sm:$0xf]
          %v1190 = vld [vmem:[%s1188 + $0x4] sm:$0xf]
          %v1191 = vld [vmem:[%s1188 + $0x8] sm:$0xf]
          %v1192 = vld [vmem:[%s1188 + $0xc] sm:$0xf]
          %s1193 = scalar_lea.vmem %s7, 3
          %v1194 = vld [vmem:[%s1193] sm:$0x1]
          %v1196 = vlaneseq
          %v1197 = vshrl.u32 %v1196, 7
          %v1198 = vsub.s32 0, %v1197
          %v1199 = vrot.slane %v1194, %v1198
          %v1205 = vunpack.c.l.b16 %v1189
          %v1206 = vunpack.c.l.b16 %v1190
          %v1207 = vunpack.c.l.b16 %v1191
          %v1208 = vunpack.c.l.b16 %v1192
          %v1209 = vpack.c.b16 %v1206, %v1205
          %v1210 = vpack.c.b16 %v1208, %v1207
          %1213 = vmatprep.subr.bf16.mxu0 0
          %1214 = vmatpush1.bf16.msra.mxu0 %v1209
          %1215 = vmatprep.subr.bf16.mxu0 0
          %1216 = vmatpush1.bf16.msra.mxu0 %v1210
          %1217 = vmatprep.subr.bf16.mxu0 0
          %1218 = vmatpush1.bf16.msra.mxu0 0
          %1219 = vmatprep.subr.bf16.mxu0 0
          %1220 = vmatpush1.bf16.msra.mxu0 0
          %1221 = vmatprep.subr.bf16.mxu0 0
          %1222 = vmatpush1.bf16.msra.mxu0 0
          %1223 = vmatprep.subr.bf16.mxu0 0
          %1224 = vmatpush1.bf16.msra.mxu0 0
          %1225 = vmatprep.subr.bf16.mxu0 0
          %1226 = vmatpush1.bf16.msra.mxu0 0
          %1227 = vmatprep.subr.bf16.mxu0 0
          %1228 = vmatpush1.bf16.msra.mxu0 0
          %1229 = vmatprep.subr.bf16.mxu0 0
          %1230 = vmatpush1.bf16.msra.mxu0 0
          %1231 = vmatprep.subr.bf16.mxu0 0
          %1232 = vmatpush1.bf16.msra.mxu0 0
          %1233 = vmatprep.subr.bf16.mxu0 0
          %1234 = vmatpush1.bf16.msra.mxu0 0
          %1235 = vmatprep.subr.bf16.mxu0 0
          %1236 = vmatpush1.bf16.msra.mxu0 0
          %1237 = vmatprep.subr.bf16.mxu0 0
          %1238 = vmatpush1.bf16.msra.mxu0 0
          %1239 = vmatprep.subr.bf16.mxu0 0
          %1240 = vmatpush1.bf16.msra.mxu0 0
          %1241 = vmatprep.subr.bf16.mxu0 0
          %1242 = vmatpush1.bf16.msra.mxu0 0
          %1243 = vmatprep.subr.bf16.mxu0 0
          %1244 = vmatpush1.bf16.msra.mxu0 0
          %1245 = vmatprep.mubr.bf16.mxu0 0
          %1246 = vmatmul.mubr.bf16.gmra.mrb[0].mxu0 %v645
          %v1247 = vpop.f32.mrb[0].mxu0
          %v1248 = vadd.f32 %v1199, %v1247
          %v1249 = vpop.f32.mrb[0].mxu0
          %v1250 = vpop.f32.mrb[0].mxu0
          %v1251 = vpop.f32.mrb[0].mxu0
          %1252 = vdwg.mxu0
          %1253 = vxpose.xlu0.b32.start [1/16] %v1183, 128
          %1254 = vxpose.xlu0.b32.cont [2/16] 0.0, 128
          %1255 = vxpose.xlu0.b32.cont [3/16] 0.0, 128
          %1256 = vxpose.xlu0.b32.cont [4/16] 0.0, 128
          %1257 = vxpose.xlu0.b32.cont [5/16] 0.0, 128
          %1258 = vxpose.xlu0.b32.cont [6/16] 0.0, 128
          %1259 = vxpose.xlu0.b32.cont [7/16] 0.0, 128
          %1260 = vxpose.xlu0.b32.cont [8/16] 0.0, 128
          %1261 = vxpose.xlu0.b32.cont [9/16] 0.0, 128
          %1262 = vxpose.xlu0.b32.cont [10/16] 0.0, 128
          %1263 = vxpose.xlu0.b32.cont [11/16] 0.0, 128
          %1264 = vxpose.xlu0.b32.cont [12/16] 0.0, 128
          %1265 = vxpose.xlu0.b32.cont [13/16] 0.0, 128
          %1266 = vxpose.xlu0.b32.cont [14/16] 0.0, 128
          %1267 = vxpose.xlu0.b32.cont [15/16] 0.0, 128
          %1268 = vxpose.xlu0.b32.end [16/16] 0.0, 128
          %v1269 = vpop.trf.xlu0
          %v1270 = vpop.trf.xlu0
          %v1271 = vpop.trf.xlu0
          %v1272 = vpop.trf.xlu0
          %v1273 = vpop.trf.xlu0
          %v1274 = vpop.trf.xlu0
          %v1275 = vpop.trf.xlu0
          %v1276 = vpop.trf.xlu0
          %v1277 = vpop.trf.xlu0
          %v1278 = vpop.trf.xlu0
          %v1279 = vpop.trf.xlu0
          %v1280 = vpop.trf.xlu0
          %v1281 = vpop.trf.xlu0
          %v1282 = vpop.trf.xlu0
          %v1283 = vpop.trf.xlu0
          %v1284 = vpop.trf.xlu0
          %v1285 = vpack.c.bf16 %v1269, %v1269
          %s1286 = scalar_lea.vmem [#allocation2], 12
          %1287 = vst.msk [vmem:[%s1286] sm:$0xf] %vm783, %v1285
          %v1288 = vpack.c.bf16 %v1248, %v1248
          %s1289 = scalar_lea.vmem [#allocation3], 12
          %1290 = vst.msk [vmem:[%s1289] sm:$0xf] %vm783, %v1288
        $region96: #{tpu_custom_call.1} parent=91 // pred_fallthru
          _
        %s1291 = smul.u32 %s37, 8
        %s1292 = scalar_lea.vmem %s605, %s1291
        %v1293 = vld [vmem:[%s1292] sm:$0xff]
        %v1294 = vpack.c.bf16 %v1293, %v1293
        %v1295 = vld [vmem:[%s612] sm:$0xf]
        %v1296 = vunpack.c.l.bf16 %v1295
        %v1297 = vld [vmem:[%s9] sm:$0x1]
        %v1299 = vlaneseq
        %v1300 = vshrl.u32 %v1299, 7
        %v1301 = vsub.s32 0, %v1300
        %v1302 = vrot.slane %v1297, %v1301
        %v1304 = vld [vmem:[%s2] sm:$0xf]
        %v1305 = vld [vmem:[%s2 + $0x4] sm:$0xf]
        %v1306 = vld [vmem:[%s2 + $0x8] sm:$0xf]
        %v1307 = vld [vmem:[%s2 + $0xc] sm:$0xf]
        %v1308 = vld [vmem:[%s3] sm:$0x1]
        %v1310 = vlaneseq
        %v1311 = vshrl.u32 %v1310, 7
        %v1312 = vsub.s32 0, %v1311
        %v1313 = vrot.slane %v1308, %v1312
        %v1319 = vunpack.c.l.b16 %v1304
        %v1320 = vunpack.c.l.b16 %v1305
        %v1321 = vunpack.c.l.b16 %v1306
        %v1322 = vunpack.c.l.b16 %v1307
        %v1323 = vpack.c.b16 %v1320, %v1319
        %v1324 = vpack.c.b16 %v1322, %v1321
        %vm1327 = vcmask 261120
        %v1329 = vsel %vm1327, %v1294, 0
        %1331 = vmatprep.subr.bf16.mxu0 0
        %1332 = vmatpush1.bf16.msra.mxu0 %v1323
        %1333 = vmatprep.subr.bf16.mxu0 0
        %1334 = vmatpush1.bf16.msra.mxu0 %v1324
        %1335 = vmatprep.subr.bf16.mxu0 0
        %1336 = vmatpush1.bf16.msra.mxu0 0
        %1337 = vmatprep.subr.bf16.mxu0 0
        %1338 = vmatpush1.bf16.msra.mxu0 0
        %1339 = vmatprep.subr.bf16.mxu0 0
        %1340 = vmatpush1.bf16.msra.mxu0 0
        %1341 = vmatprep.subr.bf16.mxu0 0
        %1342 = vmatpush1.bf16.msra.mxu0 0
        %1343 = vmatprep.subr.bf16.mxu0 0
        %1344 = vmatpush1.bf16.msra.mxu0 0
        %1345 = vmatprep.subr.bf16.mxu0 0
        %1346 = vmatpush1.bf16.msra.mxu0 0
        %1347 = vmatprep.subr.bf16.mxu0 0
        %1348 = vmatpush1.bf16.msra.mxu0 0
        %1349 = vmatprep.subr.bf16.mxu0 0
        %1350 = vmatpush1.bf16.msra.mxu0 0
        %1351 = vmatprep.subr.bf16.mxu0 0
        %1352 = vmatpush1.bf16.msra.mxu0 0
        %1353 = vmatprep.subr.bf16.mxu0 0
        %1354 = vmatpush1.bf16.msra.mxu0 0
        %1355 = vmatprep.subr.bf16.mxu0 0
        %1356 = vmatpush1.bf16.msra.mxu0 0
        %1357 = vmatprep.subr.bf16.mxu0 0
        %1358 = vmatpush1.bf16.msra.mxu0 0
        %1359 = vmatprep.subr.bf16.mxu0 0
        %1360 = vmatpush1.bf16.msra.mxu0 0
        %1361 = vmatprep.subr.bf16.mxu0 0
        %1362 = vmatpush1.bf16.msra.mxu0 0
        %1363 = vmatprep.mubr.bf16.mxu0 0
        %1364 = vmatmul.mubr.bf16.gmra.mrb[0].mxu0 %v1329
        %v1365 = vpop.f32.mrb[0].mxu0
        %v1366 = vadd.f32 %v1313, %v1365
        %v1367 = vpop.f32.mrb[0].mxu0
        %v1368 = vpop.f32.mrb[0].mxu0
        %v1369 = vpop.f32.mrb[0].mxu0
        %1370 = vdwg.mxu0
        %s1371 = scalar_lea.vmem %s2, 16
        %v1372 = vld [vmem:[%s1371] sm:$0xf]
        %v1373 = vld [vmem:[%s1371 + $0x4] sm:$0xf]
        %v1374 = vld [vmem:[%s1371 + $0x8] sm:$0xf]
        %v1375 = vld [vmem:[%s1371 + $0xc] sm:$0xf]
        %s1376 = scalar_lea.vmem %s3, 1
        %v1377 = vld [vmem:[%s1376] sm:$0x1]
        %v1379 = vlaneseq
        %v1380 = vshrl.u32 %v1379, 7
        %v1381 = vsub.s32 0, %v1380
        %v1382 = vrot.slane %v1377, %v1381
        %v1388 = vunpack.c.l.b16 %v1372
        %v1389 = vunpack.c.l.b16 %v1373
        %v1390 = vunpack.c.l.b16 %v1374
        %v1391 = vunpack.c.l.b16 %v1375
        %v1392 = vpack.c.b16 %v1389, %v1388
        %v1393 = vpack.c.b16 %v1391, %v1390
        %1396 = vmatprep.subr.bf16.mxu0 0
        %1397 = vmatpush1.bf16.msra.mxu0 %v1392
        %1398 = vmatprep.subr.bf16.mxu0 0
        %1399 = vmatpush1.bf16.msra.mxu0 %v1393
        %1400 = vmatprep.subr.bf16.mxu0 0
        %1401 = vmatpush1.bf16.msra.mxu0 0
        %1402 = vmatprep.subr.bf16.mxu0 0
        %1403 = vmatpush1.bf16.msra.mxu0 0
        %1404 = vmatprep.subr.bf16.mxu0 0
        %1405 = vmatpush1.bf16.msra.mxu0 0
        %1406 = vmatprep.subr.bf16.mxu0 0
        %1407 = vmatpush1.bf16.msra.mxu0 0
        %1408 = vmatprep.subr.bf16.mxu0 0
        %1409 = vmatpush1.bf16.msra.mxu0 0
        %1410 = vmatprep.subr.bf16.mxu0 0
        %1411 = vmatpush1.bf16.msra.mxu0 0
        %1412 = vmatprep.subr.bf16.mxu0 0
        %1413 = vmatpush1.bf16.msra.mxu0 0
        %1414 = vmatprep.subr.bf16.mxu0 0
        %1415 = vmatpush1.bf16.msra.mxu0 0
        %1416 = vmatprep.subr.bf16.mxu0 0
        %1417 = vmatpush1.bf16.msra.mxu0 0
        %1418 = vmatprep.subr.bf16.mxu0 0
        %1419 = vmatpush1.bf16.msra.mxu0 0
        %1420 = vmatprep.subr.bf16.mxu0 0
        %1421 = vmatpush1.bf16.msra.mxu0 0
        %1422 = vmatprep.subr.bf16.mxu0 0
        %1423 = vmatpush1.bf16.msra.mxu0 0
        %1424 = vmatprep.subr.bf16.mxu0 0
        %1425 = vmatpush1.bf16.msra.mxu0 0
        %1426 = vmatprep.subr.bf16.mxu0 0
        %1427 = vmatpush1.bf16.msra.mxu0 0
        %1428 = vmatprep.mubr.bf16.mxu0 0
        %1429 = vmatmul.mubr.bf16.gmra.mrb[0].mxu0 %v1329
        %v1430 = vpop.f32.mrb[0].mxu0
        %v1431 = vadd.f32 %v1382, %v1430
        %v1432 = vpop.f32.mrb[0].mxu0
        %v1433 = vpop.f32.mrb[0].mxu0
        %v1434 = vpop.f32.mrb[0].mxu0
        %1435 = vdwg.mxu0
        %s1436 = scalar_lea.vmem %s2, 32
        %v1437 = vld [vmem:[%s1436] sm:$0xf]
        %v1438 = vld [vmem:[%s1436 + $0x4] sm:$0xf]
        %v1439 = vld [vmem:[%s1436 + $0x8] sm:$0xf]
        %v1440 = vld [vmem:[%s1436 + $0xc] sm:$0xf]
        %s1441 = scalar_lea.vmem %s3, 2
        %v1442 = vld [vmem:[%s1441] sm:$0x1]
        %v1444 = vlaneseq
        %v1445 = vshrl.u32 %v1444, 7
        %v1446 = vsub.s32 0, %v1445
        %v1447 = vrot.slane %v1442, %v1446
        %v1453 = vunpack.c.l.b16 %v1437
        %v1454 = vunpack.c.l.b16 %v1438
        %v1455 = vunpack.c.l.b16 %v1439
        %v1456 = vunpack.c.l.b16 %v1440
        %v1457 = vpack.c.b16 %v1454, %v1453
        %v1458 = vpack.c.b16 %v1456, %v1455
        %1461 = vmatprep.subr.bf16.mxu0 0
        %1462 = vmatpush1.bf16.msra.mxu0 %v1457
        %1463 = vmatprep.subr.bf16.mxu0 0
        %1464 = vmatpush1.bf16.msra.mxu0 %v1458
        %1465 = vmatprep.subr.bf16.mxu0 0
        %1466 = vmatpush1.bf16.msra.mxu0 0
        %1467 = vmatprep.subr.bf16.mxu0 0
        %1468 = vmatpush1.bf16.msra.mxu0 0
        %1469 = vmatprep.subr.bf16.mxu0 0
        %1470 = vmatpush1.bf16.msra.mxu0 0
        %1471 = vmatprep.subr.bf16.mxu0 0
        %1472 = vmatpush1.bf16.msra.mxu0 0
        %1473 = vmatprep.subr.bf16.mxu0 0
        %1474 = vmatpush1.bf16.msra.mxu0 0
        %1475 = vmatprep.subr.bf16.mxu0 0
        %1476 = vmatpush1.bf16.msra.mxu0 0
        %1477 = vmatprep.subr.bf16.mxu0 0
        %1478 = vmatpush1.bf16.msra.mxu0 0
        %1479 = vmatprep.subr.bf16.mxu0 0
        %1480 = vmatpush1.bf16.msra.mxu0 0
        %1481 = vmatprep.subr.bf16.mxu0 0
        %1482 = vmatpush1.bf16.msra.mxu0 0
        %1483 = vmatprep.subr.bf16.mxu0 0
        %1484 = vmatpush1.bf16.msra.mxu0 0
        %1485 = vmatprep.subr.bf16.mxu0 0
        %1486 = vmatpush1.bf16.msra.mxu0 0
        %1487 = vmatprep.subr.bf16.mxu0 0
        %1488 = vmatpush1.bf16.msra.mxu0 0
        %1489 = vmatprep.subr.bf16.mxu0 0
        %1490 = vmatpush1.bf16.msra.mxu0 0
        %1491 = vmatprep.subr.bf16.mxu0 0
        %1492 = vmatpush1.bf16.msra.mxu0 0
        %1493 = vmatprep.mubr.bf16.mxu0 0
        %1494 = vmatmul.mubr.bf16.gmra.mrb[0].mxu0 %v1329
        %v1495 = vpop.f32.mrb[0].mxu0
        %v1496 = vadd.f32 %v1447, %v1495
        %v1497 = vpop.f32.mrb[0].mxu0
        %v1498 = vpop.f32.mrb[0].mxu0
        %v1499 = vpop.f32.mrb[0].mxu0
        %1500 = vdwg.mxu0
        %s1501 = scalar_lea.vmem %s2, 48
        %v1502 = vld [vmem:[%s1501] sm:$0xf]
        %v1503 = vld [vmem:[%s1501 + $0x4] sm:$0xf]
        %v1504 = vld [vmem:[%s1501 + $0x8] sm:$0xf]
        %v1505 = vld [vmem:[%s1501 + $0xc] sm:$0xf]
        %s1506 = scalar_lea.vmem %s3, 3
        %v1507 = vld [vmem:[%s1506] sm:$0x1]
        %v1509 = vlaneseq
        %v1510 = vshrl.u32 %v1509, 7
        %v1511 = vsub.s32 0, %v1510
        %v1512 = vrot.slane %v1507, %v1511
        %v1518 = vunpack.c.l.b16 %v1502
        %v1519 = vunpack.c.l.b16 %v1503
        %v1520 = vunpack.c.l.b16 %v1504
        %v1521 = vunpack.c.l.b16 %v1505
        %v1522 = vpack.c.b16 %v1519, %v1518
        %v1523 = vpack.c.b16 %v1521, %v1520
        %1526 = vmatprep.subr.bf16.mxu0 0
        %1527 = vmatpush1.bf16.msra.mxu0 %v1522
        %1528 = vmatprep.subr.bf16.mxu0 0
        %1529 = vmatpush1.bf16.msra.mxu0 %v1523
        %1530 = vmatprep.subr.bf16.mxu0 0
        %1531 = vmatpush1.bf16.msra.mxu0 0
        %1532 = vmatprep.subr.bf16.mxu0 0
        %1533 = vmatpush1.bf16.msra.mxu0 0
        %1534 = vmatprep.subr.bf16.mxu0 0
        %1535 = vmatpush1.bf16.msra.mxu0 0
        %1536 = vmatprep.subr.bf16.mxu0 0
        %1537 = vmatpush1.bf16.msra.mxu0 0
        %1538 = vmatprep.subr.bf16.mxu0 0
        %1539 = vmatpush1.bf16.msra.mxu0 0
        %1540 = vmatprep.subr.bf16.mxu0 0
        %1541 = vmatpush1.bf16.msra.mxu0 0
        %1542 = vmatprep.subr.bf16.mxu0 0
        %1543 = vmatpush1.bf16.msra.mxu0 0
        %1544 = vmatprep.subr.bf16.mxu0 0
        %1545 = vmatpush1.bf16.msra.mxu0 0
        %1546 = vmatprep.subr.bf16.mxu0 0
        %1547 = vmatpush1.bf16.msra.mxu0 0
        %1548 = vmatprep.subr.bf16.mxu0 0
        %1549 = vmatpush1.bf16.msra.mxu0 0
        %1550 = vmatprep.subr.bf16.mxu0 0
        %1551 = vmatpush1.bf16.msra.mxu0 0
        %1552 = vmatprep.subr.bf16.mxu0 0
        %1553 = vmatpush1.bf16.msra.mxu0 0
        %1554 = vmatprep.subr.bf16.mxu0 0
        %1555 = vmatpush1.bf16.msra.mxu0 0
        %1556 = vmatprep.subr.bf16.mxu0 0
        %1557 = vmatpush1.bf16.msra.mxu0 0
        %1558 = vmatprep.mubr.bf16.mxu0 0
        %1559 = vmatmul.mubr.bf16.gmra.mrb[0].mxu0 %v1329
        %v1560 = vpop.f32.mrb[0].mxu0
        %v1561 = vadd.f32 %v1512, %v1560
        %v1562 = vpop.f32.mrb[0].mxu0
        %v1563 = vpop.f32.mrb[0].mxu0
        %v1564 = vpop.f32.mrb[0].mxu0
        %1565 = vdwg.mxu0
        %v1566 = vpack.c.bf16 %v1366, %v1366
        %v1567 = vpack.c.bf16 %v1431, %v1431
        %v1568 = vpack.c.bf16 %v1496, %v1496
        %v1569 = vpack.c.bf16 %v1561, %v1561
        %v1570 = vld [vmem:[#allocation2] sm:$0xf]
        %v1571 = vld [vmem:[#allocation2 + $0x4] sm:$0xf]
        %v1572 = vld [vmem:[#allocation2 + $0x8] sm:$0xf]
        %v1573 = vld [vmem:[#allocation2 + $0xc] sm:$0xf]
        %v1574 = vld [vmem:[#allocation3] sm:$0xf]
        %v1575 = vld [vmem:[#allocation3 + $0x4] sm:$0xf]
        %v1576 = vld [vmem:[#allocation3 + $0x8] sm:$0xf]
        %v1577 = vld [vmem:[#allocation3 + $0xc] sm:$0xf]
        %vm1578 = vcmask 64512
        %v1580 = vsel %vm1578, %v1566, 0
        %vm1582 = vcmask 1043456
        %v1584 = vsel %vm1582, %v1570, 0
        %1586 = vmatprep.subr.bf16.mxu0 0
        %1587 = vmatpush1.bf16.msra.mxu0 %v1584
        %1588 = vmatprep.subr.bf16.mxu0 0
        %1589 = vmatpush1.bf16.msra.mxu0 0
        %1590 = vmatprep.subr.bf16.mxu0 0
        %1591 = vmatpush1.bf16.msra.mxu0 0
        %1592 = vmatprep.subr.bf16.mxu0 0
        %1593 = vmatpush1.bf16.msra.mxu0 0
        %1594 = vmatprep.subr.bf16.mxu0 0
        %1595 = vmatpush1.bf16.msra.mxu0 0
        %1596 = vmatprep.subr.bf16.mxu0 0
        %1597 = vmatpush1.bf16.msra.mxu0 0
        %1598 = vmatprep.subr.bf16.mxu0 0
        %1599 = vmatpush1.bf16.msra.mxu0 0
        %1600 = vmatprep.subr.bf16.mxu0 0
        %1601 = vmatpush1.bf16.msra.mxu0 0
        %1602 = vmatprep.subr.bf16.mxu0 0
        %1603 = vmatpush1.bf16.msra.mxu0 0
        %1604 = vmatprep.subr.bf16.mxu0 0
        %1605 = vmatpush1.bf16.msra.mxu0 0
        %1606 = vmatprep.subr.bf16.mxu0 0
        %1607 = vmatpush1.bf16.msra.mxu0 0
        %1608 = vmatprep.subr.bf16.mxu0 0
        %1609 = vmatpush1.bf16.msra.mxu0 0
        %1610 = vmatprep.subr.bf16.mxu0 0
        %1611 = vmatpush1.bf16.msra.mxu0 0
        %1612 = vmatprep.subr.bf16.mxu0 0
        %1613 = vmatpush1.bf16.msra.mxu0 0
        %1614 = vmatprep.subr.bf16.mxu0 0
        %1615 = vmatpush1.bf16.msra.mxu0 0
        %1616 = vmatprep.subr.bf16.mxu0 0
        %1617 = vmatpush1.bf16.msra.mxu0 0
        %1618 = vmatprep.mubr.bf16.mxu0 0
        %1619 = vmatmul.mubr.bf16.gmra.mrb[0].mxu0 %v1580
        %v1620 = vpop.f32.mrb[0].mxu0
        %v1621 = vadd.f32 %v1296, %v1620
        %v1622 = vpop.f32.mrb[0].mxu0
        %v1623 = vpop.f32.mrb[0].mxu0
        %v1624 = vpop.f32.mrb[0].mxu0
        %1625 = vdwg.mxu0
        %v1627 = vsel %vm1578, %v1567, 0
        %v1630 = vsel %vm1582, %v1571, 0
        %1632 = vmatprep.subr.bf16.mxu0 0
        %1633 = vmatpush1.bf16.msra.mxu0 %v1630
        %1634 = vmatprep.subr.bf16.mxu0 0
        %1635 = vmatpush1.bf16.msra.mxu0 0
        %1636 = vmatprep.subr.bf16.mxu0 0
        %1637 = vmatpush1.bf16.msra.mxu0 0
        %1638 = vmatprep.subr.bf16.mxu0 0
        %1639 = vmatpush1.bf16.msra.mxu0 0
        %1640 = vmatprep.subr.bf16.mxu0 0
        %1641 = vmatpush1.bf16.msra.mxu0 0
        %1642 = vmatprep.subr.bf16.mxu0 0
        %1643 = vmatpush1.bf16.msra.mxu0 0
        %1644 = vmatprep.subr.bf16.mxu0 0
        %1645 = vmatpush1.bf16.msra.mxu0 0
        %1646 = vmatprep.subr.bf16.mxu0 0
        %1647 = vmatpush1.bf16.msra.mxu0 0
        %1648 = vmatprep.subr.bf16.mxu0 0
        %1649 = vmatpush1.bf16.msra.mxu0 0
        %1650 = vmatprep.subr.bf16.mxu0 0
        %1651 = vmatpush1.bf16.msra.mxu0 0
        %1652 = vmatprep.subr.bf16.mxu0 0
        %1653 = vmatpush1.bf16.msra.mxu0 0
        %1654 = vmatprep.subr.bf16.mxu0 0
        %1655 = vmatpush1.bf16.msra.mxu0 0
        %1656 = vmatprep.subr.bf16.mxu0 0
        %1657 = vmatpush1.bf16.msra.mxu0 0
        %1658 = vmatprep.subr.bf16.mxu0 0
        %1659 = vmatpush1.bf16.msra.mxu0 0
        %1660 = vmatprep.subr.bf16.mxu0 0
        %1661 = vmatpush1.bf16.msra.mxu0 0
        %1662 = vmatprep.subr.bf16.mxu0 0
        %1663 = vmatpush1.bf16.msra.mxu0 0
        %1664 = vmatprep.mubr.bf16.mxu0 0
        %1665 = vmatmul.mubr.bf16.gmra.mrb[0].mxu0 %v1627
        %v1666 = vpop.f32.mrb[0].mxu0
        %v1667 = vadd.f32 %v1296, %v1666
        %v1668 = vpop.f32.mrb[0].mxu0
        %v1669 = vpop.f32.mrb[0].mxu0
        %v1670 = vpop.f32.mrb[0].mxu0
        %1671 = vdwg.mxu0
        %v1673 = vsel %vm1578, %v1568, 0
        %v1676 = vsel %vm1582, %v1572, 0
        %1678 = vmatprep.subr.bf16.mxu0 0
        %1679 = vmatpush1.bf16.msra.mxu0 %v1676
        %1680 = vmatprep.subr.bf16.mxu0 0
        %1681 = vmatpush1.bf16.msra.mxu0 0
        %1682 = vmatprep.subr.bf16.mxu0 0
        %1683 = vmatpush1.bf16.msra.mxu0 0
        %1684 = vmatprep.subr.bf16.mxu0 0
        %1685 = vmatpush1.bf16.msra.mxu0 0
        %1686 = vmatprep.subr.bf16.mxu0 0
        %1687 = vmatpush1.bf16.msra.mxu0 0
        %1688 = vmatprep.subr.bf16.mxu0 0
        %1689 = vmatpush1.bf16.msra.mxu0 0
        %1690 = vmatprep.subr.bf16.mxu0 0
        %1691 = vmatpush1.bf16.msra.mxu0 0
        %1692 = vmatprep.subr.bf16.mxu0 0
        %1693 = vmatpush1.bf16.msra.mxu0 0
        %1694 = vmatprep.subr.bf16.mxu0 0
        %1695 = vmatpush1.bf16.msra.mxu0 0
        %1696 = vmatprep.subr.bf16.mxu0 0
        %1697 = vmatpush1.bf16.msra.mxu0 0
        %1698 = vmatprep.subr.bf16.mxu0 0
        %1699 = vmatpush1.bf16.msra.mxu0 0
        %1700 = vmatprep.subr.bf16.mxu0 0
        %1701 = vmatpush1.bf16.msra.mxu0 0
        %1702 = vmatprep.subr.bf16.mxu0 0
        %1703 = vmatpush1.bf16.msra.mxu0 0
        %1704 = vmatprep.subr.bf16.mxu0 0
        %1705 = vmatpush1.bf16.msra.mxu0 0
        %1706 = vmatprep.subr.bf16.mxu0 0
        %1707 = vmatpush1.bf16.msra.mxu0 0
        %1708 = vmatprep.subr.bf16.mxu0 0
        %1709 = vmatpush1.bf16.msra.mxu0 0
        %1710 = vmatprep.mubr.bf16.mxu0 0
        %1711 = vmatmul.mubr.bf16.gmra.mrb[0].mxu0 %v1673
        %v1712 = vpop.f32.mrb[0].mxu0
        %v1713 = vadd.f32 %v1296, %v1712
        %v1714 = vpop.f32.mrb[0].mxu0
        %v1715 = vpop.f32.mrb[0].mxu0
        %v1716 = vpop.f32.mrb[0].mxu0
        %1717 = vdwg.mxu0
        %v1719 = vsel %vm1578, %v1569, 0
        %v1722 = vsel %vm1582, %v1573, 0
        %1724 = vmatprep.subr.bf16.mxu0 0
        %1725 = vmatpush1.bf16.msra.mxu0 %v1722
        %1726 = vmatprep.subr.bf16.mxu0 0
        %1727 = vmatpush1.bf16.msra.mxu0 0
        %1728 = vmatprep.subr.bf16.mxu0 0
        %1729 = vmatpush1.bf16.msra.mxu0 0
        %1730 = vmatprep.subr.bf16.mxu0 0
        %1731 = vmatpush1.bf16.msra.mxu0 0
        %1732 = vmatprep.subr.bf16.mxu0 0
        %1733 = vmatpush1.bf16.msra.mxu0 0
        %1734 = vmatprep.subr.bf16.mxu0 0
        %1735 = vmatpush1.bf16.msra.mxu0 0
        %1736 = vmatprep.subr.bf16.mxu0 0
        %1737 = vmatpush1.bf16.msra.mxu0 0
        %1738 = vmatprep.subr.bf16.mxu0 0
        %1739 = vmatpush1.bf16.msra.mxu0 0
        %1740 = vmatprep.subr.bf16.mxu0 0
        %1741 = vmatpush1.bf16.msra.mxu0 0
        %1742 = vmatprep.subr.bf16.mxu0 0
        %1743 = vmatpush1.bf16.msra.mxu0 0
        %1744 = vmatprep.subr.bf16.mxu0 0
        %1745 = vmatpush1.bf16.msra.mxu0 0
        %1746 = vmatprep.subr.bf16.mxu0 0
        %1747 = vmatpush1.bf16.msra.mxu0 0
        %1748 = vmatprep.subr.bf16.mxu0 0
        %1749 = vmatpush1.bf16.msra.mxu0 0
        %1750 = vmatprep.subr.bf16.mxu0 0
        %1751 = vmatpush1.bf16.msra.mxu0 0
        %1752 = vmatprep.subr.bf16.mxu0 0
        %1753 = vmatpush1.bf16.msra.mxu0 0
        %1754 = vmatprep.subr.bf16.mxu0 0
        %1755 = vmatpush1.bf16.msra.mxu0 0
        %1756 = vmatprep.mubr.bf16.mxu0 0
        %1757 = vmatmul.mubr.bf16.gmra.mrb[0].mxu0 %v1719
        %v1758 = vpop.f32.mrb[0].mxu0
        %v1759 = vadd.f32 %v1296, %v1758
        %v1760 = vpop.f32.mrb[0].mxu0
        %v1761 = vpop.f32.mrb[0].mxu0
        %v1762 = vpop.f32.mrb[0].mxu0
        %1763 = vdwg.mxu0
        %v1764 = vsel %vm1578, %v1621, -inf
        %1765 = vmax.xlane.f32.xlu0 %v1764
        %v1766 = vpop.xlane.xlu0 %1765
        %v1767 = vsel %vm1578, %v1667, -inf
        %1768 = vmax.xlane.f32.xlu0 %v1767
        %v1769 = vpop.xlane.xlu0 %1768
        %v1770 = vsel %vm1578, %v1713, -inf
        %1771 = vmax.xlane.f32.xlu0 %v1770
        %v1772 = vpop.xlane.xlu0 %1771
        %v1773 = vsel %vm1578, %v1759, -inf
        %1774 = vmax.xlane.f32.xlu0 %v1773
        %v1775 = vpop.xlane.xlu0 %1774
        %v1776 = vsub.f32 %v1621, %v1766
        %v1777 = vsub.f32 %v1667, %v1769
        %v1778 = vsub.f32 %v1713, %v1772
        %v1779 = vsub.f32 %v1759, %v1775
        %v1780 = vmul.f32 %v1776, 1.442695
        %v1781 = vpow.pop %v1780
        %v1782 = vmul.f32 %v1777, 1.442695
        %v1783 = vpow.pop %v1782
        %v1784 = vmul.f32 %v1778, 1.442695
        %v1785 = vpow.pop %v1784
        %v1786 = vmul.f32 %v1779, 1.442695
        %v1787 = vpow.pop %v1786
        %v1788 = vsel %vm1578, %v1781, 0.0
        %1789 = vadd.xlane.f32.xlu0 %v1788
        %v1790 = vpop.xlane.xlu0 %1789
        %v1791 = vsel %vm1578, %v1783, 0.0
        %1792 = vadd.xlane.f32.xlu0 %v1791
        %v1793 = vpop.xlane.xlu0 %1792
        %v1794 = vsel %vm1578, %v1785, 0.0
        %1795 = vadd.xlane.f32.xlu0 %v1794
        %v1796 = vpop.xlane.xlu0 %1795
        %v1797 = vsel %vm1578, %v1787, 0.0
        %1798 = vadd.xlane.f32.xlu0 %v1797
        %v1799 = vpop.xlane.xlu0 %1798
        %v1800 = vrcp.pop %v1790
        %v1801 = vrcp.pop %v1793
        %v1802 = vrcp.pop %v1796
        %v1803 = vrcp.pop %v1799
        %v1804 = vmul.f32 %v1781, %v1800
        %v1805 = vmul.f32 %v1783, %v1801
        %v1806 = vmul.f32 %v1785, %v1802
        %v1807 = vmul.f32 %v1787, %v1803
        %v1808 = vpack.c.bf16 %v1804, %v1804
        %v1809 = vpack.c.bf16 %v1805, %v1805
        %v1810 = vpack.c.bf16 %v1806, %v1806
        %v1811 = vpack.c.bf16 %v1807, %v1807
        %v1813 = vsel %vm1578, %v1808, 0
        %v1816 = vsel %vm1582, %v1574, 0
        %1818 = vmatprep.subr.bf16.mxu0 0
        %1819 = vmatpush1.bf16.msra.mxu0 %v1816
        %1820 = vmatprep.subr.bf16.mxu0 0
        %1821 = vmatpush1.bf16.msra.mxu0 0
        %1822 = vmatprep.subr.bf16.mxu0 0
        %1823 = vmatpush1.bf16.msra.mxu0 0
        %1824 = vmatprep.subr.bf16.mxu0 0
        %1825 = vmatpush1.bf16.msra.mxu0 0
        %1826 = vmatprep.subr.bf16.mxu0 0
        %1827 = vmatpush1.bf16.msra.mxu0 0
        %1828 = vmatprep.subr.bf16.mxu0 0
        %1829 = vmatpush1.bf16.msra.mxu0 0
        %1830 = vmatprep.subr.bf16.mxu0 0
        %1831 = vmatpush1.bf16.msra.mxu0 0
        %1832 = vmatprep.subr.bf16.mxu0 0
        %1833 = vmatpush1.bf16.msra.mxu0 0
        %1834 = vmatprep.subr.bf16.mxu0 0
        %1835 = vmatpush1.bf16.msra.mxu0 0
        %1836 = vmatprep.subr.bf16.mxu0 0
        %1837 = vmatpush1.bf16.msra.mxu0 0
        %1838 = vmatprep.subr.bf16.mxu0 0
        %1839 = vmatpush1.bf16.msra.mxu0 0
        %1840 = vmatprep.subr.bf16.mxu0 0
        %1841 = vmatpush1.bf16.msra.mxu0 0
        %1842 = vmatprep.subr.bf16.mxu0 0
        %1843 = vmatpush1.bf16.msra.mxu0 0
        %1844 = vmatprep.subr.bf16.mxu0 0
        %1845 = vmatpush1.bf16.msra.mxu0 0
        %1846 = vmatprep.subr.bf16.mxu0 0
        %1847 = vmatpush1.bf16.msra.mxu0 0
        %1848 = vmatprep.subr.bf16.mxu0 0
        %1849 = vmatpush1.bf16.msra.mxu0 0
        %1850 = vmatprep.mubr.bf16.mxu0 0
        %1851 = vmatmul.mubr.bf16.gmra.mrb[0].mxu0 %v1813
        %v1852 = vpop.f32.mrb[0].mxu0
        %v1853 = vadd.f32 0.0, %v1852
        %v1854 = vpop.f32.mrb[0].mxu0
        %v1855 = vpop.f32.mrb[0].mxu0
        %v1856 = vpop.f32.mrb[0].mxu0
        %1857 = vdwg.mxu0
        %v1859 = vsel %vm1578, %v1809, 0
        %v1862 = vsel %vm1582, %v1575, 0
        %1864 = vmatprep.subr.bf16.mxu0 0
        %1865 = vmatpush1.bf16.msra.mxu0 %v1862
        %1866 = vmatprep.subr.bf16.mxu0 0
        %1867 = vmatpush1.bf16.msra.mxu0 0
        %1868 = vmatprep.subr.bf16.mxu0 0
        %1869 = vmatpush1.bf16.msra.mxu0 0
        %1870 = vmatprep.subr.bf16.mxu0 0
        %1871 = vmatpush1.bf16.msra.mxu0 0
        %1872 = vmatprep.subr.bf16.mxu0 0
        %1873 = vmatpush1.bf16.msra.mxu0 0
        %1874 = vmatprep.subr.bf16.mxu0 0
        %1875 = vmatpush1.bf16.msra.mxu0 0
        %1876 = vmatprep.subr.bf16.mxu0 0
        %1877 = vmatpush1.bf16.msra.mxu0 0
        %1878 = vmatprep.subr.bf16.mxu0 0
        %1879 = vmatpush1.bf16.msra.mxu0 0
        %1880 = vmatprep.subr.bf16.mxu0 0
        %1881 = vmatpush1.bf16.msra.mxu0 0
        %1882 = vmatprep.subr.bf16.mxu0 0
        %1883 = vmatpush1.bf16.msra.mxu0 0
        %1884 = vmatprep.subr.bf16.mxu0 0
        %1885 = vmatpush1.bf16.msra.mxu0 0
        %1886 = vmatprep.subr.bf16.mxu0 0
        %1887 = vmatpush1.bf16.msra.mxu0 0
        %1888 = vmatprep.subr.bf16.mxu0 0
        %1889 = vmatpush1.bf16.msra.mxu0 0
        %1890 = vmatprep.subr.bf16.mxu0 0
        %1891 = vmatpush1.bf16.msra.mxu0 0
        %1892 = vmatprep.subr.bf16.mxu0 0
        %1893 = vmatpush1.bf16.msra.mxu0 0
        %1894 = vmatprep.subr.bf16.mxu0 0
        %1895 = vmatpush1.bf16.msra.mxu0 0
        %1896 = vmatprep.mubr.bf16.mxu0 0
        %1897 = vmatmul.mubr.bf16.gmra.mrb[0].mxu0 %v1859
        %v1898 = vpop.f32.mrb[0].mxu0
        %v1899 = vadd.f32 0.0, %v1898
        %v1900 = vpop.f32.mrb[0].mxu0
        %v1901 = vpop.f32.mrb[0].mxu0
        %v1902 = vpop.f32.mrb[0].mxu0
        %1903 = vdwg.mxu0
        %v1905 = vsel %vm1578, %v1810, 0
        %v1908 = vsel %vm1582, %v1576, 0
        %1910 = vmatprep.subr.bf16.mxu0 0
        %1911 = vmatpush1.bf16.msra.mxu0 %v1908
        %1912 = vmatprep.subr.bf16.mxu0 0
        %1913 = vmatpush1.bf16.msra.mxu0 0
        %1914 = vmatprep.subr.bf16.mxu0 0
        %1915 = vmatpush1.bf16.msra.mxu0 0
        %1916 = vmatprep.subr.bf16.mxu0 0
        %1917 = vmatpush1.bf16.msra.mxu0 0
        %1918 = vmatprep.subr.bf16.mxu0 0
        %1919 = vmatpush1.bf16.msra.mxu0 0
        %1920 = vmatprep.subr.bf16.mxu0 0
        %1921 = vmatpush1.bf16.msra.mxu0 0
        %1922 = vmatprep.subr.bf16.mxu0 0
        %1923 = vmatpush1.bf16.msra.mxu0 0
        %1924 = vmatprep.subr.bf16.mxu0 0
        %1925 = vmatpush1.bf16.msra.mxu0 0
        %1926 = vmatprep.subr.bf16.mxu0 0
        %1927 = vmatpush1.bf16.msra.mxu0 0
        %1928 = vmatprep.subr.bf16.mxu0 0
        %1929 = vmatpush1.bf16.msra.mxu0 0
        %1930 = vmatprep.subr.bf16.mxu0 0
        %1931 = vmatpush1.bf16.msra.mxu0 0
        %1932 = vmatprep.subr.bf16.mxu0 0
        %1933 = vmatpush1.bf16.msra.mxu0 0
        %1934 = vmatprep.subr.bf16.mxu0 0
        %1935 = vmatpush1.bf16.msra.mxu0 0
        %1936 = vmatprep.subr.bf16.mxu0 0
        %1937 = vmatpush1.bf16.msra.mxu0 0
        %1938 = vmatprep.subr.bf16.mxu0 0
        %1939 = vmatpush1.bf16.msra.mxu0 0
        %1940 = vmatprep.subr.bf16.mxu0 0
        %1941 = vmatpush1.bf16.msra.mxu0 0
        %1942 = vmatprep.mubr.bf16.mxu0 0
        %1943 = vmatmul.mubr.bf16.gmra.mrb[0].mxu0 %v1905
        %v1944 = vpop.f32.mrb[0].mxu0
        %v1945 = vadd.f32 0.0, %v1944
        %v1946 = vpop.f32.mrb[0].mxu0
        %v1947 = vpop.f32.mrb[0].mxu0
        %v1948 = vpop.f32.mrb[0].mxu0
        %1949 = vdwg.mxu0
        %v1951 = vsel %vm1578, %v1811, 0
        %v1954 = vsel %vm1582, %v1577, 0
        %1956 = vmatprep.subr.bf16.mxu0 0
        %1957 = vmatpush1.bf16.msra.mxu0 %v1954
        %1958 = vmatprep.subr.bf16.mxu0 0
        %1959 = vmatpush1.bf16.msra.mxu0 0
        %1960 = vmatprep.subr.bf16.mxu0 0
        %1961 = vmatpush1.bf16.msra.mxu0 0
        %1962 = vmatprep.subr.bf16.mxu0 0
        %1963 = vmatpush1.bf16.msra.mxu0 0
        %1964 = vmatprep.subr.bf16.mxu0 0
        %1965 = vmatpush1.bf16.msra.mxu0 0
        %1966 = vmatprep.subr.bf16.mxu0 0
        %1967 = vmatpush1.bf16.msra.mxu0 0
        %1968 = vmatprep.subr.bf16.mxu0 0
        %1969 = vmatpush1.bf16.msra.mxu0 0
        %1970 = vmatprep.subr.bf16.mxu0 0
        %1971 = vmatpush1.bf16.msra.mxu0 0
        %1972 = vmatprep.subr.bf16.mxu0 0
        %1973 = vmatpush1.bf16.msra.mxu0 0
        %1974 = vmatprep.subr.bf16.mxu0 0
        %1975 = vmatpush1.bf16.msra.mxu0 0
        %1976 = vmatprep.subr.bf16.mxu0 0
        %1977 = vmatpush1.bf16.msra.mxu0 0
        %1978 = vmatprep.subr.bf16.mxu0 0
        %1979 = vmatpush1.bf16.msra.mxu0 0
        %1980 = vmatprep.subr.bf16.mxu0 0
        %1981 = vmatpush1.bf16.msra.mxu0 0
        %1982 = vmatprep.subr.bf16.mxu0 0
        %1983 = vmatpush1.bf16.msra.mxu0 0
        %1984 = vmatprep.subr.bf16.mxu0 0
        %1985 = vmatpush1.bf16.msra.mxu0 0
        %1986 = vmatprep.subr.bf16.mxu0 0
        %1987 = vmatpush1.bf16.msra.mxu0 0
        %1988 = vmatprep.mubr.bf16.mxu0 0
        %1989 = vmatmul.mubr.bf16.gmra.mrb[0].mxu0 %v1951
        %v1990 = vpop.f32.mrb[0].mxu0
        %v1991 = vadd.f32 0.0, %v1990
        %v1992 = vpop.f32.mrb[0].mxu0
        %v1993 = vpop.f32.mrb[0].mxu0
        %v1994 = vpop.f32.mrb[0].mxu0
        %1995 = vdwg.mxu0
        %v1996 = vpack.c.bf16 %v1853, %v1853
        %v1997 = vld [vmem:[%s8] sm:$0xf]
        %v1999 = vsel %vm1578, %v1996, 0
        %v2002 = vsel %vm1582, %v1997, 0
        %2004 = vmatprep.subr.bf16.mxu0 0
        %2005 = vmatpush1.bf16.msra.mxu0 %v2002
        %2006 = vmatprep.subr.bf16.mxu0 0
        %2007 = vmatpush1.bf16.msra.mxu0 0
        %2008 = vmatprep.subr.bf16.mxu0 0
        %2009 = vmatpush1.bf16.msra.mxu0 0
        %2010 = vmatprep.subr.bf16.mxu0 0
        %2011 = vmatpush1.bf16.msra.mxu0 0
        %2012 = vmatprep.subr.bf16.mxu0 0
        %2013 = vmatpush1.bf16.msra.mxu0 0
        %2014 = vmatprep.subr.bf16.mxu0 0
        %2015 = vmatpush1.bf16.msra.mxu0 0
        %2016 = vmatprep.subr.bf16.mxu0 0
        %2017 = vmatpush1.bf16.msra.mxu0 0
        %2018 = vmatprep.subr.bf16.mxu0 0
        %2019 = vmatpush1.bf16.msra.mxu0 0
        %2020 = vmatprep.subr.bf16.mxu0 0
        %2021 = vmatpush1.bf16.msra.mxu0 0
        %2022 = vmatprep.subr.bf16.mxu0 0
        %2023 = vmatpush1.bf16.msra.mxu0 0
        %2024 = vmatprep.subr.bf16.mxu0 0
        %2025 = vmatpush1.bf16.msra.mxu0 0
        %2026 = vmatprep.subr.bf16.mxu0 0
        %2027 = vmatpush1.bf16.msra.mxu0 0
        %2028 = vmatprep.subr.bf16.mxu0 0
        %2029 = vmatpush1.bf16.msra.mxu0 0
        %2030 = vmatprep.subr.bf16.mxu0 0
        %2031 = vmatpush1.bf16.msra.mxu0 0
        %2032 = vmatprep.subr.bf16.mxu0 0
        %2033 = vmatpush1.bf16.msra.mxu0 0
        %2034 = vmatprep.subr.bf16.mxu0 0
        %2035 = vmatpush1.bf16.msra.mxu0 0
        %2036 = vmatprep.mubr.bf16.mxu0 0
        %2037 = vmatmul.mubr.bf16.gmra.mrb[0].mxu0 %v1999
        %v2038 = vpop.f32.mrb[0].mxu0
        %v2039 = vadd.f32 0.0, %v2038
        %v2040 = vpop.f32.mrb[0].mxu0
        %v2041 = vpop.f32.mrb[0].mxu0
        %v2042 = vpop.f32.mrb[0].mxu0
        %2043 = vdwg.mxu0
        %v2044 = vadd.f32 %v1302, %v2039
        %v2045 = vpack.c.bf16 %v1899, %v1899
        %s2046 = scalar_lea.vmem %s8, 4
        %v2047 = vld [vmem:[%s2046] sm:$0xf]
        %v2049 = vsel %vm1578, %v2045, 0
        %v2052 = vsel %vm1582, %v2047, 0
        %2054 = vmatprep.subr.bf16.mxu0 0
        %2055 = vmatpush1.bf16.msra.mxu0 %v2052
        %2056 = vmatprep.subr.bf16.mxu0 0
        %2057 = vmatpush1.bf16.msra.mxu0 0
        %2058 = vmatprep.subr.bf16.mxu0 0
        %2059 = vmatpush1.bf16.msra.mxu0 0
        %2060 = vmatprep.subr.bf16.mxu0 0
        %2061 = vmatpush1.bf16.msra.mxu0 0
        %2062 = vmatprep.subr.bf16.mxu0 0
        %2063 = vmatpush1.bf16.msra.mxu0 0
        %2064 = vmatprep.subr.bf16.mxu0 0
        %2065 = vmatpush1.bf16.msra.mxu0 0
        %2066 = vmatprep.subr.bf16.mxu0 0
        %2067 = vmatpush1.bf16.msra.mxu0 0
        %2068 = vmatprep.subr.bf16.mxu0 0
        %2069 = vmatpush1.bf16.msra.mxu0 0
        %2070 = vmatprep.subr.bf16.mxu0 0
        %2071 = vmatpush1.bf16.msra.mxu0 0
        %2072 = vmatprep.subr.bf16.mxu0 0
        %2073 = vmatpush1.bf16.msra.mxu0 0
        %2074 = vmatprep.subr.bf16.mxu0 0
        %2075 = vmatpush1.bf16.msra.mxu0 0
        %2076 = vmatprep.subr.bf16.mxu0 0
        %2077 = vmatpush1.bf16.msra.mxu0 0
        %2078 = vmatprep.subr.bf16.mxu0 0
        %2079 = vmatpush1.bf16.msra.mxu0 0
        %2080 = vmatprep.subr.bf16.mxu0 0
        %2081 = vmatpush1.bf16.msra.mxu0 0
        %2082 = vmatprep.subr.bf16.mxu0 0
        %2083 = vmatpush1.bf16.msra.mxu0 0
        %2084 = vmatprep.subr.bf16.mxu0 0
        %2085 = vmatpush1.bf16.msra.mxu0 0
        %2086 = vmatprep.mubr.bf16.mxu0 0
        %2087 = vmatmul.mubr.bf16.gmra.mrb[0].mxu0 %v2049
        %v2088 = vpop.f32.mrb[0].mxu0
        %v2089 = vadd.f32 0.0, %v2088
        %v2090 = vpop.f32.mrb[0].mxu0
        %v2091 = vpop.f32.mrb[0].mxu0
        %v2092 = vpop.f32.mrb[0].mxu0
        %2093 = vdwg.mxu0
        %v2094 = vadd.f32 %v2044, %v2089
        %v2095 = vpack.c.bf16 %v1945, %v1945
        %s2096 = scalar_lea.vmem %s8, 8
        %v2097 = vld [vmem:[%s2096] sm:$0xf]
        %v2099 = vsel %vm1578, %v2095, 0
        %v2102 = vsel %vm1582, %v2097, 0
        %2104 = vmatprep.subr.bf16.mxu0 0
        %2105 = vmatpush1.bf16.msra.mxu0 %v2102
        %2106 = vmatprep.subr.bf16.mxu0 0
        %2107 = vmatpush1.bf16.msra.mxu0 0
        %2108 = vmatprep.subr.bf16.mxu0 0
        %2109 = vmatpush1.bf16.msra.mxu0 0
        %2110 = vmatprep.subr.bf16.mxu0 0
        %2111 = vmatpush1.bf16.msra.mxu0 0
        %2112 = vmatprep.subr.bf16.mxu0 0
        %2113 = vmatpush1.bf16.msra.mxu0 0
        %2114 = vmatprep.subr.bf16.mxu0 0
        %2115 = vmatpush1.bf16.msra.mxu0 0
        %2116 = vmatprep.subr.bf16.mxu0 0
        %2117 = vmatpush1.bf16.msra.mxu0 0
        %2118 = vmatprep.subr.bf16.mxu0 0
        %2119 = vmatpush1.bf16.msra.mxu0 0
        %2120 = vmatprep.subr.bf16.mxu0 0
        %2121 = vmatpush1.bf16.msra.mxu0 0
        %2122 = vmatprep.subr.bf16.mxu0 0
        %2123 = vmatpush1.bf16.msra.mxu0 0
        %2124 = vmatprep.subr.bf16.mxu0 0
        %2125 = vmatpush1.bf16.msra.mxu0 0
        %2126 = vmatprep.subr.bf16.mxu0 0
        %2127 = vmatpush1.bf16.msra.mxu0 0
        %2128 = vmatprep.subr.bf16.mxu0 0
        %2129 = vmatpush1.bf16.msra.mxu0 0
        %2130 = vmatprep.subr.bf16.mxu0 0
        %2131 = vmatpush1.bf16.msra.mxu0 0
        %2132 = vmatprep.subr.bf16.mxu0 0
        %2133 = vmatpush1.bf16.msra.mxu0 0
        %2134 = vmatprep.subr.bf16.mxu0 0
        %2135 = vmatpush1.bf16.msra.mxu0 0
        %2136 = vmatprep.mubr.bf16.mxu0 0
        %2137 = vmatmul.mubr.bf16.gmra.mrb[0].mxu0 %v2099
        %v2138 = vpop.f32.mrb[0].mxu0
        %v2139 = vadd.f32 0.0, %v2138
        %v2140 = vpop.f32.mrb[0].mxu0
        %v2141 = vpop.f32.mrb[0].mxu0
        %v2142 = vpop.f32.mrb[0].mxu0
        %2143 = vdwg.mxu0
        %v2144 = vadd.f32 %v2094, %v2139
        %v2145 = vpack.c.bf16 %v1991, %v1991
        %s2146 = scalar_lea.vmem %s8, 12
        %v2147 = vld [vmem:[%s2146] sm:$0xf]
        %v2149 = vsel %vm1578, %v2145, 0
        %v2152 = vsel %vm1582, %v2147, 0
        %2154 = vmatprep.subr.bf16.mxu0 0
        %2155 = vmatpush1.bf16.msra.mxu0 %v2152
        %2156 = vmatprep.subr.bf16.mxu0 0
        %2157 = vmatpush1.bf16.msra.mxu0 0
        %2158 = vmatprep.subr.bf16.mxu0 0
        %2159 = vmatpush1.bf16.msra.mxu0 0
        %2160 = vmatprep.subr.bf16.mxu0 0
        %2161 = vmatpush1.bf16.msra.mxu0 0
        %2162 = vmatprep.subr.bf16.mxu0 0
        %2163 = vmatpush1.bf16.msra.mxu0 0
        %2164 = vmatprep.subr.bf16.mxu0 0
        %2165 = vmatpush1.bf16.msra.mxu0 0
        %2166 = vmatprep.subr.bf16.mxu0 0
        %2167 = vmatpush1.bf16.msra.mxu0 0
        %2168 = vmatprep.subr.bf16.mxu0 0
        %2169 = vmatpush1.bf16.msra.mxu0 0
        %2170 = vmatprep.subr.bf16.mxu0 0
        %2171 = vmatpush1.bf16.msra.mxu0 0
        %2172 = vmatprep.subr.bf16.mxu0 0
        %2173 = vmatpush1.bf16.msra.mxu0 0
        %2174 = vmatprep.subr.bf16.mxu0 0
        %2175 = vmatpush1.bf16.msra.mxu0 0
        %2176 = vmatprep.subr.bf16.mxu0 0
        %2177 = vmatpush1.bf16.msra.mxu0 0
        %2178 = vmatprep.subr.bf16.mxu0 0
        %2179 = vmatpush1.bf16.msra.mxu0 0
        %2180 = vmatprep.subr.bf16.mxu0 0
        %2181 = vmatpush1.bf16.msra.mxu0 0
        %2182 = vmatprep.subr.bf16.mxu0 0
        %2183 = vmatpush1.bf16.msra.mxu0 0
        %2184 = vmatprep.subr.bf16.mxu0 0
        %2185 = vmatpush1.bf16.msra.mxu0 0
        %2186 = vmatprep.mubr.bf16.mxu0 0
        %2187 = vmatmul.mubr.bf16.gmra.mrb[0].mxu0 %v2149
        %v2188 = vpop.f32.mrb[0].mxu0
        %v2189 = vadd.f32 0.0, %v2188
        %v2190 = vpop.f32.mrb[0].mxu0
        %v2191 = vpop.f32.mrb[0].mxu0
        %v2192 = vpop.f32.mrb[0].mxu0
        %2193 = vdwg.mxu0
        %v2194 = vadd.f32 %v2144, %v2189
        %v2195 = vadd.f32 %v2194, %v1293
        %v2196 = vld [vmem:[%s10] sm:$0x1]
        %v2197 = vld [vmem:[%s11] sm:$0x1]
        %v2198 = vsel %vm1327, %v2195, 0.0
        %2199 = vadd.xlane.f32.xlu0 %v2198
        %v2200 = vpop.xlane.xlu0 %2199
        %v2201 = vrcp.pop 32.0
        %v2202 = vmul.f32 %v2200, %v2201
        %v2203 = vsub.f32 %v2195, %v2202
        %v2204 = vmul.f32 %v2203, %v2203
        %v2205 = vsel %vm1327, %v2204, 0.0
        %2206 = vadd.xlane.f32.xlu0 %v2205
        %v2207 = vpop.xlane.xlu0 %2206
        %v2208 = vmul.f32 %v2207, %v2201
        %v2209 = vadd.f32 %v2208, 1e-05
        %v2210 = vrsqrt.pop %v2209
        %v2211 = vmul.f32 %v2203, %v2210
        %v2213 = vlaneseq
        %v2214 = vshrl.u32 %v2213, 7
        %v2215 = vsub.s32 0, %v2214
        %v2216 = vrot.slane %v2196, %v2215
        %v2218 = vmul.f32 %v2211, %v2216
        %v2220 = vlaneseq
        %v2221 = vshrl.u32 %v2220, 7
        %v2222 = vsub.s32 0, %v2221
        %v2223 = vrot.slane %v2197, %v2222
        %v2225 = vadd.f32 %v2218, %v2223
        %v2226 = vpack.c.bf16 %v2225, %v2225
        %v2227 = vld [vmem:[%s12] sm:$0xf]
        %v2228 = vld [vmem:[%s12 + $0x4] sm:$0xf]
        %v2229 = vld [vmem:[%s12 + $0x8] sm:$0xf]
        %v2230 = vld [vmem:[%s12 + $0xc] sm:$0xf]
        %v2231 = vld [vmem:[%s13] sm:$0x1]
        %v2233 = vlaneseq
        %v2234 = vshrl.u32 %v2233, 7
        %v2235 = vsub.s32 0, %v2234
        %v2236 = vrot.slane %v2231, %v2235
        %v2242 = vunpack.c.l.b16 %v2227
        %v2243 = vunpack.c.l.b16 %v2228
        %v2244 = vunpack.c.l.b16 %v2229
        %v2245 = vunpack.c.l.b16 %v2230
        %v2246 = vpack.c.b16 %v2243, %v2242
        %v2247 = vpack.c.b16 %v2245, %v2244
        %v2251 = vsel %vm1327, %v2226, 0
        %2253 = vmatprep.subr.bf16.mxu0 0
        %2254 = vmatpush1.bf16.msra.mxu0 %v2246
        %2255 = vmatprep.subr.bf16.mxu0 0
        %2256 = vmatpush1.bf16.msra.mxu0 %v2247
        %2257 = vmatprep.subr.bf16.mxu0 0
        %2258 = vmatpush1.bf16.msra.mxu0 0
        %2259 = vmatprep.subr.bf16.mxu0 0
        %2260 = vmatpush1.bf16.msra.mxu0 0
        %2261 = vmatprep.subr.bf16.mxu0 0
        %2262 = vmatpush1.bf16.msra.mxu0 0
        %2263 = vmatprep.subr.bf16.mxu0 0
        %2264 = vmatpush1.bf16.msra.mxu0 0
        %2265 = vmatprep.subr.bf16.mxu0 0
        %2266 = vmatpush1.bf16.msra.mxu0 0
        %2267 = vmatprep.subr.bf16.mxu0 0
        %2268 = vmatpush1.bf16.msra.mxu0 0
        %2269 = vmatprep.subr.bf16.mxu0 0
        %2270 = vmatpush1.bf16.msra.mxu0 0
        %2271 = vmatprep.subr.bf16.mxu0 0
        %2272 = vmatpush1.bf16.msra.mxu0 0
        %2273 = vmatprep.subr.bf16.mxu0 0
        %2274 = vmatpush1.bf16.msra.mxu0 0
        %2275 = vmatprep.subr.bf16.mxu0 0
        %2276 = vmatpush1.bf16.msra.mxu0 0
        %2277 = vmatprep.subr.bf16.mxu0 0
        %2278 = vmatpush1.bf16.msra.mxu0 0
        %2279 = vmatprep.subr.bf16.mxu0 0
        %2280 = vmatpush1.bf16.msra.mxu0 0
        %2281 = vmatprep.subr.bf16.mxu0 0
        %2282 = vmatpush1.bf16.msra.mxu0 0
        %2283 = vmatprep.subr.bf16.mxu0 0
        %2284 = vmatpush1.bf16.msra.mxu0 0
        %2285 = vmatprep.mubr.bf16.mxu0 0
        %2286 = vmatmul.mubr.bf16.gmra.mrb[0].mxu0 %v2251
        %v2287 = vpop.f32.mrb[0].mxu0
        %v2288 = vadd.f32 %v2236, %v2287
        %v2289 = vpop.f32.mrb[0].mxu0
        %v2290 = vpop.f32.mrb[0].mxu0
        %v2291 = vpop.f32.mrb[0].mxu0
        %2292 = vdwg.mxu0
        %v2293 = vmax.f32 %v2288, 0.0
        %v2294 = vpack.c.bf16 %v2293, %v2293
        %v2295 = vld [vmem:[%s14] sm:$0xf]
        %v2296 = vld [vmem:[%s14 + $0x4] sm:$0xf]
        %v2297 = vld [vmem:[%s14 + $0x8] sm:$0xf]
        %v2298 = vld [vmem:[%s14 + $0xc] sm:$0xf]
        %v2299 = vld [vmem:[%s14 + $0x10] sm:$0xf]
        %v2300 = vld [vmem:[%s14 + $0x14] sm:$0xf]
        %v2301 = vld [vmem:[%s14 + $0x18] sm:$0xf]
        %v2302 = vld [vmem:[%s14 + $0x1c] sm:$0xf]
        %v2303 = vld [vmem:[%s15] sm:$0x1]
        %v2305 = vlaneseq
        %v2306 = vshrl.u32 %v2305, 7
        %v2307 = vsub.s32 0, %v2306
        %v2308 = vrot.slane %v2303, %v2307
        %v2318 = vunpack.c.l.b16 %v2295
        %v2319 = vunpack.c.l.b16 %v2296
        %v2320 = vunpack.c.l.b16 %v2297
        %v2321 = vunpack.c.l.b16 %v2298
        %v2322 = vunpack.c.l.b16 %v2299
        %v2323 = vunpack.c.l.b16 %v2300
        %v2324 = vunpack.c.l.b16 %v2301
        %v2325 = vunpack.c.l.b16 %v2302
        %v2326 = vpack.c.b16 %v2319, %v2318
        %v2327 = vpack.c.b16 %v2321, %v2320
        %v2328 = vpack.c.b16 %v2323, %v2322
        %v2329 = vpack.c.b16 %v2325, %v2324
        %vm2334 = vcmask 523264
        %v2336 = vsel %vm2334, %v2294, 0
        %2338 = vmatprep.subr.bf16.mxu0 0
        %2339 = vmatpush1.bf16.msra.mxu0 %v2326
        %2340 = vmatprep.subr.bf16.mxu0 0
        %2341 = vmatpush1.bf16.msra.mxu0 %v2327
        %2342 = vmatprep.subr.bf16.mxu0 0
        %2343 = vmatpush1.bf16.msra.mxu0 %v2328
        %2344 = vmatprep.subr.bf16.mxu0 0
        %2345 = vmatpush1.bf16.msra.mxu0 %v2329
        %2346 = vmatprep.subr.bf16.mxu0 0
        %2347 = vmatpush1.bf16.msra.mxu0 0
        %2348 = vmatprep.subr.bf16.mxu0 0
        %2349 = vmatpush1.bf16.msra.mxu0 0
        %2350 = vmatprep.subr.bf16.mxu0 0
        %2351 = vmatpush1.bf16.msra.mxu0 0
        %2352 = vmatprep.subr.bf16.mxu0 0
        %2353 = vmatpush1.bf16.msra.mxu0 0
        %2354 = vmatprep.subr.bf16.mxu0 0
        %2355 = vmatpush1.bf16.msra.mxu0 0
        %2356 = vmatprep.subr.bf16.mxu0 0
        %2357 = vmatpush1.bf16.msra.mxu0 0
        %2358 = vmatprep.subr.bf16.mxu0 0
        %2359 = vmatpush1.bf16.msra.mxu0 0
        %2360 = vmatprep.subr.bf16.mxu0 0
        %2361 = vmatpush1.bf16.msra.mxu0 0
        %2362 = vmatprep.subr.bf16.mxu0 0
        %2363 = vmatpush1.bf16.msra.mxu0 0
        %2364 = vmatprep.subr.bf16.mxu0 0
        %2365 = vmatpush1.bf16.msra.mxu0 0
        %2366 = vmatprep.subr.bf16.mxu0 0
        %2367 = vmatpush1.bf16.msra.mxu0 0
        %2368 = vmatprep.subr.bf16.mxu0 0
        %2369 = vmatpush1.bf16.msra.mxu0 0
        %2370 = vmatprep.mubr.bf16.mxu0 0
        %2371 = vmatmul.mubr.bf16.gmra.mrb[0].mxu0 %v2336
        %v2372 = vpop.f32.mrb[0].mxu0
        %v2373 = vadd.f32 %v2308, %v2372
        %v2374 = vpop.f32.mrb[0].mxu0
        %v2375 = vpop.f32.mrb[0].mxu0
        %v2376 = vpop.f32.mrb[0].mxu0
        %2377 = vdwg.mxu0
        %v2378 = vadd.f32 %v2373, %v2225
        %v2379 = vld [vmem:[%s16] sm:$0x1]
        %v2380 = vld [vmem:[%s17] sm:$0x1]
        %v2381 = vsel %vm1327, %v2378, 0.0
        %2382 = vadd.xlane.f32.xlu0 %v2381
        %v2383 = vpop.xlane.xlu0 %2382
        %v2384 = vmul.f32 %v2383, %v2201
        %v2385 = vsub.f32 %v2378, %v2384
        %v2386 = vmul.f32 %v2385, %v2385
        %v2387 = vsel %vm1327, %v2386, 0.0
        %2388 = vadd.xlane.f32.xlu0 %v2387
        %v2389 = vpop.xlane.xlu0 %2388
        %v2390 = vmul.f32 %v2389, %v2201
        %v2391 = vadd.f32 %v2390, 1e-05
        %v2392 = vrsqrt.pop %v2391
        %v2393 = vmul.f32 %v2385, %v2392
        %v2395 = vlaneseq
        %v2396 = vshrl.u32 %v2395, 7
        %v2397 = vsub.s32 0, %v2396
        %v2398 = vrot.slane %v2379, %v2397
        %v2400 = vmul.f32 %v2393, %v2398
        %v2402 = vlaneseq
        %v2403 = vshrl.u32 %v2402, 7
        %v2404 = vsub.s32 0, %v2403
        %v2405 = vrot.slane %v2380, %v2404
        %v2407 = vadd.f32 %v2400, %v2405
        %2408 = vst.msk [vmem:[%s601] sm:$0xff] %vm1327, %v2407
        %s2409 = sand.u32 %s444, 1
        %s2410 = scalar_lea.sflag [#allocation5], %s2409
        %s2411 = sand.u32 %s444, 1
        %s2412 = smul.addr %s2411, 8
        %s2413 = scalar_lea.vmem [#allocation4], %s2412
        // Predicated region
        $region97: #{tpu_custom_call.1} parent=91 // pred_check
          %p2414 = pneg %p454
        $region98: #{tpu_custom_call.1} parent=91 // pred_check_branch
          %2416 = sbr.rel (%p2414) target = $region100
        $region99: #{tpu_custom_call.1} parent=91 // pred_region
          %s2418 = ssub.s32 128, 128
          %2419 = vsyncadd %s2410, %s2418
          %s2420 = sadd.s32 %s37, %s36
          %s2421 = smul.addr %s2420, 128
          %s2422 = scalar_lea.hbm %s18, %s2421
          %s2424 = sshll.u32 %s2413, 4
          %s2425 = int_to_ptr.vmem [resolvable:$true] %s2424
          %2427 = dma.vmem_to_hbm [thread:$0]  %s2425, 128, %s2422, %s2410
        $region100: #{tpu_custom_call.1} parent=91 // pred_fallthru
          _
      $region92: #{tpu_custom_call.1} parent=5 // pred_fallthru
        _
      %p2428 = scmp.le.s32.totalorder 2, %s27
      // Predicated region
      $region101: #{tpu_custom_call.1} parent=5 // pred_check
        %p2429 = pneg %p2428
      $region102: #{tpu_custom_call.1} parent=5 // pred_check_branch
        %2431 = sbr.rel (%p2429) target = $region104
      $region103: #{tpu_custom_call.1} parent=5 // pred_region
        %s2432 = ssub.s32 %s27, 2
        // Predicated region
        $region105: #{tpu_custom_call.1} parent=103 // pred_check
          %p2433 = pneg %p460
        $region106: #{tpu_custom_call.1} parent=103 // pred_check_branch
          %2435 = sbr.rel (%p2433) target = $region108
        $region107: #{tpu_custom_call.1} parent=103 // pred_region
          %s2436 = sand.u32 %s445, 1
          %s2437 = scalar_lea.sflag [#allocation5], %s2436
          %s2438 = sand.u32 %s445, 1
          %s2439 = smul.addr %s2438, 8
          %s2440 = scalar_lea.vmem [#allocation4], %s2439
          %2441 = dma.done %s2437, 128
        $region108: #{tpu_custom_call.1} parent=103 // pred_fallthru
          _
      $region104: #{tpu_custom_call.1} parent=5 // pred_fallthru
        _
    $region6: #{tpu_custom_call.1} parent=1 // loop_footer
      %s31 = sadd.s32 1, %s27
    $region7: #{tpu_custom_call.1} parent=1 // loop_footer_branch
      %26 = sbr.rel target = $region3
    $region8: #{tpu_custom_call.1} parent=1 // loop_exit
      _
    %2442 = vsyncpa [#allocation5], 1
    %s2443 = scalar_lea.sflag [#allocation5], 1
    %2444 = vsyncpa %s2443, 1

// kernel: tpu_custom_call.1
$region0: #{tpu_custom_call.1}
  #allocation0 [shape = 'u32[]', space=smem, size = 0x4, offset = 0x4, fixed_abs, tag = 'smem constant byte address 0x4 - core index']
  #allocation1 [shape = 'u32[144,128]{1,0:T(1,128)}', space=vmem, size = 0x12000, scoped, tag = 'internal scratch']
  #allocation2 [shape = 'bf16[4,8,8]{2,1,0:T(8,128)(2,1)}', space=vmem, size = 0x2000, scoped, tag = 'scratch operand']
  #allocation3 [shape = 'bf16[4,8,8]{2,1,0:T(8,128)(2,1)}', space=vmem, size = 0x2000, scoped, tag = 'scratch operand']
  %s0 = inlined_call_operand.vmem [shape: f32[2,8,32], index: 0, kind: input, shape index: {}]
  %s1 = inlined_call_operand.vmem [shape: bf16[2,8,8], index: 1, kind: input, shape index: {}]
  %s2 = inlined_call_operand.vmem [shape: bf16[4,32,8], index: 2, kind: input, shape index: {}]
  %s3 = inlined_call_operand.vmem [shape: f32[4,1,8], index: 3, kind: input, shape index: {}]
  %s4 = inlined_call_operand.vmem [shape: bf16[4,32,8], index: 4, kind: input, shape index: {}]
  %s5 = inlined_call_operand.vmem [shape: f32[4,1,8], index: 5, kind: input, shape index: {}]
  %s6 = inlined_call_operand.vmem [shape: bf16[4,32,8], index: 6, kind: input, shape index: {}]
  %s7 = inlined_call_operand.vmem [shape: f32[4,1,8], index: 7, kind: input, shape index: {}]
  %s8 = inlined_call_operand.vmem [shape: bf16[4,8,32], index: 8, kind: input, shape index: {}]
  %s9 = inlined_call_operand.vmem [shape: f32[1,32], index: 9, kind: input, shape index: {}]
  %s10 = inlined_call_operand.vmem [shape: f32[1,32], index: 10, kind: input, shape index: {}]
  %s11 = inlined_call_operand.vmem [shape: f32[1,32], index: 11, kind: input, shape index: {}]
  %s12 = inlined_call_operand.vmem [shape: bf16[32,64], index: 12, kind: input, shape index: {}]
  %s13 = inlined_call_operand.vmem [shape: f32[1,64], index: 13, kind: input, shape index: {}]
  %s14 = inlined_call_operand.vmem [shape: bf16[64,32], index: 14, kind: input, shape index: {}]
  %s15 = inlined_call_operand.vmem [shape: f32[1,32], index: 15, kind: input, shape index: {}]
  %s16 = inlined_call_operand.vmem [shape: f32[1,32], index: 16, kind: input, shape index: {}]
  %s17 = inlined_call_operand.vmem [shape: f32[1,32], index: 17, kind: input, shape index: {}]
  %s18 = inlined_call_operand.hbm [shape: f32[2,8,32], index: 18, kind: output, shape index: {}]
  %s19 = sld [smem:[#allocation0]]
  $region109: #{tpu_custom_call.1} parent=0
    _
  %s21 = ssub.s32 1, %s19
  %s22 = scalar_select 0, %s21, %s19
  $region1: #{tpu_custom_call.1} parent=0
    #allocation4 [shape = 'u8[8192]{0}', space=vmem, size = 0x2000, scoped, tag = 'output window, operand 0']
    #allocation5 [shape = 's32[2]{0}', space=sflag, size = 0x8, scoped, tag = 'scoped memory for tpu_custom_call.1']
    %23 = vsyncpa [#allocation5], 0
    %s24 = scalar_lea.sflag [#allocation5], 1
    %25 = vsyncpa %s24, 0
    loop: start=0, step=1, limit=4
    $region2: #{tpu_custom_call.1} parent=1 // loop_pre_header
      _
    $region3: #{tpu_custom_call.1} parent=1 // loop_header
      %s27 = sphi 0, %s31
      %p28 = scmp.ge.s32.totalorder %s27, 4
      %s34 = sphi 0, %s46
      %s35 = sphi 0, %s42
      %s36 = sphi 0, %s34
      %s37 = sphi 0, %s35
      %s38 = sphi 0, %s36
      %s39 = sphi 0, %s37
      %s49 = sphi 0, %s51
      %s52 = sphi 0, %s49
      %s53 = sphi 0, %s52
      %s69 = sphi 0, %s53
      %s77 = sphi 0, %s79
      %s80 = sphi 0, %s77
      %s81 = sphi 0, %s80
      %s97 = sphi 0, %s81
      %s101 = sphi 0, %s101
      %s103 = sphi 0, %s101
      %s104 = sphi 0, %s103
      %s118 = sphi 0, %s104
      %s122 = sphi 0, %s122
      %s124 = sphi 0, %s122
      %s125 = sphi 0, %s124
      %s139 = sphi 0, %s125
      %s143 = sphi 0, %s143
      %s145 = sphi 0, %s143
      %s146 = sphi 0, %s145
      %s160 = sphi 0, %s146
      %s164 = sphi 0, %s164
      %s166 = sphi 0, %s164
      %s167 = sphi 0, %s166
      %s181 = sphi 0, %s167
      %s185 = sphi 0, %s185
      %s187 = sphi 0, %s185
      %s188 = sphi 0, %s187
      %s202 = sphi 0, %s188
      %s206 = sphi 0, %s206
      %s208 = sphi 0, %s206
      %s209 = sphi 0, %s208
      %s223 = sphi 0, %s209
      %s227 = sphi 0, %s227
      %s229 = sphi 0, %s227
      %s230 = sphi 0, %s229
      %s244 = sphi 0, %s230
      %s248 = sphi 0, %s248
      %s250 = sphi 0, %s248
      %s251 = sphi 0, %s250
      %s265 = sphi 0, %s251
      %s269 = sphi 0, %s269
      %s271 = sphi 0, %s269
      %s272 = sphi 0, %s271
      %s286 = sphi 0, %s272
      %s290 = sphi 0, %s290
      %s292 = sphi 0, %s290
      %s293 = sphi 0, %s292
      %s307 = sphi 0, %s293
      %s311 = sphi 0, %s311
      %s313 = sphi 0, %s311
      %s314 = sphi 0, %s313
      %s328 = sphi 0, %s314
      %s332 = sphi 0, %s332
      %s334 = sphi 0, %s332
      %s335 = sphi 0, %s334
      %s349 = sphi 0, %s335
      %s353 = sphi 0, %s353
      %s355 = sphi 0, %s353
      %s356 = sphi 0, %s355
      %s370 = sphi 0, %s356
      %s374 = sphi 0, %s374
      %s376 = sphi 0, %s374
      %s377 = sphi 0, %s376
      %s391 = sphi 0, %s377
      %s395 = sphi 0, %s395
      %s397 = sphi 0, %s395
      %s398 = sphi 0, %s397
      %s412 = sphi 0, %s398
      %s416 = sphi 0, %s416
      %s418 = sphi 0, %s416
      %s419 = sphi 0, %s418
      %s433 = sphi 0, %s419
      %s441 = sphi 0, %s443
      %s444 = sphi 0, %s441
      %s445 = sphi 0, %s444
      %s461 = sphi 0, %s445
    $region4: #{tpu_custom_call.1} parent=1 // loop_header_branch
      %30 = sbr.rel (%p28) target = $region8
    $region5: #{tpu_custom_call.1} parent=1 // loop_body
      %s32 = ssub.s32 %s27, 1
      %s33 = ssub.s32 %s27, 2
      %s40 = sadd.s32 1, %s35
      %p41 = scmp.ge.s32.totalorder %s40, 1
      %s42 = scalar_select %p41, 0, %s40
      %s43 = sadd.s32 1, %s34
      %s44 = scalar_select %p41, %s43, %s34
      %p45 = scmp.ge.s32.totalorder %s44, 2
      %s46 = scalar_select %p45, 0, %s44
      %s47 = ssub.s32 %s34, %s46
      %p48 = scmp.eq.s32.totalorder %s47, 0
      %s50 = sadd.s32 %s49, 1
      %s51 = scalar_select %p48, %s49, %s50
      %p54 = pneg %p48
      %p55 = scmp.eq.s32.totalorder %s27, 1
      %p56 = por %p54, %p55
      %p57 = scmp.ne.s32.totalorder %s49, %s52
      %p58 = scmp.eq.s32.totalorder %s27, 0
      %p59 = por %p57, %p58
      %p60 = scmp.ne.s32.totalorder %s49, %s52
      %p61 = scmp.eq.s32.totalorder %s32, 1
      %p62 = por %p60, %p61
      %p63 = scmp.ne.s32.totalorder %s52, %s53
      %p64 = scmp.eq.s32.totalorder %s32, 0
      %p65 = por %p63, %p64
      %p66 = scmp.ne.s32.totalorder %s52, %s53
      %p67 = scmp.eq.s32.totalorder %s33, 1
      %p68 = por %p66, %p67
      %p70 = scmp.ne.s32.totalorder %s53, %s69
      %p71 = scmp.eq.s32.totalorder %s33, 0
      %p72 = por %p70, %p71
      %s73 = ssub.s32 %s34, %s46
      %s74 = ssub.s32 %s35, %s42
      %s75 = sor.u32 %s73, %s74
      %p76 = scmp.eq.s32.totalorder %s75, 0
      %s78 = sadd.s32 %s77, 1
      %s79 = scalar_select %p76, %s77, %s78
      %p82 = pneg %p76
      %p83 = scmp.eq.s32.totalorder %s27, 1
      %p84 = por %p82, %p83
      %p85 = scmp.ne.s32.totalorder %s77, %s80
      %p86 = scmp.eq.s32.totalorder %s27, 0
      %p87 = por %p85, %p86
      %p88 = scmp.ne.s32.totalorder %s77, %s80
      %p89 = scmp.eq.s32.totalorder %s32, 1
      %p90 = por %p88, %p89
      %p91 = scmp.ne.s32.totalorder %s80, %s81
      %p92 = scmp.eq.s32.totalorder %s32, 0
      %p93 = por %p91, %p92
      %p94 = scmp.ne.s32.totalorder %s80, %s81
      %p95 = scmp.eq.s32.totalorder %s33, 1
      %p96 = por %p94, %p95
      %p98 = scmp.ne.s32.totalorder %s81, %s97
      %p99 = scmp.eq.s32.totalorder %s33, 0
      %p100 = por %p98, %p99
      %s102 = sadd.s32 %s101, 1
      %p105 = scmp.eq.s32.totalorder %s27, 1
      %p106 = scmp.ne.s32.totalorder %s101, %s103
      %p107 = scmp.eq.s32.totalorder %s27, 0
      %p108 = por %p106, %p107
      %p109 = scmp.ne.s32.totalorder %s101, %s103
      %p110 = scmp.eq.s32.totalorder %s32, 1
      %p111 = por %p109, %p110
      %p112 = scmp.ne.s32.totalorder %s103, %s104
      %p113 = scmp.eq.s32.totalorder %s32, 0
      %p114 = por %p112, %p113
      %p115 = scmp.ne.s32.totalorder %s103, %s104
      %p116 = scmp.eq.s32.totalorder %s33, 1
      %p117 = por %p115, %p116
      %p119 = scmp.ne.s32.totalorder %s104, %s118
      %p120 = scmp.eq.s32.totalorder %s33, 0
      %p121 = por %p119, %p120
      %s123 = sadd.s32 %s122, 1
      %p126 = scmp.eq.s32.totalorder %s27, 1
      %p127 = scmp.ne.s32.totalorder %s122, %s124
      %p128 = scmp.eq.s32.totalorder %s27, 0
      %p129 = por %p127, %p128
      %p130 = scmp.ne.s32.totalorder %s122, %s124
      %p131 = scmp.eq.s32.totalorder %s32, 1
      %p132 = por %p130, %p131
      %p133 = scmp.ne.s32.totalorder %s124, %s125
      %p134 = scmp.eq.s32.totalorder %s32, 0
      %p135 = por %p133, %p134
      %p136 = scmp.ne.s32.totalorder %s124, %s125
      %p137 = scmp.eq.s32.totalorder %s33, 1
      %p138 = por %p136, %p137
      %p140 = scmp.ne.s32.totalorder %s125, %s139
      %p141 = scmp.eq.s32.totalorder %s33, 0
      %p142 = por %p140, %p141
      %s144 = sadd.s32 %s143, 1
      %p147 = scmp.eq.s32.totalorder %s27, 1
      %p148 = scmp.ne.s32.totalorder %s143, %s145
      %p149 = scmp.eq.s32.totalorder %s27, 0
      %p150 = por %p148, %p149
      %p151 = scmp.ne.s32.totalorder %s143, %s145
      %p152 = scmp.eq.s32.totalorder %s32, 1
      %p153 = por %p151, %p152
      %p154 = scmp.ne.s32.totalorder %s145, %s146
      %p155 = scmp.eq.s32.totalorder %s32, 0
      %p156 = por %p154, %p155
      %p157 = scmp.ne.s32.totalorder %s145, %s146
      %p158 = scmp.eq.s32.totalorder %s33, 1
      %p159 = por %p157, %p158
      %p161 = scmp.ne.s32.totalorder %s146, %s160
      %p162 = scmp.eq.s32.totalorder %s33, 0
      %p163 = por %p161, %p162
      %s165 = sadd.s32 %s164, 1
      %p168 = scmp.eq.s32.totalorder %s27, 1
      %p169 = scmp.ne.s32.totalorder %s164, %s166
      %p170 = scmp.eq.s32.totalorder %s27, 0
      %p171 = por %p169, %p170
      %p172 = scmp.ne.s32.totalorder %s164, %s166
      %p173 = scmp.eq.s32.totalorder %s32, 1
      %p174 = por %p172, %p173
      %p175 = scmp.ne.s32.totalorder %s166, %s167
      %p176 = scmp.eq.s32.totalorder %s32, 0
      %p177 = por %p175, %p176
      %p178 = scmp.ne.s32.totalorder %s166, %s167
      %p179 = scmp.eq.s32.totalorder %s33, 1
      %p180 = por %p178, %p179
      %p182 = scmp.ne.s32.totalorder %s167, %s181
      %p183 = scmp.eq.s32.totalorder %s33, 0
      %p184 = por %p182, %p183
      %s186 = sadd.s32 %s185, 1
      %p189 = scmp.eq.s32.totalorder %s27, 1
      %p190 = scmp.ne.s32.totalorder %s185, %s187
      %p191 = scmp.eq.s32.totalorder %s27, 0
      %p192 = por %p190, %p191
      %p193 = scmp.ne.s32.totalorder %s185, %s187
      %p194 = scmp.eq.s32.totalorder %s32, 1
      %p195 = por %p193, %p194
      %p196 = scmp.ne.s32.totalorder %s187, %s188
      %p197 = scmp.eq.s32.totalorder %s32, 0
      %p198 = por %p196, %p197
      %p199 = scmp.ne.s32.totalorder %s187, %s188
      %p200 = scmp.eq.s32.totalorder %s33, 1
      %p201 = por %p199, %p200
      %p203 = scmp.ne.s32.totalorder %s188, %s202
      %p204 = scmp.eq.s32.totalorder %s33, 0
      %p205 = por %p203, %p204
      %s207 = sadd.s32 %s206, 1
      %p210 = scmp.eq.s32.totalorder %s27, 1
      %p211 = scmp.ne.s32.totalorder %s206, %s208
      %p212 = scmp.eq.s32.totalorder %s27, 0
      %p213 = por %p211, %p212
      %p214 = scmp.ne.s32.totalorder %s206, %s208
      %p215 = scmp.eq.s32.totalorder %s32, 1
      %p216 = por %p214, %p215
      %p217 = scmp.ne.s32.totalorder %s208, %s209
      %p218 = scmp.eq.s32.totalorder %s32, 0
      %p219 = por %p217, %p218
      %p220 = scmp.ne.s32.totalorder %s208, %s209
      %p221 = scmp.eq.s32.totalorder %s33, 1
      %p222 = por %p220, %p221
      %p224 = scmp.ne.s32.totalorder %s209, %s223
      %p225 = scmp.eq.s32.totalorder %s33, 0
      %p226 = por %p224, %p225
      %s228 = sadd.s32 %s227, 1
      %p231 = scmp.eq.s32.totalorder %s27, 1
      %p232 = scmp.ne.s32.totalorder %s227, %s229
      %p233 = scmp.eq.s32.totalorder %s27, 0
      %p234 = por %p232, %p233
      %p235 = scmp.ne.s32.totalorder %s227, %s229
      %p236 = scmp.eq.s32.totalorder %s32, 1
      %p237 = por %p235, %p236
      %p238 = scmp.ne.s32.totalorder %s229, %s230
      %p239 = scmp.eq.s32.totalorder %s32, 0
      %p240 = por %p238, %p239
      %p241 = scmp.ne.s32.totalorder %s229, %s230
      %p242 = scmp.eq.s32.totalorder %s33, 1
      %p243 = por %p241, %p242
      %p245 = scmp.ne.s32.totalorder %s230, %s244
      %p246 = scmp.eq.s32.totalorder %s33, 0
      %p247 = por %p245, %p246
      %s249 = sadd.s32 %s248, 1
      %p252 = scmp.eq.s32.totalorder %s27, 1
      %p253 = scmp.ne.s32.totalorder %s248, %s250
      %p254 = scmp.eq.s32.totalorder %s27, 0
      %p255 = por %p253, %p254
      %p256 = scmp.ne.s32.totalorder %s248, %s250
      %p257 = scmp.eq.s32.totalorder %s32, 1
      %p258 = por %p256, %p257
      %p259 = scmp.ne.s32.totalorder %s250, %s251
      %p260 = scmp.eq.s32.totalorder %s32, 0
      %p261 = por %p259, %p260
      %p262 = scmp.ne.s32.totalorder %s250, %s251
      %p263 = scmp.eq.s32.totalorder %s33, 1
      %p264 = por %p262, %p263
      %p266 = scmp.ne.s32.totalorder %s251, %s265
      %p267 = scmp.eq.s32.totalorder %s33, 0
      %p268 = por %p266, %p267
      %s270 = sadd.s32 %s269, 1
      %p273 = scmp.eq.s32.totalorder %s27, 1
      %p274 = scmp.ne.s32.totalorder %s269, %s271
      %p275 = scmp.eq.s32.totalorder %s27, 0
      %p276 = por %p274, %p275
      %p277 = scmp.ne.s32.totalorder %s269, %s271
      %p278 = scmp.eq.s32.totalorder %s32, 1
      %p279 = por %p277, %p278
      %p280 = scmp.ne.s32.totalorder %s271, %s272
      %p281 = scmp.eq.s32.totalorder %s32, 0
      %p282 = por %p280, %p281
      %p283 = scmp.ne.s32.totalorder %s271, %s272
      %p284 = scmp.eq.s32.totalorder %s33, 1
      %p285 = por %p283, %p284
      %p287 = scmp.ne.s32.totalorder %s272, %s286
      %p288 = scmp.eq.s32.totalorder %s33, 0
      %p289 = por %p287, %p288
      %s291 = sadd.s32 %s290, 1
      %p294 = scmp.eq.s32.totalorder %s27, 1
      %p295 = scmp.ne.s32.totalorder %s290, %s292
      %p296 = scmp.eq.s32.totalorder %s27, 0
      %p297 = por %p295, %p296
      %p298 = scmp.ne.s32.totalorder %s290, %s292
      %p299 = scmp.eq.s32.totalorder %s32, 1
      %p300 = por %p298, %p299
      %p301 = scmp.ne.s32.totalorder %s292, %s293
      %p302 = scmp.eq.s32.totalorder %s32, 0
      %p303 = por %p301, %p302
      %p304 = scmp.ne.s32.totalorder %s292, %s293
      %p305 = scmp.eq.s32.totalorder %s33, 1
      %p306 = por %p304, %p305
      %p308 = scmp.ne.s32.totalorder %s293, %s307
      %p309 = scmp.eq.s32.totalorder %s33, 0
      %p310 = por %p308, %p309
      %s312 = sadd.s32 %s311, 1
      %p315 = scmp.eq.s32.totalorder %s27, 1
      %p316 = scmp.ne.s32.totalorder %s311, %s313
      %p317 = scmp.eq.s32.totalorder %s27, 0
      %p318 = por %p316, %p317
      %p319 = scmp.ne.s32.totalorder %s311, %s313
      %p320 = scmp.eq.s32.totalorder %s32, 1
      %p321 = por %p319, %p320
      %p322 = scmp.ne.s32.totalorder %s313, %s314
      %p323 = scmp.eq.s32.totalorder %s32, 0
      %p324 = por %p322, %p323
      %p325 = scmp.ne.s32.totalorder %s313, %s314
      %p326 = scmp.eq.s32.totalorder %s33, 1
      %p327 = por %p325, %p326
      %p329 = scmp.ne.s32.totalorder %s314, %s328
      %p330 = scmp.eq.s32.totalorder %s33, 0
      %p331 = por %p329, %p330
      %s333 = sadd.s32 %s332, 1
      %p336 = scmp.eq.s32.totalorder %s27, 1
      %p337 = scmp.ne.s32.totalorder %s332, %s334
      %p338 = scmp.eq.s32.totalorder %s27, 0
      %p339 = por %p337, %p338
      %p340 = scmp.ne.s32.totalorder %s332, %s334
      %p341 = scmp.eq.s32.totalorder %s32, 1
      %p342 = por %p340, %p341
      %p343 = scmp.ne.s32.totalorder %s334, %s335
      %p344 = scmp.eq.s32.totalorder %s32, 0
      %p345 = por %p343, %p344
      %p346 = scmp.ne.s32.totalorder %s334, %s335
      %p347 = scmp.eq.s32.totalorder %s33, 1
      %p348 = por %p346, %p347
      %p350 = scmp.ne.s32.totalorder %s335, %s349
      %p351 = scmp.eq.s32.totalorder %s33, 0
      %p352 = por %p350, %p351
      %s354 = sadd.s32 %s353, 1
      %p357 = scmp.eq.s32.totalorder %s27, 1
      %p358 = scmp.ne.s32.totalorder %s353, %s355
      %p359 = scmp.eq.s32.totalorder %s27, 0
      %p360 = por %p358, %p359
      %p361 = scmp.ne.s32.totalorder %s353, %s355
      %p362 = scmp.eq.s32.totalorder %s32, 1
      %p363 = por %p361, %p362
      %p364 = scmp.ne.s32.totalorder %s355, %s356
      %p365 = scmp.eq.s32.totalorder %s32, 0
      %p366 = por %p364, %p365
      %p367 = scmp.ne.s32.totalorder %s355, %s356
      %p368 = scmp.eq.s32.totalorder %s33, 1
      %p369 = por %p367, %p368
      %p371 = scmp.ne.s32.totalorder %s356, %s370
      %p372 = scmp.eq.s32.totalorder %s33, 0
      %p373 = por %p371, %p372
      %s375 = sadd.s32 %s374, 1
      %p378 = scmp.eq.s32.totalorder %s27, 1
      %p379 = scmp.ne.s32.totalorder %s374, %s376
      %p380 = scmp.eq.s32.totalorder %s27, 0
      %p381 = por %p379, %p380
      %p382 = scmp.ne.s32.totalorder %s374, %s376
      %p383 = scmp.eq.s32.totalorder %s32, 1
      %p384 = por %p382, %p383
      %p385 = scmp.ne.s32.totalorder %s376, %s377
      %p386 = scmp.eq.s32.totalorder %s32, 0
      %p387 = por %p385, %p386
      %p388 = scmp.ne.s32.totalorder %s376, %s377
      %p389 = scmp.eq.s32.totalorder %s33, 1
      %p390 = por %p388, %p389
      %p392 = scmp.ne.s32.totalorder %s377, %s391
      %p393 = scmp.eq.s32.totalorder %s33, 0
      %p394 = por %p392, %p393
      %s396 = sadd.s32 %s395, 1
      %p399 = scmp.eq.s32.totalorder %s27, 1
      %p400 = scmp.ne.s32.totalorder %s395, %s397
      %p401 = scmp.eq.s32.totalorder %s27, 0
      %p402 = por %p400, %p401
      %p403 = scmp.ne.s32.totalorder %s395, %s397
      %p404 = scmp.eq.s32.totalorder %s32, 1
      %p405 = por %p403, %p404
      %p406 = scmp.ne.s32.totalorder %s397, %s398
      %p407 = scmp.eq.s32.totalorder %s32, 0
      %p408 = por %p406, %p407
      %p409 = scmp.ne.s32.totalorder %s397, %s398
      %p410 = scmp.eq.s32.totalorder %s33, 1
      %p411 = por %p409, %p410
      %p413 = scmp.ne.s32.totalorder %s398, %s412
      %p414 = scmp.eq.s32.totalorder %s33, 0
      %p415 = por %p413, %p414
      %s417 = sadd.s32 %s416, 1
      %p420 = scmp.eq.s32.totalorder %s27, 1
      %p421 = scmp.ne.s32.totalorder %s416, %s418
      %p422 = scmp.eq.s32.totalorder %s27, 0
      %p423 = por %p421, %p422
      %p424 = scmp.ne.s32.totalorder %s416, %s418
      %p425 = scmp.eq.s32.totalorder %s32, 1
      %p426 = por %p424, %p425
      %p427 = scmp.ne.s32.totalorder %s418, %s419
      %p428 = scmp.eq.s32.totalorder %s32, 0
      %p429 = por %p427, %p428
      %p430 = scmp.ne.s32.totalorder %s418, %s419
      %p431 = scmp.eq.s32.totalorder %s33, 1
      %p432 = por %p430, %p431
      %p434 = scmp.ne.s32.totalorder %s419, %s433
      %p435 = scmp.eq.s32.totalorder %s33, 0
      %p436 = por %p434, %p435
      %s437 = ssub.s32 %s34, %s46
      %s438 = ssub.s32 %s35, %s42
      %s439 = sor.u32 %s437, %s438
      %p440 = scmp.eq.s32.totalorder %s439, 0
      %s442 = sadd.s32 %s441, 1
      %s443 = scalar_select %p440, %s441, %s442
      %p446 = pneg %p440
      %p447 = scmp.eq.s32.totalorder %s27, 1
      %p448 = por %p446, %p447
      %p449 = scmp.ne.s32.totalorder %s441, %s444
      %p450 = scmp.eq.s32.totalorder %s27, 0
      %p451 = por %p449, %p450
      %p452 = scmp.ne.s32.totalorder %s441, %s444
      %p453 = scmp.eq.s32.totalorder %s32, 1
      %p454 = por %p452, %p453
      %p455 = scmp.ne.s32.totalorder %s444, %s445
      %p456 = scmp.eq.s32.totalorder %s32, 0
      %p457 = por %p455, %p456
      %p458 = scmp.ne.s32.totalorder %s444, %s445
      %p459 = scmp.eq.s32.totalorder %s33, 1
      %p460 = por %p458, %p459
      %p462 = scmp.ne.s32.totalorder %s445, %s461
      %p463 = scmp.eq.s32.totalorder %s33, 0
      %p464 = por %p462, %p463
      %p465 = scmp.le.s32.totalorder 1, %s27
      %p466 = scmp.lt.s32.totalorder %s27, 3
      %p467 = pnand %p465, %p466
      %p468 = pneg %p467
      // Predicated region
      $region9: #{tpu_custom_call.1} parent=5 // pred_check
        _
      $region10: #{tpu_custom_call.1} parent=5 // pred_check_branch
        %470 = sbr.rel (%p467) target = $region12
      $region11: #{tpu_custom_call.1} parent=5 // pred_region
        %s471 = ssub.s32 %s27, 1
        // Predicated region
        $region13: #{tpu_custom_call.1} parent=11 // pred_check
          %p472 = pneg %p114
        $region14: #{tpu_custom_call.1} parent=11 // pred_check_branch
          %474 = sbr.rel (%p472) target = $region16
        $region15: #{tpu_custom_call.1} parent=11 // pred_region
          _
        $region16: #{tpu_custom_call.1} parent=11 // pred_fallthru
          _
        // Predicated region
        $region17: #{tpu_custom_call.1} parent=11 // pred_check
          %p475 = pneg %p135
        $region18: #{tpu_custom_call.1} parent=11 // pred_check_branch
          %477 = sbr.rel (%p475) target = $region20
        $region19: #{tpu_custom_call.1} parent=11 // pred_region
          _
        $region20: #{tpu_custom_call.1} parent=11 // pred_fallthru
          _
        // Predicated region
        $region21: #{tpu_custom_call.1} parent=11 // pred_check
          %p478 = pneg %p156
        $region22: #{tpu_custom_call.1} parent=11 // pred_check_branch
          %480 = sbr.rel (%p478) target = $region24
        $region23: #{tpu_custom_call.1} parent=11 // pred_region
          _
        $region24: #{tpu_custom_call.1} parent=11 // pred_fallthru
          _
        // Predicated region
        $region25: #{tpu_custom_call.1} parent=11 // pred_check
          %p481 = pneg %p177
        $region26: #{tpu_custom_call.1} parent=11 // pred_check_branch
          %483 = sbr.rel (%p481) target = $region28
        $region27: #{tpu_custom_call.1} parent=11 // pred_region
          _
        $region28: #{tpu_custom_call.1} parent=11 // pred_fallthru
          _
        // Predicated region
        $region29: #{tpu_custom_call.1} parent=11 // pred_check
          %p484 = pneg %p198
        $region30: #{tpu_custom_call.1} parent=11 // pred_check_branch
          %486 = sbr.rel (%p484) target = $region32
        $region31: #{tpu_custom_call.1} parent=11 // pred_region
          _
        $region32: #{tpu_custom_call.1} parent=11 // pred_fallthru
          _
        // Predicated region
        $region33: #{tpu_custom_call.1} parent=11 // pred_check
          %p487 = pneg %p219
        $region34: #{tpu_custom_call.1} parent=11 // pred_check_branch
          %489 = sbr.rel (%p487) target = $region36
        $region35: #{tpu_custom_call.1} parent=11 // pred_region
          _
        $region36: #{tpu_custom_call.1} parent=11 // pred_fallthru
          _
        // Predicated region
        $region37: #{tpu_custom_call.1} parent=11 // pred_check
          %p490 = pneg %p240
        $region38: #{tpu_custom_call.1} parent=11 // pred_check_branch
          %492 = sbr.rel (%p490) target = $region40
        $region39: #{tpu_custom_call.1} parent=11 // pred_region
          _
        $region40: #{tpu_custom_call.1} parent=11 // pred_fallthru
          _
        // Predicated region
        $region41: #{tpu_custom_call.1} parent=11 // pred_check
          %p493 = pneg %p261
        $region42: #{tpu_custom_call.1} parent=11 // pred_check_branch
          %495 = sbr.rel (%p493) target = $region44
        $region43: #{tpu_custom_call.1} parent=11 // pred_region
          _
        $region44: #{tpu_custom_call.1} parent=11 // pred_fallthru
          _
        // Predicated region
        $region45: #{tpu_custom_call.1} parent=11 // pred_check
          %p496 = pneg %p282
        $region46: #{tpu_custom_call.1} parent=11 // pred_check_branch
          %498 = sbr.rel (%p496) target = $region48
        $region47: #{tpu_custom_call.1} parent=11 // pred_region
          _
        $region48: #{tpu_custom_call.1} parent=11 // pred_fallthru
          _
        // Predicated region
        $region49: #{tpu_custom_call.1} parent=11 // pred_check
          %p499 = pneg %p303
        $region50: #{tpu_custom_call.1} parent=11 // pred_check_branch
          %501 = sbr.rel (%p499) target = $region52
        $region51: #{tpu_custom_call.1} parent=11 // pred_region
          _
        $region52: #{tpu_custom_call.1} parent=11 // pred_fallthru
          _
        // Predicated region
        $region53: #{tpu_custom_call.1} parent=11 // pred_check
          %p502 = pneg %p324
        $region54: #{tpu_custom_call.1} parent=11 // pred_check_branch
          %504 = sbr.rel (%p502) target = $region56
        $region55: #{tpu_custom_call.1} parent=11 // pred_region
          _
        $region56: #{tpu_custom_call.1} parent=11 // pred_fallthru
          _
        // Predicated region
        $region57: #{tpu_custom_call.1} parent=11 // pred_check
          %p505 = pneg %p345
        $region58: #{tpu_custom_call.1} parent=11 // pred_check_branch
          %507 = sbr.rel (%p505) target = $region60
        $region59: #{tpu_custom_call.1} parent=11 // pred_region
          _
        $region60: #{tpu_custom_call.1} parent=11 // pred_fallthru
          _
        // Predicated region
        $region61: #{tpu_custom_call.1} parent=11 // pred_check
          %p508 = pneg %p366
        $region62: #{tpu_custom_call.1} parent=11 // pred_check_branch
          %510 = sbr.rel (%p508) target = $region64
        $region63: #{tpu_custom_call.1} parent=11 // pred_region
          _
        $region64: #{tpu_custom_call.1} parent=11 // pred_fallthru
          _
        // Predicated region
        $region65: #{tpu_custom_call.1} parent=11 // pred_check
          %p511 = pneg %p387
        $region66: #{tpu_custom_call.1} parent=11 // pred_check_branch
          %513 = sbr.rel (%p511) target = $region68
        $region67: #{tpu_custom_call.1} parent=11 // pred_region
          _
        $region68: #{tpu_custom_call.1} parent=11 // pred_fallthru
          _
        // Predicated region
        $region69: #{tpu_custom_call.1} parent=11 // pred_check
          %p514 = pneg %p408
        $region70: #{tpu_custom_call.1} parent=11 // pred_check_branch
          %516 = sbr.rel (%p514) target = $region72
        $region71: #{tpu_custom_call.1} parent=11 // pred_region
          _
        $region72: #{tpu_custom_call.1} parent=11 // pred_fallthru
          _
        // Predicated region
        $region73: #{tpu_custom_call.1} parent=11 // pred_check
          %p517 = pneg %p429
        $region74: #{tpu_custom_call.1} parent=11 // pred_check_branch
          %519 = sbr.rel (%p517) target = $region76
        $region75: #{tpu_custom_call.1} parent=11 // pred_region
          _
        $region76: #{tpu_custom_call.1} parent=11 // pred_fallthru
          _
      $region12: #{tpu_custom_call.1} parent=5 // pred_fallthru
        _
      %p520 = scmp.lt.s32.totalorder %s27, 2
      // Predicated region
      $region77: #{tpu_custom_call.1} parent=5 // pred_check
        %p521 = pneg %p520
      $region78: #{tpu_custom_call.1} parent=5 // pred_check_branch
        %523 = sbr.rel (%p521) target = $region80
      $region79: #{tpu_custom_call.1} parent=5 // pred_region
        // Predicated region
        $region81: #{tpu_custom_call.1} parent=79 // pred_check
          %p524 = pneg %p59
        $region82: #{tpu_custom_call.1} parent=79 // pred_check_branch
          %526 = sbr.rel (%p524) target = $region84
        $region83: #{tpu_custom_call.1} parent=79 // pred_region
          %p527 = scmp.lt.s32.totalorder %s34, 1
          %s528 = scalar_select %p527, %s34, 1
          %s529 = smul.addr %s528, 8
          %s530 = scalar_lea.vmem %s0, %s529
        $region84: #{tpu_custom_call.1} parent=79 // pred_fallthru
          _
        // Predicated region
        $region85: #{tpu_custom_call.1} parent=79 // pred_check
          %p531 = pneg %p87
        $region86: #{tpu_custom_call.1} parent=79 // pred_check_branch
          %533 = sbr.rel (%p531) target = $region88
        $region87: #{tpu_custom_call.1} parent=79 // pred_region
          %p534 = scmp.lt.s32.totalorder %s34, 1
          %s535 = scalar_select %p534, %s34, 1
          %p536 = scmp.lt.s32.totalorder %s35, 0
          %s537 = scalar_select %p536, %s35, 0
          %s538 = sadd.s32 %s537, %s535
          %s539 = smul.addr %s538, 4
          %s540 = scalar_lea.vmem %s1, %s539
        $region88: #{tpu_custom_call.1} parent=79 // pred_fallthru
          _
      $region80: #{tpu_custom_call.1} parent=5 // pred_fallthru
        _
      %p541 = scmp.le.s32.totalorder 1, %s27
      %p542 = scmp.lt.s32.totalorder %s27, 3
      %p543 = pnand %p541, %p542
      %p544 = pneg %p543
      // Predicated region
      $region89: #{tpu_custom_call.1} parent=5 // pred_check
        _
      $region90: #{tpu_custom_call.1} parent=5 // pred_check_branch
        %546 = sbr.rel (%p543) target = $region92
      $region91: #{tpu_custom_call.1} parent=5 // pred_region
        %s547 = ssub.s32 %s27, 1
        %p548 = scmp.lt.s32.totalorder %s36, 1
        %s549 = scalar_select %p548, %s36, 1
        %s550 = smul.addr %s549, 8
        %s551 = scalar_lea.vmem %s0, %s550
        %p552 = pneg %p65
        %p553 = pneg %p62
        %p554 = scmp.lt.s32.totalorder %s36, 1
        %s555 = scalar_select %p554, %s36, 1
        %p556 = scmp.lt.s32.totalorder %s37, 0
        %s557 = scalar_select %p556, %s37, 0
        %s558 = sadd.s32 %s557, %s555
        %s559 = smul.addr %s558, 4
        %s560 = scalar_lea.vmem %s1, %s559
        %p561 = pneg %p93
        %p562 = pneg %p90
        %p563 = pneg %p114
        %p564 = pneg %p111
        %p565 = pneg %p135
        %p566 = pneg %p132
        %p567 = pneg %p156
        %p568 = pneg %p153
        %p569 = pneg %p177
        %p570 = pneg %p174
        %p571 = pneg %p198
        %p572 = pneg %p195
        %p573 = pneg %p219
        %p574 = pneg %p216
        %p575 = pneg %p240
        %p576 = pneg %p237
        %p577 = pneg %p261
        %p578 = pneg %p258
        %p579 = pneg %p282
        %p580 = pneg %p279
        %p581 = pneg %p303
        %p582 = pneg %p300
        %p583 = pneg %p324
        %p584 = pneg %p321
        %p585 = pneg %p345
        %p586 = pneg %p342
        %p587 = pneg %p366
        %p588 = pneg %p363
        %p589 = pneg %p387
        %p590 = pneg %p384
        %p591 = pneg %p408
        %p592 = pneg %p405
        %p593 = pneg %p429
        %p594 = pneg %p426
        %p595 = pneg %p457
        %p596 = pneg %p454
        %s597 = sand.u32 %s444, 1
        %s598 = scalar_lea.sflag [#allocation5], %s597
        %s599 = sand.u32 %s444, 1
        %s600 = smul.addr %s599, 8
        %s601 = scalar_lea.vmem [#allocation4], %s600
        %p602 = scmp.lt.s32.totalorder %s36, 1
        %s603 = scalar_select %p602, %s36, 1
        %s604 = smul.addr %s603, 8
        %s605 = scalar_lea.vmem %s0, %s604
        %p606 = scmp.lt.s32.totalorder %s36, 1
        %s607 = scalar_select %p606, %s36, 1
        %p608 = scmp.lt.s32.totalorder %s37, 0
        %s609 = scalar_select %p608, %s37, 0
        %s610 = sadd.s32 %s609, %s607
        %s611 = smul.addr %s610, 4
        %s612 = scalar_lea.vmem %s1, %s611
        %p614 = scmp.eq.s32.totalorder %s37, 0
        // Predicated region
        $region93: #{tpu_custom_call.1} parent=91 // pred_check
          %p615 = pneg %p614
        $region94: #{tpu_custom_call.1} parent=91 // pred_check_branch
          %617 = sbr.rel (%p615) target = $region96
        $region95: #{tpu_custom_call.1} parent=91 // pred_region
          %v618 = vld [vmem:[%s605] sm:$0xff]
          %v619 = vpack.c.bf16 %v618, %v618
          %v620 = vld [vmem:[%s4] sm:$0xf]
          %v621 = vld [vmem:[%s4 + $0x4] sm:$0xf]
          %v622 = vld [vmem:[%s4 + $0x8] sm:$0xf]
          %v623 = vld [vmem:[%s4 + $0xc] sm:$0xf]
          %v624 = vld [vmem:[%s5] sm:$0x1]
          %v626 = vlaneseq
          %v627 = vshrl.u32 %v626, 7
          %v628 = vsub.s32 0, %v627
          %v629 = vrot.slane %v624, %v628
          %v635 = vunpack.c.l.b16 %v620
          %v636 = vunpack.c.l.b16 %v621
          %v637 = vunpack.c.l.b16 %v622
          %v638 = vunpack.c.l.b16 %v623
          %v639 = vpack.c.b16 %v636, %v635
          %v640 = vpack.c.b16 %v638, %v637
          %vm643 = vcmask 261120
          %v645 = vsel %vm643, %v619, 0
          %647 = vmatprep.subr.bf16.mxu0 0
          %648 = vmatpush1.bf16.msra.mxu0 %v639
          %649 = vmatprep.subr.bf16.mxu0 0
          %650 = vmatpush1.bf16.msra.mxu0 %v640
          %651 = vmatprep.subr.bf16.mxu0 0
          %652 = vmatpush1.bf16.msra.mxu0 0
          %653 = vmatprep.subr.bf16.mxu0 0
          %654 = vmatpush1.bf16.msra.mxu0 0
          %655 = vmatprep.subr.bf16.mxu0 0
          %656 = vmatpush1.bf16.msra.mxu0 0
          %657 = vmatprep.subr.bf16.mxu0 0
          %658 = vmatpush1.bf16.msra.mxu0 0
          %659 = vmatprep.subr.bf16.mxu0 0
          %660 = vmatpush1.bf16.msra.mxu0 0
          %661 = vmatprep.subr.bf16.mxu0 0
          %662 = vmatpush1.bf16.msra.mxu0 0
          %663 = vmatprep.subr.bf16.mxu0 0
          %664 = vmatpush1.bf16.msra.mxu0 0
          %665 = vmatprep.subr.bf16.mxu0 0
          %666 = vmatpush1.bf16.msra.mxu0 0
          %667 = vmatprep.subr.bf16.mxu0 0
          %668 = vmatpush1.bf16.msra.mxu0 0
          %669 = vmatprep.subr.bf16.mxu0 0
          %670 = vmatpush1.bf16.msra.mxu0 0
          %671 = vmatprep.subr.bf16.mxu0 0
          %672 = vmatpush1.bf16.msra.mxu0 0
          %673 = vmatprep.subr.bf16.mxu0 0
          %674 = vmatpush1.bf16.msra.mxu0 0
          %675 = vmatprep.subr.bf16.mxu0 0
          %676 = vmatpush1.bf16.msra.mxu0 0
          %677 = vmatprep.subr.bf16.mxu0 0
          %678 = vmatpush1.bf16.msra.mxu0 0
          %679 = vmatprep.mubr.bf16.mxu0 0
          %680 = vmatmul.mubr.bf16.gmra.mrb[0].mxu0 %v645
          %v681 = vpop.f32.mrb[0].mxu0
          %v682 = vadd.f32 %v629, %v681
          %v683 = vpop.f32.mrb[0].mxu0
          %v684 = vpop.f32.mrb[0].mxu0
          %v685 = vpop.f32.mrb[0].mxu0
          %686 = vdwg.mxu0
          %v687 = vld [vmem:[%s6] sm:$0xf]
          %v688 = vld [vmem:[%s6 + $0x4] sm:$0xf]
          %v689 = vld [vmem:[%s6 + $0x8] sm:$0xf]
          %v690 = vld [vmem:[%s6 + $0xc] sm:$0xf]
          %v691 = vld [vmem:[%s7] sm:$0x1]
          %v693 = vlaneseq
          %v694 = vshrl.u32 %v693, 7
          %v695 = vsub.s32 0, %v694
          %v696 = vrot.slane %v691, %v695
          %v702 = vunpack.c.l.b16 %v687
          %v703 = vunpack.c.l.b16 %v688
          %v704 = vunpack.c.l.b16 %v689
          %v705 = vunpack.c.l.b16 %v690
          %v706 = vpack.c.b16 %v703, %v702
          %v707 = vpack.c.b16 %v705, %v704
          %710 = vmatprep.subr.bf16.mxu0 0
          %711 = vmatpush1.bf16.msra.mxu0 %v706
          %712 = vmatprep.subr.bf16.mxu0 0
          %713 = vmatpush1.bf16.msra.mxu0 %v707
          %714 = vmatprep.subr.bf16.mxu0 0
          %715 = vmatpush1.bf16.msra.mxu0 0
          %716 = vmatprep.subr.bf16.mxu0 0
          %717 = vmatpush1.bf16.msra.mxu0 0
          %718 = vmatprep.subr.bf16.mxu0 0
          %719 = vmatpush1.bf16.msra.mxu0 0
          %720 = vmatprep.subr.bf16.mxu0 0
          %721 = vmatpush1.bf16.msra.mxu0 0
          %722 = vmatprep.subr.bf16.mxu0 0
          %723 = vmatpush1.bf16.msra.mxu0 0
          %724 = vmatprep.subr.bf16.mxu0 0
          %725 = vmatpush1.bf16.msra.mxu0 0
          %726 = vmatprep.subr.bf16.mxu0 0
          %727 = vmatpush1.bf16.msra.mxu0 0
          %728 = vmatprep.subr.bf16.mxu0 0
          %729 = vmatpush1.bf16.msra.mxu0 0
          %730 = vmatprep.subr.bf16.mxu0 0
          %731 = vmatpush1.bf16.msra.mxu0 0
          %732 = vmatprep.subr.bf16.mxu0 0
          %733 = vmatpush1.bf16.msra.mxu0 0
          %734 = vmatprep.subr.bf16.mxu0 0
          %735 = vmatpush1.bf16.msra.mxu0 0
          %736 = vmatprep.subr.bf16.mxu0 0
          %737 = vmatpush1.bf16.msra.mxu0 0
          %738 = vmatprep.subr.bf16.mxu0 0
          %739 = vmatpush1.bf16.msra.mxu0 0
          %740 = vmatprep.subr.bf16.mxu0 0
          %741 = vmatpush1.bf16.msra.mxu0 0
          %742 = vmatprep.mubr.bf16.mxu0 0
          %743 = vmatmul.mubr.bf16.gmra.mrb[0].mxu0 %v645
          %v744 = vpop.f32.mrb[0].mxu0
          %v745 = vadd.f32 %v696, %v744
          %v746 = vpop.f32.mrb[0].mxu0
          %v747 = vpop.f32.mrb[0].mxu0
          %v748 = vpop.f32.mrb[0].mxu0
          %749 = vdwg.mxu0
          %750 = vxpose.xlu0.b32.start [1/16] %v682, 128
          %751 = vxpose.xlu0.b32.cont [2/16] 0.0, 128
          %752 = vxpose.xlu0.b32.cont [3/16] 0.0, 128
          %753 = vxpose.xlu0.b32.cont [4/16] 0.0, 128
          %754 = vxpose.xlu0.b32.cont [5/16] 0.0, 128
          %755 = vxpose.xlu0.b32.cont [6/16] 0.0, 128
          %756 = vxpose.xlu0.b32.cont [7/16] 0.0, 128
          %757 = vxpose.xlu0.b32.cont [8/16] 0.0, 128
          %758 = vxpose.xlu0.b32.cont [9/16] 0.0, 128
          %759 = vxpose.xlu0.b32.cont [10/16] 0.0, 128
          %760 = vxpose.xlu0.b32.cont [11/16] 0.0, 128
          %761 = vxpose.xlu0.b32.cont [12/16] 0.0, 128
          %762 = vxpose.xlu0.b32.cont [13/16] 0.0, 128
          %763 = vxpose.xlu0.b32.cont [14/16] 0.0, 128
          %764 = vxpose.xlu0.b32.cont [15/16] 0.0, 128
          %765 = vxpose.xlu0.b32.end [16/16] 0.0, 128
          %v766 = vpop.trf.xlu0
          %v767 = vpop.trf.xlu0
          %v768 = vpop.trf.xlu0
          %v769 = vpop.trf.xlu0
          %v770 = vpop.trf.xlu0
          %v771 = vpop.trf.xlu0
          %v772 = vpop.trf.xlu0
          %v773 = vpop.trf.xlu0
          %v774 = vpop.trf.xlu0
          %v775 = vpop.trf.xlu0
          %v776 = vpop.trf.xlu0
          %v777 = vpop.trf.xlu0
          %v778 = vpop.trf.xlu0
          %v779 = vpop.trf.xlu0
          %v780 = vpop.trf.xlu0
          %v781 = vpop.trf.xlu0
          %v782 = vpack.c.bf16 %v766, %v766
          %vm783 = vcmask 60416
          %784 = vst.msk [vmem:[#allocation2] sm:$0xf] %vm783, %v782
          %v785 = vpack.c.bf16 %v745, %v745
          %786 = vst.msk [vmem:[#allocation3] sm:$0xf] %vm783, %v785
          %s787 = scalar_lea.vmem %s4, 16
          %v788 = vld [vmem:[%s787] sm:$0xf]
          %v789 = vld [vmem:[%s787 + $0x4] sm:$0xf]
          %v790 = vld [vmem:[%s787 + $0x8] sm:$0xf]
          %v791 = vld [vmem:[%s787 + $0xc] sm:$0xf]
          %s792 = scalar_lea.vmem %s5, 1
          %v793 = vld [vmem:[%s792] sm:$0x1]
          %v795 = vlaneseq
          %v796 = vshrl.u32 %v795, 7
          %v797 = vsub.s32 0, %v796
          %v798 = vrot.slane %v793, %v797
          %v804 = vunpack.c.l.b16 %v788
          %v805 = vunpack.c.l.b16 %v789
          %v806 = vunpack.c.l.b16 %v790
          %v807 = vunpack.c.l.b16 %v791
          %v808 = vpack.c.b16 %v805, %v804
          %v809 = vpack.c.b16 %v807, %v806
          %812 = vmatprep.subr.bf16.mxu0 0
          %813 = vmatpush1.bf16.msra.mxu0 %v808
          %814 = vmatprep.subr.bf16.mxu0 0
          %815 = vmatpush1.bf16.msra.mxu0 %v809
          %816 = vmatprep.subr.bf16.mxu0 0
          %817 = vmatpush1.bf16.msra.mxu0 0
          %818 = vmatprep.subr.bf16.mxu0 0
          %819 = vmatpush1.bf16.msra.mxu0 0
          %820 = vmatprep.subr.bf16.mxu0 0
          %821 = vmatpush1.bf16.msra.mxu0 0
          %822 = vmatprep.subr.bf16.mxu0 0
          %823 = vmatpush1.bf16.msra.mxu0 0
          %824 = vmatprep.subr.bf16.mxu0 0
          %825 = vmatpush1.bf16.msra.mxu0 0
          %826 = vmatprep.subr.bf16.mxu0 0
          %827 = vmatpush1.bf16.msra.mxu0 0
          %828 = vmatprep.subr.bf16.mxu0 0
          %829 = vmatpush1.bf16.msra.mxu0 0
          %830 = vmatprep.subr.bf16.mxu0 0
          %831 = vmatpush1.bf16.msra.mxu0 0
          %832 = vmatprep.subr.bf16.mxu0 0
          %833 = vmatpush1.bf16.msra.mxu0 0
          %834 = vmatprep.subr.bf16.mxu0 0
          %835 = vmatpush1.bf16.msra.mxu0 0
          %836 = vmatprep.subr.bf16.mxu0 0
          %837 = vmatpush1.bf16.msra.mxu0 0
          %838 = vmatprep.subr.bf16.mxu0 0
          %839 = vmatpush1.bf16.msra.mxu0 0
          %840 = vmatprep.subr.bf16.mxu0 0
          %841 = vmatpush1.bf16.msra.mxu0 0
          %842 = vmatprep.subr.bf16.mxu0 0
          %843 = vmatpush1.bf16.msra.mxu0 0
          %844 = vmatprep.mubr.bf16.mxu0 0
          %845 = vmatmul.mubr.bf16.gmra.mrb[0].mxu0 %v645
          %v846 = vpop.f32.mrb[0].mxu0
          %v847 = vadd.f32 %v798, %v846
          %v848 = vpop.f32.mrb[0].mxu0
          %v849 = vpop.f32.mrb[0].mxu0
          %v850 = vpop.f32.mrb[0].mxu0
          %851 = vdwg.mxu0
          %s852 = scalar_lea.vmem %s6, 16
          %v853 = vld [vmem:[%s852] sm:$0xf]
          %v854 = vld [vmem:[%s852 + $0x4] sm:$0xf]
          %v855 = vld [vmem:[%s852 + $0x8] sm:$0xf]
          %v856 = vld [vmem:[%s852 + $0xc] sm:$0xf]
          %s857 = scalar_lea.vmem %s7, 1
          %v858 = vld [vmem:[%s857] sm:$0x1]
          %v860 = vlaneseq
          %v861 = vshrl.u32 %v860, 7
          %v862 = vsub.s32 0, %v861
          %v863 = vrot.slane %v858, %v862
          %v869 = vunpack.c.l.b16 %v853
          %v870 = vunpack.c.l.b16 %v854
          %v871 = vunpack.c.l.b16 %v855
          %v872 = vunpack.c.l.b16 %v856
          %v873 = vpack.c.b16 %v870, %v869
          %v874 = vpack.c.b16 %v872, %v871
          %877 = vmatprep.subr.bf16.mxu0 0
          %878 = vmatpush1.bf16.msra.mxu0 %v873
          %879 = vmatprep.subr.bf16.mxu0 0
          %880 = vmatpush1.bf16.msra.mxu0 %v874
          %881 = vmatprep.subr.bf16.mxu0 0
          %882 = vmatpush1.bf16.msra.mxu0 0
          %883 = vmatprep.subr.bf16.mxu0 0
          %884 = vmatpush1.bf16.msra.mxu0 0
          %885 = vmatprep.subr.bf16.mxu0 0
          %886 = vmatpush1.bf16.msra.mxu0 0
          %887 = vmatprep.subr.bf16.mxu0 0
          %888 = vmatpush1.bf16.msra.mxu0 0
          %889 = vmatprep.subr.bf16.mxu0 0
          %890 = vmatpush1.bf16.msra.mxu0 0
          %891 = vmatprep.subr.bf16.mxu0 0
          %892 = vmatpush1.bf16.msra.mxu0 0
          %893 = vmatprep.subr.bf16.mxu0 0
          %894 = vmatpush1.bf16.msra.mxu0 0
          %895 = vmatprep.subr.bf16.mxu0 0
          %896 = vmatpush1.bf16.msra.mxu0 0
          %897 = vmatprep.subr.bf16.mxu0 0
          %898 = vmatpush1.bf16.msra.mxu0 0
          %899 = vmatprep.subr.bf16.mxu0 0
          %900 = vmatpush1.bf16.msra.mxu0 0
          %901 = vmatprep.subr.bf16.mxu0 0
          %902 = vmatpush1.bf16.msra.mxu0 0
          %903 = vmatprep.subr.bf16.mxu0 0
          %904 = vmatpush1.bf16.msra.mxu0 0
          %905 = vmatprep.subr.bf16.mxu0 0
          %906 = vmatpush1.bf16.msra.mxu0 0
          %907 = vmatprep.subr.bf16.mxu0 0
          %908 = vmatpush1.bf16.msra.mxu0 0
          %909 = vmatprep.mubr.bf16.mxu0 0
          %910 = vmatmul.mubr.bf16.gmra.mrb[0].mxu0 %v645
          %v911 = vpop.f32.mrb[0].mxu0
          %v912 = vadd.f32 %v863, %v911
          %v913 = vpop.f32.mrb[0].mxu0
          %v914 = vpop.f32.mrb[0].mxu0
          %v915 = vpop.f32.mrb[0].mxu0
          %916 = vdwg.mxu0
          %917 = vxpose.xlu0.b32.start [1/16] %v847, 128
          %918 = vxpose.xlu0.b32.cont [2/16] 0.0, 128
          %919 = vxpose.xlu0.b32.cont [3/16] 0.0, 128
          %920 = vxpose.xlu0.b32.cont [4/16] 0.0, 128
          %921 = vxpose.xlu0.b32.cont [5/16] 0.0, 128
          %922 = vxpose.xlu0.b32.cont [6/16] 0.0, 128
          %923 = vxpose.xlu0.b32.cont [7/16] 0.0, 128
          %924 = vxpose.xlu0.b32.cont [8/16] 0.0, 128
          %925 = vxpose.xlu0.b32.cont [9/16] 0.0, 128
          %926 = vxpose.xlu0.b32.cont [10/16] 0.0, 128
          %927 = vxpose.xlu0.b32.cont [11/16] 0.0, 128
          %928 = vxpose.xlu0.b32.cont [12/16] 0.0, 128
          %929 = vxpose.xlu0.b32.cont [13/16] 0.0, 128
          %930 = vxpose.xlu0.b32.cont [14/16] 0.0, 128
          %931 = vxpose.xlu0.b32.cont [15/16] 0.0, 128
          %932 = vxpose.xlu0.b32.end [16/16] 0.0, 128
          %v933 = vpop.trf.xlu0
          %v934 = vpop.trf.xlu0
          %v935 = vpop.trf.xlu0
          %v936 = vpop.trf.xlu0
          %v937 = vpop.trf.xlu0
          %v938 = vpop.trf.xlu0
          %v939 = vpop.trf.xlu0
          %v940 = vpop.trf.xlu0
          %v941 = vpop.trf.xlu0
          %v942 = vpop.trf.xlu0
          %v943 = vpop.trf.xlu0
          %v944 = vpop.trf.xlu0
          %v945 = vpop.trf.xlu0
          %v946 = vpop.trf.xlu0
          %v947 = vpop.trf.xlu0
          %v948 = vpop.trf.xlu0
          %v949 = vpack.c.bf16 %v933, %v933
          %s950 = scalar_lea.vmem [#allocation2], 4
          %951 = vst.msk [vmem:[%s950] sm:$0xf] %vm783, %v949
          %v952 = vpack.c.bf16 %v912, %v912
          %s953 = scalar_lea.vmem [#allocation3], 4
          %954 = vst.msk [vmem:[%s953] sm:$0xf] %vm783, %v952
          %s955 = scalar_lea.vmem %s4, 32
          %v956 = vld [vmem:[%s955] sm:$0xf]
          %v957 = vld [vmem:[%s955 + $0x4] sm:$0xf]
          %v958 = vld [vmem:[%s955 + $0x8] sm:$0xf]
          %v959 = vld [vmem:[%s955 + $0xc] sm:$0xf]
          %s960 = scalar_lea.vmem %s5, 2
          %v961 = vld [vmem:[%s960] sm:$0x1]
          %v963 = vlaneseq
          %v964 = vshrl.u32 %v963, 7
          %v965 = vsub.s32 0, %v964
          %v966 = vrot.slane %v961, %v965
          %v972 = vunpack.c.l.b16 %v956
          %v973 = vunpack.c.l.b16 %v957
          %v974 = vunpack.c.l.b16 %v958
          %v975 = vunpack.c.l.b16 %v959
          %v976 = vpack.c.b16 %v973, %v972
          %v977 = vpack.c.b16 %v975, %v974
          %980 = vmatprep.subr.bf16.mxu0 0
          %981 = vmatpush1.bf16.msra.mxu0 %v976
          %982 = vmatprep.subr.bf16.mxu0 0
          %983 = vmatpush1.bf16.msra.mxu0 %v977
          %984 = vmatprep.subr.bf16.mxu0 0
          %985 = vmatpush1.bf16.msra.mxu0 0
          %986 = vmatprep.subr.bf16.mxu0 0
          %987 = vmatpush1.bf16.msra.mxu0 0
          %988 = vmatprep.subr.bf16.mxu0 0
          %989 = vmatpush1.bf16.msra.mxu0 0
          %990 = vmatprep.subr.bf16.mxu0 0
          %991 = vmatpush1.bf16.msra.mxu0 0
          %992 = vmatprep.subr.bf16.mxu0 0
          %993 = vmatpush1.bf16.msra.mxu0 0
          %994 = vmatprep.subr.bf16.mxu0 0
          %995 = vmatpush1.bf16.msra.mxu0 0
          %996 = vmatprep.subr.bf16.mxu0 0
          %997 = vmatpush1.bf16.msra.mxu0 0
          %998 = vmatprep.subr.bf16.mxu0 0
          %999 = vmatpush1.bf16.msra.mxu0 0
          %1000 = vmatprep.subr.bf16.mxu0 0
          %1001 = vmatpush1.bf16.msra.mxu0 0
          %1002 = vmatprep.subr.bf16.mxu0 0
          %1003 = vmatpush1.bf16.msra.mxu0 0
          %1004 = vmatprep.subr.bf16.mxu0 0
          %1005 = vmatpush1.bf16.msra.mxu0 0
          %1006 = vmatprep.subr.bf16.mxu0 0
          %1007 = vmatpush1.bf16.msra.mxu0 0
          %1008 = vmatprep.subr.bf16.mxu0 0
          %1009 = vmatpush1.bf16.msra.mxu0 0
          %1010 = vmatprep.subr.bf16.mxu0 0
          %1011 = vmatpush1.bf16.msra.mxu0 0
          %1012 = vmatprep.mubr.bf16.mxu0 0
          %1013 = vmatmul.mubr.bf16.gmra.mrb[0].mxu0 %v645
          %v1014 = vpop.f32.mrb[0].mxu0
          %v1015 = vadd.f32 %v966, %v1014
          %v1016 = vpop.f32.mrb[0].mxu0
          %v1017 = vpop.f32.mrb[0].mxu0
          %v1018 = vpop.f32.mrb[0].mxu0
          %1019 = vdwg.mxu0
          %s1020 = scalar_lea.vmem %s6, 32
          %v1021 = vld [vmem:[%s1020] sm:$0xf]
          %v1022 = vld [vmem:[%s1020 + $0x4] sm:$0xf]
          %v1023 = vld [vmem:[%s1020 + $0x8] sm:$0xf]
          %v1024 = vld [vmem:[%s1020 + $0xc] sm:$0xf]
          %s1025 = scalar_lea.vmem %s7, 2
          %v1026 = vld [vmem:[%s1025] sm:$0x1]
          %v1028 = vlaneseq
          %v1029 = vshrl.u32 %v1028, 7
          %v1030 = vsub.s32 0, %v1029
          %v1031 = vrot.slane %v1026, %v1030
          %v1037 = vunpack.c.l.b16 %v1021
          %v1038 = vunpack.c.l.b16 %v1022
          %v1039 = vunpack.c.l.b16 %v1023
          %v1040 = vunpack.c.l.b16 %v1024
          %v1041 = vpack.c.b16 %v1038, %v1037
          %v1042 = vpack.c.b16 %v1040, %v1039
          %1045 = vmatprep.subr.bf16.mxu0 0
          %1046 = vmatpush1.bf16.msra.mxu0 %v1041
          %1047 = vmatprep.subr.bf16.mxu0 0
          %1048 = vmatpush1.bf16.msra.mxu0 %v1042
          %1049 = vmatprep.subr.bf16.mxu0 0
          %1050 = vmatpush1.bf16.msra.mxu0 0
          %1051 = vmatprep.subr.bf16.mxu0 0
          %1052 = vmatpush1.bf16.msra.mxu0 0
          %1053 = vmatprep.subr.bf16.mxu0 0
          %1054 = vmatpush1.bf16.msra.mxu0 0
          %1055 = vmatprep.subr.bf16.mxu0 0
          %1056 = vmatpush1.bf16.msra.mxu0 0
          %1057 = vmatprep.subr.bf16.mxu0 0
          %1058 = vmatpush1.bf16.msra.mxu0 0
          %1059 = vmatprep.subr.bf16.mxu0 0
          %1060 = vmatpush1.bf16.msra.mxu0 0
          %1061 = vmatprep.subr.bf16.mxu0 0
          %1062 = vmatpush1.bf16.msra.mxu0 0
          %1063 = vmatprep.subr.bf16.mxu0 0
          %1064 = vmatpush1.bf16.msra.mxu0 0
          %1065 = vmatprep.subr.bf16.mxu0 0
          %1066 = vmatpush1.bf16.msra.mxu0 0
          %1067 = vmatprep.subr.bf16.mxu0 0
          %1068 = vmatpush1.bf16.msra.mxu0 0
          %1069 = vmatprep.subr.bf16.mxu0 0
          %1070 = vmatpush1.bf16.msra.mxu0 0
          %1071 = vmatprep.subr.bf16.mxu0 0
          %1072 = vmatpush1.bf16.msra.mxu0 0
          %1073 = vmatprep.subr.bf16.mxu0 0
          %1074 = vmatpush1.bf16.msra.mxu0 0
          %1075 = vmatprep.subr.bf16.mxu0 0
          %1076 = vmatpush1.bf16.msra.mxu0 0
          %1077 = vmatprep.mubr.bf16.mxu0 0
          %1078 = vmatmul.mubr.bf16.gmra.mrb[0].mxu0 %v645
          %v1079 = vpop.f32.mrb[0].mxu0
          %v1080 = vadd.f32 %v1031, %v1079
          %v1081 = vpop.f32.mrb[0].mxu0
          %v1082 = vpop.f32.mrb[0].mxu0
          %v1083 = vpop.f32.mrb[0].mxu0
          %1084 = vdwg.mxu0
          %1085 = vxpose.xlu0.b32.start [1/16] %v1015, 128
          %1086 = vxpose.xlu0.b32.cont [2/16] 0.0, 128
          %1087 = vxpose.xlu0.b32.cont [3/16] 0.0, 128
          %1088 = vxpose.xlu0.b32.cont [4/16] 0.0, 128
          %1089 = vxpose.xlu0.b32.cont [5/16] 0.0, 128
          %1090 = vxpose.xlu0.b32.cont [6/16] 0.0, 128
          %1091 = vxpose.xlu0.b32.cont [7/16] 0.0, 128
          %1092 = vxpose.xlu0.b32.cont [8/16] 0.0, 128
          %1093 = vxpose.xlu0.b32.cont [9/16] 0.0, 128
          %1094 = vxpose.xlu0.b32.cont [10/16] 0.0, 128
          %1095 = vxpose.xlu0.b32.cont [11/16] 0.0, 128
          %1096 = vxpose.xlu0.b32.cont [12/16] 0.0, 128
          %1097 = vxpose.xlu0.b32.cont [13/16] 0.0, 128
          %1098 = vxpose.xlu0.b32.cont [14/16] 0.0, 128
          %1099 = vxpose.xlu0.b32.cont [15/16] 0.0, 128
          %1100 = vxpose.xlu0.b32.end [16/16] 0.0, 128
          %v1101 = vpop.trf.xlu0
          %v1102 = vpop.trf.xlu0
          %v1103 = vpop.trf.xlu0
          %v1104 = vpop.trf.xlu0
          %v1105 = vpop.trf.xlu0
          %v1106 = vpop.trf.xlu0
          %v1107 = vpop.trf.xlu0
          %v1108 = vpop.trf.xlu0
          %v1109 = vpop.trf.xlu0
          %v1110 = vpop.trf.xlu0
          %v1111 = vpop.trf.xlu0
          %v1112 = vpop.trf.xlu0
          %v1113 = vpop.trf.xlu0
          %v1114 = vpop.trf.xlu0
          %v1115 = vpop.trf.xlu0
          %v1116 = vpop.trf.xlu0
          %v1117 = vpack.c.bf16 %v1101, %v1101
          %s1118 = scalar_lea.vmem [#allocation2], 8
          %1119 = vst.msk [vmem:[%s1118] sm:$0xf] %vm783, %v1117
          %v1120 = vpack.c.bf16 %v1080, %v1080
          %s1121 = scalar_lea.vmem [#allocation3], 8
          %1122 = vst.msk [vmem:[%s1121] sm:$0xf] %vm783, %v1120
          %s1123 = scalar_lea.vmem %s4, 48
          %v1124 = vld [vmem:[%s1123] sm:$0xf]
          %v1125 = vld [vmem:[%s1123 + $0x4] sm:$0xf]
          %v1126 = vld [vmem:[%s1123 + $0x8] sm:$0xf]
          %v1127 = vld [vmem:[%s1123 + $0xc] sm:$0xf]
          %s1128 = scalar_lea.vmem %s5, 3
          %v1129 = vld [vmem:[%s1128] sm:$0x1]
          %v1131 = vlaneseq
          %v1132 = vshrl.u32 %v1131, 7
          %v1133 = vsub.s32 0, %v1132
          %v1134 = vrot.slane %v1129, %v1133
          %v1140 = vunpack.c.l.b16 %v1124
          %v1141 = vunpack.c.l.b16 %v1125
          %v1142 = vunpack.c.l.b16 %v1126
          %v1143 = vunpack.c.l.b16 %v1127
          %v1144 = vpack.c.b16 %v1141, %v1140
          %v1145 = vpack.c.b16 %v1143, %v1142
          %1148 = vmatprep.subr.bf16.mxu0 0
          %1149 = vmatpush1.bf16.msra.mxu0 %v1144
          %1150 = vmatprep.subr.bf16.mxu0 0
          %1151 = vmatpush1.bf16.msra.mxu0 %v1145
          %1152 = vmatprep.subr.bf16.mxu0 0
          %1153 = vmatpush1.bf16.msra.mxu0 0
          %1154 = vmatprep.subr.bf16.mxu0 0
          %1155 = vmatpush1.bf16.msra.mxu0 0
          %1156 = vmatprep.subr.bf16.mxu0 0
          %1157 = vmatpush1.bf16.msra.mxu0 0
          %1158 = vmatprep.subr.bf16.mxu0 0
          %1159 = vmatpush1.bf16.msra.mxu0 0
          %1160 = vmatprep.subr.bf16.mxu0 0
          %1161 = vmatpush1.bf16.msra.mxu0 0
          %1162 = vmatprep.subr.bf16.mxu0 0
          %1163 = vmatpush1.bf16.msra.mxu0 0
          %1164 = vmatprep.subr.bf16.mxu0 0
          %1165 = vmatpush1.bf16.msra.mxu0 0
          %1166 = vmatprep.subr.bf16.mxu0 0
          %1167 = vmatpush1.bf16.msra.mxu0 0
          %1168 = vmatprep.subr.bf16.mxu0 0
          %1169 = vmatpush1.bf16.msra.mxu0 0
          %1170 = vmatprep.subr.bf16.mxu0 0
          %1171 = vmatpush1.bf16.msra.mxu0 0
          %1172 = vmatprep.subr.bf16.mxu0 0
          %1173 = vmatpush1.bf16.msra.mxu0 0
          %1174 = vmatprep.subr.bf16.mxu0 0
          %1175 = vmatpush1.bf16.msra.mxu0 0
          %1176 = vmatprep.subr.bf16.mxu0 0
          %1177 = vmatpush1.bf16.msra.mxu0 0
          %1178 = vmatprep.subr.bf16.mxu0 0
          %1179 = vmatpush1.bf16.msra.mxu0 0
          %1180 = vmatprep.mubr.bf16.mxu0 0
          %1181 = vmatmul.mubr.bf16.gmra.mrb[0].mxu0 %v645
          %v1182 = vpop.f32.mrb[0].mxu0
          %v1183 = vadd.f32 %v1134, %v1182
          %v1184 = vpop.f32.mrb[0].mxu0
          %v1185 = vpop.f32.mrb[0].mxu0
          %v1186 = vpop.f32.mrb[0].mxu0
          %1187 = vdwg.mxu0
          %s1188 = scalar_lea.vmem %s6, 48
          %v1189 = vld [vmem:[%s1188] sm:$0xf]
          %v1190 = vld [vmem:[%s1188 + $0x4] sm:$0xf]
          %v1191 = vld [vmem:[%s1188 + $0x8] sm:$0xf]
          %v1192 = vld [vmem:[%s1188 + $0xc] sm:$0xf]
          %s1193 = scalar_lea.vmem %s7, 3
          %v1194 = vld [vmem:[%s1193] sm:$0x1]
          %v1196 = vlaneseq
          %v1197 = vshrl.u32 %v1196, 7
          %v1198 = vsub.s32 0, %v1197
          %v1199 = vrot.slane %v1194, %v1198
          %v1205 = vunpack.c.l.b16 %v1189
          %v1206 = vunpack.c.l.b16 %v1190
          %v1207 = vunpack.c.l.b16 %v1191
          %v1208 = vunpack.c.l.b16 %v1192
          %v1209 = vpack.c.b16 %v1206, %v1205
          %v1210 = vpack.c.b16 %v1208, %v1207
          %1213 = vmatprep.subr.bf16.mxu0 0
          %1214 = vmatpush1.bf16.msra.mxu0 %v1209
          %1215 = vmatprep.subr.bf16.mxu0 0
          %1216 = vmatpush1.bf16.msra.mxu0 %v1210
          %1217 = vmatprep.subr.bf16.mxu0 0
          %1218 = vmatpush1.bf16.msra.mxu0 0
          %1219 = vmatprep.subr.bf16.mxu0 0
          %1220 = vmatpush1.bf16.msra.mxu0 0
          %1221 = vmatprep.subr.bf16.mxu0 0
          %1222 = vmatpush1.bf16.msra.mxu0 0
          %1223 = vmatprep.subr.bf16.mxu0 0
          %1224 = vmatpush1.bf16.msra.mxu0 0
          %1225 = vmatprep.subr.bf16.mxu0 0
          %1226 = vmatpush1.bf16.msra.mxu0 0
          %1227 = vmatprep.subr.bf16.mxu0 0
          %1228 = vmatpush1.bf16.msra.mxu0 0
          %1229 = vmatprep.subr.bf16.mxu0 0
          %1230 = vmatpush1.bf16.msra.mxu0 0
          %1231 = vmatprep.subr.bf16.mxu0 0
          %1232 = vmatpush1.bf16.msra.mxu0 0
          %1233 = vmatprep.subr.bf16.mxu0 0
          %1234 = vmatpush1.bf16.msra.mxu0 0
          %1235 = vmatprep.subr.bf16.mxu0 0
          %1236 = vmatpush1.bf16.msra.mxu0 0
          %1237 = vmatprep.subr.bf16.mxu0 0
          %1238 = vmatpush1.bf16.msra.mxu0 0
          %1239 = vmatprep.subr.bf16.mxu0 0
          %1240 = vmatpush1.bf16.msra.mxu0 0
          %1241 = vmatprep.subr.bf16.mxu0 0
          %1242 = vmatpush1.bf16.msra.mxu0 0
          %1243 = vmatprep.subr.bf16.mxu0 0
          %1244 = vmatpush1.bf16.msra.mxu0 0
          %1245 = vmatprep.mubr.bf16.mxu0 0
          %1246 = vmatmul.mubr.bf16.gmra.mrb[0].mxu0 %v645
          %v1247 = vpop.f32.mrb[0].mxu0
          %v1248 = vadd.f32 %v1199, %v1247
          %v1249 = vpop.f32.mrb[0].mxu0
          %v1250 = vpop.f32.mrb[0].mxu0
          %v1251 = vpop.f32.mrb[0].mxu0
          %1252 = vdwg.mxu0
          %1253 = vxpose.xlu0.b32.start [1/16] %v1183, 128
          %1254 = vxpose.xlu0.b32.cont [2/16] 0.0, 128
          %1255 = vxpose.xlu0.b32.cont [3/16] 0.0, 128
          %1256 = vxpose.xlu0.b32.cont [4/16] 0.0, 128
          %1257 = vxpose.xlu0.b32.cont [5/16] 0.0, 128
          %1258 = vxpose.xlu0.b32.cont [6/16] 0.0, 128
          %1259 = vxpose.xlu0.b32.cont [7/16] 0.0, 128
          %1260 = vxpose.xlu0.b32.cont [8/16] 0.0, 128
          %1261 = vxpose.xlu0.b32.cont [9/16] 0.0, 128
          %1262 = vxpose.xlu0.b32.cont [10/16] 0.0, 128
          %1263 = vxpose.xlu0.b32.cont [11/16] 0.0, 128
          %1264 = vxpose.xlu0.b32.cont [12/16] 0.0, 128
          %1265 = vxpose.xlu0.b32.cont [13/16] 0.0, 128
          %1266 = vxpose.xlu0.b32.cont [14/16] 0.0, 128
          %1267 = vxpose.xlu0.b32.cont [15/16] 0.0, 128
          %1268 = vxpose.xlu0.b32.end [16/16] 0.0, 128
          %v1269 = vpop.trf.xlu0
          %v1270 = vpop.trf.xlu0
          %v1271 = vpop.trf.xlu0
          %v1272 = vpop.trf.xlu0
          %v1273 = vpop.trf.xlu0
          %v1274 = vpop.trf.xlu0
          %v1275 = vpop.trf.xlu0
          %v1276 = vpop.trf.xlu0
          %v1277 = vpop.trf.xlu0
          %v1278 = vpop.trf.xlu0
          %v1279 = vpop.trf.xlu0
          %v1280 = vpop.trf.xlu0
          %v1281 = vpop.trf.xlu0
          %v1282 = vpop.trf.xlu0
          %v1283 = vpop.trf.xlu0
          %v1284 = vpop.trf.xlu0
          %v1285 = vpack.c.bf16 %v1269, %v1269
          %s1286 = scalar_lea.vmem [#allocation2], 12
          %1287 = vst.msk [vmem:[%s1286] sm:$0xf] %vm783, %v1285
          %v1288 = vpack.c.bf16 %v1248, %v1248
          %s1289 = scalar_lea.vmem [#allocation3], 12
          %1290 = vst.msk [vmem:[%s1289] sm:$0xf] %vm783, %v1288
        $region96: #{tpu_custom_call.1} parent=91 // pred_fallthru
          _
        %s1291 = smul.u32 %s37, 8
        %s1292 = scalar_lea.vmem %s605, %s1291
        %v1293 = vld [vmem:[%s1292] sm:$0xff]
        %v1294 = vpack.c.bf16 %v1293, %v1293
        %v1295 = vld [vmem:[%s612] sm:$0xf]
        %v1296 = vunpack.c.l.bf16 %v1295
        %v1297 = vld [vmem:[%s9] sm:$0x1]
        %v1299 = vlaneseq
        %v1300 = vshrl.u32 %v1299, 7
        %v1301 = vsub.s32 0, %v1300
        %v1302 = vrot.slane %v1297, %v1301
        %v1304 = vld [vmem:[%s2] sm:$0xf]
        %v1305 = vld [vmem:[%s2 + $0x4] sm:$0xf]
        %v1306 = vld [vmem:[%s2 + $0x8] sm:$0xf]
        %v1307 = vld [vmem:[%s2 + $0xc] sm:$0xf]
        %v1308 = vld [vmem:[%s3] sm:$0x1]
        %v1310 = vlaneseq
        %v1311 = vshrl.u32 %v1310, 7
        %v1312 = vsub.s32 0, %v1311
        %v1313 = vrot.slane %v1308, %v1312
        %v1319 = vunpack.c.l.b16 %v1304
        %v1320 = vunpack.c.l.b16 %v1305
        %v1321 = vunpack.c.l.b16 %v1306
        %v1322 = vunpack.c.l.b16 %v1307
        %v1323 = vpack.c.b16 %v1320, %v1319
        %v1324 = vpack.c.b16 %v1322, %v1321
        %vm1327 = vcmask 261120
        %v1329 = vsel %vm1327, %v1294, 0
        %1331 = vmatprep.subr.bf16.mxu0 0
        %1332 = vmatpush1.bf16.msra.mxu0 %v1323
        %1333 = vmatprep.subr.bf16.mxu0 0
        %1334 = vmatpush1.bf16.msra.mxu0 %v1324
        %1335 = vmatprep.subr.bf16.mxu0 0
        %1336 = vmatpush1.bf16.msra.mxu0 0
        %1337 = vmatprep.subr.bf16.mxu0 0
        %1338 = vmatpush1.bf16.msra.mxu0 0
        %1339 = vmatprep.subr.bf16.mxu0 0
        %1340 = vmatpush1.bf16.msra.mxu0 0
        %1341 = vmatprep.subr.bf16.mxu0 0
        %1342 = vmatpush1.bf16.msra.mxu0 0
        %1343 = vmatprep.subr.bf16.mxu0 0
        %1344 = vmatpush1.bf16.msra.mxu0 0
        %1345 = vmatprep.subr.bf16.mxu0 0
        %1346 = vmatpush1.bf16.msra.mxu0 0
        %1347 = vmatprep.subr.bf16.mxu0 0
        %1348 = vmatpush1.bf16.msra.mxu0 0
        %1349 = vmatprep.subr.bf16.mxu0 0
        %1350 = vmatpush1.bf16.msra.mxu0 0
        %1351 = vmatprep.subr.bf16.mxu0 0
        %1352 = vmatpush1.bf16.msra.mxu0 0
        %1353 = vmatprep.subr.bf16.mxu0 0
        %1354 = vmatpush1.bf16.msra.mxu0 0
        %1355 = vmatprep.subr.bf16.mxu0 0
        %1356 = vmatpush1.bf16.msra.mxu0 0
        %1357 = vmatprep.subr.bf16.mxu0 0
        %1358 = vmatpush1.bf16.msra.mxu0 0
        %1359 = vmatprep.subr.bf16.mxu0 0
        %1360 = vmatpush1.bf16.msra.mxu0 0
        %1361 = vmatprep.subr.bf16.mxu0 0
        %1362 = vmatpush1.bf16.msra.mxu0 0
        %1363 = vmatprep.mubr.bf16.mxu0 0
        %1364 = vmatmul.mubr.bf16.gmra.mrb[0].mxu0 %v1329
        %v1365 = vpop.f32.mrb[0].mxu0
        %v1366 = vadd.f32 %v1313, %v1365
        %v1367 = vpop.f32.mrb[0].mxu0
        %v1368 = vpop.f32.mrb[0].mxu0
        %v1369 = vpop.f32.mrb[0].mxu0
        %1370 = vdwg.mxu0
        %s1371 = scalar_lea.vmem %s2, 16
        %v1372 = vld [vmem:[%s1371] sm:$0xf]
        %v1373 = vld [vmem:[%s1371 + $0x4] sm:$0xf]
        %v1374 = vld [vmem:[%s1371 + $0x8] sm:$0xf]
        %v1375 = vld [vmem:[%s1371 + $0xc] sm:$0xf]
        %s1376 = scalar_lea.vmem %s3, 1
        %v1377 = vld [vmem:[%s1376] sm:$0x1]
        %v1379 = vlaneseq
        %v1380 = vshrl.u32 %v1379, 7
        %v1381 = vsub.s32 0, %v1380
        %v1382 = vrot.slane %v1377, %v1381
        %v1388 = vunpack.c.l.b16 %v1372
        %v1389 = vunpack.c.l.b16 %v1373
        %v1390 = vunpack.c.l.b16 %v1374
        %v1391 = vunpack.c.l.b16 %v1375
        %v1392 = vpack.c.b16 %v1389, %v1388
        %v1393 = vpack.c.b16 %v1391, %v1390
        %1396 = vmatprep.subr.bf16.mxu0 0
        %1397 = vmatpush1.bf16.msra.mxu0 %v1392
        %1398 = vmatprep.subr.bf16.mxu0 0
        %1399 = vmatpush1.bf16.msra.mxu0 %v1393
        %1400 = vmatprep.subr.bf16.mxu0 0
        %1401 = vmatpush1.bf16.msra.mxu0 0
        %1402 = vmatprep.subr.bf16.mxu0 0
        %1403 = vmatpush1.bf16.msra.mxu0 0
        %1404 = vmatprep.subr.bf16.mxu0 0
        %1405 = vmatpush1.bf16.msra.mxu0 0
        %1406 = vmatprep.subr.bf16.mxu0 0
        %1407 = vmatpush1.bf16.msra.mxu0 0
        %1408 = vmatprep.subr.bf16.mxu0 0
        %1409 = vmatpush1.bf16.msra.mxu0 0
        %1410 = vmatprep.subr.bf16.mxu0 0
        %1411 = vmatpush1.bf16.msra.mxu0 0
        %1412 = vmatprep.subr.bf16.mxu0 0
        %1413 = vmatpush1.bf16.msra.mxu0 0
        %1414 = vmatprep.subr.bf16.mxu0 0
        %1415 = vmatpush1.bf16.msra.mxu0 0
        %1416 = vmatprep.subr.bf16.mxu0 0
        %1417 = vmatpush1.bf16.msra.mxu0 0
        %1418 = vmatprep.subr.bf16.mxu0 0
        %1419 = vmatpush1.bf16.msra.mxu0 0
        %1420 = vmatprep.subr.bf16.mxu0 0
        %1421 = vmatpush1.bf16.msra.mxu0 0
        %1422 = vmatprep.subr.bf16.mxu0 0
        %1423 = vmatpush1.bf16.msra.mxu0 0
        %1424 = vmatprep.subr.bf16.mxu0 0
        %1425 = vmatpush1.bf16.msra.mxu0 0
        %1426 = vmatprep.subr.bf16.mxu0 0
        %1427 = vmatpush1.bf16.msra.mxu0 0
        %1428 = vmatprep.mubr.bf16.mxu0 0
        %1429 = vmatmul.mubr.bf16.gmra.mrb[0].mxu0 %v1329
        %v1430 = vpop.f32.mrb[0].mxu0
        %v1431 = vadd.f32 %v1382, %v1430
        %v1432 = vpop.f32.mrb[0].mxu0
        %v1433 = vpop.f32.mrb[0].mxu0
        %v1434 = vpop.f32.mrb[0].mxu0
        %1435 = vdwg.mxu0
        %s1436 = scalar_lea.vmem %s2, 32
        %v1437 = vld [vmem:[%s1436] sm:$0xf]
        %v1438 = vld [vmem:[%s1436 + $0x4] sm:$0xf]
        %v1439 = vld [vmem:[%s1436 + $0x8] sm:$0xf]
        %v1440 = vld [vmem:[%s1436 + $0xc] sm:$0xf]
        %s1441 = scalar_lea.vmem %s3, 2
        %v1442 = vld [vmem:[%s1441] sm:$0x1]
        %v1444 = vlaneseq
        %v1445 = vshrl.u32 %v1444, 7
        %v1446 = vsub.s32 0, %v1445
        %v1447 = vrot.slane %v1442, %v1446
        %v1453 = vunpack.c.l.b16 %v1437
        %v1454 = vunpack.c.l.b16 %v1438
        %v1455 = vunpack.c.l.b16 %v1439
        %v1456 = vunpack.c.l.b16 %v1440
        %v1457 = vpack.c.b16 %v1454, %v1453
        %v1458 = vpack.c.b16 %v1456, %v1455
        %1461 = vmatprep.subr.bf16.mxu0 0
        %1462 = vmatpush1.bf16.msra.mxu0 %v1457
        %1463 = vmatprep.subr.bf16.mxu0 0
        %1464 = vmatpush1.bf16.msra.mxu0 %v1458
        %1465 = vmatprep.subr.bf16.mxu0 0
        %1466 = vmatpush1.bf16.msra.mxu0 0
        %1467 = vmatprep.subr.bf16.mxu0 0
        %1468 = vmatpush1.bf16.msra.mxu0 0
        %1469 = vmatprep.subr.bf16.mxu0 0
        %1470 = vmatpush1.bf16.msra.mxu0 0
        %1471 = vmatprep.subr.bf16.mxu0 0
        %1472 = vmatpush1.bf16.msra.mxu0 0
        %1473 = vmatprep.subr.bf16.mxu0 0
        %1474 = vmatpush1.bf16.msra.mxu0 0
        %1475 = vmatprep.subr.bf16.mxu0 0
        %1476 = vmatpush1.bf16.msra.mxu0 0
        %1477 = vmatprep.subr.bf16.mxu0 0
        %1478 = vmatpush1.bf16.msra.mxu0 0
        %1479 = vmatprep.subr.bf16.mxu0 0
        %1480 = vmatpush1.bf16.msra.mxu0 0
        %1481 = vmatprep.subr.bf16.mxu0 0
        %1482 = vmatpush1.bf16.msra.mxu0 0
        %1483 = vmatprep.subr.bf16.mxu0 0
        %1484 = vmatpush1.bf16.msra.mxu0 0
        %1485 = vmatprep.subr.bf16.mxu0 0
        %1486 = vmatpush1.bf16.msra.mxu0 0
        %1487 = vmatprep.subr.bf16.mxu0 0
        %1488 = vmatpush1.bf16.msra.mxu0 0
        %1489 = vmatprep.subr.bf16.mxu0 0
        %1490 = vmatpush1.bf16.msra.mxu0 0
        %1491 = vmatprep.subr.bf16.mxu0 0
        %1492 = vmatpush1.bf16.msra.mxu0 0
        %1493 = vmatprep.mubr.bf16.mxu0 0
        %1494 = vmatmul.mubr.bf16.gmra.mrb[0].mxu0 %v1329
        %v1495 = vpop.f32.mrb[0].mxu0
        %v1496 = vadd.f32 %v1447, %v1495
        %v1497 = vpop.f32.mrb[0].mxu0
        %v1498 = vpop.f32.mrb[0].mxu0
        %v1499 = vpop.f32.mrb[0].mxu0
        %1500 = vdwg.mxu0
        %s1501 = scalar_lea.vmem %s2, 48
        %v1502 = vld [vmem:[%s1501] sm:$0xf]
        %v1503 = vld [vmem:[%s1501 + $0x4] sm:$0xf]
        %v1504 = vld [vmem:[%s1501 + $0x8] sm:$0xf]
        %v1505 = vld [vmem:[%s1501 + $0xc] sm:$0xf]
        %s1506 = scalar_lea.vmem %s3, 3
        %v1507 = vld [vmem:[%s1506] sm:$0x1]
        %v1509 = vlaneseq
        %v1510 = vshrl.u32 %v1509, 7
        %v1511 = vsub.s32 0, %v1510
        %v1512 = vrot.slane %v1507, %v1511
        %v1518 = vunpack.c.l.b16 %v1502
        %v1519 = vunpack.c.l.b16 %v1503
        %v1520 = vunpack.c.l.b16 %v1504
        %v1521 = vunpack.c.l.b16 %v1505
        %v1522 = vpack.c.b16 %v1519, %v1518
        %v1523 = vpack.c.b16 %v1521, %v1520
        %1526 = vmatprep.subr.bf16.mxu0 0
        %1527 = vmatpush1.bf16.msra.mxu0 %v1522
        %1528 = vmatprep.subr.bf16.mxu0 0
        %1529 = vmatpush1.bf16.msra.mxu0 %v1523
        %1530 = vmatprep.subr.bf16.mxu0 0
        %1531 = vmatpush1.bf16.msra.mxu0 0
        %1532 = vmatprep.subr.bf16.mxu0 0
        %1533 = vmatpush1.bf16.msra.mxu0 0
        %1534 = vmatprep.subr.bf16.mxu0 0
        %1535 = vmatpush1.bf16.msra.mxu0 0
        %1536 = vmatprep.subr.bf16.mxu0 0
        %1537 = vmatpush1.bf16.msra.mxu0 0
        %1538 = vmatprep.subr.bf16.mxu0 0
        %1539 = vmatpush1.bf16.msra.mxu0 0
        %1540 = vmatprep.subr.bf16.mxu0 0
        %1541 = vmatpush1.bf16.msra.mxu0 0
        %1542 = vmatprep.subr.bf16.mxu0 0
        %1543 = vmatpush1.bf16.msra.mxu0 0
        %1544 = vmatprep.subr.bf16.mxu0 0
        %1545 = vmatpush1.bf16.msra.mxu0 0
        %1546 = vmatprep.subr.bf16.mxu0 0
        %1547 = vmatpush1.bf16.msra.mxu0 0
        %1548 = vmatprep.subr.bf16.mxu0 0
        %1549 = vmatpush1.bf16.msra.mxu0 0
        %1550 = vmatprep.subr.bf16.mxu0 0
        %1551 = vmatpush1.bf16.msra.mxu0 0
        %1552 = vmatprep.subr.bf16.mxu0 0
        %1553 = vmatpush1.bf16.msra.mxu0 0
        %1554 = vmatprep.subr.bf16.mxu0 0
        %1555 = vmatpush1.bf16.msra.mxu0 0
        %1556 = vmatprep.subr.bf16.mxu0 0
        %1557 = vmatpush1.bf16.msra.mxu0 0
        %1558 = vmatprep.mubr.bf16.mxu0 0
        %1559 = vmatmul.mubr.bf16.gmra.mrb[0].mxu0 %v1329
        %v1560 = vpop.f32.mrb[0].mxu0
        %v1561 = vadd.f32 %v1512, %v1560
        %v1562 = vpop.f32.mrb[0].mxu0
        %v1563 = vpop.f32.mrb[0].mxu0
        %v1564 = vpop.f32.mrb[0].mxu0
        %1565 = vdwg.mxu0
        %v1566 = vpack.c.bf16 %v1366, %v1366
        %v1567 = vpack.c.bf16 %v1431, %v1431
        %v1568 = vpack.c.bf16 %v1496, %v1496
        %v1569 = vpack.c.bf16 %v1561, %v1561
        %v1570 = vld [vmem:[#allocation2] sm:$0xf]
        %v1571 = vld [vmem:[#allocation2 + $0x4] sm:$0xf]
        %v1572 = vld [vmem:[#allocation2 + $0x8] sm:$0xf]
        %v1573 = vld [vmem:[#allocation2 + $0xc] sm:$0xf]
        %v1574 = vld [vmem:[#allocation3] sm:$0xf]
        %v1575 = vld [vmem:[#allocation3 + $0x4] sm:$0xf]
        %v1576 = vld [vmem:[#allocation3 + $0x8] sm:$0xf]
        %v1577 = vld [vmem:[#allocation3 + $0xc] sm:$0xf]
        %vm1578 = vcmask 64512
        %v1580 = vsel %vm1578, %v1566, 0
        %vm1582 = vcmask 1043456
        %v1584 = vsel %vm1582, %v1570, 0
        %1586 = vmatprep.subr.bf16.mxu0 0
        %1587 = vmatpush1.bf16.msra.mxu0 %v1584
        %1588 = vmatprep.subr.bf16.mxu0 0
        %1589 = vmatpush1.bf16.msra.mxu0 0
        %1590 = vmatprep.subr.bf16.mxu0 0
        %1591 = vmatpush1.bf16.msra.mxu0 0
        %1592 = vmatprep.subr.bf16.mxu0 0
        %1593 = vmatpush1.bf16.msra.mxu0 0
        %1594 = vmatprep.subr.bf16.mxu0 0
        %1595 = vmatpush1.bf16.msra.mxu0 0
        %1596 = vmatprep.subr.bf16.mxu0 0
        %1597 = vmatpush1.bf16.msra.mxu0 0
        %1598 = vmatprep.subr.bf16.mxu0 0
        %1599 = vmatpush1.bf16.msra.mxu0 0
        %1600 = vmatprep.subr.bf16.mxu0 0
        %1601 = vmatpush1.bf16.msra.mxu0 0
        %1602 = vmatprep.subr.bf16.mxu0 0
        %1603 = vmatpush1.bf16.msra.mxu0 0
        %1604 = vmatprep.subr.bf16.mxu0 0
        %1605 = vmatpush1.bf16.msra.mxu0 0
        %1606 = vmatprep.subr.bf16.mxu0 0
        %1607 = vmatpush1.bf16.msra.mxu0 0
        %1608 = vmatprep.subr.bf16.mxu0 0
        %1609 = vmatpush1.bf16.msra.mxu0 0
        %1610 = vmatprep.subr.bf16.mxu0 0
        %1611 = vmatpush1.bf16.msra.mxu0 0
        %1612 = vmatprep.subr.bf16.mxu0 0
        %1613 = vmatpush1.bf16.msra.mxu0 0
        %1614 = vmatprep.subr.bf16.mxu0 0
        %1615 = vmatpush1.bf16.msra.mxu0 0
        %1616 = vmatprep.subr.bf16.mxu0 0
        %1617 = vmatpush1.bf16.msra.mxu0 0
        %1618 = vmatprep.mubr.bf16.mxu0 0
        %1619 = vmatmul.mubr.bf16.gmra.mrb[0].mxu0 %v1580
        %v1620 = vpop.f32.mrb[0].mxu0
        %v1621 = vadd.f32 %v1296, %v1620
        %v1622 = vpop.f32.mrb[0].mxu0
        %v1623 = vpop.f32.mrb[0].mxu0
        %v1624 = vpop.f32.mrb[0].mxu0
        %1625 = vdwg.mxu0
        %v1627 = vsel %vm1578, %v1567, 0
        %v1630 = vsel %vm1582, %v1571, 0
        %1632 = vmatprep.subr.bf16.mxu0 0
        %1633 = vmatpush1.bf16.msra.mxu0 %v1630
        %1634 = vmatprep.subr.bf16.mxu0 0
        %1635 = vmatpush1.bf16.msra.mxu0 0
        %1636 = vmatprep.subr.bf16.mxu0 0
        %1637 = vmatpush1.bf16.msra.mxu0 0
        %1638 = vmatprep.subr.bf16.mxu0 0
        %1639 = vmatpush1.bf16.msra.mxu0 0
        %1640 = vmatprep.subr.bf16.mxu0 0
        %1641 = vmatpush1.bf16.msra.mxu0 0
        %1642 = vmatprep.subr.bf16.mxu0 0
        %1643 = vmatpush1.bf16.msra.mxu0 0
        %1644 = vmatprep.subr.bf16.mxu0 0
        %1645 = vmatpush1.bf16.msra.mxu0 0
        %1646 = vmatprep.subr.bf16.mxu0 0
        %1647 = vmatpush1.bf16.msra.mxu0 0
        %1648 = vmatprep.subr.bf16.mxu0 0
        %1649 = vmatpush1.bf16.msra.mxu0 0
        %1650 = vmatprep.subr.bf16.mxu0 0
        %1651 = vmatpush1.bf16.msra.mxu0 0
        %1652 = vmatprep.subr.bf16.mxu0 0
        %1653 = vmatpush1.bf16.msra.mxu0 0
        %1654 = vmatprep.subr.bf16.mxu0 0
        %1655 = vmatpush1.bf16.msra.mxu0 0
        %1656 = vmatprep.subr.bf16.mxu0 0
        %1657 = vmatpush1.bf16.msra.mxu0 0
        %1658 = vmatprep.subr.bf16.mxu0 0
        %1659 = vmatpush1.bf16.msra.mxu0 0
        %1660 = vmatprep.subr.bf16.mxu0 0
        %1661 = vmatpush1.bf16.msra.mxu0 0
        %1662 = vmatprep.subr.bf16.mxu0 0
        %1663 = vmatpush1.bf16.msra.mxu0 0
        %1664 = vmatprep.mubr.bf16.mxu0 0
        %1665 = vmatmul.mubr.bf16.gmra.mrb[0].mxu0 %v1627
        %v1666 = vpop.f32.mrb[0].mxu0
        %v1667 = vadd.f32 %v1296, %v1666
        %v1668 = vpop.f32.mrb[0].mxu0
        %v1669 = vpop.f32.mrb[0].mxu0
        %v1670 = vpop.f32.mrb[0].mxu0
        %1671 = vdwg.mxu0
        %v1673 = vsel %vm1578, %v1568, 0
        %v1676 = vsel %vm1582, %v1572, 0
        %1678 = vmatprep.subr.bf16.mxu0 0
        %1679 = vmatpush1.bf16.msra.mxu0 %v1676
        %1680 = vmatprep.subr.bf16.mxu0 0
        %1681 = vmatpush1.bf16.msra.mxu0 0
        %1682 = vmatprep.subr.bf16.mxu0 0
        %1683 = vmatpush1.bf16.msra.mxu0 0
        %1684 = vmatprep.subr.bf16.mxu0 0
        %1685 = vmatpush1.bf16.msra.mxu0 0
        %1686 = vmatprep.subr.bf16.mxu0 0
        %1687 = vmatpush1.bf16.msra.mxu0 0
        %1688 = vmatprep.subr.bf16.mxu0 0
        %1689 = vmatpush1.bf16.msra.mxu0 0
        %1690 = vmatprep.subr.bf16.mxu0 0
        %1691 = vmatpush1.bf16.msra.mxu0 0
        %1692 = vmatprep.subr.bf16.mxu0 0
        %1693 = vmatpush1.bf16.msra.mxu0 0
        %1694 = vmatprep.subr.bf16.mxu0 0
        %1695 = vmatpush1.bf16.msra.mxu0 0
        %1696 = vmatprep.subr.bf16.mxu0 0
        %1697 = vmatpush1.bf16.msra.mxu0 0
        %1698 = vmatprep.subr.bf16.mxu0 0
        %1699 = vmatpush1.bf16.msra.mxu0 0
        %1700 = vmatprep.subr.bf16.mxu0 0
        %1701 = vmatpush1.bf16.msra.mxu0 0
        %1702 = vmatprep.subr.bf16.mxu0 0
        %1703 = vmatpush1.bf16.msra.mxu0 0
        %1704 = vmatprep.subr.bf16.mxu0 0
        %1705 = vmatpush1.bf16.msra.mxu0 0
        %1706 = vmatprep.subr.bf16.mxu0 0
        %1707 = vmatpush1.bf16.msra.mxu0 0
        %1708 = vmatprep.subr.bf16.mxu0 0
        %1709 = vmatpush1.bf16.msra.mxu0 0
        %1710 = vmatprep.mubr.bf16.mxu0 0
        %1711 = vmatmul.mubr.bf16.gmra.mrb[0].mxu0 %v1673
        %v1712 = vpop.f32.mrb[0].mxu0
        %v1713 = vadd.f32 %v1296, %v1712
        %v1714 = vpop.f32.mrb[0].mxu0
        %v1715 = vpop.f32.mrb[0].mxu0
        %v1716 = vpop.f32.mrb[0].mxu0
        %1717 = vdwg.mxu0
        %v1719 = vsel %vm1578, %v1569, 0
        %v1722 = vsel %vm1582, %v1573, 0
        %1724 = vmatprep.subr.bf16.mxu0 0
        %1725 = vmatpush1.bf16.msra.mxu0 %v1722
        %1726 = vmatprep.subr.bf16.mxu0 0
        %1727 = vmatpush1.bf16.msra.mxu0 0
        %1728 = vmatprep.subr.bf16.mxu0 0
        %1729 = vmatpush1.bf16.msra.mxu0 0
        %1730 = vmatprep.subr.bf16.mxu0 0
        %1731 = vmatpush1.bf16.msra.mxu0 0
        %1732 = vmatprep.subr.bf16.mxu0 0
        %1733 = vmatpush1.bf16.msra.mxu0 0
        %1734 = vmatprep.subr.bf16.mxu0 0
        %1735 = vmatpush1.bf16.msra.mxu0 0
        %1736 = vmatprep.subr.bf16.mxu0 0
        %1737 = vmatpush1.bf16.msra.mxu0 0
        %1738 = vmatprep.subr.bf16.mxu0 0
        %1739 = vmatpush1.bf16.msra.mxu0 0
        %1740 = vmatprep.subr.bf16.mxu0 0
        %1741 = vmatpush1.bf16.msra.mxu0 0
        %1742 = vmatprep.subr.bf16.mxu0 0
        %1743 = vmatpush1.bf16.msra.mxu0 0
        %1744 = vmatprep.subr.bf16.mxu0 0
        %1745 = vmatpush1.bf16.msra.mxu0 0
        %1746 = vmatprep.subr.bf16.mxu0 0
        %1747 = vmatpush1.bf16.msra.mxu0 0
        %1748 = vmatprep.subr.bf16.mxu0 0
        %1749 = vmatpush1.bf16.msra.mxu0 0
        %1750 = vmatprep.subr.bf16.mxu0 0
        %1751 = vmatpush1.bf16.msra.mxu0 0
        %1752 = vmatprep.subr.bf16.mxu0 0
        %1753 = vmatpush1.bf16.msra.mxu0 0
        %1754 = vmatprep.subr.bf16.mxu0 0
        %1755 = vmatpush1.bf16.msra.mxu0 0
        %1756 = vmatprep.mubr.bf16.mxu0 0
        %1757 = vmatmul.mubr.bf16.gmra.mrb[0].mxu0 %v1719
        %v1758 = vpop.f32.mrb[0].mxu0
        %v1759 = vadd.f32 %v1296, %v1758
        %v1760 = vpop.f32.mrb[0].mxu0
        %v1761 = vpop.f32.mrb[0].mxu0
        %v1762 = vpop.f32.mrb[0].mxu0
        %1763 = vdwg.mxu0
        %v1764 = vsel %vm1578, %v1621, -inf
        %1765 = vmax.xlane.f32.xlu0 %v1764
        %v1766 = vpop.xlane.xlu0 %1765
        %v1767 = vsel %vm1578, %v1667, -inf
        %1768 = vmax.xlane.f32.xlu0 %v1767
        %v1769 = vpop.xlane.xlu0 %1768
        %v1770 = vsel %vm1578, %v1713, -inf
        %1771 = vmax.xlane.f32.xlu0 %v1770
        %v1772 = vpop.xlane.xlu0 %1771
        %v1773 = vsel %vm1578, %v1759, -inf
        %1774 = vmax.xlane.f32.xlu0 %v1773
        %v1775 = vpop.xlane.xlu0 %1774
        %v1776 = vsub.f32 %v1621, %v1766
        %v1777 = vsub.f32 %v1667, %v1769
        %v1778 = vsub.f32 %v1713, %v1772
        %v1779 = vsub.f32 %v1759, %v1775
        %v1780 = vmul.f32 %v1776, 1.442695
        %v1781 = vpow.pop %v1780
        %v1782 = vmul.f32 %v1777, 1.442695
        %v1783 = vpow.pop %v1782
        %v1784 = vmul.f32 %v1778, 1.442695
        %v1785 = vpow.pop %v1784
        %v1786 = vmul.f32 %v1779, 1.442695
        %v1787 = vpow.pop %v1786
        %v1788 = vsel %vm1578, %v1781, 0.0
        %1789 = vadd.xlane.f32.xlu0 %v1788
        %v1790 = vpop.xlane.xlu0 %1789
        %v1791 = vsel %vm1578, %v1783, 0.0
        %1792 = vadd.xlane.f32.xlu0 %v1791
        %v1793 = vpop.xlane.xlu0 %1792
        %v1794 = vsel %vm1578, %v1785, 0.0
        %1795 = vadd.xlane.f32.xlu0 %v1794
        %v1796 = vpop.xlane.xlu0 %1795
        %v1797 = vsel %vm1578, %v1787, 0.0
        %1798 = vadd.xlane.f32.xlu0 %v1797
        %v1799 = vpop.xlane.xlu0 %1798
        %v1800 = vrcp.pop %v1790
        %v1801 = vrcp.pop %v1793
        %v1802 = vrcp.pop %v1796
        %v1803 = vrcp.pop %v1799
        %v1804 = vmul.f32 %v1781, %v1800
        %v1805 = vmul.f32 %v1783, %v1801
        %v1806 = vmul.f32 %v1785, %v1802
        %v1807 = vmul.f32 %v1787, %v1803
        %v1808 = vpack.c.bf16 %v1804, %v1804
        %v1809 = vpack.c.bf16 %v1805, %v1805
        %v1810 = vpack.c.bf16 %v1806, %v1806
        %v1811 = vpack.c.bf16 %v1807, %v1807
        %v1813 = vsel %vm1578, %v1808, 0
        %v1816 = vsel %vm1582, %v1574, 0
        %1818 = vmatprep.subr.bf16.mxu0 0
        %1819 = vmatpush1.bf16.msra.mxu0 %v1816
        %1820 = vmatprep.subr.bf16.mxu0 0
        %1821 = vmatpush1.bf16.msra.mxu0 0
        %1822 = vmatprep.subr.bf16.mxu0 0
        %1823 = vmatpush1.bf16.msra.mxu0 0
        %1824 = vmatprep.subr.bf16.mxu0 0
        %1825 = vmatpush1.bf16.msra.mxu0 0
        %1826 = vmatprep.subr.bf16.mxu0 0
        %1827 = vmatpush1.bf16.msra.mxu0 0
        %1828 = vmatprep.subr.bf16.mxu0 0
        %1829 = vmatpush1.bf16.msra.mxu0 0
        %1830 = vmatprep.subr.bf16.mxu0 0
        %1831 = vmatpush1.bf16.msra.mxu0 0
        %1832 = vmatprep.subr.bf16.mxu0 0
        %1833 = vmatpush1.bf16.msra.mxu0 0
        %1834 = vmatprep.subr.bf16.mxu0 0
        %1835 = vmatpush1.bf16.msra.mxu0 0
        %1836 = vmatprep.subr.bf16.mxu0 0
        %1837 = vmatpush1.bf16.msra.mxu0 0
        %1838 = vmatprep.subr.bf16.mxu0 0
        %1839 = vmatpush1.bf16.msra.mxu0 0
        %1840 = vmatprep.subr.bf16.mxu0 0
        %1841 = vmatpush1.bf16.msra.mxu0 0
        %1842 = vmatprep.subr.bf16.mxu0 0
        %1843 = vmatpush1.bf16.msra.mxu0 0
        %1844 = vmatprep.subr.bf16.mxu0 0
        %1845 = vmatpush1.bf16.msra.mxu0 0
        %1846 = vmatprep.subr.bf16.mxu0 0
        %1847 = vmatpush1.bf16.msra.mxu0 0
        %1848 = vmatprep.subr.bf16.mxu0 0
        %1849 = vmatpush1.bf16.msra.mxu0 0
        %1850 = vmatprep.mubr.bf16.mxu0 0
        %1851 = vmatmul.mubr.bf16.gmra.mrb[0].mxu0 %v1813
        %v1852 = vpop.f32.mrb[0].mxu0
        %v1853 = vadd.f32 0.0, %v1852
        %v1854 = vpop.f32.mrb[0].mxu0
        %v1855 = vpop.f32.mrb[0].mxu0
        %v1856 = vpop.f32.mrb[0].mxu0
        %1857 = vdwg.mxu0
        %v1859 = vsel %vm1578, %v1809, 0
        %v1862 = vsel %vm1582, %v1575, 0
        %1864 = vmatprep.subr.bf16.mxu0 0
        %1865 = vmatpush1.bf16.msra.mxu0 %v1862
        %1866 = vmatprep.subr.bf16.mxu0 0
        %1867 = vmatpush1.bf16.msra.mxu0 0
        %1868 = vmatprep.subr.bf16.mxu0 0
        %1869 = vmatpush1.bf16.msra.mxu0 0
        %1870 = vmatprep.subr.bf16.mxu0 0
        %1871 = vmatpush1.bf16.msra.mxu0 0
        %1872 = vmatprep.subr.bf16.mxu0 0
        %1873 = vmatpush1.bf16.msra.mxu0 0
        %1874 = vmatprep.subr.bf16.mxu0 0
        %1875 = vmatpush1.bf16.msra.mxu0 0
        %1876 = vmatprep.subr.bf16.mxu0 0
        %1877 = vmatpush1.bf16.msra.mxu0 0
        %1878 = vmatprep.subr.bf16.mxu0 0
        %1879 = vmatpush1.bf16.msra.mxu0 0
        %1880 = vmatprep.subr.bf16.mxu0 0
        %1881 = vmatpush1.bf16.msra.mxu0 0
        %1882 = vmatprep.subr.bf16.mxu0 0
        %1883 = vmatpush1.bf16.msra.mxu0 0
        %1884 = vmatprep.subr.bf16.mxu0 0
        %1885 = vmatpush1.bf16.msra.mxu0 0
        %1886 = vmatprep.subr.bf16.mxu0 0
        %1887 = vmatpush1.bf16.msra.mxu0 0
        %1888 = vmatprep.subr.bf16.mxu0 0
        %1889 = vmatpush1.bf16.msra.mxu0 0
        %1890 = vmatprep.subr.bf16.mxu0 0
        %1891 = vmatpush1.bf16.msra.mxu0 0
        %1892 = vmatprep.subr.bf16.mxu0 0
        %1893 = vmatpush1.bf16.msra.mxu0 0
        %1894 = vmatprep.subr.bf16.mxu0 0
        %1895 = vmatpush1.bf16.msra.mxu0 0
        %1896 = vmatprep.mubr.bf16.mxu0 0
        %1897 = vmatmul.mubr.bf16.gmra.mrb[0].mxu0 %v1859
        %v1898 = vpop.f32.mrb[0].mxu0
        %v1899 = vadd.f32 0.0, %v1898
        %v1900 = vpop.f32.mrb[0].mxu0
        %v1901 = vpop.f32.mrb[0].mxu0
        %v1902 = vpop.f32.mrb[0].mxu0
        %1903 = vdwg.mxu0
        %v1905 = vsel %vm1578, %v1810, 0
        %v1908 = vsel %vm1582, %v1576, 0
        %1910 = vmatprep.subr.bf16.mxu0 0
        %1911 = vmatpush1.bf16.msra.mxu0 %v1908
        %1912 = vmatprep.subr.bf16.mxu0 0
        %1913 = vmatpush1.bf16.msra.mxu0 0
        %1914 = vmatprep.subr.bf16.mxu0 0
        %1915 = vmatpush1.bf16.msra.mxu0 0
        %1916 = vmatprep.subr.bf16.mxu0 0
        %1917 = vmatpush1.bf16.msra.mxu0 0
        %1918 = vmatprep.subr.bf16.mxu0 0
        %1919 = vmatpush1.bf16.msra.mxu0 0
        %1920 = vmatprep.subr.bf16.mxu0 0
        %1921 = vmatpush1.bf16.msra.mxu0 0
        %1922 = vmatprep.subr.bf16.mxu0 0
        %1923 = vmatpush1.bf16.msra.mxu0 0
        %1924 = vmatprep.subr.bf16.mxu0 0
        %1925 = vmatpush1.bf16.msra.mxu0 0
        %1926 = vmatprep.subr.bf16.mxu0 0
        %1927 = vmatpush1.bf16.msra.mxu0 0
        %1928 = vmatprep.subr.bf16.mxu0 0
        %1929 = vmatpush1.bf16.msra.mxu0 0
        %1930 = vmatprep.subr.bf16.mxu0 0
        %1931 = vmatpush1.bf16.msra.mxu0 0
        %1932 = vmatprep.subr.bf16.mxu0 0
        %1933 = vmatpush1.bf16.msra.mxu0 0
        %1934 = vmatprep.subr.bf16.mxu0 0
        %1935 = vmatpush1.bf16.msra.mxu0 0
        %1936 = vmatprep.subr.bf16.mxu0 0
        %1937 = vmatpush1.bf16.msra.mxu0 0
        %1938 = vmatprep.subr.bf16.mxu0 0
        %1939 = vmatpush1.bf16.msra.mxu0 0
        %1940 = vmatprep.subr.bf16.mxu0 0
        %1941 = vmatpush1.bf16.msra.mxu0 0
        %1942 = vmatprep.mubr.bf16.mxu0 0
        %1943 = vmatmul.mubr.bf16.gmra.mrb[0].mxu0 %v1905
        %v1944 = vpop.f32.mrb[0].mxu0
        %v1945 = vadd.f32 0.0, %v1944
        %v1946 = vpop.f32.mrb[0].mxu0
        %v1947 = vpop.f32.mrb[0].mxu0
        %v1948 = vpop.f32.mrb[0].mxu0
        %1949 = vdwg.mxu0
        %v1951 = vsel %vm1578, %v1811, 0
        %v1954 = vsel %vm1582, %v1577, 0
        %1956 = vmatprep.subr.bf16.mxu0 0
        %1957 = vmatpush1.bf16.msra.mxu0 %v1954
        %1958 = vmatprep.subr.bf16.mxu0 0
        %1959 = vmatpush1.bf16.msra.mxu0 0
        %1960 = vmatprep.subr.bf16.mxu0 0
        %1961 = vmatpush1.bf16.msra.mxu0 0
        %1962 = vmatprep.subr.bf16.mxu0 0
        %1963 = vmatpush1.bf16.msra.mxu0 0
        %1964 = vmatprep.subr.bf16.mxu0 0
        %1965 = vmatpush1.bf16.msra.mxu0 0
        %1966 = vmatprep.subr.bf16.mxu0 0
        %1967 = vmatpush1.bf16.msra.mxu0 0
        %1968 = vmatprep.subr.bf16.mxu0 0
        %1969 = vmatpush1.bf16.msra.mxu0 0
        %1970 = vmatprep.subr.bf16.mxu0 0
        %1971 = vmatpush1.bf16.msra.mxu0 0
        %1972 = vmatprep.subr.bf16.mxu0 0
        %1973 = vmatpush1.bf16.msra.mxu0 0
        %1974 = vmatprep.subr.bf16.mxu0 0
        %1975 = vmatpush1.bf16.msra.mxu0 0
        %1976 = vmatprep.subr.bf16.mxu0 0
        %1977 = vmatpush1.bf16.msra.mxu0 0
        %1978 = vmatprep.subr.bf16.mxu0 0
        %1979 = vmatpush1.bf16.msra.mxu0 0
        %1980 = vmatprep.subr.bf16.mxu0 0
        %1981 = vmatpush1.bf16.msra.mxu0 0
        %1982 = vmatprep.subr.bf16.mxu0 0
        %1983 = vmatpush1.bf16.msra.mxu0 0
        %1984 = vmatprep.subr.bf16.mxu0 0
        %1985 = vmatpush1.bf16.msra.mxu0 0
        %1986 = vmatprep.subr.bf16.mxu0 0
        %1987 = vmatpush1.bf16.msra.mxu0 0
        %1988 = vmatprep.mubr.bf16.mxu0 0
        %1989 = vmatmul.mubr.bf16.gmra.mrb[0].mxu0 %v1951
        %v1990 = vpop.f32.mrb[0].mxu0
        %v1991 = vadd.f32 0.0, %v1990
        %v1992 = vpop.f32.mrb[0].mxu0
        %v1993 = vpop.f32.mrb[0].mxu0
        %v1994 = vpop.f32.mrb[0].mxu0
        %1995 = vdwg.mxu0
        %v1996 = vpack.c.bf16 %v1853, %v1853
        %v1997 = vld [vmem:[%s8] sm:$0xf]
        %v1999 = vsel %vm1578, %v1996, 0
        %v2002 = vsel %vm1582, %v1997, 0
        %2004 = vmatprep.subr.bf16.mxu0 0
        %2005 = vmatpush1.bf16.msra.mxu0 %v2002
        %2006 = vmatprep.subr.bf16.mxu0 0
        %2007 = vmatpush1.bf16.msra.mxu0 0
        %2008 = vmatprep.subr.bf16.mxu0 0
        %2009 = vmatpush1.bf16.msra.mxu0 0
        %2010 = vmatprep.subr.bf16.mxu0 0
        %2011 = vmatpush1.bf16.msra.mxu0 0
        %2012 = vmatprep.subr.bf16.mxu0 0
        %2013 = vmatpush1.bf16.msra.mxu0 0
        %2014 = vmatprep.subr.bf16.mxu0 0
        %2015 = vmatpush1.bf16.msra.mxu0 0
        %2016 = vmatprep.subr.bf16.mxu0 0
        %2017 = vmatpush1.bf16.msra.mxu0 0
        %2018 = vmatprep.subr.bf16.mxu0 0
        %2019 = vmatpush1.bf16.msra.mxu0 0
        %2020 = vmatprep.subr.bf16.mxu0 0
        %2021 = vmatpush1.bf16.msra.mxu0 0
        %2022 = vmatprep.subr.bf16.mxu0 0
        %2023 = vmatpush1.bf16.msra.mxu0 0
        %2024 = vmatprep.subr.bf16.mxu0 0
        %2025 = vmatpush1.bf16.msra.mxu0 0
        %2026 = vmatprep.subr.bf16.mxu0 0
        %2027 = vmatpush1.bf16.msra.mxu0 0
        %2028 = vmatprep.subr.bf16.mxu0 0
        %2029 = vmatpush1.bf16.msra.mxu0 0
        %2030 = vmatprep.subr.bf16.mxu0 0
        %2031 = vmatpush1.bf16.msra.mxu0 0
        %2032 = vmatprep.subr.bf16.mxu0 0
        %2033 = vmatpush1.bf16.msra.mxu0 0
        %2034 = vmatprep.subr.bf16.mxu0 0
        %2035 = vmatpush1.bf16.msra.mxu0 0
        %2036 = vmatprep.mubr.bf16.mxu0 0
        %2037 = vmatmul.mubr.bf16.gmra.mrb[0].mxu0 %v1999
        %v2038 = vpop.f32.mrb[0].mxu0
        %v2039 = vadd.f32 0.0, %v2038
        %v2040 = vpop.f32.mrb[0].mxu0
        %v2041 = vpop.f32.mrb[0].mxu0
        %v2042 = vpop.f32.mrb[0].mxu0
        %2043 = vdwg.mxu0
        %v2044 = vadd.f32 %v1302, %v2039
        %v2045 = vpack.c.bf16 %v1899, %v1899
        %s2046 = scalar_lea.vmem %s8, 4
        %v2047 = vld [vmem:[%s2046] sm:$0xf]
        %v2049 = vsel %vm1578, %v2045, 0
        %v2052 = vsel %vm1582, %v2047, 0
        %2054 = vmatprep.subr.bf16.mxu0 0
        %2055 = vmatpush1.bf16.msra.mxu0 %v2052
        %2056 = vmatprep.subr.bf16.mxu0 0
        %2057 = vmatpush1.bf16.msra.mxu0 0
        %2058 = vmatprep.subr.bf16.mxu0 0
        %2059 = vmatpush1.bf16.msra.mxu0 0
        %2060 = vmatprep.subr.bf16.mxu0 0
        %2061 = vmatpush1.bf16.msra.mxu0 0
        %2062 = vmatprep.subr.bf16.mxu0 0
        %2063 = vmatpush1.bf16.msra.mxu0 0
        %2064 = vmatprep.subr.bf16.mxu0 0
        %2065 = vmatpush1.bf16.msra.mxu0 0
        %2066 = vmatprep.subr.bf16.mxu0 0
        %2067 = vmatpush1.bf16.msra.mxu0 0
        %2068 = vmatprep.subr.bf16.mxu0 0
        %2069 = vmatpush1.bf16.msra.mxu0 0
        %2070 = vmatprep.subr.bf16.mxu0 0
        %2071 = vmatpush1.bf16.msra.mxu0 0
        %2072 = vmatprep.subr.bf16.mxu0 0
        %2073 = vmatpush1.bf16.msra.mxu0 0
        %2074 = vmatprep.subr.bf16.mxu0 0
        %2075 = vmatpush1.bf16.msra.mxu0 0
        %2076 = vmatprep.subr.bf16.mxu0 0
        %2077 = vmatpush1.bf16.msra.mxu0 0
        %2078 = vmatprep.subr.bf16.mxu0 0
        %2079 = vmatpush1.bf16.msra.mxu0 0
        %2080 = vmatprep.subr.bf16.mxu0 0
        %2081 = vmatpush1.bf16.msra.mxu0 0
        %2082 = vmatprep.subr.bf16.mxu0 0
        %2083 = vmatpush1.bf16.msra.mxu0 0
        %2084 = vmatprep.subr.bf16.mxu0 0
        %2085 = vmatpush1.bf16.msra.mxu0 0
        %2086 = vmatprep.mubr.bf16.mxu0 0
        %2087 = vmatmul.mubr.bf16.gmra.mrb[0].mxu0 %v2049
        %v2088 = vpop.f32.mrb[0].mxu0
        %v2089 = vadd.f32 0.0, %v2088
        %v2090 = vpop.f32.mrb[0].mxu0
        %v2091 = vpop.f32.mrb[0].mxu0
        %v2092 = vpop.f32.mrb[0].mxu0
        %2093 = vdwg.mxu0
        %v2094 = vadd.f32 %v2044, %v2089
        %v2095 = vpack.c.bf16 %v1945, %v1945
        %s2096 = scalar_lea.vmem %s8, 8
        %v2097 = vld [vmem:[%s2096] sm:$0xf]
        %v2099 = vsel %vm1578, %v2095, 0
        %v2102 = vsel %vm1582, %v2097, 0
        %2104 = vmatprep.subr.bf16.mxu0 0
        %2105 = vmatpush1.bf16.msra.mxu0 %v2102
        %2106 = vmatprep.subr.bf16.mxu0 0
        %2107 = vmatpush1.bf16.msra.mxu0 0
        %2108 = vmatprep.subr.bf16.mxu0 0
        %2109 = vmatpush1.bf16.msra.mxu0 0
        %2110 = vmatprep.subr.bf16.mxu0 0
        %2111 = vmatpush1.bf16.msra.mxu0 0
        %2112 = vmatprep.subr.bf16.mxu0 0
        %2113 = vmatpush1.bf16.msra.mxu0 0
        %2114 = vmatprep.subr.bf16.mxu0 0
        %2115 = vmatpush1.bf16.msra.mxu0 0
        %2116 = vmatprep.subr.bf16.mxu0 0
        %2117 = vmatpush1.bf16.msra.mxu0 0
        %2118 = vmatprep.subr.bf16.mxu0 0
        %2119 = vmatpush1.bf16.msra.mxu0 0
        %2120 = vmatprep.subr.bf16.mxu0 0
        %2121 = vmatpush1.bf16.msra.mxu0 0
        %2122 = vmatprep.subr.bf16.mxu0 0
        %2123 = vmatpush1.bf16.msra.mxu0 0
        %2124 = vmatprep.subr.bf16.mxu0 0
        %2125 = vmatpush1.bf16.msra.mxu0 0
        %2126 = vmatprep.subr.bf16.mxu0 0
        %2127 = vmatpush1.bf16.msra.mxu0 0
        %2128 = vmatprep.subr.bf16.mxu0 0
        %2129 = vmatpush1.bf16.msra.mxu0 0
        %2130 = vmatprep.subr.bf16.mxu0 0
        %2131 = vmatpush1.bf16.msra.mxu0 0
        %2132 = vmatprep.subr.bf16.mxu0 0
        %2133 = vmatpush1.bf16.msra.mxu0 0
        %2134 = vmatprep.subr.bf16.mxu0 0
        %2135 = vmatpush1.bf16.msra.mxu0 0
        %2136 = vmatprep.mubr.bf16.mxu0 0
        %2137 = vmatmul.mubr.bf16.gmra.mrb[0].mxu0 %v2099
        %v2138 = vpop.f32.mrb[0].mxu0
        %v2139 = vadd.f32 0.0, %v2138
        %v2140 = vpop.f32.mrb[0].mxu0
        %v2141 = vpop.f32.mrb[0].mxu0
        %v2142 = vpop.f32.mrb[0].mxu0
        %2143 = vdwg.mxu0
        %v2144 = vadd.f32 %v2094, %v2139
        %v2145 = vpack.c.bf16 %v1991, %v1991
        %s2146 = scalar_lea.vmem %s8, 12
        %v2147 = vld [vmem:[%s2146] sm:$0xf]
        %v2149 = vsel %vm1578, %v2145, 0
        %v2152 = vsel %vm1582, %v2147, 0
        %2154 = vmatprep.subr.bf16.mxu0 0
        %2155 = vmatpush1.bf16.msra.mxu0 %v2152
        %2156 = vmatprep.subr.bf16.mxu0 0
        %2157 = vmatpush1.bf16.msra.mxu0 0
        %2158 = vmatprep.subr.bf16.mxu0 0
        %2159 = vmatpush1.bf16.msra.mxu0 0
        %2160 = vmatprep.subr.bf16.mxu0 0
        %2161 = vmatpush1.bf16.msra.mxu0 0
        %2162 = vmatprep.subr.bf16.mxu0 0
        %2163 = vmatpush1.bf16.msra.mxu0 0
        %2164 = vmatprep.subr.bf16.mxu0 0
        %2165 = vmatpush1.bf16.msra.mxu0 0
        %2166 = vmatprep.subr.bf16.mxu0 0
        %2167 = vmatpush1.bf16.msra.mxu0 0
        %2168 = vmatprep.subr.bf16.mxu0 0
        %2169 = vmatpush1.bf16.msra.mxu0 0
        %2170 = vmatprep.subr.bf16.mxu0 0
        %2171 = vmatpush1.bf16.msra.mxu0 0
        %2172 = vmatprep.subr.bf16.mxu0 0
        %2173 = vmatpush1.bf16.msra.mxu0 0
        %2174 = vmatprep.subr.bf16.mxu0 0
        %2175 = vmatpush1.bf16.msra.mxu0 0
        %2176 = vmatprep.subr.bf16.mxu0 0
        %2177 = vmatpush1.bf16.msra.mxu0 0
        %2178 = vmatprep.subr.bf16.mxu0 0
        %2179 = vmatpush1.bf16.msra.mxu0 0
        %2180 = vmatprep.subr.bf16.mxu0 0
        %2181 = vmatpush1.bf16.msra.mxu0 0
        %2182 = vmatprep.subr.bf16.mxu0 0
        %2183 = vmatpush1.bf16.msra.mxu0 0
        %2184 = vmatprep.subr.bf16.mxu0 0
        %2185 = vmatpush1.bf16.msra.mxu0 0
        %2186 = vmatprep.mubr.bf16.mxu0 0
        %2187 = vmatmul.mubr.bf16.gmra.mrb[0].mxu0 %v2149
        %v2188 = vpop.f32.mrb[0].mxu0
        %v2189 = vadd.f32 0.0, %v2188
        %v2190 = vpop.f32.mrb[0].mxu0
        %v2191 = vpop.f32.mrb[0].mxu0
        %v2192 = vpop.f32.mrb[0].mxu0
        %2193 = vdwg.mxu0
        %v2194 = vadd.f32 %v2144, %v2189
        %v2195 = vadd.f32 %v2194, %v1293
        %v2196 = vld [vmem:[%s10] sm:$0x1]
        %v2197 = vld [vmem:[%s11] sm:$0x1]
        %v2198 = vsel %vm1327, %v2195, 0.0
        %2199 = vadd.xlane.f32.xlu0 %v2198
        %v2200 = vpop.xlane.xlu0 %2199
        %v2201 = vrcp.pop 32.0
        %v2202 = vmul.f32 %v2200, %v2201
        %v2203 = vsub.f32 %v2195, %v2202
        %v2204 = vmul.f32 %v2203, %v2203
        %v2205 = vsel %vm1327, %v2204, 0.0
        %2206 = vadd.xlane.f32.xlu0 %v2205
        %v2207 = vpop.xlane.xlu0 %2206
        %v2208 = vmul.f32 %v2207, %v2201
        %v2209 = vadd.f32 %v2208, 1e-05
        %v2210 = vrsqrt.pop %v2209
        %v2211 = vmul.f32 %v2203, %v2210
        %v2213 = vlaneseq
        %v2214 = vshrl.u32 %v2213, 7
        %v2215 = vsub.s32 0, %v2214
        %v2216 = vrot.slane %v2196, %v2215
        %v2218 = vmul.f32 %v2211, %v2216
        %v2220 = vlaneseq
        %v2221 = vshrl.u32 %v2220, 7
        %v2222 = vsub.s32 0, %v2221
        %v2223 = vrot.slane %v2197, %v2222
        %v2225 = vadd.f32 %v2218, %v2223
        %v2226 = vpack.c.bf16 %v2225, %v2225
        %v2227 = vld [vmem:[%s12] sm:$0xf]
        %v2228 = vld [vmem:[%s12 + $0x4] sm:$0xf]
        %v2229 = vld [vmem:[%s12 + $0x8] sm:$0xf]
        %v2230 = vld [vmem:[%s12 + $0xc] sm:$0xf]
        %v2231 = vld [vmem:[%s13] sm:$0x1]
        %v2233 = vlaneseq
        %v2234 = vshrl.u32 %v2233, 7
        %v2235 = vsub.s32 0, %v2234
        %v2236 = vrot.slane %v2231, %v2235
        %v2242 = vunpack.c.l.b16 %v2227
        %v2243 = vunpack.c.l.b16 %v2228
        %v2244 = vunpack.c.l.b16 %v2229
        %v2245 = vunpack.c.l.b16 %v2230
        %v2246 = vpack.c.b16 %v2243, %v2242
        %v2247 = vpack.c.b16 %v2245, %v2244
        %v2251 = vsel %vm1327, %v2226, 0
        %2253 = vmatprep.subr.bf16.mxu0 0
        %2254 = vmatpush1.bf16.msra.mxu0 %v2246
        %2255 = vmatprep.subr.bf16.mxu0 0
        %2256 = vmatpush1.bf16.msra.mxu0 %v2247
        %2257 = vmatprep.subr.bf16.mxu0 0
        %2258 = vmatpush1.bf16.msra.mxu0 0
        %2259 = vmatprep.subr.bf16.mxu0 0
        %2260 = vmatpush1.bf16.msra.mxu0 0
        %2261 = vmatprep.subr.bf16.mxu0 0
        %2262 = vmatpush1.bf16.msra.mxu0 0
        %2263 = vmatprep.subr.bf16.mxu0 0
        %2264 = vmatpush1.bf16.msra.mxu0 0
        %2265 = vmatprep.subr.bf16.mxu0 0
        %2266 = vmatpush1.bf16.msra.mxu0 0
        %2267 = vmatprep.subr.bf16.mxu0 0
        %2268 = vmatpush1.bf16.msra.mxu0 0
        %2269 = vmatprep.subr.bf16.mxu0 0
        %2270 = vmatpush1.bf16.msra.mxu0 0
        %2271 = vmatprep.subr.bf16.mxu0 0
        %2272 = vmatpush1.bf16.msra.mxu0 0
        %2273 = vmatprep.subr.bf16.mxu0 0
        %2274 = vmatpush1.bf16.msra.mxu0 0
        %2275 = vmatprep.subr.bf16.mxu0 0
        %2276 = vmatpush1.bf16.msra.mxu0 0
        %2277 = vmatprep.subr.bf16.mxu0 0
        %2278 = vmatpush1.bf16.msra.mxu0 0
        %2279 = vmatprep.subr.bf16.mxu0 0
        %2280 = vmatpush1.bf16.msra.mxu0 0
        %2281 = vmatprep.subr.bf16.mxu0 0
        %2282 = vmatpush1.bf16.msra.mxu0 0
        %2283 = vmatprep.subr.bf16.mxu0 0
        %2284 = vmatpush1.bf16.msra.mxu0 0
        %2285 = vmatprep.mubr.bf16.mxu0 0
        %2286 = vmatmul.mubr.bf16.gmra.mrb[0].mxu0 %v2251
        %v2287 = vpop.f32.mrb[0].mxu0
        %v2288 = vadd.f32 %v2236, %v2287
        %v2289 = vpop.f32.mrb[0].mxu0
        %v2290 = vpop.f32.mrb[0].mxu0
        %v2291 = vpop.f32.mrb[0].mxu0
        %2292 = vdwg.mxu0
        %v2293 = vmax.f32 %v2288, 0.0
        %v2294 = vpack.c.bf16 %v2293, %v2293
        %v2295 = vld [vmem:[%s14] sm:$0xf]
        %v2296 = vld [vmem:[%s14 + $0x4] sm:$0xf]
        %v2297 = vld [vmem:[%s14 + $0x8] sm:$0xf]
        %v2298 = vld [vmem:[%s14 + $0xc] sm:$0xf]
        %v2299 = vld [vmem:[%s14 + $0x10] sm:$0xf]
        %v2300 = vld [vmem:[%s14 + $0x14] sm:$0xf]
        %v2301 = vld [vmem:[%s14 + $0x18] sm:$0xf]
        %v2302 = vld [vmem:[%s14 + $0x1c] sm:$0xf]
        %v2303 = vld [vmem:[%s15] sm:$0x1]
        %v2305 = vlaneseq
        %v2306 = vshrl.u32 %v2305, 7
        %v2307 = vsub.s32 0, %v2306
        %v2308 = vrot.slane %v2303, %v2307
        %v2318 = vunpack.c.l.b16 %v2295
        %v2319 = vunpack.c.l.b16 %v2296
        %v2320 = vunpack.c.l.b16 %v2297
        %v2321 = vunpack.c.l.b16 %v2298
        %v2322 = vunpack.c.l.b16 %v2299
        %v2323 = vunpack.c.l.b16 %v2300
        %v2324 = vunpack.c.l.b16 %v2301
        %v2325 = vunpack.c.l.b16 %v2302
        %v2326 = vpack.c.b16 %v2319, %v2318
        %v2327 = vpack.c.b16 %v2321, %v2320
        %v2328 = vpack.c.b16 %v2323, %v2322
        %v2329 = vpack.c.b16 %v2325, %v2324
        %vm2334 = vcmask 523264
        %v2336 = vsel %vm2334, %v2294, 0
        %2338 = vmatprep.subr.bf16.mxu0 0
        %2339 = vmatpush1.bf16.msra.mxu0 %v2326
        %2340 = vmatprep.subr.bf16.mxu0 0
        %2341 = vmatpush1.bf16.msra.mxu0 %v2327
        %2342 = vmatprep.subr.bf16.mxu0 0
        %2343 = vmatpush1.bf16.msra.mxu0 %v2328
        %2344 = vmatprep.subr.bf16.mxu0 0
        %2345 = vmatpush1.bf16.msra.mxu0 %v2329
        %2346 = vmatprep.subr.bf16.mxu0 0
        %2347 = vmatpush1.bf16.msra.mxu0 0
        %2348 = vmatprep.subr.bf16.mxu0 0
        %2349 = vmatpush1.bf16.msra.mxu0 0
        %2350 = vmatprep.subr.bf16.mxu0 0
        %2351 = vmatpush1.bf16.msra.mxu0 0
        %2352 = vmatprep.subr.bf16.mxu0 0
        %2353 = vmatpush1.bf16.msra.mxu0 0
        %2354 = vmatprep.subr.bf16.mxu0 0
        %2355 = vmatpush1.bf16.msra.mxu0 0
        %2356 = vmatprep.subr.bf16.mxu0 0
        %2357 = vmatpush1.bf16.msra.mxu0 0
        %2358 = vmatprep.subr.bf16.mxu0 0
        %2359 = vmatpush1.bf16.msra.mxu0 0
        %2360 = vmatprep.subr.bf16.mxu0 0
        %2361 = vmatpush1.bf16.msra.mxu0 0
        %2362 = vmatprep.subr.bf16.mxu0 0
        %2363 = vmatpush1.bf16.msra.mxu0 0
        %2364 = vmatprep.subr.bf16.mxu0 0
        %2365 = vmatpush1.bf16.msra.mxu0 0
        %2366 = vmatprep.subr.bf16.mxu0 0
        %2367 = vmatpush1.bf16.msra.mxu0 0
        %2368 = vmatprep.subr.bf16.mxu0 0
        %2369 = vmatpush1.bf16.msra.mxu0 0
        %2370 = vmatprep.mubr.bf16.mxu0 0
        %2371 = vmatmul.mubr.bf16.gmra.mrb[0].mxu0 %v2336
        %v2372 = vpop.f32.mrb[0].mxu0
        %v2373 = vadd.f32 %v2308, %v2372
        %v2374 = vpop.f32.mrb[0].mxu0
        %v2375 = vpop.f32.mrb[0].mxu0
        %v2376 = vpop.f32.mrb[0].mxu0
        %2377 = vdwg.mxu0
        %v2378 = vadd.f32 %v2373, %v2225
        %v2379 = vld [vmem:[%s16] sm:$0x1]
        %v2380 = vld [vmem:[%s17] sm:$0x1]
        %v2381 = vsel %vm1327, %v2378, 0.0
        %2382 = vadd.xlane.f32.xlu0 %v2381
        %v2383 = vpop.xlane.xlu0 %2382
        %v2384 = vmul.f32 %v2383, %v2201
        %v2385 = vsub.f32 %v2378, %v2384
        %v2386 = vmul.f32 %v2385, %v2385
        %v2387 = vsel %vm1327, %v2386, 0.0
        %2388 = vadd.xlane.f32.xlu0 %v2387
        %v2389 = vpop.xlane.xlu0 %2388
        %v2390 = vmul.f32 %v2389, %v2201
        %v2391 = vadd.f32 %v2390, 1e-05
        %v2392 = vrsqrt.pop %v2391
        %v2393 = vmul.f32 %v2385, %v2392
        %v2395 = vlaneseq
        %v2396 = vshrl.u32 %v2395, 7
        %v2397 = vsub.s32 0, %v2396
        %v2398 = vrot.slane %v2379, %v2397
        %v2400 = vmul.f32 %v2393, %v2398
        %v2402 = vlaneseq
        %v2403 = vshrl.u32 %v2402, 7
        %v2404 = vsub.s32 0, %v2403
        %v2405 = vrot.slane %v2380, %v2404
        %v2407 = vadd.f32 %v2400, %v2405
        %2408 = vst.msk [vmem:[%s601] sm:$0xff] %vm1327, %v2407
        %s2409 = sand.u32 %s444, 1
        %s2410 = scalar_lea.sflag [#allocation5], %s2409
        %s2411 = sand.u32 %s444, 1
        %s2412 = smul.addr %s2411, 8
        %s2413 = scalar_lea.vmem [#allocation4], %s2412
        // Predicated region
        $region97: #{tpu_custom_call.1} parent=91 // pred_check
          %p2414 = pneg %p454
        $region98: #{tpu_custom_call.1} parent=91 // pred_check_branch
          %2416 = sbr.rel (%p2414) target = $region100
        $region99: #{tpu_custom_call.1} parent=91 // pred_region
          %s2418 = ssub.s32 128, 128
          %2419 = vsyncadd %s2410, %s2418
          %s2420 = sadd.s32 %s37, %s36
          %s2421 = smul.addr %s2420, 128
          %s2422 = scalar_lea.hbm %s18, %s2421
          %s2424 = sshll.u32 %s2413, 4
          %s2425 = int_to_ptr.vmem [resolvable:$true] %s2424
          %2427 = dma.vmem_to_hbm [thread:$0]  %s2425, 128, %s2422, %s2410
        $region100: #{tpu_custom_call.1} parent=91 // pred_fallthru
          _
      $region92: #{tpu_custom_call.1} parent=5 // pred_fallthru
        _
      %p2428 = scmp.le.s32.totalorder 2, %s27
      // Predicated region
      $region101: #{tpu_custom_call.1} parent=5 // pred_check
        %p2429 = pneg %p2428
      $region102: #{tpu_custom_call.1} parent=5 // pred_check_branch
        %2431 = sbr.rel (%p2429) target = $region104
      $region103: #{tpu_custom_call.1} parent=5 // pred_region
        %s2432 = ssub.s32 %s27, 2
        // Predicated region
        $region105: #{tpu_custom_call.1} parent=103 // pred_check
          %p2433 = pneg %p460
        $region106: #{tpu_custom_call.1} parent=103 // pred_check_branch
          %2435 = sbr.rel (%p2433) target = $region108
        $region107: #{tpu_custom_call.1} parent=103 // pred_region
          %s2436 = sand.u32 %s445, 1
          %s2437 = scalar_lea.sflag [#allocation5], %s2436
          %s2438 = sand.u32 %s445, 1
          %s2439 = smul.addr %s2438, 8
          %s2440 = scalar_lea.vmem [#allocation4], %s2439
          %2441 = dma.done %s2437, 128
        $region108: #{tpu_custom_call.1} parent=103 // pred_fallthru
          _
      $region104: #{tpu_custom_call.1} parent=5 // pred_fallthru
        _
    $region6: #{tpu_custom_call.1} parent=1 // loop_footer
      %s31 = sadd.s32 1, %s27
    $region7: #{tpu_custom_call.1} parent=1 // loop_footer_branch
      %26 = sbr.rel target = $region3
    $region8: #{tpu_custom_call.1} parent=1 // loop_exit
      _
    %2442 = vsyncpa [#allocation5], 1
    %s2443 = scalar_lea.sflag [#allocation5], 1
    %2444 = vsyncpa %s2443, 1

</llo_original>
